<compile_context>
chip_gen: v7x
topology: tpu7x:2x2x1
jax: 0.10.0
libtpu: 0.0.40
codegen_flags: <defaults>
</compile_context>

<pallas_src>
import functools
import math

import numpy as np
import jax
import jax.numpy as jnp
from jax.experimental import pallas as pl
from jax.experimental.pallas import tpu as pltpu


# MXU operand precision: bf16 operands + f32 accumulation.
MXU_DTYPE = jnp.bfloat16


# ----------------------------- in-kernel helpers -----------------------------

def _mm(a, w):
    """MXU matmul: low-precision operands, f32 accumulation."""
    return jnp.dot(a.astype(MXU_DTYPE), w.astype(MXU_DTYPE),
                   preferred_element_type=jnp.float32)


def _layernorm(x, g, b, eps=1e-6):
    # PyTorch nn.LayerNorm semantics: biased variance over last dim, eps inside sqrt.
    mu = jnp.mean(x, axis=-1, keepdims=True)
    var = jnp.mean((x - mu) ** 2, axis=-1, keepdims=True)
    return (x - mu) * jax.lax.rsqrt(var + eps) * g + b


def _mha(q_in, kv_in, bias, wq, wk, wv, wo, ln_g, ln_b, *, n_head, d_k, d_v):
    """Post-LN multi-head attention (residual taken from q_in). No per-head loop."""
    Lq = q_in.shape[0]
    Lk = kv_in.shape[0]
    # One projection matmul each for Q / K / V; keep the results bf16 from here on.
    q = _mm(q_in, wq).reshape(Lq, n_head, d_k).astype(MXU_DTYPE)
    k = _mm(kv_in, wk).reshape(Lk, n_head, d_k).astype(MXU_DTYPE)
    v = _mm(kv_in, wv).reshape(Lk, n_head, d_v).astype(MXU_DTYPE)

    # Batched-over-heads score matmul; additive mask bias (hoisted, broadcast over heads).
    scores = jnp.einsum('qhd,khd->hqk', q, k, preferred_element_type=jnp.float32)
    scores = scores * (1.0 / math.sqrt(d_k)) + bias            # (H, Lq, Lk)

    # Softmax with EUP reciprocal instead of VALU divide.  Fully-masked rows become a
    # uniform distribution (matches PyTorch masked_fill + softmax).
    m = jnp.max(scores, axis=-1, keepdims=True)
    e = jnp.exp(scores - m)
    attn = e * pl.reciprocal(jnp.sum(e, axis=-1, keepdims=True), approx=True)

    # Batched PV matmul, then concat-heads + single output projection.
    ctx = jnp.einsum('hqk,khd->qhd', attn.astype(MXU_DTYPE), v,
                     preferred_element_type=jnp.float32)
    ctx = ctx.reshape(Lq, n_head * d_v)
    out = _mm(ctx, wo)
    return _layernorm(out + q_in, ln_g, ln_b)


# ----------------------------- fused decoder kernel --------------------------

def decoder_kernel(x_ref, enc_ref, tmask_ref, smask_ref, pos_ref,
                   s_wq, s_wk, s_wv, s_wo, s_g, s_b,
                   c_wq, c_wk, c_wv, c_wo, c_g, c_b,
                   f_w1, f_b1, f_w2, f_b2, f_g, f_b,
                   lnf_g, lnf_b,
                   out_ref, x_scr, *, n_head, d_k, d_v):
    """One (batch, layer) grid step: applies a single DecoderLayer to the resident x."""
    li = pl.program_id(1)

    @pl.when(li == 0)
    def _():
        # Positional encoding (+ eval-mode dropout = identity) once per batch element.
        x_scr[...] = x_ref[0] + pos_ref[...]

    x = x_scr[...]                                   # (Lt, D) f32, persists across layers
    enc = enc_ref[0]                                 # (Ls, D)

    # Hoisted additive mask biases: 0 where attended, -1e9 where masked (cheap VPU work).
    tbias = (tmask_ref[0] - 1.0) * 1e9               # (Lt, Lt) -> broadcasts over heads
    sbias = (smask_ref[0] - 1.0) * 1e9               # (1, Ls)  -> broadcasts over heads & queries

    mha = functools.partial(_mha, n_head=n_head, d_k=d_k, d_v=d_v)

    # masked self-attention
    x = mha(x, x, tbias, s_wq[0], s_wk[0], s_wv[0], s_wo[0], s_g[0], s_b[0])
    # encoder-decoder cross-attention
    x = mha(x, enc, sbias, c_wq[0], c_wk[0], c_wv[0], c_wo[0], c_g[0], c_b[0])
    # position-wise feed-forward
    h = jnp.maximum(_mm(x, f_w1[0]) + f_b1[0], 0.0)
    h = _mm(h, f_w2[0]) + f_b2[0]
    x = _layernorm(h + x, f_g[0], f_b[0])

    x_scr[...] = x

    @pl.when(li == pl.num_programs(1) - 1)
    def _():
        # final layer norm (fused into the same kernel)
        out_ref[0] = _layernorm(x, lnf_g[...], lnf_b[...]).astype(out_ref.dtype)


_STACKED_KEYS = ("s_wq", "s_wk", "s_wv", "s_wo", "s_g", "s_b",
                 "c_wq", "c_wk", "c_wv", "c_wo", "c_g", "c_b",
                 "f_w1", "f_b1", "f_w2", "f_b2", "f_g", "f_b")


def decoder_forward(params, trg_seq, trg_mask, enc_output, src_mask, *, n_head, d_k, d_v):
    B, Lt, D = trg_seq.shape
    Ls = enc_output.shape[1]
    n_layers = params["s_wq"].shape[0]
    pos = params["pos"][:Lt]                         # (Lt, D) positional table slice

    kernel = functools.partial(decoder_kernel, n_head=n_head, d_k=d_k, d_v=d_v)

    def per_batch(a):                                # indexed by batch, constant over layers
        nd = a.ndim
        return pl.BlockSpec((1,) + a.shape[1:],
                            lambda b, li, nd=nd: (b,) + (0,) * (nd - 1))

    def per_layer(a):                                # streamed: one layer's slice per step
        nd = a.ndim
        return pl.BlockSpec((1,) + a.shape[1:],
                            lambda b, li, nd=nd: (li,) + (0,) * (nd - 1))

    def invariant(a):                                # whole array, constant block index
        nd = a.ndim
        return pl.BlockSpec(a.shape, lambda b, li, nd=nd: (0,) * nd)

    layer_ws = [params[k] for k in _STACKED_KEYS]
    inputs = ([trg_seq, enc_output, trg_mask, src_mask, pos]
              + layer_ws + [params["lnf_g"], params["lnf_b"]])

    in_specs = ([per_batch(trg_seq),                 # trg activations
                 per_batch(enc_output),              # encoder output
                 per_batch(trg_mask),                # trg (self-attn) mask
                 per_batch(src_mask),                # src (cross-attn) mask
                 invariant(pos)]                     # positional table
                + [per_layer(w) for w in layer_ws]   # per-layer weight streaming
                + [invariant(params["lnf_g"]), invariant(params["lnf_b"])])

    return pl.pallas_call(
        kernel,
        out_shape=jax.ShapeDtypeStruct((B, Lt, D), trg_seq.dtype),
        grid=(B, n_layers),                          # batch outer (parallel), layers inner
        in_specs=in_specs,
        out_specs=pl.BlockSpec((1, Lt, D), lambda b, li: (b, 0, 0)),
        scratch_shapes=[pltpu.VMEM((Lt, D), jnp.float32)],   # resident activation
        compiler_params=pltpu.CompilerParams(
            dimension_semantics=("parallel", "arbitrary"),
            vmem_limit_bytes=32 * 1024 * 1024,       # explicit budget: safe on v5e/v6e/v7x
        ),
    )(*inputs)


# ----------------------------- params / glue ---------------------------------

def sinusoid_table(n_position, d_hid):
    pos = np.arange(n_position)[:, None].astype(np.float64)
    j = np.arange(d_hid)[None, :]
    angle = pos / np.power(10000.0, 2 * (j // 2) / d_hid)
    table = np.zeros((n_position, d_hid), dtype=np.float32)
    table[:, 0::2] = np.sin(angle[:, 0::2])
    table[:, 1::2] = np.cos(angle[:, 1::2])
    return jnp.asarray(table)


def init_params(key, n_layers, n_head, d_k, d_v, d_model, d_inner, n_position=200):
    # Weight matrices are stored bf16 at rest (halves streamed-weight HBM traffic);
    # biases / LayerNorm params stay f32.  For bit-exact f32 parity with the PyTorch
    # reference, set MXU_DTYPE = jnp.float32 (which also makes these weights f32).
    def u(kk, shape, fan_in, dtype=MXU_DTYPE):
        bound = 1.0 / math.sqrt(fan_in)
        return jax.random.uniform(kk, shape, jnp.float32, -bound, bound).astype(dtype)

    H, nl = n_head, n_layers
    k = jax.random.split(key, 12)
    ones = lambda: jnp.ones((nl, 1, d_model), jnp.float32)
    zeros = lambda: jnp.zeros((nl, 1, d_model), jnp.float32)
    return dict(
        pos=sinusoid_table(n_position, d_model),
        # self-attention (w_qs / w_ks / w_vs / fc are bias-free, as in the reference)
        s_wq=u(k[0], (nl, d_model, H * d_k), d_model),
        s_wk=u(k[1], (nl, d_model, H * d_k), d_model),
        s_wv=u(k[2], (nl, d_model, H * d_v), d_model),
        s_wo=u(k[3], (nl, H * d_v, d_model), H * d_v),
        s_g=ones(), s_b=zeros(),
        # encoder-decoder cross-attention
        c_wq=u(k[4], (nl, d_model, H * d_k), d_model),
        c_wk=u(k[5], (nl, d_model, H * d_k), d_model),
        c_wv=u(k[6], (nl, d_model, H * d_v), d_model),
        c_wo=u(k[7], (nl, H * d_v, d_model), H * d_v),
        c_g=ones(), c_b=zeros(),
        # position-wise FFN (Linear layers with biases)
        f_w1=u(k[8], (nl, d_model, d_inner), d_model),
        f_b1=u(k[9], (nl, 1, d_inner), d_model, jnp.float32),
        f_w2=u(k[10], (nl, d_inner, d_model), d_inner),
        f_b2=u(k[11], (nl, 1, d_model), d_inner, jnp.float32),
        f_g=ones(), f_b=zeros(),
        # final layer norm
        lnf_g=jnp.ones((1, d_model), jnp.float32),
        lnf_b=jnp.zeros((1, d_model), jnp.float32),
    )


# ----------------------------- main -------------------------------------------

if __name__ == "__main__":
    # small config consistent with the module's __init__ (n_component == d_model),
    # chosen lane-dense (d_model, d_inner multiples of 128).
    n_layers, n_head, d_k, d_v = 2, 4, 32, 32
    d_model, d_inner = 128, 256
    B, Lt, Ls = 2, 8, 16

    key = jax.random.PRNGKey(0)
    kp, kt, ke = jax.random.split(key, 3)
    params = init_params(kp, n_layers, n_head, d_k, d_v, d_model, d_inner)

    # continuous decoder input (n_component = d_model) and encoder output
    trg_seq = jax.random.normal(kt, (B, Lt, d_model), jnp.float32)
    enc_output = jax.random.normal(ke, (B, Ls, d_model), jnp.float32)

    # trg_mask: causal (subsequent) mask, (B, Lt, Lt); src_mask: pad mask, (B, 1, Ls)
    trg_mask = jnp.broadcast_to(jnp.tril(jnp.ones((Lt, Lt), jnp.float32)), (B, Lt, Lt))
    src_mask = jnp.ones((B, 1, Ls), jnp.float32).at[:, :, -3:].set(0.0)

    out = decoder_forward(params, trg_seq, trg_mask, enc_output, src_mask,
                          n_head=n_head, d_k=d_k, d_v=d_v)
    jax.block_until_ready(out)
    assert out.shape == (B, Lt, d_model) and out.dtype == jnp.float32
    assert bool(jnp.all(jnp.isfinite(out)))
    print("KERNEL_OK")
</pallas_src>

<mosaic_0001>
module attributes {stable_mosaic.version = 11 : i64} {
  func.func @decoder_kernel(%arg0: i32, %arg1: i32, %arg2: memref<1x8x128xf32, #tpu.memory_space<vmem>>, %arg3: memref<1x16x128xf32, #tpu.memory_space<vmem>>, %arg4: memref<1x8x8xf32, #tpu.memory_space<vmem>>, %arg5: memref<1x1x16xf32, #tpu.memory_space<vmem>>, %arg6: memref<8x128xf32, #tpu.memory_space<vmem>>, %arg7: memref<1x128x128xbf16, #tpu.memory_space<vmem>>, %arg8: memref<1x128x128xbf16, #tpu.memory_space<vmem>>, %arg9: memref<1x128x128xbf16, #tpu.memory_space<vmem>>, %arg10: memref<1x128x128xbf16, #tpu.memory_space<vmem>>, %arg11: memref<1x1x128xf32, #tpu.memory_space<vmem>>, %arg12: memref<1x1x128xf32, #tpu.memory_space<vmem>>, %arg13: memref<1x128x128xbf16, #tpu.memory_space<vmem>>, %arg14: memref<1x128x128xbf16, #tpu.memory_space<vmem>>, %arg15: memref<1x128x128xbf16, #tpu.memory_space<vmem>>, %arg16: memref<1x128x128xbf16, #tpu.memory_space<vmem>>, %arg17: memref<1x1x128xf32, #tpu.memory_space<vmem>>, %arg18: memref<1x1x128xf32, #tpu.memory_space<vmem>>, %arg19: memref<1x128x256xbf16, #tpu.memory_space<vmem>>, %arg20: memref<1x1x256xf32, #tpu.memory_space<vmem>>, %arg21: memref<1x256x128xbf16, #tpu.memory_space<vmem>>, %arg22: memref<1x1x128xf32, #tpu.memory_space<vmem>>, %arg23: memref<1x1x128xf32, #tpu.memory_space<vmem>>, %arg24: memref<1x1x128xf32, #tpu.memory_space<vmem>>, %arg25: memref<1x128xf32, #tpu.memory_space<vmem>>, %arg26: memref<1x128xf32, #tpu.memory_space<vmem>>, %arg27: memref<1x8x128xf32, #tpu.memory_space<vmem>>, %arg28: memref<8x128xf32, #tpu.memory_space<vmem>>) attributes {dimension_semantics = [#tpu.dimension_semantics<parallel>, #tpu.dimension_semantics<arbitrary>], iteration_bounds = array<i64: 2, 2>, scalar_prefetch = 0 : i64, scratch_operands = 1 : i64, tpu.core_type = #tpu.core_type<tc>, window_params = [{transform_indices = @transform_0, window_bounds = array<i64: 1, 8, 128>}, {transform_indices = @transform_1, window_bounds = array<i64: 1, 16, 128>}, {transform_indices = @transform_2, window_bounds = array<i64: 1, 8, 8>}, {transform_indices = @transform_3, window_bounds = array<i64: 1, 1, 16>}, {pipeline_mode = #tpu.pipeline_mode<synchronous>, transform_indices = @transform_4, window_bounds = array<i64: 8, 128>}, {transform_indices = @transform_5, window_bounds = array<i64: 1, 128, 128>}, {transform_indices = @transform_6, window_bounds = array<i64: 1, 128, 128>}, {transform_indices = @transform_7, window_bounds = array<i64: 1, 128, 128>}, {transform_indices = @transform_8, window_bounds = array<i64: 1, 128, 128>}, {transform_indices = @transform_9, window_bounds = array<i64: 1, 1, 128>}, {transform_indices = @transform_10, window_bounds = array<i64: 1, 1, 128>}, {transform_indices = @transform_11, window_bounds = array<i64: 1, 128, 128>}, {transform_indices = @transform_12, window_bounds = array<i64: 1, 128, 128>}, {transform_indices = @transform_13, window_bounds = array<i64: 1, 128, 128>}, {transform_indices = @transform_14, window_bounds = array<i64: 1, 128, 128>}, {transform_indices = @transform_15, window_bounds = array<i64: 1, 1, 128>}, {transform_indices = @transform_16, window_bounds = array<i64: 1, 1, 128>}, {transform_indices = @transform_17, window_bounds = array<i64: 1, 128, 256>}, {transform_indices = @transform_18, window_bounds = array<i64: 1, 1, 256>}, {transform_indices = @transform_19, window_bounds = array<i64: 1, 256, 128>}, {transform_indices = @transform_20, window_bounds = array<i64: 1, 1, 128>}, {transform_indices = @transform_21, window_bounds = array<i64: 1, 1, 128>}, {transform_indices = @transform_22, window_bounds = array<i64: 1, 1, 128>}, {pipeline_mode = #tpu.pipeline_mode<synchronous>, transform_indices = @transform_23, window_bounds = array<i64: 1, 128>}, {pipeline_mode = #tpu.pipeline_mode<synchronous>, transform_indices = @transform_24, window_bounds = array<i64: 1, 128>}, {transform_indices = @transform_25, window_bounds = array<i64: 1, 8, 128>}]} {
    %c0_i32 = arith.constant 0 : i32
    %0 = arith.cmpi eq, %arg1, %c0_i32 : i32
    %1 = arith.extui %0 : i1 to i32
    %c0_i32_0 = arith.constant 0 : i32
    %2 = arith.cmpi ne, %1, %c0_i32_0 : i32
    scf.if %2 {
      %c0_107 = arith.constant 0 : index
      %c0_108 = arith.constant 0 : index
      %c0_109 = arith.constant 0 : index
      %205 = vector.load %arg2[%c0_107, %c0_108, %c0_109] : memref<1x8x128xf32, #tpu.memory_space<vmem>>, vector<1x8x128xf32>
      %206 = vector.shape_cast %205 : vector<1x8x128xf32> to vector<8x128xf32>
      %c0_110 = arith.constant 0 : index
      %c0_111 = arith.constant 0 : index
      %207 = vector.load %arg6[%c0_110, %c0_111] : memref<8x128xf32, #tpu.memory_space<vmem>>, vector<8x128xf32>
      %208 = arith.addf %206, %207 : vector<8x128xf32>
      %c0_112 = arith.constant 0 : index
      %c0_113 = arith.constant 0 : index
      %209 = vector.load %arg28[%c0_112, %c0_113] : memref<8x128xf32, #tpu.memory_space<vmem>>, vector<8x128xf32>
      tpu.vector_store %arg28[%c0_112, %c0_113], %208 {strides = array<i32>} : memref<8x128xf32, #tpu.memory_space<vmem>>, vector<8x128xf32>,
    } else {
    }
    %c0 = arith.constant 0 : index
    %c0_1 = arith.constant 0 : index
    %3 = vector.load %arg28[%c0, %c0_1] : memref<8x128xf32, #tpu.memory_space<vmem>>, vector<8x128xf32>
    %c0_2 = arith.constant 0 : index
    %c0_3 = arith.constant 0 : index
    %c0_4 = arith.constant 0 : index
    %4 = vector.load %arg3[%c0_2, %c0_3, %c0_4] : memref<1x16x128xf32, #tpu.memory_space<vmem>>, vector<1x16x128xf32>
    %5 = vector.shape_cast %4 : vector<1x16x128xf32> to vector<16x128xf32>
    %c0_5 = arith.constant 0 : index
    %c0_6 = arith.constant 0 : index
    %c0_7 = arith.constant 0 : index
    %6 = vector.load %arg4[%c0_5, %c0_6, %c0_7] : memref<1x8x8xf32, #tpu.memory_space<vmem>>, vector<1x8x8xf32>
    %7 = vector.shape_cast %6 : vector<1x8x8xf32> to vector<8x8xf32>
    %cst = arith.constant 1.000000e+00 : f32
    %8 = vector.broadcast %cst : f32 to vector<8x8xf32>
    %9 = arith.subf %7, %8 : vector<8x8xf32>
    %cst_8 = arith.constant 1.000000e+09 : f32
    %10 = vector.broadcast %cst_8 : f32 to vector<8x8xf32>
    %11 = arith.mulf %9, %10 : vector<8x8xf32>
    %c0_9 = arith.constant 0 : index
    %c0_10 = arith.constant 0 : index
    %c0_11 = arith.constant 0 : index
    %12 = vector.load %arg5[%c0_9, %c0_10, %c0_11] : memref<1x1x16xf32, #tpu.memory_space<vmem>>, vector<1x1x16xf32>
    %13 = vector.shape_cast %12 : vector<1x1x16xf32> to vector<1x16xf32>
    %cst_12 = arith.constant 1.000000e+00 : f32
    %14 = vector.broadcast %cst_12 : f32 to vector<1x16xf32>
    %15 = arith.subf %13, %14 : vector<1x16xf32>
    %cst_13 = arith.constant 1.000000e+09 : f32
    %16 = vector.broadcast %cst_13 : f32 to vector<1x16xf32>
    %17 = arith.mulf %15, %16 : vector<1x16xf32>
    %c0_14 = arith.constant 0 : index
    %c0_15 = arith.constant 0 : index
    %c0_16 = arith.constant 0 : index
    %18 = vector.load %arg7[%c0_14, %c0_15, %c0_16] : memref<1x128x128xbf16, #tpu.memory_space<vmem>>, vector<1x128x128xbf16>
    %19 = vector.shape_cast %18 : vector<1x128x128xbf16> to vector<128x128xbf16>
    %c0_17 = arith.constant 0 : index
    %c0_18 = arith.constant 0 : index
    %c0_19 = arith.constant 0 : index
    %20 = vector.load %arg8[%c0_17, %c0_18, %c0_19] : memref<1x128x128xbf16, #tpu.memory_space<vmem>>, vector<1x128x128xbf16>
    %21 = vector.shape_cast %20 : vector<1x128x128xbf16> to vector<128x128xbf16>
    %c0_20 = arith.constant 0 : index
    %c0_21 = arith.constant 0 : index
    %c0_22 = arith.constant 0 : index
    %22 = vector.load %arg9[%c0_20, %c0_21, %c0_22] : memref<1x128x128xbf16, #tpu.memory_space<vmem>>, vector<1x128x128xbf16>
    %23 = vector.shape_cast %22 : vector<1x128x128xbf16> to vector<128x128xbf16>
    %c0_23 = arith.constant 0 : index
    %c0_24 = arith.constant 0 : index
    %c0_25 = arith.constant 0 : index
    %24 = vector.load %arg10[%c0_23, %c0_24, %c0_25] : memref<1x128x128xbf16, #tpu.memory_space<vmem>>, vector<1x128x128xbf16>
    %25 = vector.shape_cast %24 : vector<1x128x128xbf16> to vector<128x128xbf16>
    %c0_26 = arith.constant 0 : index
    %c0_27 = arith.constant 0 : index
    %c0_28 = arith.constant 0 : index
    %26 = vector.load %arg11[%c0_26, %c0_27, %c0_28] : memref<1x1x128xf32, #tpu.memory_space<vmem>>, vector<1x1x128xf32>
    %27 = vector.shape_cast %26 : vector<1x1x128xf32> to vector<1x128xf32>
    %c0_29 = arith.constant 0 : index
    %c0_30 = arith.constant 0 : index
    %c0_31 = arith.constant 0 : index
    %28 = vector.load %arg12[%c0_29, %c0_30, %c0_31] : memref<1x1x128xf32, #tpu.memory_space<vmem>>, vector<1x1x128xf32>
    %29 = vector.shape_cast %28 : vector<1x1x128xf32> to vector<1x128xf32>
    %30 = arith.truncf %3 : vector<8x128xf32> to vector<8x128xbf16>
    %cst_32 = arith.constant dense<0.000000e+00> : vector<8x128xf32>
    %31 = tpu.matmul %30, %19, %cst_32 {dimension_numbers = #tpu.dot_dimension_numbers<[1], [0], [0], [1], [0, 0, 1, 1], [], []>} : vector<8x128xbf16>, vector<128x128xbf16>, vector<8x128xf32> -> vector<8x128xf32>
    %32 = vector.shape_cast %31 : vector<8x128xf32> to vector<8x4x32xf32>
    %33 = arith.truncf %32 : vector<8x4x32xf32> to vector<8x4x32xbf16>
    %34 = arith.truncf %3 : vector<8x128xf32> to vector<8x128xbf16>
    %cst_33 = arith.constant dense<0.000000e+00> : vector<8x128xf32>
    %35 = tpu.matmul %34, %21, %cst_33 {dimension_numbers = #tpu.dot_dimension_numbers<[1], [0], [0], [1], [0, 0, 1, 1], [], []>} : vector<8x128xbf16>, vector<128x128xbf16>, vector<8x128xf32> -> vector<8x128xf32>
    %36 = vector.shape_cast %35 : vector<8x128xf32> to vector<8x4x32xf32>
    %37 = arith.truncf %36 : vector<8x4x32xf32> to vector<8x4x32xbf16>
    %38 = arith.truncf %3 : vector<8x128xf32> to vector<8x128xbf16>
    %cst_34 = arith.constant dense<0.000000e+00> : vector<8x128xf32>
    %39 = tpu.matmul %38, %23, %cst_34 {dimension_numbers = #tpu.dot_dimension_numbers<[1], [0], [0], [1], [0, 0, 1, 1], [], []>} : vector<8x128xbf16>, vector<128x128xbf16>, vector<8x128xf32> -> vector<8x128xf32>
    %40 = vector.shape_cast %39 : vector<8x128xf32> to vector<8x4x32xf32>
    %41 = arith.truncf %40 : vector<8x4x32xf32> to vector<8x4x32xbf16>
    "tpu.trace_start"() <{level = 10 : i32, message = "qhd,khd->hqk"}> : () -> ()
    %cst_35 = arith.constant dense<0.000000e+00> : vector<4x8x8xf32>
    %42 = tpu.matmul %33, %37, %cst_35 {dimension_numbers = #tpu.dot_dimension_numbers<[2], [2], [0], [0], [0, 1, 0, 0, 1, 0], [1], [1]>} : vector<8x4x32xbf16>, vector<8x4x32xbf16>, vector<4x8x8xf32> -> vector<4x8x8xf32>
    "tpu.trace_stop"() : () -> ()
    %cst_36 = arith.constant 0.176776692 : f32
    %43 = vector.broadcast %cst_36 : f32 to vector<4x8x8xf32>
    %44 = arith.mulf %42, %43 : vector<4x8x8xf32>
    %45 = vector.shape_cast %11 : vector<8x8xf32> to vector<1x8x8xf32>
    %46 = vector.broadcast %45 : vector<1x8x8xf32> to vector<4x8x8xf32>
    %47 = arith.addf %44, %46 : vector<4x8x8xf32>
    %cst_37 = arith.constant dense<0xFF800000> : vector<4x8xf32>
    %48 = vector.multi_reduction <maximumf>, %47, %cst_37 [2] : vector<4x8x8xf32> to vector<4x8xf32>
    %49 = vector.shape_cast %48 : vector<4x8xf32> to vector<4x8x1xf32>
    %50 = vector.broadcast %49 : vector<4x8x1xf32> to vector<4x8x8xf32>
    %51 = arith.subf %47, %50 : vector<4x8x8xf32>
    %52 = math.exp %51 : vector<4x8x8xf32>
    %cst_38 = arith.constant dense<0.000000e+00> : vector<4x8xf32>
    %53 = vector.multi_reduction <add>, %52, %cst_38 [2] : vector<4x8x8xf32> to vector<4x8xf32>
    %54 = vector.shape_cast %53 : vector<4x8xf32> to vector<4x8x1xf32>
    %55 = tpu.reciprocal %54 {approx = true} : vector<4x8x1xf32> -> vector<4x8x1xf32>
    %56 = vector.broadcast %55 : vector<4x8x1xf32> to vector<4x8x8xf32>
    %57 = arith.mulf %52, %56 : vector<4x8x8xf32>
    %58 = arith.truncf %57 : vector<4x8x8xf32> to vector<4x8x8xbf16>
    "tpu.trace_start"() <{level = 10 : i32, message = "hqk,khd->qhd"}> : () -> ()
    %cst_39 = arith.constant dense<0.000000e+00> : vector<4x32x8xf32>
    %59 = tpu.matmul %41, %58, %cst_39 {dimension_numbers = #tpu.dot_dimension_numbers<[0], [2], [2], [1], [0, 1, 0, 2, 1, 1], [1], [0]>} : vector<8x4x32xbf16>, vector<4x8x8xbf16>, vector<4x32x8xf32> -> vector<4x32x8xf32>
    %60 = tpu.transpose %59, [2, 0, 1] : vector<4x32x8xf32> -> vector<8x4x32xf32>
    "tpu.trace_stop"() : () -> ()
    %61 = vector.shape_cast %60 : vector<8x4x32xf32> to vector<8x128xf32>
    %62 = arith.truncf %61 : vector<8x128xf32> to vector<8x128xbf16>
    %cst_40 = arith.constant dense<0.000000e+00> : vector<8x128xf32>
    %63 = tpu.matmul %62, %25, %cst_40 {dimension_numbers = #tpu.dot_dimension_numbers<[1], [0], [0], [1], [0, 0, 1, 1], [], []>} : vector<8x128xbf16>, vector<128x128xbf16>, vector<8x128xf32> -> vector<8x128xf32>
    %64 = arith.addf %63, %3 : vector<8x128xf32>
    %cst_41 = arith.constant dense<0.000000e+00> : vector<8xf32>
    %65 = vector.multi_reduction <add>, %64, %cst_41 [1] : vector<8x128xf32> to vector<8xf32>
    %66 = vector.shape_cast %65 : vector<8xf32> to vector<8x1xf32>
    %cst_42 = arith.constant 1.280000e+02 : f32
    %67 = vector.broadcast %cst_42 : f32 to vector<8x1xf32>
    %68 = arith.divf %66, %67 : vector<8x1xf32>
    %69 = vector.broadcast %68 : vector<8x1xf32> to vector<8x128xf32>
    %70 = arith.subf %64, %69 : vector<8x128xf32>
    %71 = arith.mulf %70, %70 : vector<8x128xf32>
    %cst_43 = arith.constant dense<0.000000e+00> : vector<8xf32>
    %72 = vector.multi_reduction <add>, %71, %cst_43 [1] : vector<8x128xf32> to vector<8xf32>
    %73 = vector.shape_cast %72 : vector<8xf32> to vector<8x1xf32>
    %cst_44 = arith.constant 1.280000e+02 : f32
    %74 = vector.broadcast %cst_44 : f32 to vector<8x1xf32>
    %75 = arith.divf %73, %74 : vector<8x1xf32>
    %76 = vector.broadcast %68 : vector<8x1xf32> to vector<8x128xf32>
    %77 = arith.subf %64, %76 : vector<8x128xf32>
    %cst_45 = arith.constant 9.99999997E-7 : f32
    %78 = vector.broadcast %cst_45 : f32 to vector<8x1xf32>
    %79 = arith.addf %75, %78 : vector<8x1xf32>
    %80 = math.rsqrt %79 : vector<8x1xf32>
    %81 = vector.broadcast %80 : vector<8x1xf32> to vector<8x128xf32>
    %82 = arith.mulf %77, %81 : vector<8x128xf32>
    %83 = vector.broadcast %27 : vector<1x128xf32> to vector<8x128xf32>
    %84 = arith.mulf %82, %83 : vector<8x128xf32>
    %85 = vector.broadcast %29 : vector<1x128xf32> to vector<8x128xf32>
    %86 = arith.addf %84, %85 : vector<8x128xf32>
    %c0_46 = arith.constant 0 : index
    %c0_47 = arith.constant 0 : index
    %c0_48 = arith.constant 0 : index
    %87 = vector.load %arg13[%c0_46, %c0_47, %c0_48] : memref<1x128x128xbf16, #tpu.memory_space<vmem>>, vector<1x128x128xbf16>
    %88 = vector.shape_cast %87 : vector<1x128x128xbf16> to vector<128x128xbf16>
    %c0_49 = arith.constant 0 : index
    %c0_50 = arith.constant 0 : index
    %c0_51 = arith.constant 0 : index
    %89 = vector.load %arg14[%c0_49, %c0_50, %c0_51] : memref<1x128x128xbf16, #tpu.memory_space<vmem>>, vector<1x128x128xbf16>
    %90 = vector.shape_cast %89 : vector<1x128x128xbf16> to vector<128x128xbf16>
    %c0_52 = arith.constant 0 : index
    %c0_53 = arith.constant 0 : index
    %c0_54 = arith.constant 0 : index
    %91 = vector.load %arg15[%c0_52, %c0_53, %c0_54] : memref<1x128x128xbf16, #tpu.memory_space<vmem>>, vector<1x128x128xbf16>
    %92 = vector.shape_cast %91 : vector<1x128x128xbf16> to vector<128x128xbf16>
    %c0_55 = arith.constant 0 : index
    %c0_56 = arith.constant 0 : index
    %c0_57 = arith.constant 0 : index
    %93 = vector.load %arg16[%c0_55, %c0_56, %c0_57] : memref<1x128x128xbf16, #tpu.memory_space<vmem>>, vector<1x128x128xbf16>
    %94 = vector.shape_cast %93 : vector<1x128x128xbf16> to vector<128x128xbf16>
    %c0_58 = arith.constant 0 : index
    %c0_59 = arith.constant 0 : index
    %c0_60 = arith.constant 0 : index
    %95 = vector.load %arg17[%c0_58, %c0_59, %c0_60] : memref<1x1x128xf32, #tpu.memory_space<vmem>>, vector<1x1x128xf32>
    %96 = vector.shape_cast %95 : vector<1x1x128xf32> to vector<1x128xf32>
    %c0_61 = arith.constant 0 : index
    %c0_62 = arith.constant 0 : index
    %c0_63 = arith.constant 0 : index
    %97 = vector.load %arg18[%c0_61, %c0_62, %c0_63] : memref<1x1x128xf32, #tpu.memory_space<vmem>>, vector<1x1x128xf32>
    %98 = vector.shape_cast %97 : vector<1x1x128xf32> to vector<1x128xf32>
    %99 = arith.truncf %86 : vector<8x128xf32> to vector<8x128xbf16>
    %cst_64 = arith.constant dense<0.000000e+00> : vector<8x128xf32>
    %100 = tpu.matmul %99, %88, %cst_64 {dimension_numbers = #tpu.dot_dimension_numbers<[1], [0], [0], [1], [0, 0, 1, 1], [], []>} : vector<8x128xbf16>, vector<128x128xbf16>, vector<8x128xf32> -> vector<8x128xf32>
    %101 = vector.shape_cast %100 : vector<8x128xf32> to vector<8x4x32xf32>
    %102 = arith.truncf %101 : vector<8x4x32xf32> to vector<8x4x32xbf16>
    %103 = arith.truncf %5 : vector<16x128xf32> to vector<16x128xbf16>
    %cst_65 = arith.constant dense<0.000000e+00> : vector<16x128xf32>
    %104 = tpu.matmul %103, %90, %cst_65 {dimension_numbers = #tpu.dot_dimension_numbers<[1], [0], [0], [1], [0, 0, 1, 1], [], []>} : vector<16x128xbf16>, vector<128x128xbf16>, vector<16x128xf32> -> vector<16x128xf32>
    %105 = vector.shape_cast %104 : vector<16x128xf32> to vector<16x4x32xf32>
    %106 = arith.truncf %105 : vector<16x4x32xf32> to vector<16x4x32xbf16>
    %107 = arith.truncf %5 : vector<16x128xf32> to vector<16x128xbf16>
    %cst_66 = arith.constant dense<0.000000e+00> : vector<16x128xf32>
    %108 = tpu.matmul %107, %92, %cst_66 {dimension_numbers = #tpu.dot_dimension_numbers<[1], [0], [0], [1], [0, 0, 1, 1], [], []>} : vector<16x128xbf16>, vector<128x128xbf16>, vector<16x128xf32> -> vector<16x128xf32>
    %109 = vector.shape_cast %108 : vector<16x128xf32> to vector<16x4x32xf32>
    %110 = arith.truncf %109 : vector<16x4x32xf32> to vector<16x4x32xbf16>
    "tpu.trace_start"() <{level = 10 : i32, message = "qhd,khd->hqk"}> : () -> ()
    %cst_67 = arith.constant dense<0.000000e+00> : vector<4x8x16xf32>
    %111 = tpu.matmul %102, %106, %cst_67 {dimension_numbers = #tpu.dot_dimension_numbers<[2], [2], [0], [0], [0, 1, 0, 0, 1, 0], [1], [1]>} : vector<8x4x32xbf16>, vector<16x4x32xbf16>, vector<4x8x16xf32> -> vector<4x8x16xf32>
    "tpu.trace_stop"() : () -> ()
    %cst_68 = arith.constant 0.176776692 : f32
    %112 = vector.broadcast %cst_68 : f32 to vector<4x8x16xf32>
    %113 = arith.mulf %111, %112 : vector<4x8x16xf32>
    %114 = vector.shape_cast %17 : vector<1x16xf32> to vector<1x1x16xf32>
    %115 = vector.broadcast %114 : vector<1x1x16xf32> to vector<4x8x16xf32>
    %116 = arith.addf %113, %115 : vector<4x8x16xf32>
    %cst_69 = arith.constant dense<0xFF800000> : vector<4x8xf32>
    %117 = vector.multi_reduction <maximumf>, %116, %cst_69 [2] : vector<4x8x16xf32> to vector<4x8xf32>
    %118 = vector.shape_cast %117 : vector<4x8xf32> to vector<4x8x1xf32>
    %119 = vector.broadcast %118 : vector<4x8x1xf32> to vector<4x8x16xf32>
    %120 = arith.subf %116, %119 : vector<4x8x16xf32>
    %121 = math.exp %120 : vector<4x8x16xf32>
    %cst_70 = arith.constant dense<0.000000e+00> : vector<4x8xf32>
    %122 = vector.multi_reduction <add>, %121, %cst_70 [2] : vector<4x8x16xf32> to vector<4x8xf32>
    %123 = vector.shape_cast %122 : vector<4x8xf32> to vector<4x8x1xf32>
    %124 = tpu.reciprocal %123 {approx = true} : vector<4x8x1xf32> -> vector<4x8x1xf32>
    %125 = vector.broadcast %124 : vector<4x8x1xf32> to vector<4x8x16xf32>
    %126 = arith.mulf %121, %125 : vector<4x8x16xf32>
    %127 = arith.truncf %126 : vector<4x8x16xf32> to vector<4x8x16xbf16>
    "tpu.trace_start"() <{level = 10 : i32, message = "hqk,khd->qhd"}> : () -> ()
    %cst_71 = arith.constant dense<0.000000e+00> : vector<4x32x8xf32>
    %128 = tpu.matmul %110, %127, %cst_71 {dimension_numbers = #tpu.dot_dimension_numbers<[0], [2], [2], [1], [0, 1, 0, 2, 1, 1], [1], [0]>} : vector<16x4x32xbf16>, vector<4x8x16xbf16>, vector<4x32x8xf32> -> vector<4x32x8xf32>
    %129 = tpu.transpose %128, [2, 0, 1] : vector<4x32x8xf32> -> vector<8x4x32xf32>
    "tpu.trace_stop"() : () -> ()
    %130 = vector.shape_cast %129 : vector<8x4x32xf32> to vector<8x128xf32>
    %131 = arith.truncf %130 : vector<8x128xf32> to vector<8x128xbf16>
    %cst_72 = arith.constant dense<0.000000e+00> : vector<8x128xf32>
    %132 = tpu.matmul %131, %94, %cst_72 {dimension_numbers = #tpu.dot_dimension_numbers<[1], [0], [0], [1], [0, 0, 1, 1], [], []>} : vector<8x128xbf16>, vector<128x128xbf16>, vector<8x128xf32> -> vector<8x128xf32>
    %133 = arith.addf %132, %86 : vector<8x128xf32>
    %cst_73 = arith.constant dense<0.000000e+00> : vector<8xf32>
    %134 = vector.multi_reduction <add>, %133, %cst_73 [1] : vector<8x128xf32> to vector<8xf32>
    %135 = vector.shape_cast %134 : vector<8xf32> to vector<8x1xf32>
    %cst_74 = arith.constant 1.280000e+02 : f32
    %136 = vector.broadcast %cst_74 : f32 to vector<8x1xf32>
    %137 = arith.divf %135, %136 : vector<8x1xf32>
    %138 = vector.broadcast %137 : vector<8x1xf32> to vector<8x128xf32>
    %139 = arith.subf %133, %138 : vector<8x128xf32>
    %140 = arith.mulf %139, %139 : vector<8x128xf32>
    %cst_75 = arith.constant dense<0.000000e+00> : vector<8xf32>
    %141 = vector.multi_reduction <add>, %140, %cst_75 [1] : vector<8x128xf32> to vector<8xf32>
    %142 = vector.shape_cast %141 : vector<8xf32> to vector<8x1xf32>
    %cst_76 = arith.constant 1.280000e+02 : f32
    %143 = vector.broadcast %cst_76 : f32 to vector<8x1xf32>
    %144 = arith.divf %142, %143 : vector<8x1xf32>
    %145 = vector.broadcast %137 : vector<8x1xf32> to vector<8x128xf32>
    %146 = arith.subf %133, %145 : vector<8x128xf32>
    %cst_77 = arith.constant 9.99999997E-7 : f32
    %147 = vector.broadcast %cst_77 : f32 to vector<8x1xf32>
    %148 = arith.addf %144, %147 : vector<8x1xf32>
    %149 = math.rsqrt %148 : vector<8x1xf32>
    %150 = vector.broadcast %149 : vector<8x1xf32> to vector<8x128xf32>
    %151 = arith.mulf %146, %150 : vector<8x128xf32>
    %152 = vector.broadcast %96 : vector<1x128xf32> to vector<8x128xf32>
    %153 = arith.mulf %151, %152 : vector<8x128xf32>
    %154 = vector.broadcast %98 : vector<1x128xf32> to vector<8x128xf32>
    %155 = arith.addf %153, %154 : vector<8x128xf32>
    %c0_78 = arith.constant 0 : index
    %c0_79 = arith.constant 0 : index
    %c0_80 = arith.constant 0 : index
    %156 = vector.load %arg19[%c0_78, %c0_79, %c0_80] : memref<1x128x256xbf16, #tpu.memory_space<vmem>>, vector<1x128x256xbf16>
    %157 = vector.shape_cast %156 : vector<1x128x256xbf16> to vector<128x256xbf16>
    %158 = arith.truncf %155 : vector<8x128xf32> to vector<8x128xbf16>
    %cst_81 = arith.constant dense<0.000000e+00> : vector<8x256xf32>
    %159 = tpu.matmul %158, %157, %cst_81 {dimension_numbers = #tpu.dot_dimension_numbers<[1], [0], [0], [1], [0, 0, 1, 1], [], []>} : vector<8x128xbf16>, vector<128x256xbf16>, vector<8x256xf32> -> vector<8x256xf32>
    %c0_82 = arith.constant 0 : index
    %c0_83 = arith.constant 0 : index
    %c0_84 = arith.constant 0 : index
    %160 = vector.load %arg20[%c0_82, %c0_83, %c0_84] : memref<1x1x256xf32, #tpu.memory_space<vmem>>, vector<1x1x256xf32>
    %161 = vector.shape_cast %160 : vector<1x1x256xf32> to vector<1x256xf32>
    %162 = vector.broadcast %161 : vector<1x256xf32> to vector<8x256xf32>
    %163 = arith.addf %159, %162 : vector<8x256xf32>
    %cst_85 = arith.constant 0.000000e+00 : f32
    %164 = vector.broadcast %cst_85 : f32 to vector<8x256xf32>
    %165 = arith.maximumf %163, %164 : vector<8x256xf32>
    %c0_86 = arith.constant 0 : index
    %c0_87 = arith.constant 0 : index
    %c0_88 = arith.constant 0 : index
    %166 = vector.load %arg21[%c0_86, %c0_87, %c0_88] : memref<1x256x128xbf16, #tpu.memory_space<vmem>>, vector<1x256x128xbf16>
    %167 = vector.shape_cast %166 : vector<1x256x128xbf16> to vector<256x128xbf16>
    %168 = arith.truncf %165 : vector<8x256xf32> to vector<8x256xbf16>
    %cst_89 = arith.constant dense<0.000000e+00> : vector<8x128xf32>
    %169 = tpu.matmul %168, %167, %cst_89 {dimension_numbers = #tpu.dot_dimension_numbers<[1], [0], [0], [1], [0, 0, 1, 1], [], []>} : vector<8x256xbf16>, vector<256x128xbf16>, vector<8x128xf32> -> vector<8x128xf32>
    %c0_90 = arith.constant 0 : index
    %c0_91 = arith.constant 0 : index
    %c0_92 = arith.constant 0 : index
    %170 = vector.load %arg22[%c0_90, %c0_91, %c0_92] : memref<1x1x128xf32, #tpu.memory_space<vmem>>, vector<1x1x128xf32>
    %171 = vector.shape_cast %170 : vector<1x1x128xf32> to vector<1x128xf32>
    %172 = vector.broadcast %171 : vector<1x128xf32> to vector<8x128xf32>
    %173 = arith.addf %169, %172 : vector<8x128xf32>
    %174 = arith.addf %173, %155 : vector<8x128xf32>
    %c0_93 = arith.constant 0 : index
    %c0_94 = arith.constant 0 : index
    %c0_95 = arith.constant 0 : index
    %175 = vector.load %arg23[%c0_93, %c0_94, %c0_95] : memref<1x1x128xf32, #tpu.memory_space<vmem>>, vector<1x1x128xf32>
    %176 = vector.shape_cast %175 : vector<1x1x128xf32> to vector<1x128xf32>
    %c0_96 = arith.constant 0 : index
    %c0_97 = arith.constant 0 : index
    %c0_98 = arith.constant 0 : index
    %177 = vector.load %arg24[%c0_96, %c0_97, %c0_98] : memref<1x1x128xf32, #tpu.memory_space<vmem>>, vector<1x1x128xf32>
    %178 = vector.shape_cast %177 : vector<1x1x128xf32> to vector<1x128xf32>
    %cst_99 = arith.constant dense<0.000000e+00> : vector<8xf32>
    %179 = vector.multi_reduction <add>, %174, %cst_99 [1] : vector<8x128xf32> to vector<8xf32>
    %180 = vector.shape_cast %179 : vector<8xf32> to vector<8x1xf32>
    %cst_100 = arith.constant 1.280000e+02 : f32
    %181 = vector.broadcast %cst_100 : f32 to vector<8x1xf32>
    %182 = arith.divf %180, %181 : vector<8x1xf32>
    %183 = vector.broadcast %182 : vector<8x1xf32> to vector<8x128xf32>
    %184 = arith.subf %174, %183 : vector<8x128xf32>
    %185 = arith.mulf %184, %184 : vector<8x128xf32>
    %cst_101 = arith.constant dense<0.000000e+00> : vector<8xf32>
    %186 = vector.multi_reduction <add>, %185, %cst_101 [1] : vector<8x128xf32> to vector<8xf32>
    %187 = vector.shape_cast %186 : vector<8xf32> to vector<8x1xf32>
    %cst_102 = arith.constant 1.280000e+02 : f32
    %188 = vector.broadcast %cst_102 : f32 to vector<8x1xf32>
    %189 = arith.divf %187, %188 : vector<8x1xf32>
    %190 = vector.broadcast %182 : vector<8x1xf32> to vector<8x128xf32>
    %191 = arith.subf %174, %190 : vector<8x128xf32>
    %cst_103 = arith.constant 9.99999997E-7 : f32
    %192 = vector.broadcast %cst_103 : f32 to vector<8x1xf32>
    %193 = arith.addf %189, %192 : vector<8x1xf32>
    %194 = math.rsqrt %193 : vector<8x1xf32>
    %195 = vector.broadcast %194 : vector<8x1xf32> to vector<8x128xf32>
    %196 = arith.mulf %191, %195 : vector<8x128xf32>
    %197 = vector.broadcast %176 : vector<1x128xf32> to vector<8x128xf32>
    %198 = arith.mulf %196, %197 : vector<8x128xf32>
    %199 = vector.broadcast %178 : vector<1x128xf32> to vector<8x128xf32>
    %200 = arith.addf %198, %199 : vector<8x128xf32>
    %c0_104 = arith.constant 0 : index
    %c0_105 = arith.constant 0 : index
    %201 = vector.load %arg28[%c0_104, %c0_105] : memref<8x128xf32, #tpu.memory_space<vmem>>, vector<8x128xf32>
    tpu.vector_store %arg28[%c0_104, %c0_105], %200 {strides = array<i32>} : memref<8x128xf32, #tpu.memory_space<vmem>>, vector<8x128xf32>,
    %c1_i32 = arith.constant 1 : i32
    %202 = arith.cmpi eq, %arg1, %c1_i32 : i32
    %203 = arith.extui %202 : i1 to i32
    %c0_i32_106 = arith.constant 0 : i32
    %204 = arith.cmpi ne, %203, %c0_i32_106 : i32
    scf.if %204 {
      %c0_107 = arith.constant 0 : index
      %c0_108 = arith.constant 0 : index
      %205 = vector.load %arg25[%c0_107, %c0_108] : memref<1x128xf32, #tpu.memory_space<vmem>>, vector<1x128xf32>
      %c0_109 = arith.constant 0 : index
      %c0_110 = arith.constant 0 : index
      %206 = vector.load %arg26[%c0_109, %c0_110] : memref<1x128xf32, #tpu.memory_space<vmem>>, vector<1x128xf32>
      %cst_111 = arith.constant dense<0.000000e+00> : vector<8xf32>
      %207 = vector.multi_reduction <add>, %200, %cst_111 [1] : vector<8x128xf32> to vector<8xf32>
      %208 = vector.shape_cast %207 : vector<8xf32> to vector<8x1xf32>
      %cst_112 = arith.constant 1.280000e+02 : f32
      %209 = vector.broadcast %cst_112 : f32 to vector<8x1xf32>
      %210 = arith.divf %208, %209 : vector<8x1xf32>
      %211 = vector.broadcast %210 : vector<8x1xf32> to vector<8x128xf32>
      %212 = arith.subf %200, %211 : vector<8x128xf32>
      %213 = arith.mulf %212, %212 : vector<8x128xf32>
      %cst_113 = arith.constant dense<0.000000e+00> : vector<8xf32>
      %214 = vector.multi_reduction <add>, %213, %cst_113 [1] : vector<8x128xf32> to vector<8xf32>
      %215 = vector.shape_cast %214 : vector<8xf32> to vector<8x1xf32>
      %cst_114 = arith.constant 1.280000e+02 : f32
      %216 = vector.broadcast %cst_114 : f32 to vector<8x1xf32>
      %217 = arith.divf %215, %216 : vector<8x1xf32>
      %218 = vector.broadcast %210 : vector<8x1xf32> to vector<8x128xf32>
      %219 = arith.subf %200, %218 : vector<8x128xf32>
      %cst_115 = arith.constant 9.99999997E-7 : f32
      %220 = vector.broadcast %cst_115 : f32 to vector<8x1xf32>
      %221 = arith.addf %217, %220 : vector<8x1xf32>
      %222 = math.rsqrt %221 : vector<8x1xf32>
      %223 = vector.broadcast %222 : vector<8x1xf32> to vector<8x128xf32>
      %224 = arith.mulf %219, %223 : vector<8x128xf32>
      %225 = vector.broadcast %205 : vector<1x128xf32> to vector<8x128xf32>
      %226 = arith.mulf %224, %225 : vector<8x128xf32>
      %227 = vector.broadcast %206 : vector<1x128xf32> to vector<8x128xf32>
      %228 = arith.addf %226, %227 : vector<8x128xf32>
      %c0_116 = arith.constant 0 : index
      %c0_117 = arith.constant 0 : index
      %c0_118 = arith.constant 0 : index
      %229 = vector.load %arg27[%c0_116, %c0_117, %c0_118] : memref<1x8x128xf32, #tpu.memory_space<vmem>>, vector<1x8x128xf32>
      %230 = vector.shape_cast %229 : vector<1x8x128xf32> to vector<8x128xf32>
      %231 = vector.shape_cast %228 : vector<8x128xf32> to vector<1x8x128xf32>
      tpu.vector_store %arg27[%c0_116, %c0_117, %c0_118], %231 {strides = array<i32>} : memref<1x8x128xf32, #tpu.memory_space<vmem>>, vector<1x8x128xf32>,
    } else {
    }
    return
  }
  func.func @transform_0(%arg0: i32, %arg1: i32) -> (i32, i32, i32) {
    %c0_i32 = arith.constant 0 : i32
    %c0_i32_0 = arith.constant 0 : i32
    %c0_i32_1 = arith.constant 0 : i32
    return %arg0, %c0_i32, %c0_i32_0 : i32, i32, i32
  }
  func.func @transform_1(%arg0: i32, %arg1: i32) -> (i32, i32, i32) {
    %c0_i32 = arith.constant 0 : i32
    %c0_i32_0 = arith.constant 0 : i32
    %c0_i32_1 = arith.constant 0 : i32
    return %arg0, %c0_i32, %c0_i32_0 : i32, i32, i32
  }
  func.func @transform_2(%arg0: i32, %arg1: i32) -> (i32, i32, i32) {
    %c0_i32 = arith.constant 0 : i32
    %c0_i32_0 = arith.constant 0 : i32
    %c0_i32_1 = arith.constant 0 : i32
    return %arg0, %c0_i32, %c0_i32_0 : i32, i32, i32
  }
  func.func @transform_3(%arg0: i32, %arg1: i32) -> (i32, i32, i32) {
    %c0_i32 = arith.constant 0 : i32
    %c0_i32_0 = arith.constant 0 : i32
    %c0_i32_1 = arith.constant 0 : i32
    return %arg0, %c0_i32, %c0_i32_0 : i32, i32, i32
  }
  func.func @transform_4(%arg0: i32, %arg1: i32) -> (i32, i32) {
    %c0_i32 = arith.constant 0 : i32
    %c0_i32_0 = arith.constant 0 : i32
    %c0_i32_1 = arith.constant 0 : i32
    return %c0_i32, %c0_i32_0 : i32, i32
  }
  func.func @transform_5(%arg0: i32, %arg1: i32) -> (i32, i32, i32) {
    %c0_i32 = arith.constant 0 : i32
    %c0_i32_0 = arith.constant 0 : i32
    %c0_i32_1 = arith.constant 0 : i32
    return %arg1, %c0_i32, %c0_i32_0 : i32, i32, i32
  }
  func.func @transform_6(%arg0: i32, %arg1: i32) -> (i32, i32, i32) {
    %c0_i32 = arith.constant 0 : i32
    %c0_i32_0 = arith.constant 0 : i32
    %c0_i32_1 = arith.constant 0 : i32
    return %arg1, %c0_i32, %c0_i32_0 : i32, i32, i32
  }
  func.func @transform_7(%arg0: i32, %arg1: i32) -> (i32, i32, i32) {
    %c0_i32 = arith.constant 0 : i32
    %c0_i32_0 = arith.constant 0 : i32
    %c0_i32_1 = arith.constant 0 : i32
    return %arg1, %c0_i32, %c0_i32_0 : i32, i32, i32
  }
  func.func @transform_8(%arg0: i32, %arg1: i32) -> (i32, i32, i32) {
    %c0_i32 = arith.constant 0 : i32
    %c0_i32_0 = arith.constant 0 : i32
    %c0_i32_1 = arith.constant 0 : i32
    return %arg1, %c0_i32, %c0_i32_0 : i32, i32, i32
  }
  func.func @transform_9(%arg0: i32, %arg1: i32) -> (i32, i32, i32) {
    %c0_i32 = arith.constant 0 : i32
    %c0_i32_0 = arith.constant 0 : i32
    %c0_i32_1 = arith.constant 0 : i32
    return %arg1, %c0_i32, %c0_i32_0 : i32, i32, i32
  }
  func.func @transform_10(%arg0: i32, %arg1: i32) -> (i32, i32, i32) {
    %c0_i32 = arith.constant 0 : i32
    %c0_i32_0 = arith.constant 0 : i32
    %c0_i32_1 = arith.constant 0 : i32
    return %arg1, %c0_i32, %c0_i32_0 : i32, i32, i32
  }
  func.func @transform_11(%arg0: i32, %arg1: i32) -> (i32, i32, i32) {
    %c0_i32 = arith.constant 0 : i32
    %c0_i32_0 = arith.constant 0 : i32
    %c0_i32_1 = arith.constant 0 : i32
    return %arg1, %c0_i32, %c0_i32_0 : i32, i32, i32
  }
  func.func @transform_12(%arg0: i32, %arg1: i32) -> (i32, i32, i32) {
    %c0_i32 = arith.constant 0 : i32
    %c0_i32_0 = arith.constant 0 : i32
    %c0_i32_1 = arith.constant 0 : i32
    return %arg1, %c0_i32, %c0_i32_0 : i32, i32, i32
  }
  func.func @transform_13(%arg0: i32, %arg1: i32) -> (i32, i32, i32) {
    %c0_i32 = arith.constant 0 : i32
    %c0_i32_0 = arith.constant 0 : i32
    %c0_i32_1 = arith.constant 0 : i32
    return %arg1, %c0_i32, %c0_i32_0 : i32, i32, i32
  }
  func.func @transform_14(%arg0: i32, %arg1: i32) -> (i32, i32, i32) {
    %c0_i32 = arith.constant 0 : i32
    %c0_i32_0 = arith.constant 0 : i32
    %c0_i32_1 = arith.constant 0 : i32
    return %arg1, %c0_i32, %c0_i32_0 : i32, i32, i32
  }
  func.func @transform_15(%arg0: i32, %arg1: i32) -> (i32, i32, i32) {
    %c0_i32 = arith.constant 0 : i32
    %c0_i32_0 = arith.constant 0 : i32
    %c0_i32_1 = arith.constant 0 : i32
    return %arg1, %c0_i32, %c0_i32_0 : i32, i32, i32
  }
  func.func @transform_16(%arg0: i32, %arg1: i32) -> (i32, i32, i32) {
    %c0_i32 = arith.constant 0 : i32
    %c0_i32_0 = arith.constant 0 : i32
    %c0_i32_1 = arith.constant 0 : i32
    return %arg1, %c0_i32, %c0_i32_0 : i32, i32, i32
  }
  func.func @transform_17(%arg0: i32, %arg1: i32) -> (i32, i32, i32) {
    %c0_i32 = arith.constant 0 : i32
    %c0_i32_0 = arith.constant 0 : i32
    %c0_i32_1 = arith.constant 0 : i32
    return %arg1, %c0_i32, %c0_i32_0 : i32, i32, i32
  }
  func.func @transform_18(%arg0: i32, %arg1: i32) -> (i32, i32, i32) {
    %c0_i32 = arith.constant 0 : i32
    %c0_i32_0 = arith.constant 0 : i32
    %c0_i32_1 = arith.constant 0 : i32
    return %arg1, %c0_i32, %c0_i32_0 : i32, i32, i32
  }
  func.func @transform_19(%arg0: i32, %arg1: i32) -> (i32, i32, i32) {
    %c0_i32 = arith.constant 0 : i32
    %c0_i32_0 = arith.constant 0 : i32
    %c0_i32_1 = arith.constant 0 : i32
    return %arg1, %c0_i32, %c0_i32_0 : i32, i32, i32
  }
  func.func @transform_20(%arg0: i32, %arg1: i32) -> (i32, i32, i32) {
    %c0_i32 = arith.constant 0 : i32
    %c0_i32_0 = arith.constant 0 : i32
    %c0_i32_1 = arith.constant 0 : i32
    return %arg1, %c0_i32, %c0_i32_0 : i32, i32, i32
  }
  func.func @transform_21(%arg0: i32, %arg1: i32) -> (i32, i32, i32) {
    %c0_i32 = arith.constant 0 : i32
    %c0_i32_0 = arith.constant 0 : i32
    %c0_i32_1 = arith.constant 0 : i32
    return %arg1, %c0_i32, %c0_i32_0 : i32, i32, i32
  }
  func.func @transform_22(%arg0: i32, %arg1: i32) -> (i32, i32, i32) {
    %c0_i32 = arith.constant 0 : i32
    %c0_i32_0 = arith.constant 0 : i32
    %c0_i32_1 = arith.constant 0 : i32
    return %arg1, %c0_i32, %c0_i32_0 : i32, i32, i32
  }
  func.func @transform_23(%arg0: i32, %arg1: i32) -> (i32, i32) {
    %c0_i32 = arith.constant 0 : i32
    %c0_i32_0 = arith.constant 0 : i32
    %c0_i32_1 = arith.constant 0 : i32
    return %c0_i32, %c0_i32_0 : i32, i32
  }
  func.func @transform_24(%arg0: i32, %arg1: i32) -> (i32, i32) {
    %c0_i32 = arith.constant 0 : i32
    %c0_i32_0 = arith.constant 0 : i32
    %c0_i32_1 = arith.constant 0 : i32
    return %c0_i32, %c0_i32_0 : i32, i32
  }
  func.func @transform_25(%arg0: i32, %arg1: i32) -> (i32, i32, i32) {
    %c0_i32 = arith.constant 0 : i32
    %c0_i32_0 = arith.constant 0 : i32
    %c0_i32_1 = arith.constant 0 : i32
    return %arg0, %c0_i32, %c0_i32_0 : i32, i32, i32
  }
}

</mosaic_0001>

<llo_original>
// kernel: tpu_custom_call.1
$region0: #{tpu_custom_call.1}
  #allocation0 [shape = 'u32[]', space=smem, size = 0x4, offset = 0x4, fixed_abs, tag = 'smem constant byte address 0x4 - core index']
  #allocation1 [shape = 'u32[144,128]{1,0:T(1,128)}', space=vmem, size = 0x12000, scoped, tag = 'internal scratch']
  #allocation2 [shape = 'f32[8,128]{1,0:T(8,128)}', space=vmem, size = 0x1000, scoped, tag = 'scratch operand']
  %s0 = inlined_call_operand.hbm [shape: f32[2,8,128], index: 0, kind: input, shape index: {}]
  %s1 = inlined_call_operand.hbm [shape: f32[2,16,128], index: 1, kind: input, shape index: {}]
  %s2 = inlined_call_operand.hbm [shape: f32[2,8,8], index: 2, kind: input, shape index: {}]
  %s3 = inlined_call_operand.vmem [shape: f32[2,1,16], index: 3, kind: input, shape index: {}]
  %s4 = inlined_call_operand.vmem [shape: f32[8,128], index: 4, kind: input, shape index: {}]
  %s5 = inlined_call_operand.hbm [shape: bf16[2,128,128], index: 5, kind: input, shape index: {}]
  %s6 = inlined_call_operand.hbm [shape: bf16[2,128,128], index: 6, kind: input, shape index: {}]
  %s7 = inlined_call_operand.hbm [shape: bf16[2,128,128], index: 7, kind: input, shape index: {}]
  %s8 = inlined_call_operand.hbm [shape: bf16[2,128,128], index: 8, kind: input, shape index: {}]
  %s9 = inlined_call_operand.vmem [shape: f32[2,1,128], index: 9, kind: input, shape index: {}]
  %s10 = inlined_call_operand.vmem [shape: f32[2,1,128], index: 10, kind: input, shape index: {}]
  %s11 = inlined_call_operand.hbm [shape: bf16[2,128,128], index: 11, kind: input, shape index: {}]
  %s12 = inlined_call_operand.hbm [shape: bf16[2,128,128], index: 12, kind: input, shape index: {}]
  %s13 = inlined_call_operand.hbm [shape: bf16[2,128,128], index: 13, kind: input, shape index: {}]
  %s14 = inlined_call_operand.hbm [shape: bf16[2,128,128], index: 14, kind: input, shape index: {}]
  %s15 = inlined_call_operand.vmem [shape: f32[2,1,128], index: 15, kind: input, shape index: {}]
  %s16 = inlined_call_operand.vmem [shape: f32[2,1,128], index: 16, kind: input, shape index: {}]
  %s17 = inlined_call_operand.hbm [shape: bf16[2,128,256], index: 17, kind: input, shape index: {}]
  %s18 = inlined_call_operand.vmem [shape: f32[2,1,256], index: 18, kind: input, shape index: {}]
  %s19 = inlined_call_operand.hbm [shape: bf16[2,256,128], index: 19, kind: input, shape index: {}]
  %s20 = inlined_call_operand.vmem [shape: f32[2,1,128], index: 20, kind: input, shape index: {}]
  %s21 = inlined_call_operand.vmem [shape: f32[2,1,128], index: 21, kind: input, shape index: {}]
  %s22 = inlined_call_operand.vmem [shape: f32[2,1,128], index: 22, kind: input, shape index: {}]
  %s23 = inlined_call_operand.vmem [shape: f32[1,128], index: 23, kind: input, shape index: {}]
  %s24 = inlined_call_operand.vmem [shape: f32[1,128], index: 24, kind: input, shape index: {}]
  %s25 = inlined_call_operand.hbm [shape: f32[2,8,128], index: 25, kind: output, shape index: {}]
  %s26 = sld [smem:[#allocation0]]
  $region193: #{tpu_custom_call.1} parent=0
    _
  %s28 = ssub.s32 1, %s26
  %s29 = scalar_select 0, %s28, %s26
  $region1: #{tpu_custom_call.1} parent=0
    #allocation3 [shape = 'u8[8192]{0}', space=vmem, size = 0x2000, scoped, tag = 'input window, operand 0']
    #allocation4 [shape = 's32[2]{0}', space=sflag, size = 0x8, scoped, tag = 'scoped memory for tpu_custom_call.1']
    #allocation5 [shape = 's32[2]{0}', space=sflag, size = 0x8, scoped, tag = 'scoped memory for tpu_custom_call.1']
    #allocation6 [shape = 'u8[16384]{0}', space=vmem, size = 0x4000, scoped, tag = 'input window, operand 1']
    #allocation7 [shape = 's32[2]{0}', space=sflag, size = 0x8, scoped, tag = 'scoped memory for tpu_custom_call.1']
    #allocation8 [shape = 'u8[8192]{0}', space=vmem, size = 0x2000, scoped, tag = 'input window, operand 2']
    #allocation9 [shape = 'u8[65536]{0}', space=vmem, size = 0x10000, scoped, tag = 'input window, operand 5']
    #allocation10 [shape = 's32[2]{0}', space=sflag, size = 0x8, scoped, tag = 'scoped memory for tpu_custom_call.1']
    #allocation11 [shape = 'u8[65536]{0}', space=vmem, size = 0x10000, scoped, tag = 'input window, operand 6']
    #allocation12 [shape = 'u8[65536]{0}', space=vmem, size = 0x10000, scoped, tag = 'input window, operand 7']
    #allocation13 [shape = 's32[2]{0}', space=sflag, size = 0x8, scoped, tag = 'scoped memory for tpu_custom_call.1']
    #allocation14 [shape = 'u8[65536]{0}', space=vmem, size = 0x10000, scoped, tag = 'input window, operand 8']
    #allocation15 [shape = 'u8[65536]{0}', space=vmem, size = 0x10000, scoped, tag = 'input window, operand 11']
    #allocation16 [shape = 's32[2]{0}', space=sflag, size = 0x8, scoped, tag = 'scoped memory for tpu_custom_call.1']
    #allocation17 [shape = 'u8[65536]{0}', space=vmem, size = 0x10000, scoped, tag = 'input window, operand 12']
    #allocation18 [shape = 'u8[65536]{0}', space=vmem, size = 0x10000, scoped, tag = 'input window, operand 13']
    #allocation19 [shape = 's32[2]{0}', space=sflag, size = 0x8, scoped, tag = 'scoped memory for tpu_custom_call.1']
    #allocation20 [shape = 'u8[65536]{0}', space=vmem, size = 0x10000, scoped, tag = 'input window, operand 14']
    #allocation21 [shape = 'u8[131072]{0}', space=vmem, size = 0x20000, scoped, tag = 'input window, operand 17']
    #allocation22 [shape = 's32[2]{0}', space=sflag, size = 0x8, scoped, tag = 'scoped memory for tpu_custom_call.1']
    #allocation23 [shape = 'u8[131072]{0}', space=vmem, size = 0x20000, scoped, tag = 'input window, operand 19']
    #allocation24 [shape = 'u8[8192]{0}', space=vmem, size = 0x2000, scoped, tag = 'output window, operand 0']
    %30 = vsyncpa [#allocation4], 0
    %s31 = scalar_lea.sflag [#allocation4], 1
    %32 = vsyncpa %s31, 0
    %33 = vsyncpa [#allocation7], 0
    %s34 = scalar_lea.sflag [#allocation7], 1
    %35 = vsyncpa %s34, 0
    %36 = vsyncpa [#allocation10], 0
    %s37 = scalar_lea.sflag [#allocation10], 1
    %38 = vsyncpa %s37, 0
    %39 = vsyncpa [#allocation13], 0
    %s40 = scalar_lea.sflag [#allocation13], 1
    %41 = vsyncpa %s40, 0
    %42 = vsyncpa [#allocation16], 0
    %s43 = scalar_lea.sflag [#allocation16], 1
    %44 = vsyncpa %s43, 0
    %45 = vsyncpa [#allocation19], 0
    %s46 = scalar_lea.sflag [#allocation19], 1
    %47 = vsyncpa %s46, 0
    %48 = vsyncpa [#allocation22], 0
    %s49 = scalar_lea.sflag [#allocation22], 1
    %50 = vsyncpa %s49, 0
    %51 = vsyncpa [#allocation5], 0
    %s52 = scalar_lea.sflag [#allocation5], 1
    %53 = vsyncpa %s52, 0
    loop: start=0, step=1, limit=6
    $region2: #{tpu_custom_call.1} parent=1 // loop_pre_header
      _
    $region3: #{tpu_custom_call.1} parent=1 // loop_header
      %s55 = sphi 0, %s59
      %p56 = scmp.ge.s32.totalorder %s55, 6
      %s62 = sphi 0, %s74
      %s63 = sphi 0, %s70
      %s64 = sphi 0, %s62
      %s65 = sphi 0, %s63
      %s66 = sphi 0, %s64
      %s67 = sphi 0, %s65
      %s77 = sphi 0, %s79
      %s80 = sphi 0, %s77
      %s81 = sphi 0, %s80
      %s97 = sphi 0, %s81
      %s103 = sphi 0, %s105
      %s106 = sphi 0, %s103
      %s107 = sphi 0, %s106
      %s123 = sphi 0, %s107
      %s129 = sphi 0, %s131
      %s132 = sphi 0, %s129
      %s133 = sphi 0, %s132
      %s149 = sphi 0, %s133
      %s155 = sphi 0, %s157
      %s158 = sphi 0, %s155
      %s159 = sphi 0, %s158
      %s175 = sphi 0, %s159
      %s179 = sphi 0, %s179
      %s181 = sphi 0, %s179
      %s182 = sphi 0, %s181
      %s196 = sphi 0, %s182
      %s202 = sphi 0, %s204
      %s205 = sphi 0, %s202
      %s206 = sphi 0, %s205
      %s222 = sphi 0, %s206
      %s228 = sphi 0, %s230
      %s231 = sphi 0, %s228
      %s232 = sphi 0, %s231
      %s248 = sphi 0, %s232
      %s254 = sphi 0, %s256
      %s257 = sphi 0, %s254
      %s258 = sphi 0, %s257
      %s274 = sphi 0, %s258
      %s280 = sphi 0, %s282
      %s283 = sphi 0, %s280
      %s284 = sphi 0, %s283
      %s300 = sphi 0, %s284
      %s306 = sphi 0, %s308
      %s309 = sphi 0, %s306
      %s310 = sphi 0, %s309
      %s326 = sphi 0, %s310
      %s332 = sphi 0, %s334
      %s335 = sphi 0, %s332
      %s336 = sphi 0, %s335
      %s352 = sphi 0, %s336
      %s358 = sphi 0, %s360
      %s361 = sphi 0, %s358
      %s362 = sphi 0, %s361
      %s378 = sphi 0, %s362
      %s384 = sphi 0, %s386
      %s387 = sphi 0, %s384
      %s388 = sphi 0, %s387
      %s404 = sphi 0, %s388
      %s410 = sphi 0, %s412
      %s413 = sphi 0, %s410
      %s414 = sphi 0, %s413
      %s430 = sphi 0, %s414
      %s436 = sphi 0, %s438
      %s439 = sphi 0, %s436
      %s440 = sphi 0, %s439
      %s456 = sphi 0, %s440
      %s462 = sphi 0, %s464
      %s465 = sphi 0, %s462
      %s466 = sphi 0, %s465
      %s482 = sphi 0, %s466
      %s488 = sphi 0, %s490
      %s491 = sphi 0, %s488
      %s492 = sphi 0, %s491
      %s508 = sphi 0, %s492
      %s514 = sphi 0, %s516
      %s517 = sphi 0, %s514
      %s518 = sphi 0, %s517
      %s534 = sphi 0, %s518
      %s540 = sphi 0, %s542
      %s543 = sphi 0, %s540
      %s544 = sphi 0, %s543
      %s560 = sphi 0, %s544
      %s566 = sphi 0, %s568
      %s569 = sphi 0, %s566
      %s570 = sphi 0, %s569
      %s586 = sphi 0, %s570
      %s592 = sphi 0, %s594
      %s595 = sphi 0, %s592
      %s596 = sphi 0, %s595
      %s612 = sphi 0, %s596
      %s618 = sphi 0, %s620
      %s621 = sphi 0, %s618
      %s622 = sphi 0, %s621
      %s638 = sphi 0, %s622
      %s644 = sphi 0, %s646
      %s647 = sphi 0, %s644
      %s648 = sphi 0, %s647
      %s664 = sphi 0, %s648
      %s668 = sphi 0, %s668
      %s670 = sphi 0, %s668
      %s671 = sphi 0, %s670
      %s685 = sphi 0, %s671
      %s689 = sphi 0, %s689
      %s691 = sphi 0, %s689
      %s692 = sphi 0, %s691
      %s706 = sphi 0, %s692
      %s712 = sphi 0, %s714
      %s715 = sphi 0, %s712
      %s716 = sphi 0, %s715
      %s732 = sphi 0, %s716
    $region4: #{tpu_custom_call.1} parent=1 // loop_header_branch
      %58 = sbr.rel (%p56) target = $region8
    $region5: #{tpu_custom_call.1} parent=1 // loop_body
      %s60 = ssub.s32 %s55, 1
      %s61 = ssub.s32 %s55, 2
      %s68 = sadd.s32 1, %s63
      %p69 = scmp.ge.s32.totalorder %s68, 2
      %s70 = scalar_select %p69, 0, %s68
      %s71 = sadd.s32 1, %s62
      %s72 = scalar_select %p69, %s71, %s62
      %p73 = scmp.ge.s32.totalorder %s72, 2
      %s74 = scalar_select %p73, 0, %s72
      %s75 = ssub.s32 %s62, %s74
      %p76 = scmp.eq.s32.totalorder %s75, 0
      %s78 = sadd.s32 %s77, 1
      %s79 = scalar_select %p76, %s77, %s78
      %p82 = pneg %p76
      %p83 = scmp.eq.s32.totalorder %s55, 3
      %p84 = por %p82, %p83
      %p85 = scmp.ne.s32.totalorder %s77, %s80
      %p86 = scmp.eq.s32.totalorder %s55, 0
      %p87 = por %p85, %p86
      %p88 = scmp.ne.s32.totalorder %s77, %s80
      %p89 = scmp.eq.s32.totalorder %s60, 3
      %p90 = por %p88, %p89
      %p91 = scmp.ne.s32.totalorder %s80, %s81
      %p92 = scmp.eq.s32.totalorder %s60, 0
      %p93 = por %p91, %p92
      %p94 = scmp.ne.s32.totalorder %s80, %s81
      %p95 = scmp.eq.s32.totalorder %s61, 3
      %p96 = por %p94, %p95
      %p98 = scmp.ne.s32.totalorder %s81, %s97
      %p99 = scmp.eq.s32.totalorder %s61, 0
      %p100 = por %p98, %p99
      %s101 = ssub.s32 %s62, %s74
      %p102 = scmp.eq.s32.totalorder %s101, 0
      %s104 = sadd.s32 %s103, 1
      %s105 = scalar_select %p102, %s103, %s104
      %p108 = pneg %p102
      %p109 = scmp.eq.s32.totalorder %s55, 3
      %p110 = por %p108, %p109
      %p111 = scmp.ne.s32.totalorder %s103, %s106
      %p112 = scmp.eq.s32.totalorder %s55, 0
      %p113 = por %p111, %p112
      %p114 = scmp.ne.s32.totalorder %s103, %s106
      %p115 = scmp.eq.s32.totalorder %s60, 3
      %p116 = por %p114, %p115
      %p117 = scmp.ne.s32.totalorder %s106, %s107
      %p118 = scmp.eq.s32.totalorder %s60, 0
      %p119 = por %p117, %p118
      %p120 = scmp.ne.s32.totalorder %s106, %s107
      %p121 = scmp.eq.s32.totalorder %s61, 3
      %p122 = por %p120, %p121
      %p124 = scmp.ne.s32.totalorder %s107, %s123
      %p125 = scmp.eq.s32.totalorder %s61, 0
      %p126 = por %p124, %p125
      %s127 = ssub.s32 %s62, %s74
      %p128 = scmp.eq.s32.totalorder %s127, 0
      %s130 = sadd.s32 %s129, 1
      %s131 = scalar_select %p128, %s129, %s130
      %p134 = pneg %p128
      %p135 = scmp.eq.s32.totalorder %s55, 3
      %p136 = por %p134, %p135
      %p137 = scmp.ne.s32.totalorder %s129, %s132
      %p138 = scmp.eq.s32.totalorder %s55, 0
      %p139 = por %p137, %p138
      %p140 = scmp.ne.s32.totalorder %s129, %s132
      %p141 = scmp.eq.s32.totalorder %s60, 3
      %p142 = por %p140, %p141
      %p143 = scmp.ne.s32.totalorder %s132, %s133
      %p144 = scmp.eq.s32.totalorder %s60, 0
      %p145 = por %p143, %p144
      %p146 = scmp.ne.s32.totalorder %s132, %s133
      %p147 = scmp.eq.s32.totalorder %s61, 3
      %p148 = por %p146, %p147
      %p150 = scmp.ne.s32.totalorder %s133, %s149
      %p151 = scmp.eq.s32.totalorder %s61, 0
      %p152 = por %p150, %p151
      %s153 = ssub.s32 %s62, %s74
      %p154 = scmp.eq.s32.totalorder %s153, 0
      %s156 = sadd.s32 %s155, 1
      %s157 = scalar_select %p154, %s155, %s156
      %p160 = pneg %p154
      %p161 = scmp.eq.s32.totalorder %s55, 3
      %p162 = por %p160, %p161
      %p163 = scmp.ne.s32.totalorder %s155, %s158
      %p164 = scmp.eq.s32.totalorder %s55, 0
      %p165 = por %p163, %p164
      %p166 = scmp.ne.s32.totalorder %s155, %s158
      %p167 = scmp.eq.s32.totalorder %s60, 3
      %p168 = por %p166, %p167
      %p169 = scmp.ne.s32.totalorder %s158, %s159
      %p170 = scmp.eq.s32.totalorder %s60, 0
      %p171 = por %p169, %p170
      %p172 = scmp.ne.s32.totalorder %s158, %s159
      %p173 = scmp.eq.s32.totalorder %s61, 3
      %p174 = por %p172, %p173
      %p176 = scmp.ne.s32.totalorder %s159, %s175
      %p177 = scmp.eq.s32.totalorder %s61, 0
      %p178 = por %p176, %p177
      %s180 = sadd.s32 %s179, 1
      %p183 = scmp.eq.s32.totalorder %s55, 3
      %p184 = scmp.ne.s32.totalorder %s179, %s181
      %p185 = scmp.eq.s32.totalorder %s55, 0
      %p186 = por %p184, %p185
      %p187 = scmp.ne.s32.totalorder %s179, %s181
      %p188 = scmp.eq.s32.totalorder %s60, 3
      %p189 = por %p187, %p188
      %p190 = scmp.ne.s32.totalorder %s181, %s182
      %p191 = scmp.eq.s32.totalorder %s60, 0
      %p192 = por %p190, %p191
      %p193 = scmp.ne.s32.totalorder %s181, %s182
      %p194 = scmp.eq.s32.totalorder %s61, 3
      %p195 = por %p193, %p194
      %p197 = scmp.ne.s32.totalorder %s182, %s196
      %p198 = scmp.eq.s32.totalorder %s61, 0
      %p199 = por %p197, %p198
      %s200 = ssub.s32 %s63, %s70
      %p201 = scmp.eq.s32.totalorder %s200, 0
      %s203 = sadd.s32 %s202, 1
      %s204 = scalar_select %p201, %s202, %s203
      %p207 = pneg %p201
      %p208 = scmp.eq.s32.totalorder %s55, 3
      %p209 = por %p207, %p208
      %p210 = scmp.ne.s32.totalorder %s202, %s205
      %p211 = scmp.eq.s32.totalorder %s55, 0
      %p212 = por %p210, %p211
      %p213 = scmp.ne.s32.totalorder %s202, %s205
      %p214 = scmp.eq.s32.totalorder %s60, 3
      %p215 = por %p213, %p214
      %p216 = scmp.ne.s32.totalorder %s205, %s206
      %p217 = scmp.eq.s32.totalorder %s60, 0
      %p218 = por %p216, %p217
      %p219 = scmp.ne.s32.totalorder %s205, %s206
      %p220 = scmp.eq.s32.totalorder %s61, 3
      %p221 = por %p219, %p220
      %p223 = scmp.ne.s32.totalorder %s206, %s222
      %p224 = scmp.eq.s32.totalorder %s61, 0
      %p225 = por %p223, %p224
      %s226 = ssub.s32 %s63, %s70
      %p227 = scmp.eq.s32.totalorder %s226, 0
      %s229 = sadd.s32 %s228, 1
      %s230 = scalar_select %p227, %s228, %s229
      %p233 = pneg %p227
      %p234 = scmp.eq.s32.totalorder %s55, 3
      %p235 = por %p233, %p234
      %p236 = scmp.ne.s32.totalorder %s228, %s231
      %p237 = scmp.eq.s32.totalorder %s55, 0
      %p238 = por %p236, %p237
      %p239 = scmp.ne.s32.totalorder %s228, %s231
      %p240 = scmp.eq.s32.totalorder %s60, 3
      %p241 = por %p239, %p240
      %p242 = scmp.ne.s32.totalorder %s231, %s232
      %p243 = scmp.eq.s32.totalorder %s60, 0
      %p244 = por %p242, %p243
      %p245 = scmp.ne.s32.totalorder %s231, %s232
      %p246 = scmp.eq.s32.totalorder %s61, 3
      %p247 = por %p245, %p246
      %p249 = scmp.ne.s32.totalorder %s232, %s248
      %p250 = scmp.eq.s32.totalorder %s61, 0
      %p251 = por %p249, %p250
      %s252 = ssub.s32 %s63, %s70
      %p253 = scmp.eq.s32.totalorder %s252, 0
      %s255 = sadd.s32 %s254, 1
      %s256 = scalar_select %p253, %s254, %s255
      %p259 = pneg %p253
      %p260 = scmp.eq.s32.totalorder %s55, 3
      %p261 = por %p259, %p260
      %p262 = scmp.ne.s32.totalorder %s254, %s257
      %p263 = scmp.eq.s32.totalorder %s55, 0
      %p264 = por %p262, %p263
      %p265 = scmp.ne.s32.totalorder %s254, %s257
      %p266 = scmp.eq.s32.totalorder %s60, 3
      %p267 = por %p265, %p266
      %p268 = scmp.ne.s32.totalorder %s257, %s258
      %p269 = scmp.eq.s32.totalorder %s60, 0
      %p270 = por %p268, %p269
      %p271 = scmp.ne.s32.totalorder %s257, %s258
      %p272 = scmp.eq.s32.totalorder %s61, 3
      %p273 = por %p271, %p272
      %p275 = scmp.ne.s32.totalorder %s258, %s274
      %p276 = scmp.eq.s32.totalorder %s61, 0
      %p277 = por %p275, %p276
      %s278 = ssub.s32 %s63, %s70
      %p279 = scmp.eq.s32.totalorder %s278, 0
      %s281 = sadd.s32 %s280, 1
      %s282 = scalar_select %p279, %s280, %s281
      %p285 = pneg %p279
      %p286 = scmp.eq.s32.totalorder %s55, 3
      %p287 = por %p285, %p286
      %p288 = scmp.ne.s32.totalorder %s280, %s283
      %p289 = scmp.eq.s32.totalorder %s55, 0
      %p290 = por %p288, %p289
      %p291 = scmp.ne.s32.totalorder %s280, %s283
      %p292 = scmp.eq.s32.totalorder %s60, 3
      %p293 = por %p291, %p292
      %p294 = scmp.ne.s32.totalorder %s283, %s284
      %p295 = scmp.eq.s32.totalorder %s60, 0
      %p296 = por %p294, %p295
      %p297 = scmp.ne.s32.totalorder %s283, %s284
      %p298 = scmp.eq.s32.totalorder %s61, 3
      %p299 = por %p297, %p298
      %p301 = scmp.ne.s32.totalorder %s284, %s300
      %p302 = scmp.eq.s32.totalorder %s61, 0
      %p303 = por %p301, %p302
      %s304 = ssub.s32 %s63, %s70
      %p305 = scmp.eq.s32.totalorder %s304, 0
      %s307 = sadd.s32 %s306, 1
      %s308 = scalar_select %p305, %s306, %s307
      %p311 = pneg %p305
      %p312 = scmp.eq.s32.totalorder %s55, 3
      %p313 = por %p311, %p312
      %p314 = scmp.ne.s32.totalorder %s306, %s309
      %p315 = scmp.eq.s32.totalorder %s55, 0
      %p316 = por %p314, %p315
      %p317 = scmp.ne.s32.totalorder %s306, %s309
      %p318 = scmp.eq.s32.totalorder %s60, 3
      %p319 = por %p317, %p318
      %p320 = scmp.ne.s32.totalorder %s309, %s310
      %p321 = scmp.eq.s32.totalorder %s60, 0
      %p322 = por %p320, %p321
      %p323 = scmp.ne.s32.totalorder %s309, %s310
      %p324 = scmp.eq.s32.totalorder %s61, 3
      %p325 = por %p323, %p324
      %p327 = scmp.ne.s32.totalorder %s310, %s326
      %p328 = scmp.eq.s32.totalorder %s61, 0
      %p329 = por %p327, %p328
      %s330 = ssub.s32 %s63, %s70
      %p331 = scmp.eq.s32.totalorder %s330, 0
      %s333 = sadd.s32 %s332, 1
      %s334 = scalar_select %p331, %s332, %s333
      %p337 = pneg %p331
      %p338 = scmp.eq.s32.totalorder %s55, 3
      %p339 = por %p337, %p338
      %p340 = scmp.ne.s32.totalorder %s332, %s335
      %p341 = scmp.eq.s32.totalorder %s55, 0
      %p342 = por %p340, %p341
      %p343 = scmp.ne.s32.totalorder %s332, %s335
      %p344 = scmp.eq.s32.totalorder %s60, 3
      %p345 = por %p343, %p344
      %p346 = scmp.ne.s32.totalorder %s335, %s336
      %p347 = scmp.eq.s32.totalorder %s60, 0
      %p348 = por %p346, %p347
      %p349 = scmp.ne.s32.totalorder %s335, %s336
      %p350 = scmp.eq.s32.totalorder %s61, 3
      %p351 = por %p349, %p350
      %p353 = scmp.ne.s32.totalorder %s336, %s352
      %p354 = scmp.eq.s32.totalorder %s61, 0
      %p355 = por %p353, %p354
      %s356 = ssub.s32 %s63, %s70
      %p357 = scmp.eq.s32.totalorder %s356, 0
      %s359 = sadd.s32 %s358, 1
      %s360 = scalar_select %p357, %s358, %s359
      %p363 = pneg %p357
      %p364 = scmp.eq.s32.totalorder %s55, 3
      %p365 = por %p363, %p364
      %p366 = scmp.ne.s32.totalorder %s358, %s361
      %p367 = scmp.eq.s32.totalorder %s55, 0
      %p368 = por %p366, %p367
      %p369 = scmp.ne.s32.totalorder %s358, %s361
      %p370 = scmp.eq.s32.totalorder %s60, 3
      %p371 = por %p369, %p370
      %p372 = scmp.ne.s32.totalorder %s361, %s362
      %p373 = scmp.eq.s32.totalorder %s60, 0
      %p374 = por %p372, %p373
      %p375 = scmp.ne.s32.totalorder %s361, %s362
      %p376 = scmp.eq.s32.totalorder %s61, 3
      %p377 = por %p375, %p376
      %p379 = scmp.ne.s32.totalorder %s362, %s378
      %p380 = scmp.eq.s32.totalorder %s61, 0
      %p381 = por %p379, %p380
      %s382 = ssub.s32 %s63, %s70
      %p383 = scmp.eq.s32.totalorder %s382, 0
      %s385 = sadd.s32 %s384, 1
      %s386 = scalar_select %p383, %s384, %s385
      %p389 = pneg %p383
      %p390 = scmp.eq.s32.totalorder %s55, 3
      %p391 = por %p389, %p390
      %p392 = scmp.ne.s32.totalorder %s384, %s387
      %p393 = scmp.eq.s32.totalorder %s55, 0
      %p394 = por %p392, %p393
      %p395 = scmp.ne.s32.totalorder %s384, %s387
      %p396 = scmp.eq.s32.totalorder %s60, 3
      %p397 = por %p395, %p396
      %p398 = scmp.ne.s32.totalorder %s387, %s388
      %p399 = scmp.eq.s32.totalorder %s60, 0
      %p400 = por %p398, %p399
      %p401 = scmp.ne.s32.totalorder %s387, %s388
      %p402 = scmp.eq.s32.totalorder %s61, 3
      %p403 = por %p401, %p402
      %p405 = scmp.ne.s32.totalorder %s388, %s404
      %p406 = scmp.eq.s32.totalorder %s61, 0
      %p407 = por %p405, %p406
      %s408 = ssub.s32 %s63, %s70
      %p409 = scmp.eq.s32.totalorder %s408, 0
      %s411 = sadd.s32 %s410, 1
      %s412 = scalar_select %p409, %s410, %s411
      %p415 = pneg %p409
      %p416 = scmp.eq.s32.totalorder %s55, 3
      %p417 = por %p415, %p416
      %p418 = scmp.ne.s32.totalorder %s410, %s413
      %p419 = scmp.eq.s32.totalorder %s55, 0
      %p420 = por %p418, %p419
      %p421 = scmp.ne.s32.totalorder %s410, %s413
      %p422 = scmp.eq.s32.totalorder %s60, 3
      %p423 = por %p421, %p422
      %p424 = scmp.ne.s32.totalorder %s413, %s414
      %p425 = scmp.eq.s32.totalorder %s60, 0
      %p426 = por %p424, %p425
      %p427 = scmp.ne.s32.totalorder %s413, %s414
      %p428 = scmp.eq.s32.totalorder %s61, 3
      %p429 = por %p427, %p428
      %p431 = scmp.ne.s32.totalorder %s414, %s430
      %p432 = scmp.eq.s32.totalorder %s61, 0
      %p433 = por %p431, %p432
      %s434 = ssub.s32 %s63, %s70
      %p435 = scmp.eq.s32.totalorder %s434, 0
      %s437 = sadd.s32 %s436, 1
      %s438 = scalar_select %p435, %s436, %s437
      %p441 = pneg %p435
      %p442 = scmp.eq.s32.totalorder %s55, 3
      %p443 = por %p441, %p442
      %p444 = scmp.ne.s32.totalorder %s436, %s439
      %p445 = scmp.eq.s32.totalorder %s55, 0
      %p446 = por %p444, %p445
      %p447 = scmp.ne.s32.totalorder %s436, %s439
      %p448 = scmp.eq.s32.totalorder %s60, 3
      %p449 = por %p447, %p448
      %p450 = scmp.ne.s32.totalorder %s439, %s440
      %p451 = scmp.eq.s32.totalorder %s60, 0
      %p452 = por %p450, %p451
      %p453 = scmp.ne.s32.totalorder %s439, %s440
      %p454 = scmp.eq.s32.totalorder %s61, 3
      %p455 = por %p453, %p454
      %p457 = scmp.ne.s32.totalorder %s440, %s456
      %p458 = scmp.eq.s32.totalorder %s61, 0
      %p459 = por %p457, %p458
      %s460 = ssub.s32 %s63, %s70
      %p461 = scmp.eq.s32.totalorder %s460, 0
      %s463 = sadd.s32 %s462, 1
      %s464 = scalar_select %p461, %s462, %s463
      %p467 = pneg %p461
      %p468 = scmp.eq.s32.totalorder %s55, 3
      %p469 = por %p467, %p468
      %p470 = scmp.ne.s32.totalorder %s462, %s465
      %p471 = scmp.eq.s32.totalorder %s55, 0
      %p472 = por %p470, %p471
      %p473 = scmp.ne.s32.totalorder %s462, %s465
      %p474 = scmp.eq.s32.totalorder %s60, 3
      %p475 = por %p473, %p474
      %p476 = scmp.ne.s32.totalorder %s465, %s466
      %p477 = scmp.eq.s32.totalorder %s60, 0
      %p478 = por %p476, %p477
      %p479 = scmp.ne.s32.totalorder %s465, %s466
      %p480 = scmp.eq.s32.totalorder %s61, 3
      %p481 = por %p479, %p480
      %p483 = scmp.ne.s32.totalorder %s466, %s482
      %p484 = scmp.eq.s32.totalorder %s61, 0
      %p485 = por %p483, %p484
      %s486 = ssub.s32 %s63, %s70
      %p487 = scmp.eq.s32.totalorder %s486, 0
      %s489 = sadd.s32 %s488, 1
      %s490 = scalar_select %p487, %s488, %s489
      %p493 = pneg %p487
      %p494 = scmp.eq.s32.totalorder %s55, 3
      %p495 = por %p493, %p494
      %p496 = scmp.ne.s32.totalorder %s488, %s491
      %p497 = scmp.eq.s32.totalorder %s55, 0
      %p498 = por %p496, %p497
      %p499 = scmp.ne.s32.totalorder %s488, %s491
      %p500 = scmp.eq.s32.totalorder %s60, 3
      %p501 = por %p499, %p500
      %p502 = scmp.ne.s32.totalorder %s491, %s492
      %p503 = scmp.eq.s32.totalorder %s60, 0
      %p504 = por %p502, %p503
      %p505 = scmp.ne.s32.totalorder %s491, %s492
      %p506 = scmp.eq.s32.totalorder %s61, 3
      %p507 = por %p505, %p506
      %p509 = scmp.ne.s32.totalorder %s492, %s508
      %p510 = scmp.eq.s32.totalorder %s61, 0
      %p511 = por %p509, %p510
      %s512 = ssub.s32 %s63, %s70
      %p513 = scmp.eq.s32.totalorder %s512, 0
      %s515 = sadd.s32 %s514, 1
      %s516 = scalar_select %p513, %s514, %s515
      %p519 = pneg %p513
      %p520 = scmp.eq.s32.totalorder %s55, 3
      %p521 = por %p519, %p520
      %p522 = scmp.ne.s32.totalorder %s514, %s517
      %p523 = scmp.eq.s32.totalorder %s55, 0
      %p524 = por %p522, %p523
      %p525 = scmp.ne.s32.totalorder %s514, %s517
      %p526 = scmp.eq.s32.totalorder %s60, 3
      %p527 = por %p525, %p526
      %p528 = scmp.ne.s32.totalorder %s517, %s518
      %p529 = scmp.eq.s32.totalorder %s60, 0
      %p530 = por %p528, %p529
      %p531 = scmp.ne.s32.totalorder %s517, %s518
      %p532 = scmp.eq.s32.totalorder %s61, 3
      %p533 = por %p531, %p532
      %p535 = scmp.ne.s32.totalorder %s518, %s534
      %p536 = scmp.eq.s32.totalorder %s61, 0
      %p537 = por %p535, %p536
      %s538 = ssub.s32 %s63, %s70
      %p539 = scmp.eq.s32.totalorder %s538, 0
      %s541 = sadd.s32 %s540, 1
      %s542 = scalar_select %p539, %s540, %s541
      %p545 = pneg %p539
      %p546 = scmp.eq.s32.totalorder %s55, 3
      %p547 = por %p545, %p546
      %p548 = scmp.ne.s32.totalorder %s540, %s543
      %p549 = scmp.eq.s32.totalorder %s55, 0
      %p550 = por %p548, %p549
      %p551 = scmp.ne.s32.totalorder %s540, %s543
      %p552 = scmp.eq.s32.totalorder %s60, 3
      %p553 = por %p551, %p552
      %p554 = scmp.ne.s32.totalorder %s543, %s544
      %p555 = scmp.eq.s32.totalorder %s60, 0
      %p556 = por %p554, %p555
      %p557 = scmp.ne.s32.totalorder %s543, %s544
      %p558 = scmp.eq.s32.totalorder %s61, 3
      %p559 = por %p557, %p558
      %p561 = scmp.ne.s32.totalorder %s544, %s560
      %p562 = scmp.eq.s32.totalorder %s61, 0
      %p563 = por %p561, %p562
      %s564 = ssub.s32 %s63, %s70
      %p565 = scmp.eq.s32.totalorder %s564, 0
      %s567 = sadd.s32 %s566, 1
      %s568 = scalar_select %p565, %s566, %s567
      %p571 = pneg %p565
      %p572 = scmp.eq.s32.totalorder %s55, 3
      %p573 = por %p571, %p572
      %p574 = scmp.ne.s32.totalorder %s566, %s569
      %p575 = scmp.eq.s32.totalorder %s55, 0
      %p576 = por %p574, %p575
      %p577 = scmp.ne.s32.totalorder %s566, %s569
      %p578 = scmp.eq.s32.totalorder %s60, 3
      %p579 = por %p577, %p578
      %p580 = scmp.ne.s32.totalorder %s569, %s570
      %p581 = scmp.eq.s32.totalorder %s60, 0
      %p582 = por %p580, %p581
      %p583 = scmp.ne.s32.totalorder %s569, %s570
      %p584 = scmp.eq.s32.totalorder %s61, 3
      %p585 = por %p583, %p584
      %p587 = scmp.ne.s32.totalorder %s570, %s586
      %p588 = scmp.eq.s32.totalorder %s61, 0
      %p589 = por %p587, %p588
      %s590 = ssub.s32 %s63, %s70
      %p591 = scmp.eq.s32.totalorder %s590, 0
      %s593 = sadd.s32 %s592, 1
      %s594 = scalar_select %p591, %s592, %s593
      %p597 = pneg %p591
      %p598 = scmp.eq.s32.totalorder %s55, 3
      %p599 = por %p597, %p598
      %p600 = scmp.ne.s32.totalorder %s592, %s595
      %p601 = scmp.eq.s32.totalorder %s55, 0
      %p602 = por %p600, %p601
      %p603 = scmp.ne.s32.totalorder %s592, %s595
      %p604 = scmp.eq.s32.totalorder %s60, 3
      %p605 = por %p603, %p604
      %p606 = scmp.ne.s32.totalorder %s595, %s596
      %p607 = scmp.eq.s32.totalorder %s60, 0
      %p608 = por %p606, %p607
      %p609 = scmp.ne.s32.totalorder %s595, %s596
      %p610 = scmp.eq.s32.totalorder %s61, 3
      %p611 = por %p609, %p610
      %p613 = scmp.ne.s32.totalorder %s596, %s612
      %p614 = scmp.eq.s32.totalorder %s61, 0
      %p615 = por %p613, %p614
      %s616 = ssub.s32 %s63, %s70
      %p617 = scmp.eq.s32.totalorder %s616, 0
      %s619 = sadd.s32 %s618, 1
      %s620 = scalar_select %p617, %s618, %s619
      %p623 = pneg %p617
      %p624 = scmp.eq.s32.totalorder %s55, 3
      %p625 = por %p623, %p624
      %p626 = scmp.ne.s32.totalorder %s618, %s621
      %p627 = scmp.eq.s32.totalorder %s55, 0
      %p628 = por %p626, %p627
      %p629 = scmp.ne.s32.totalorder %s618, %s621
      %p630 = scmp.eq.s32.totalorder %s60, 3
      %p631 = por %p629, %p630
      %p632 = scmp.ne.s32.totalorder %s621, %s622
      %p633 = scmp.eq.s32.totalorder %s60, 0
      %p634 = por %p632, %p633
      %p635 = scmp.ne.s32.totalorder %s621, %s622
      %p636 = scmp.eq.s32.totalorder %s61, 3
      %p637 = por %p635, %p636
      %p639 = scmp.ne.s32.totalorder %s622, %s638
      %p640 = scmp.eq.s32.totalorder %s61, 0
      %p641 = por %p639, %p640
      %s642 = ssub.s32 %s63, %s70
      %p643 = scmp.eq.s32.totalorder %s642, 0
      %s645 = sadd.s32 %s644, 1
      %s646 = scalar_select %p643, %s644, %s645
      %p649 = pneg %p643
      %p650 = scmp.eq.s32.totalorder %s55, 3
      %p651 = por %p649, %p650
      %p652 = scmp.ne.s32.totalorder %s644, %s647
      %p653 = scmp.eq.s32.totalorder %s55, 0
      %p654 = por %p652, %p653
      %p655 = scmp.ne.s32.totalorder %s644, %s647
      %p656 = scmp.eq.s32.totalorder %s60, 3
      %p657 = por %p655, %p656
      %p658 = scmp.ne.s32.totalorder %s647, %s648
      %p659 = scmp.eq.s32.totalorder %s60, 0
      %p660 = por %p658, %p659
      %p661 = scmp.ne.s32.totalorder %s647, %s648
      %p662 = scmp.eq.s32.totalorder %s61, 3
      %p663 = por %p661, %p662
      %p665 = scmp.ne.s32.totalorder %s648, %s664
      %p666 = scmp.eq.s32.totalorder %s61, 0
      %p667 = por %p665, %p666
      %s669 = sadd.s32 %s668, 1
      %p672 = scmp.eq.s32.totalorder %s55, 3
      %p673 = scmp.ne.s32.totalorder %s668, %s670
      %p674 = scmp.eq.s32.totalorder %s55, 0
      %p675 = por %p673, %p674
      %p676 = scmp.ne.s32.totalorder %s668, %s670
      %p677 = scmp.eq.s32.totalorder %s60, 3
      %p678 = por %p676, %p677
      %p679 = scmp.ne.s32.totalorder %s670, %s671
      %p680 = scmp.eq.s32.totalorder %s60, 0
      %p681 = por %p679, %p680
      %p682 = scmp.ne.s32.totalorder %s670, %s671
      %p683 = scmp.eq.s32.totalorder %s61, 3
      %p684 = por %p682, %p683
      %p686 = scmp.ne.s32.totalorder %s671, %s685
      %p687 = scmp.eq.s32.totalorder %s61, 0
      %p688 = por %p686, %p687
      %s690 = sadd.s32 %s689, 1
      %p693 = scmp.eq.s32.totalorder %s55, 3
      %p694 = scmp.ne.s32.totalorder %s689, %s691
      %p695 = scmp.eq.s32.totalorder %s55, 0
      %p696 = por %p694, %p695
      %p697 = scmp.ne.s32.totalorder %s689, %s691
      %p698 = scmp.eq.s32.totalorder %s60, 3
      %p699 = por %p697, %p698
      %p700 = scmp.ne.s32.totalorder %s691, %s692
      %p701 = scmp.eq.s32.totalorder %s60, 0
      %p702 = por %p700, %p701
      %p703 = scmp.ne.s32.totalorder %s691, %s692
      %p704 = scmp.eq.s32.totalorder %s61, 3
      %p705 = por %p703, %p704
      %p707 = scmp.ne.s32.totalorder %s692, %s706
      %p708 = scmp.eq.s32.totalorder %s61, 0
      %p709 = por %p707, %p708
      %s710 = ssub.s32 %s62, %s74
      %p711 = scmp.eq.s32.totalorder %s710, 0
      %s713 = sadd.s32 %s712, 1
      %s714 = scalar_select %p711, %s712, %s713
      %p717 = pneg %p711
      %p718 = scmp.eq.s32.totalorder %s55, 3
      %p719 = por %p717, %p718
      %p720 = scmp.ne.s32.totalorder %s712, %s715
      %p721 = scmp.eq.s32.totalorder %s55, 0
      %p722 = por %p720, %p721
      %p723 = scmp.ne.s32.totalorder %s712, %s715
      %p724 = scmp.eq.s32.totalorder %s60, 3
      %p725 = por %p723, %p724
      %p726 = scmp.ne.s32.totalorder %s715, %s716
      %p727 = scmp.eq.s32.totalorder %s60, 0
      %p728 = por %p726, %p727
      %p729 = scmp.ne.s32.totalorder %s715, %s716
      %p730 = scmp.eq.s32.totalorder %s61, 3
      %p731 = por %p729, %p730
      %p733 = scmp.ne.s32.totalorder %s716, %s732
      %p734 = scmp.eq.s32.totalorder %s61, 0
      %p735 = por %p733, %p734
      %p736 = scmp.le.s32.totalorder 1, %s55
      %p737 = scmp.lt.s32.totalorder %s55, 5
      %p738 = pnand %p736, %p737
      %p739 = pneg %p738
      // Predicated region
      $region9: #{tpu_custom_call.1} parent=5 // pred_check
        _
      $region10: #{tpu_custom_call.1} parent=5 // pred_check_branch
        %741 = sbr.rel (%p738) target = $region12
      $region11: #{tpu_custom_call.1} parent=5 // pred_region
        %s742 = ssub.s32 %s55, 1
        // Predicated region
        $region13: #{tpu_custom_call.1} parent=11 // pred_check
          %p743 = pneg %p192
        $region14: #{tpu_custom_call.1} parent=11 // pred_check_branch
          %745 = sbr.rel (%p743) target = $region16
        $region15: #{tpu_custom_call.1} parent=11 // pred_region
          _
        $region16: #{tpu_custom_call.1} parent=11 // pred_fallthru
          _
        // Predicated region
        $region17: #{tpu_custom_call.1} parent=11 // pred_check
          %p746 = pneg %p681
        $region18: #{tpu_custom_call.1} parent=11 // pred_check_branch
          %748 = sbr.rel (%p746) target = $region20
        $region19: #{tpu_custom_call.1} parent=11 // pred_region
          _
        $region20: #{tpu_custom_call.1} parent=11 // pred_fallthru
          _
        // Predicated region
        $region21: #{tpu_custom_call.1} parent=11 // pred_check
          %p749 = pneg %p702
        $region22: #{tpu_custom_call.1} parent=11 // pred_check_branch
          %751 = sbr.rel (%p749) target = $region24
        $region23: #{tpu_custom_call.1} parent=11 // pred_region
          _
        $region24: #{tpu_custom_call.1} parent=11 // pred_fallthru
          _
      $region12: #{tpu_custom_call.1} parent=5 // pred_fallthru
        _
      %p752 = scmp.lt.s32.totalorder %s55, 4
      // Predicated region
      $region25: #{tpu_custom_call.1} parent=5 // pred_check
        %p753 = pneg %p752
      $region26: #{tpu_custom_call.1} parent=5 // pred_check_branch
        %755 = sbr.rel (%p753) target = $region28
      $region27: #{tpu_custom_call.1} parent=5 // pred_region
        // Predicated region
        $region29: #{tpu_custom_call.1} parent=27 // pred_check
          %p756 = pneg %p87
        $region30: #{tpu_custom_call.1} parent=27 // pred_check_branch
          %758 = sbr.rel (%p756) target = $region32
        $region31: #{tpu_custom_call.1} parent=27 // pred_region
          %s759 = sand.u32 %s77, 1
          %s760 = scalar_lea.sflag [#allocation4], %s759
          %s761 = sand.u32 %s77, 1
          %s762 = smul.addr %s761, 8
          %s763 = scalar_lea.vmem [#allocation3], %s762
          %s765 = ssub.s32 128, 128
          %766 = vsyncadd %s760, %s765
          %s767 = smul.addr %s62, 128
          %s768 = scalar_lea.hbm %s0, %s767
          %s770 = sshll.u32 %s763, 4
          %s771 = int_to_ptr.vmem [resolvable:$true] %s770
          %773 = dma.hbm_to_vmem [thread:$0]  %s768, 128, %s771, %s760
        $region32: #{tpu_custom_call.1} parent=27 // pred_fallthru
          _
        // Predicated region
        $region33: #{tpu_custom_call.1} parent=27 // pred_check
          %p774 = pneg %p113
        $region34: #{tpu_custom_call.1} parent=27 // pred_check_branch
          %776 = sbr.rel (%p774) target = $region36
        $region35: #{tpu_custom_call.1} parent=27 // pred_region
          %s777 = sand.u32 %s55, 1
          %s778 = scalar_lea.sflag [#allocation7], %s777
          %s779 = sand.u32 %s103, 1
          %s780 = smul.addr %s779, 16
          %s781 = scalar_lea.vmem [#allocation6], %s780
          %s783 = ssub.s32 256, 256
          %784 = vsyncadd %s778, %s783
          %s785 = smul.addr %s62, 2
          %s786 = smul.addr %s785, 128
          %s787 = scalar_lea.hbm %s1, %s786
          %s788 = sshll.u32 %s781, 4
          %s789 = int_to_ptr.vmem [resolvable:$true] %s788
          %794 = dma.hbm_to_vmem [thread:$0]  %s787, 256, %s789, %s778, 128, 128, 8
        $region36: #{tpu_custom_call.1} parent=27 // pred_fallthru
          _
        // Predicated region
        $region37: #{tpu_custom_call.1} parent=27 // pred_check
          %p795 = pneg %p139
        $region38: #{tpu_custom_call.1} parent=27 // pred_check_branch
          %797 = sbr.rel (%p795) target = $region40
        $region39: #{tpu_custom_call.1} parent=27 // pred_region
          %s798 = sand.u32 %s55, 1
          %s799 = scalar_lea.sflag [#allocation7], %s798
          %s800 = sand.u32 %s129, 1
          %s801 = smul.addr %s800, 8
          %s802 = scalar_lea.vmem [#allocation8], %s801
          %s804 = ssub.s32 128, 128
          %805 = vsyncadd %s799, %s804
          %s806 = smul.addr %s62, 128
          %s807 = scalar_lea.hbm %s2, %s806
          %s809 = sshll.u32 %s802, 4
          %s810 = int_to_ptr.vmem [resolvable:$true] %s809
          %812 = dma.hbm_to_vmem [thread:$0]  %s807, 128, %s810, %s799
        $region40: #{tpu_custom_call.1} parent=27 // pred_fallthru
          _
        // Predicated region
        $region41: #{tpu_custom_call.1} parent=27 // pred_check
          %p813 = pneg %p165
        $region42: #{tpu_custom_call.1} parent=27 // pred_check_branch
          %815 = sbr.rel (%p813) target = $region44
        $region43: #{tpu_custom_call.1} parent=27 // pred_region
          %p816 = scmp.lt.s32.totalorder %s62, 1
          %s817 = scalar_select %p816, %s62, 1
          %s818 = scalar_lea.vmem %s3, %s817
        $region44: #{tpu_custom_call.1} parent=27 // pred_fallthru
          _
        // Predicated region
        $region45: #{tpu_custom_call.1} parent=27 // pred_check
          %p819 = pneg %p212
        $region46: #{tpu_custom_call.1} parent=27 // pred_check_branch
          %821 = sbr.rel (%p819) target = $region48
        $region47: #{tpu_custom_call.1} parent=27 // pred_region
          %s822 = sand.u32 %s55, 1
          %s823 = scalar_lea.sflag [#allocation10], %s822
          %s824 = sand.u32 %s202, 1
          %s825 = smul.addr %s824, 64
          %s826 = scalar_lea.vmem [#allocation9], %s825
          %s828 = ssub.s32 1024, 1024
          %829 = vsyncadd %s823, %s828
          %s830 = smul.addr %s63, 16
          %s831 = smul.addr %s830, 64
          %s832 = scalar_lea.hbm %s5, %s831
          %s833 = sshll.u32 %s826, 4
          %s834 = int_to_ptr.vmem [resolvable:$true] %s833
          %839 = dma.hbm_to_vmem [thread:$0]  %s832, 1024, %s834, %s823, 64, 64, 4
        $region48: #{tpu_custom_call.1} parent=27 // pred_fallthru
          _
        // Predicated region
        $region49: #{tpu_custom_call.1} parent=27 // pred_check
          %p840 = pneg %p238
        $region50: #{tpu_custom_call.1} parent=27 // pred_check_branch
          %842 = sbr.rel (%p840) target = $region52
        $region51: #{tpu_custom_call.1} parent=27 // pred_region
          %s843 = sand.u32 %s55, 1
          %s844 = scalar_lea.sflag [#allocation10], %s843
          %s845 = sand.u32 %s228, 1
          %s846 = smul.addr %s845, 64
          %s847 = scalar_lea.vmem [#allocation11], %s846
          %s849 = ssub.s32 1024, 1024
          %850 = vsyncadd %s844, %s849
          %s851 = smul.addr %s63, 16
          %s852 = smul.addr %s851, 64
          %s853 = scalar_lea.hbm %s6, %s852
          %s854 = sshll.u32 %s847, 4
          %s855 = int_to_ptr.vmem [resolvable:$true] %s854
          %860 = dma.hbm_to_vmem [thread:$0]  %s853, 1024, %s855, %s844, 64, 64, 4
        $region52: #{tpu_custom_call.1} parent=27 // pred_fallthru
          _
        // Predicated region
        $region53: #{tpu_custom_call.1} parent=27 // pred_check
          %p861 = pneg %p264
        $region54: #{tpu_custom_call.1} parent=27 // pred_check_branch
          %863 = sbr.rel (%p861) target = $region56
        $region55: #{tpu_custom_call.1} parent=27 // pred_region
          %s864 = sand.u32 %s55, 1
          %s865 = scalar_lea.sflag [#allocation13], %s864
          %s866 = sand.u32 %s254, 1
          %s867 = smul.addr %s866, 64
          %s868 = scalar_lea.vmem [#allocation12], %s867
          %s870 = ssub.s32 1024, 1024
          %871 = vsyncadd %s865, %s870
          %s872 = smul.addr %s63, 16
          %s873 = smul.addr %s872, 64
          %s874 = scalar_lea.hbm %s7, %s873
          %s875 = sshll.u32 %s868, 4
          %s876 = int_to_ptr.vmem [resolvable:$true] %s875
          %881 = dma.hbm_to_vmem [thread:$0]  %s874, 1024, %s876, %s865, 64, 64, 4
        $region56: #{tpu_custom_call.1} parent=27 // pred_fallthru
          _
        // Predicated region
        $region57: #{tpu_custom_call.1} parent=27 // pred_check
          %p882 = pneg %p290
        $region58: #{tpu_custom_call.1} parent=27 // pred_check_branch
          %884 = sbr.rel (%p882) target = $region60
        $region59: #{tpu_custom_call.1} parent=27 // pred_region
          %s885 = sand.u32 %s55, 1
          %s886 = scalar_lea.sflag [#allocation13], %s885
          %s887 = sand.u32 %s280, 1
          %s888 = smul.addr %s887, 64
          %s889 = scalar_lea.vmem [#allocation14], %s888
          %s891 = ssub.s32 1024, 1024
          %892 = vsyncadd %s886, %s891
          %s893 = smul.addr %s63, 16
          %s894 = smul.addr %s893, 64
          %s895 = scalar_lea.hbm %s8, %s894
          %s896 = sshll.u32 %s889, 4
          %s897 = int_to_ptr.vmem [resolvable:$true] %s896
          %902 = dma.hbm_to_vmem [thread:$0]  %s895, 1024, %s897, %s886, 64, 64, 4
        $region60: #{tpu_custom_call.1} parent=27 // pred_fallthru
          _
        // Predicated region
        $region61: #{tpu_custom_call.1} parent=27 // pred_check
          %p903 = pneg %p316
        $region62: #{tpu_custom_call.1} parent=27 // pred_check_branch
          %905 = sbr.rel (%p903) target = $region64
        $region63: #{tpu_custom_call.1} parent=27 // pred_region
          %p906 = scmp.lt.s32.totalorder %s63, 1
          %s907 = scalar_select %p906, %s63, 1
          %s908 = scalar_lea.vmem %s9, %s907
        $region64: #{tpu_custom_call.1} parent=27 // pred_fallthru
          _
        // Predicated region
        $region65: #{tpu_custom_call.1} parent=27 // pred_check
          %p909 = pneg %p342
        $region66: #{tpu_custom_call.1} parent=27 // pred_check_branch
          %911 = sbr.rel (%p909) target = $region68
        $region67: #{tpu_custom_call.1} parent=27 // pred_region
          %p912 = scmp.lt.s32.totalorder %s63, 1
          %s913 = scalar_select %p912, %s63, 1
          %s914 = scalar_lea.vmem %s10, %s913
        $region68: #{tpu_custom_call.1} parent=27 // pred_fallthru
          _
        // Predicated region
        $region69: #{tpu_custom_call.1} parent=27 // pred_check
          %p915 = pneg %p368
        $region70: #{tpu_custom_call.1} parent=27 // pred_check_branch
          %917 = sbr.rel (%p915) target = $region72
        $region71: #{tpu_custom_call.1} parent=27 // pred_region
          %s918 = sand.u32 %s55, 1
          %s919 = scalar_lea.sflag [#allocation16], %s918
          %s920 = sand.u32 %s358, 1
          %s921 = smul.addr %s920, 64
          %s922 = scalar_lea.vmem [#allocation15], %s921
          %s924 = ssub.s32 1024, 1024
          %925 = vsyncadd %s919, %s924
          %s926 = smul.addr %s63, 16
          %s927 = smul.addr %s926, 64
          %s928 = scalar_lea.hbm %s11, %s927
          %s929 = sshll.u32 %s922, 4
          %s930 = int_to_ptr.vmem [resolvable:$true] %s929
          %935 = dma.hbm_to_vmem [thread:$0]  %s928, 1024, %s930, %s919, 64, 64, 4
        $region72: #{tpu_custom_call.1} parent=27 // pred_fallthru
          _
        // Predicated region
        $region73: #{tpu_custom_call.1} parent=27 // pred_check
          %p936 = pneg %p394
        $region74: #{tpu_custom_call.1} parent=27 // pred_check_branch
          %938 = sbr.rel (%p936) target = $region76
        $region75: #{tpu_custom_call.1} parent=27 // pred_region
          %s939 = sand.u32 %s55, 1
          %s940 = scalar_lea.sflag [#allocation16], %s939
          %s941 = sand.u32 %s384, 1
          %s942 = smul.addr %s941, 64
          %s943 = scalar_lea.vmem [#allocation17], %s942
          %s945 = ssub.s32 1024, 1024
          %946 = vsyncadd %s940, %s945
          %s947 = smul.addr %s63, 16
          %s948 = smul.addr %s947, 64
          %s949 = scalar_lea.hbm %s12, %s948
          %s950 = sshll.u32 %s943, 4
          %s951 = int_to_ptr.vmem [resolvable:$true] %s950
          %956 = dma.hbm_to_vmem [thread:$0]  %s949, 1024, %s951, %s940, 64, 64, 4
        $region76: #{tpu_custom_call.1} parent=27 // pred_fallthru
          _
        // Predicated region
        $region77: #{tpu_custom_call.1} parent=27 // pred_check
          %p957 = pneg %p420
        $region78: #{tpu_custom_call.1} parent=27 // pred_check_branch
          %959 = sbr.rel (%p957) target = $region80
        $region79: #{tpu_custom_call.1} parent=27 // pred_region
          %s960 = sand.u32 %s55, 1
          %s961 = scalar_lea.sflag [#allocation19], %s960
          %s962 = sand.u32 %s410, 1
          %s963 = smul.addr %s962, 64
          %s964 = scalar_lea.vmem [#allocation18], %s963
          %s966 = ssub.s32 1024, 1024
          %967 = vsyncadd %s961, %s966
          %s968 = smul.addr %s63, 16
          %s969 = smul.addr %s968, 64
          %s970 = scalar_lea.hbm %s13, %s969
          %s971 = sshll.u32 %s964, 4
          %s972 = int_to_ptr.vmem [resolvable:$true] %s971
          %977 = dma.hbm_to_vmem [thread:$0]  %s970, 1024, %s972, %s961, 64, 64, 4
        $region80: #{tpu_custom_call.1} parent=27 // pred_fallthru
          _
        // Predicated region
        $region81: #{tpu_custom_call.1} parent=27 // pred_check
          %p978 = pneg %p446
        $region82: #{tpu_custom_call.1} parent=27 // pred_check_branch
          %980 = sbr.rel (%p978) target = $region84
        $region83: #{tpu_custom_call.1} parent=27 // pred_region
          %s981 = sand.u32 %s55, 1
          %s982 = scalar_lea.sflag [#allocation19], %s981
          %s983 = sand.u32 %s436, 1
          %s984 = smul.addr %s983, 64
          %s985 = scalar_lea.vmem [#allocation20], %s984
          %s987 = ssub.s32 1024, 1024
          %988 = vsyncadd %s982, %s987
          %s989 = smul.addr %s63, 16
          %s990 = smul.addr %s989, 64
          %s991 = scalar_lea.hbm %s14, %s990
          %s992 = sshll.u32 %s985, 4
          %s993 = int_to_ptr.vmem [resolvable:$true] %s992
          %998 = dma.hbm_to_vmem [thread:$0]  %s991, 1024, %s993, %s982, 64, 64, 4
        $region84: #{tpu_custom_call.1} parent=27 // pred_fallthru
          _
        // Predicated region
        $region85: #{tpu_custom_call.1} parent=27 // pred_check
          %p999 = pneg %p472
        $region86: #{tpu_custom_call.1} parent=27 // pred_check_branch
          %1001 = sbr.rel (%p999) target = $region88
        $region87: #{tpu_custom_call.1} parent=27 // pred_region
          %p1002 = scmp.lt.s32.totalorder %s63, 1
          %s1003 = scalar_select %p1002, %s63, 1
          %s1004 = scalar_lea.vmem %s15, %s1003
        $region88: #{tpu_custom_call.1} parent=27 // pred_fallthru
          _
        // Predicated region
        $region89: #{tpu_custom_call.1} parent=27 // pred_check
          %p1005 = pneg %p498
        $region90: #{tpu_custom_call.1} parent=27 // pred_check_branch
          %1007 = sbr.rel (%p1005) target = $region92
        $region91: #{tpu_custom_call.1} parent=27 // pred_region
          %p1008 = scmp.lt.s32.totalorder %s63, 1
          %s1009 = scalar_select %p1008, %s63, 1
          %s1010 = scalar_lea.vmem %s16, %s1009
        $region92: #{tpu_custom_call.1} parent=27 // pred_fallthru
          _
        // Predicated region
        $region93: #{tpu_custom_call.1} parent=27 // pred_check
          %p1011 = pneg %p524
        $region94: #{tpu_custom_call.1} parent=27 // pred_check_branch
          %1013 = sbr.rel (%p1011) target = $region96
        $region95: #{tpu_custom_call.1} parent=27 // pred_region
          %s1014 = sand.u32 %s55, 1
          %s1015 = scalar_lea.sflag [#allocation22], %s1014
          %s1016 = sand.u32 %s514, 1
          %s1017 = smul.addr %s1016, 128
          %s1018 = scalar_lea.vmem [#allocation21], %s1017
          %s1020 = ssub.s32 2048, 2048
          %1021 = vsyncadd %s1015, %s1020
          %s1022 = smul.addr %s63, 32
          %s1023 = smul.addr %s1022, 64
          %s1024 = scalar_lea.hbm %s17, %s1023
          %s1025 = sshll.u32 %s1018, 4
          %s1026 = int_to_ptr.vmem [resolvable:$true] %s1025
          %1031 = dma.hbm_to_vmem [thread:$0]  %s1024, 2048, %s1026, %s1015, 128, 128, 8
        $region96: #{tpu_custom_call.1} parent=27 // pred_fallthru
          _
        // Predicated region
        $region97: #{tpu_custom_call.1} parent=27 // pred_check
          %p1032 = pneg %p550
        $region98: #{tpu_custom_call.1} parent=27 // pred_check_branch
          %1034 = sbr.rel (%p1032) target = $region100
        $region99: #{tpu_custom_call.1} parent=27 // pred_region
          %p1035 = scmp.lt.s32.totalorder %s63, 1
          %s1036 = scalar_select %p1035, %s63, 1
          %s1037 = smul.addr %s1036, 2
          %s1038 = scalar_lea.vmem %s18, %s1037
        $region100: #{tpu_custom_call.1} parent=27 // pred_fallthru
          _
        // Predicated region
        $region101: #{tpu_custom_call.1} parent=27 // pred_check
          %p1039 = pneg %p576
        $region102: #{tpu_custom_call.1} parent=27 // pred_check_branch
          %1041 = sbr.rel (%p1039) target = $region104
        $region103: #{tpu_custom_call.1} parent=27 // pred_region
          %s1042 = sand.u32 %s55, 1
          %s1043 = scalar_lea.sflag [#allocation22], %s1042
          %s1044 = sand.u32 %s566, 1
          %s1045 = smul.addr %s1044, 128
          %s1046 = scalar_lea.vmem [#allocation23], %s1045
          %s1048 = ssub.s32 2048, 2048
          %1049 = vsyncadd %s1043, %s1048
          %s1050 = smul.addr %s63, 32
          %s1051 = smul.addr %s1050, 64
          %s1052 = scalar_lea.hbm %s19, %s1051
          %s1053 = sshll.u32 %s1046, 4
          %s1054 = int_to_ptr.vmem [resolvable:$true] %s1053
          %1059 = dma.hbm_to_vmem [thread:$0]  %s1052, 2048, %s1054, %s1043, 64, 64, 4
        $region104: #{tpu_custom_call.1} parent=27 // pred_fallthru
          _
        // Predicated region
        $region105: #{tpu_custom_call.1} parent=27 // pred_check
          %p1060 = pneg %p602
        $region106: #{tpu_custom_call.1} parent=27 // pred_check_branch
          %1062 = sbr.rel (%p1060) target = $region108
        $region107: #{tpu_custom_call.1} parent=27 // pred_region
          %p1063 = scmp.lt.s32.totalorder %s63, 1
          %s1064 = scalar_select %p1063, %s63, 1
          %s1065 = scalar_lea.vmem %s20, %s1064
        $region108: #{tpu_custom_call.1} parent=27 // pred_fallthru
          _
        // Predicated region
        $region109: #{tpu_custom_call.1} parent=27 // pred_check
          %p1066 = pneg %p628
        $region110: #{tpu_custom_call.1} parent=27 // pred_check_branch
          %1068 = sbr.rel (%p1066) target = $region112
        $region111: #{tpu_custom_call.1} parent=27 // pred_region
          %p1069 = scmp.lt.s32.totalorder %s63, 1
          %s1070 = scalar_select %p1069, %s63, 1
          %s1071 = scalar_lea.vmem %s21, %s1070
        $region112: #{tpu_custom_call.1} parent=27 // pred_fallthru
          _
        // Predicated region
        $region113: #{tpu_custom_call.1} parent=27 // pred_check
          %p1072 = pneg %p654
        $region114: #{tpu_custom_call.1} parent=27 // pred_check_branch
          %1074 = sbr.rel (%p1072) target = $region116
        $region115: #{tpu_custom_call.1} parent=27 // pred_region
          %p1075 = scmp.lt.s32.totalorder %s63, 1
          %s1076 = scalar_select %p1075, %s63, 1
          %s1077 = scalar_lea.vmem %s22, %s1076
        $region116: #{tpu_custom_call.1} parent=27 // pred_fallthru
          _
      $region28: #{tpu_custom_call.1} parent=5 // pred_fallthru
        _
      %p1078 = scmp.le.s32.totalorder 1, %s55
      %p1079 = scmp.lt.s32.totalorder %s55, 5
      %p1080 = pnand %p1078, %p1079
      %p1081 = pneg %p1080
      // Predicated region
      $region117: #{tpu_custom_call.1} parent=5 // pred_check
        _
      $region118: #{tpu_custom_call.1} parent=5 // pred_check_branch
        %1083 = sbr.rel (%p1080) target = $region120
      $region119: #{tpu_custom_call.1} parent=5 // pred_region
        %s1084 = ssub.s32 %s55, 1
        %s1085 = sand.u32 %s80, 1
        %s1086 = scalar_lea.sflag [#allocation4], %s1085
        %s1087 = sand.u32 %s80, 1
        %s1088 = smul.addr %s1087, 8
        %s1089 = scalar_lea.vmem [#allocation3], %s1088
        // Predicated region
        $region121: #{tpu_custom_call.1} parent=119 // pred_check
          %p1090 = pneg %p93
        $region122: #{tpu_custom_call.1} parent=119 // pred_check_branch
          %1092 = sbr.rel (%p1090) target = $region124
        $region123: #{tpu_custom_call.1} parent=119 // pred_region
          %1093 = dma.done %s1086, 128
        $region124: #{tpu_custom_call.1} parent=119 // pred_fallthru
          _
        %s1094 = sand.u32 %s60, 1
        %s1095 = scalar_lea.sflag [#allocation7], %s1094
        %s1096 = sand.u32 %s106, 1
        %s1097 = smul.addr %s1096, 16
        %s1098 = scalar_lea.vmem [#allocation6], %s1097
        // Predicated region
        $region125: #{tpu_custom_call.1} parent=119 // pred_check
          %p1099 = pneg %p119
        $region126: #{tpu_custom_call.1} parent=119 // pred_check_branch
          %1101 = sbr.rel (%p1099) target = $region128
        $region127: #{tpu_custom_call.1} parent=119 // pred_region
          %1102 = dma.done %s1095, 256
        $region128: #{tpu_custom_call.1} parent=119 // pred_fallthru
          _
        %s1103 = sand.u32 %s60, 1
        %s1104 = scalar_lea.sflag [#allocation7], %s1103
        %s1105 = sand.u32 %s132, 1
        %s1106 = smul.addr %s1105, 8
        %s1107 = scalar_lea.vmem [#allocation8], %s1106
        // Predicated region
        $region129: #{tpu_custom_call.1} parent=119 // pred_check
          %p1108 = pneg %p145
        $region130: #{tpu_custom_call.1} parent=119 // pred_check_branch
          %1110 = sbr.rel (%p1108) target = $region132
        $region131: #{tpu_custom_call.1} parent=119 // pred_region
          %1111 = dma.done %s1104, 128
        $region132: #{tpu_custom_call.1} parent=119 // pred_fallthru
          _
        %s1112 = sand.u32 %s60, 1
        %s1113 = scalar_lea.sflag [#allocation10], %s1112
        %s1114 = sand.u32 %s205, 1
        %s1115 = smul.addr %s1114, 64
        %s1116 = scalar_lea.vmem [#allocation9], %s1115
        // Predicated region
        $region133: #{tpu_custom_call.1} parent=119 // pred_check
          %p1117 = pneg %p218
        $region134: #{tpu_custom_call.1} parent=119 // pred_check_branch
          %1119 = sbr.rel (%p1117) target = $region136
        $region135: #{tpu_custom_call.1} parent=119 // pred_region
          %1120 = dma.done %s1113, 1024
        $region136: #{tpu_custom_call.1} parent=119 // pred_fallthru
          _
        %s1121 = sand.u32 %s60, 1
        %s1122 = scalar_lea.sflag [#allocation10], %s1121
        %s1123 = sand.u32 %s231, 1
        %s1124 = smul.addr %s1123, 64
        %s1125 = scalar_lea.vmem [#allocation11], %s1124
        // Predicated region
        $region137: #{tpu_custom_call.1} parent=119 // pred_check
          %p1126 = pneg %p244
        $region138: #{tpu_custom_call.1} parent=119 // pred_check_branch
          %1128 = sbr.rel (%p1126) target = $region140
        $region139: #{tpu_custom_call.1} parent=119 // pred_region
          %1129 = dma.done %s1122, 1024
        $region140: #{tpu_custom_call.1} parent=119 // pred_fallthru
          _
        %s1130 = sand.u32 %s60, 1
        %s1131 = scalar_lea.sflag [#allocation13], %s1130
        %s1132 = sand.u32 %s257, 1
        %s1133 = smul.addr %s1132, 64
        %s1134 = scalar_lea.vmem [#allocation12], %s1133
        // Predicated region
        $region141: #{tpu_custom_call.1} parent=119 // pred_check
          %p1135 = pneg %p270
        $region142: #{tpu_custom_call.1} parent=119 // pred_check_branch
          %1137 = sbr.rel (%p1135) target = $region144
        $region143: #{tpu_custom_call.1} parent=119 // pred_region
          %1138 = dma.done %s1131, 1024
        $region144: #{tpu_custom_call.1} parent=119 // pred_fallthru
          _
        %s1139 = sand.u32 %s60, 1
        %s1140 = scalar_lea.sflag [#allocation13], %s1139
        %s1141 = sand.u32 %s283, 1
        %s1142 = smul.addr %s1141, 64
        %s1143 = scalar_lea.vmem [#allocation14], %s1142
        // Predicated region
        $region145: #{tpu_custom_call.1} parent=119 // pred_check
          %p1144 = pneg %p296
        $region146: #{tpu_custom_call.1} parent=119 // pred_check_branch
          %1146 = sbr.rel (%p1144) target = $region148
        $region147: #{tpu_custom_call.1} parent=119 // pred_region
          %1147 = dma.done %s1140, 1024
        $region148: #{tpu_custom_call.1} parent=119 // pred_fallthru
          _
        %s1148 = sand.u32 %s60, 1
        %s1149 = scalar_lea.sflag [#allocation16], %s1148
        %s1150 = sand.u32 %s361, 1
        %s1151 = smul.addr %s1150, 64
        %s1152 = scalar_lea.vmem [#allocation15], %s1151
        // Predicated region
        $region149: #{tpu_custom_call.1} parent=119 // pred_check
          %p1153 = pneg %p374
        $region150: #{tpu_custom_call.1} parent=119 // pred_check_branch
          %1155 = sbr.rel (%p1153) target = $region152
        $region151: #{tpu_custom_call.1} parent=119 // pred_region
          %1156 = dma.done %s1149, 1024
        $region152: #{tpu_custom_call.1} parent=119 // pred_fallthru
          _
        %s1157 = sand.u32 %s60, 1
        %s1158 = scalar_lea.sflag [#allocation16], %s1157
        %s1159 = sand.u32 %s387, 1
        %s1160 = smul.addr %s1159, 64
        %s1161 = scalar_lea.vmem [#allocation17], %s1160
        // Predicated region
        $region153: #{tpu_custom_call.1} parent=119 // pred_check
          %p1162 = pneg %p400
        $region154: #{tpu_custom_call.1} parent=119 // pred_check_branch
          %1164 = sbr.rel (%p1162) target = $region156
        $region155: #{tpu_custom_call.1} parent=119 // pred_region
          %1165 = dma.done %s1158, 1024
        $region156: #{tpu_custom_call.1} parent=119 // pred_fallthru
          _
        %s1166 = sand.u32 %s60, 1
        %s1167 = scalar_lea.sflag [#allocation19], %s1166
        %s1168 = sand.u32 %s413, 1
        %s1169 = smul.addr %s1168, 64
        %s1170 = scalar_lea.vmem [#allocation18], %s1169
        // Predicated region
        $region157: #{tpu_custom_call.1} parent=119 // pred_check
          %p1171 = pneg %p426
        $region158: #{tpu_custom_call.1} parent=119 // pred_check_branch
          %1173 = sbr.rel (%p1171) target = $region160
        $region159: #{tpu_custom_call.1} parent=119 // pred_region
          %1174 = dma.done %s1167, 1024
        $region160: #{tpu_custom_call.1} parent=119 // pred_fallthru
          _
        %s1175 = sand.u32 %s60, 1
        %s1176 = scalar_lea.sflag [#allocation19], %s1175
        %s1177 = sand.u32 %s439, 1
        %s1178 = smul.addr %s1177, 64
        %s1179 = scalar_lea.vmem [#allocation20], %s1178
        // Predicated region
        $region161: #{tpu_custom_call.1} parent=119 // pred_check
          %p1180 = pneg %p452
        $region162: #{tpu_custom_call.1} parent=119 // pred_check_branch
          %1182 = sbr.rel (%p1180) target = $region164
        $region163: #{tpu_custom_call.1} parent=119 // pred_region
          %1183 = dma.done %s1176, 1024
        $region164: #{tpu_custom_call.1} parent=119 // pred_fallthru
          _
        %s1184 = sand.u32 %s60, 1
        %s1185 = scalar_lea.sflag [#allocation22], %s1184
        %s1186 = sand.u32 %s517, 1
        %s1187 = smul.addr %s1186, 128
        %s1188 = scalar_lea.vmem [#allocation21], %s1187
        // Predicated region
        $region165: #{tpu_custom_call.1} parent=119 // pred_check
          %p1189 = pneg %p530
        $region166: #{tpu_custom_call.1} parent=119 // pred_check_branch
          %1191 = sbr.rel (%p1189) target = $region168
        $region167: #{tpu_custom_call.1} parent=119 // pred_region
          %1192 = dma.done %s1185, 2048
        $region168: #{tpu_custom_call.1} parent=119 // pred_fallthru
          _
        %s1193 = sand.u32 %s60, 1
        %s1194 = scalar_lea.sflag [#allocation22], %s1193
        %s1195 = sand.u32 %s569, 1
        %s1196 = smul.addr %s1195, 128
        %s1197 = scalar_lea.vmem [#allocation23], %s1196
        // Predicated region
        $region169: #{tpu_custom_call.1} parent=119 // pred_check
          %p1198 = pneg %p582
        $region170: #{tpu_custom_call.1} parent=119 // pred_check_branch
          %1200 = sbr.rel (%p1198) target = $region172
        $region171: #{tpu_custom_call.1} parent=119 // pred_region
          %1201 = dma.done %s1194, 2048
        $region172: #{tpu_custom_call.1} parent=119 // pred_fallthru
          _
        %s1202 = sand.u32 %s80, 1
        %s1203 = scalar_lea.sflag [#allocation4], %s1202
        %s1204 = sand.u32 %s80, 1
        %s1205 = smul.addr %s1204, 8
        %s1206 = scalar_lea.vmem [#allocation3], %s1205
        %p1207 = pneg %p93
        %p1208 = pneg %p90
        %s1209 = sand.u32 %s60, 1
        %s1210 = scalar_lea.sflag [#allocation7], %s1209
        %s1211 = sand.u32 %s106, 1
        %s1212 = smul.addr %s1211, 16
        %s1213 = scalar_lea.vmem [#allocation6], %s1212
        %p1214 = pneg %p119
        %p1215 = pneg %p116
        %s1216 = sand.u32 %s60, 1
        %s1217 = scalar_lea.sflag [#allocation7], %s1216
        %s1218 = sand.u32 %s132, 1
        %s1219 = smul.addr %s1218, 8
        %s1220 = scalar_lea.vmem [#allocation8], %s1219
        %p1221 = pneg %p145
        %p1222 = pneg %p142
        %p1223 = scmp.lt.s32.totalorder %s64, 1
        %s1224 = scalar_select %p1223, %s64, 1
        %s1225 = scalar_lea.vmem %s3, %s1224
        %p1226 = pneg %p171
        %p1227 = pneg %p168
        %p1228 = pneg %p192
        %p1229 = pneg %p189
        %s1230 = sand.u32 %s60, 1
        %s1231 = scalar_lea.sflag [#allocation10], %s1230
        %s1232 = sand.u32 %s205, 1
        %s1233 = smul.addr %s1232, 64
        %s1234 = scalar_lea.vmem [#allocation9], %s1233
        %p1235 = pneg %p218
        %p1236 = pneg %p215
        %s1237 = sand.u32 %s60, 1
        %s1238 = scalar_lea.sflag [#allocation10], %s1237
        %s1239 = sand.u32 %s231, 1
        %s1240 = smul.addr %s1239, 64
        %s1241 = scalar_lea.vmem [#allocation11], %s1240
        %p1242 = pneg %p244
        %p1243 = pneg %p241
        %s1244 = sand.u32 %s60, 1
        %s1245 = scalar_lea.sflag [#allocation13], %s1244
        %s1246 = sand.u32 %s257, 1
        %s1247 = smul.addr %s1246, 64
        %s1248 = scalar_lea.vmem [#allocation12], %s1247
        %p1249 = pneg %p270
        %p1250 = pneg %p267
        %s1251 = sand.u32 %s60, 1
        %s1252 = scalar_lea.sflag [#allocation13], %s1251
        %s1253 = sand.u32 %s283, 1
        %s1254 = smul.addr %s1253, 64
        %s1255 = scalar_lea.vmem [#allocation14], %s1254
        %p1256 = pneg %p296
        %p1257 = pneg %p293
        %p1258 = scmp.lt.s32.totalorder %s65, 1
        %s1259 = scalar_select %p1258, %s65, 1
        %s1260 = scalar_lea.vmem %s9, %s1259
        %p1261 = pneg %p322
        %p1262 = pneg %p319
        %p1263 = scmp.lt.s32.totalorder %s65, 1
        %s1264 = scalar_select %p1263, %s65, 1
        %s1265 = scalar_lea.vmem %s10, %s1264
        %p1266 = pneg %p348
        %p1267 = pneg %p345
        %s1268 = sand.u32 %s60, 1
        %s1269 = scalar_lea.sflag [#allocation16], %s1268
        %s1270 = sand.u32 %s361, 1
        %s1271 = smul.addr %s1270, 64
        %s1272 = scalar_lea.vmem [#allocation15], %s1271
        %p1273 = pneg %p374
        %p1274 = pneg %p371
        %s1275 = sand.u32 %s60, 1
        %s1276 = scalar_lea.sflag [#allocation16], %s1275
        %s1277 = sand.u32 %s387, 1
        %s1278 = smul.addr %s1277, 64
        %s1279 = scalar_lea.vmem [#allocation17], %s1278
        %p1280 = pneg %p400
        %p1281 = pneg %p397
        %s1282 = sand.u32 %s60, 1
        %s1283 = scalar_lea.sflag [#allocation19], %s1282
        %s1284 = sand.u32 %s413, 1
        %s1285 = smul.addr %s1284, 64
        %s1286 = scalar_lea.vmem [#allocation18], %s1285
        %p1287 = pneg %p426
        %p1288 = pneg %p423
        %s1289 = sand.u32 %s60, 1
        %s1290 = scalar_lea.sflag [#allocation19], %s1289
        %s1291 = sand.u32 %s439, 1
        %s1292 = smul.addr %s1291, 64
        %s1293 = scalar_lea.vmem [#allocation20], %s1292
        %p1294 = pneg %p452
        %p1295 = pneg %p449
        %p1296 = scmp.lt.s32.totalorder %s65, 1
        %s1297 = scalar_select %p1296, %s65, 1
        %s1298 = scalar_lea.vmem %s15, %s1297
        %p1299 = pneg %p478
        %p1300 = pneg %p475
        %p1301 = scmp.lt.s32.totalorder %s65, 1
        %s1302 = scalar_select %p1301, %s65, 1
        %s1303 = scalar_lea.vmem %s16, %s1302
        %p1304 = pneg %p504
        %p1305 = pneg %p501
        %s1306 = sand.u32 %s60, 1
        %s1307 = scalar_lea.sflag [#allocation22], %s1306
        %s1308 = sand.u32 %s517, 1
        %s1309 = smul.addr %s1308, 128
        %s1310 = scalar_lea.vmem [#allocation21], %s1309
        %p1311 = pneg %p530
        %p1312 = pneg %p527
        %p1313 = scmp.lt.s32.totalorder %s65, 1
        %s1314 = scalar_select %p1313, %s65, 1
        %s1315 = smul.addr %s1314, 2
        %s1316 = scalar_lea.vmem %s18, %s1315
        %p1317 = pneg %p556
        %p1318 = pneg %p553
        %s1319 = sand.u32 %s60, 1
        %s1320 = scalar_lea.sflag [#allocation22], %s1319
        %s1321 = sand.u32 %s569, 1
        %s1322 = smul.addr %s1321, 128
        %s1323 = scalar_lea.vmem [#allocation23], %s1322
        %p1324 = pneg %p582
        %p1325 = pneg %p579
        %p1326 = scmp.lt.s32.totalorder %s65, 1
        %s1327 = scalar_select %p1326, %s65, 1
        %s1328 = scalar_lea.vmem %s20, %s1327
        %p1329 = pneg %p608
        %p1330 = pneg %p605
        %p1331 = scmp.lt.s32.totalorder %s65, 1
        %s1332 = scalar_select %p1331, %s65, 1
        %s1333 = scalar_lea.vmem %s21, %s1332
        %p1334 = pneg %p634
        %p1335 = pneg %p631
        %p1336 = scmp.lt.s32.totalorder %s65, 1
        %s1337 = scalar_select %p1336, %s65, 1
        %s1338 = scalar_lea.vmem %s22, %s1337
        %p1339 = pneg %p660
        %p1340 = pneg %p657
        %p1341 = pneg %p681
        %p1342 = pneg %p678
        %p1343 = pneg %p702
        %p1344 = pneg %p699
        %p1345 = pneg %p728
        %p1346 = pneg %p725
        %s1347 = sand.u32 %s715, 1
        %s1348 = scalar_lea.sflag [#allocation5], %s1347
        %s1349 = sand.u32 %s715, 1
        %s1350 = smul.addr %s1349, 8
        %s1351 = scalar_lea.vmem [#allocation24], %s1350
        %p1352 = scmp.lt.s32.totalorder %s64, 1
        %s1353 = scalar_select %p1352, %s64, 1
        %s1354 = scalar_lea.vmem %s3, %s1353
        %p1355 = scmp.lt.s32.totalorder %s65, 1
        %s1356 = scalar_select %p1355, %s65, 1
        %s1357 = scalar_lea.vmem %s9, %s1356
        %p1358 = scmp.lt.s32.totalorder %s65, 1
        %s1359 = scalar_select %p1358, %s65, 1
        %s1360 = scalar_lea.vmem %s10, %s1359
        %p1361 = scmp.lt.s32.totalorder %s65, 1
        %s1362 = scalar_select %p1361, %s65, 1
        %s1363 = scalar_lea.vmem %s15, %s1362
        %p1364 = scmp.lt.s32.totalorder %s65, 1
        %s1365 = scalar_select %p1364, %s65, 1
        %s1366 = scalar_lea.vmem %s16, %s1365
        %p1367 = scmp.lt.s32.totalorder %s65, 1
        %s1368 = scalar_select %p1367, %s65, 1
        %s1369 = smul.addr %s1368, 2
        %s1370 = scalar_lea.vmem %s18, %s1369
        %p1371 = scmp.lt.s32.totalorder %s65, 1
        %s1372 = scalar_select %p1371, %s65, 1
        %s1373 = scalar_lea.vmem %s20, %s1372
        %p1374 = scmp.lt.s32.totalorder %s65, 1
        %s1375 = scalar_select %p1374, %s65, 1
        %s1376 = scalar_lea.vmem %s21, %s1375
        %p1377 = scmp.lt.s32.totalorder %s65, 1
        %s1378 = scalar_select %p1377, %s65, 1
        %s1379 = scalar_lea.vmem %s22, %s1378
        %p1381 = scmp.eq.s32.totalorder %s65, 0
        // Predicated region
        $region173: #{tpu_custom_call.1} parent=119 // pred_check
          %p1382 = pneg %p1381
        $region174: #{tpu_custom_call.1} parent=119 // pred_check_branch
          %1384 = sbr.rel (%p1382) target = $region176
        $region175: #{tpu_custom_call.1} parent=119 // pred_region
          %v1385 = vld [vmem:[%s1089] sm:$0xff]
          %v1386 = vld [vmem:[%s4] sm:$0xff]
          %v1387 = vadd.f32 %v1385, %v1386
          %1388 = vst [vmem:[#allocation2] sm:$0xff] %v1387
        $region176: #{tpu_custom_call.1} parent=119 // pred_fallthru
          _
        %v1389 = vld [vmem:[#allocation2] sm:$0xff]
        %v1390 = vld [vmem:[%s1098] sm:$0xff]
        %v1391 = vld [vmem:[%s1098 + $0x8] sm:$0xff]
        %v1392 = vld [vmem:[%s1107] sm:$0xff]
        %v1393 = vsub.f32 %v1392, 1.0
        %v1394 = vmul.f32 %v1393, 1e+09
        %v1395 = vld [vmem:[%s1354] sm:$0x1]
        %v1396 = vsub.f32 %v1395, 1.0
        %v1397 = vmul.f32 %v1396, 1e+09
        %v1398 = vld [vmem:[%s1116] sm:$0xf]
        %v1399 = vld [vmem:[%s1116 + $0x4] sm:$0xf]
        %v1400 = vld [vmem:[%s1116 + $0x8] sm:$0xf]
        %v1401 = vld [vmem:[%s1116 + $0xc] sm:$0xf]
        %v1402 = vld [vmem:[%s1116 + $0x10] sm:$0xf]
        %v1403 = vld [vmem:[%s1116 + $0x14] sm:$0xf]
        %v1404 = vld [vmem:[%s1116 + $0x18] sm:$0xf]
        %v1405 = vld [vmem:[%s1116 + $0x1c] sm:$0xf]
        %v1406 = vld [vmem:[%s1116 + $0x20] sm:$0xf]
        %v1407 = vld [vmem:[%s1116 + $0x24] sm:$0xf]
        %v1408 = vld [vmem:[%s1116 + $0x28] sm:$0xf]
        %v1409 = vld [vmem:[%s1116 + $0x2c] sm:$0xf]
        %v1410 = vld [vmem:[%s1116 + $0x30] sm:$0xf]
        %v1411 = vld [vmem:[%s1116 + $0x34] sm:$0xf]
        %v1412 = vld [vmem:[%s1116 + $0x38] sm:$0xf]
        %v1413 = vld [vmem:[%s1116 + $0x3c] sm:$0xf]
        %v1414 = vld [vmem:[%s1125] sm:$0xf]
        %v1415 = vld [vmem:[%s1125 + $0x4] sm:$0xf]
        %v1416 = vld [vmem:[%s1125 + $0x8] sm:$0xf]
        %v1417 = vld [vmem:[%s1125 + $0xc] sm:$0xf]
        %v1418 = vld [vmem:[%s1125 + $0x10] sm:$0xf]
        %v1419 = vld [vmem:[%s1125 + $0x14] sm:$0xf]
        %v1420 = vld [vmem:[%s1125 + $0x18] sm:$0xf]
        %v1421 = vld [vmem:[%s1125 + $0x1c] sm:$0xf]
        %v1422 = vld [vmem:[%s1125 + $0x20] sm:$0xf]
        %v1423 = vld [vmem:[%s1125 + $0x24] sm:$0xf]
        %v1424 = vld [vmem:[%s1125 + $0x28] sm:$0xf]
        %v1425 = vld [vmem:[%s1125 + $0x2c] sm:$0xf]
        %v1426 = vld [vmem:[%s1125 + $0x30] sm:$0xf]
        %v1427 = vld [vmem:[%s1125 + $0x34] sm:$0xf]
        %v1428 = vld [vmem:[%s1125 + $0x38] sm:$0xf]
        %v1429 = vld [vmem:[%s1125 + $0x3c] sm:$0xf]
        %v1430 = vld [vmem:[%s1134] sm:$0xf]
        %v1431 = vld [vmem:[%s1134 + $0x4] sm:$0xf]
        %v1432 = vld [vmem:[%s1134 + $0x8] sm:$0xf]
        %v1433 = vld [vmem:[%s1134 + $0xc] sm:$0xf]
        %v1434 = vld [vmem:[%s1134 + $0x10] sm:$0xf]
        %v1435 = vld [vmem:[%s1134 + $0x14] sm:$0xf]
        %v1436 = vld [vmem:[%s1134 + $0x18] sm:$0xf]
        %v1437 = vld [vmem:[%s1134 + $0x1c] sm:$0xf]
        %v1438 = vld [vmem:[%s1134 + $0x20] sm:$0xf]
        %v1439 = vld [vmem:[%s1134 + $0x24] sm:$0xf]
        %v1440 = vld [vmem:[%s1134 + $0x28] sm:$0xf]
        %v1441 = vld [vmem:[%s1134 + $0x2c] sm:$0xf]
        %v1442 = vld [vmem:[%s1134 + $0x30] sm:$0xf]
        %v1443 = vld [vmem:[%s1134 + $0x34] sm:$0xf]
        %v1444 = vld [vmem:[%s1134 + $0x38] sm:$0xf]
        %v1445 = vld [vmem:[%s1134 + $0x3c] sm:$0xf]
        %v1446 = vld [vmem:[%s1143] sm:$0xf]
        %v1447 = vld [vmem:[%s1143 + $0x4] sm:$0xf]
        %v1448 = vld [vmem:[%s1143 + $0x8] sm:$0xf]
        %v1449 = vld [vmem:[%s1143 + $0xc] sm:$0xf]
        %v1450 = vld [vmem:[%s1143 + $0x10] sm:$0xf]
        %v1451 = vld [vmem:[%s1143 + $0x14] sm:$0xf]
        %v1452 = vld [vmem:[%s1143 + $0x18] sm:$0xf]
        %v1453 = vld [vmem:[%s1143 + $0x1c] sm:$0xf]
        %v1454 = vld [vmem:[%s1143 + $0x20] sm:$0xf]
        %v1455 = vld [vmem:[%s1143 + $0x24] sm:$0xf]
        %v1456 = vld [vmem:[%s1143 + $0x28] sm:$0xf]
        %v1457 = vld [vmem:[%s1143 + $0x2c] sm:$0xf]
        %v1458 = vld [vmem:[%s1143 + $0x30] sm:$0xf]
        %v1459 = vld [vmem:[%s1143 + $0x34] sm:$0xf]
        %v1460 = vld [vmem:[%s1143 + $0x38] sm:$0xf]
        %v1461 = vld [vmem:[%s1143 + $0x3c] sm:$0xf]
        %v1462 = vld [vmem:[%s1357] sm:$0x1]
        %v1463 = vld [vmem:[%s1360] sm:$0x1]
        %v1464 = vpack.c.bf16 %v1389, %v1389
        %v1481 = vunpack.c.l.b16 %v1398
        %v1482 = vunpack.c.l.b16 %v1399
        %v1483 = vunpack.c.l.b16 %v1400
        %v1484 = vunpack.c.l.b16 %v1401
        %v1485 = vunpack.c.l.b16 %v1402
        %v1486 = vunpack.c.l.b16 %v1403
        %v1487 = vunpack.c.l.b16 %v1404
        %v1488 = vunpack.c.l.b16 %v1405
        %v1489 = vunpack.c.l.b16 %v1406
        %v1490 = vunpack.c.l.b16 %v1407
        %v1491 = vunpack.c.l.b16 %v1408
        %v1492 = vunpack.c.l.b16 %v1409
        %v1493 = vunpack.c.l.b16 %v1410
        %v1494 = vunpack.c.l.b16 %v1411
        %v1495 = vunpack.c.l.b16 %v1412
        %v1496 = vunpack.c.l.b16 %v1413
        %v1497 = vpack.c.b16 %v1482, %v1481
        %v1498 = vpack.c.b16 %v1484, %v1483
        %v1499 = vpack.c.b16 %v1486, %v1485
        %v1500 = vpack.c.b16 %v1488, %v1487
        %v1501 = vpack.c.b16 %v1490, %v1489
        %v1502 = vpack.c.b16 %v1492, %v1491
        %v1503 = vpack.c.b16 %v1494, %v1493
        %v1504 = vpack.c.b16 %v1496, %v1495
        %1513 = vmatprep.subr.bf16.mxu0 0
        %1514 = vmatpush1.bf16.msra.mxu0 %v1497
        %1515 = vmatprep.subr.bf16.mxu0 0
        %1516 = vmatpush1.bf16.msra.mxu0 %v1498
        %1517 = vmatprep.subr.bf16.mxu0 0
        %1518 = vmatpush1.bf16.msra.mxu0 %v1499
        %1519 = vmatprep.subr.bf16.mxu0 0
        %1520 = vmatpush1.bf16.msra.mxu0 %v1500
        %1521 = vmatprep.subr.bf16.mxu0 0
        %1522 = vmatpush1.bf16.msra.mxu0 %v1501
        %1523 = vmatprep.subr.bf16.mxu0 0
        %1524 = vmatpush1.bf16.msra.mxu0 %v1502
        %1525 = vmatprep.subr.bf16.mxu0 0
        %1526 = vmatpush1.bf16.msra.mxu0 %v1503
        %1527 = vmatprep.subr.bf16.mxu0 0
        %1528 = vmatpush1.bf16.msra.mxu0 %v1504
        %1529 = vmatprep.subr.bf16.mxu0 0
        %1530 = vmatpush1.bf16.msra.mxu0 0
        %1531 = vmatprep.subr.bf16.mxu0 0
        %1532 = vmatpush1.bf16.msra.mxu0 0
        %1533 = vmatprep.subr.bf16.mxu0 0
        %1534 = vmatpush1.bf16.msra.mxu0 0
        %1535 = vmatprep.subr.bf16.mxu0 0
        %1536 = vmatpush1.bf16.msra.mxu0 0
        %1537 = vmatprep.subr.bf16.mxu0 0
        %1538 = vmatpush1.bf16.msra.mxu0 0
        %1539 = vmatprep.subr.bf16.mxu0 0
        %1540 = vmatpush1.bf16.msra.mxu0 0
        %1541 = vmatprep.subr.bf16.mxu0 0
        %1542 = vmatpush1.bf16.msra.mxu0 0
        %1543 = vmatprep.subr.bf16.mxu0 0
        %1544 = vmatpush1.bf16.msra.mxu0 0
        %1545 = vmatprep.mubr.bf16.mxu0 0
        %1546 = vmatmul.mubr.bf16.gmra.mrb[0].mxu0 %v1464
        %v1547 = vpop.f32.mrb[0].mxu0
        %v1548 = vadd.f32 0.0, %v1547
        %v1549 = vpop.f32.mrb[0].mxu0
        %v1550 = vpop.f32.mrb[0].mxu0
        %v1551 = vpop.f32.mrb[0].mxu0
        %1552 = vdwg.mxu0
        %1554 = vrot.lane.b32.xlu0 %v1548, 96
        %v1555 = vpop.permute.xlu0 %1554
        %1557 = vrot.lane.b32.xlu0 %v1548, 64
        %v1558 = vpop.permute.xlu0 %1557
        %1560 = vrot.lane.b32.xlu0 %v1548, 32
        %v1561 = vpop.permute.xlu0 %1560
        %v1563 = vcombine.low %v1548, %v1558
        %v1564 = vcombine.high %v1548, %v1558
        %v1566 = vunpack.c.l.s4 1983009808
        %v1567 = vunpack.c.0.s8 %v1566
        %v1568 = vlaneseq
        %v1569 = vshrl.u32 %v1568, 7
        %v1570 = vsub.s32 %v1567, %v1569
        %v1571 = vrot.slane %v1563, %v1570
        %v1573 = vunpack.c.l.s4 1983009808
        %v1574 = vunpack.c.0.s8 %v1573
        %v1575 = vlaneseq
        %v1576 = vshrl.u32 %v1575, 7
        %v1577 = vsub.s32 %v1574, %v1576
        %v1578 = vrot.slane %v1564, %v1577
        %v1579 = vcombine.low %v1555, %v1561
        %v1580 = vcombine.high %v1555, %v1561
        %v1582 = vunpack.c.l.s4 1983009808
        %v1583 = vunpack.c.0.s8 %v1582
        %v1584 = vlaneseq
        %v1585 = vshrl.u32 %v1584, 7
        %v1586 = vsub.s32 %v1583, %v1585
        %v1587 = vrot.slane %v1579, %v1586
        %v1589 = vunpack.c.l.s4 1983009808
        %v1590 = vunpack.c.0.s8 %v1589
        %v1591 = vlaneseq
        %v1592 = vshrl.u32 %v1591, 7
        %v1593 = vsub.s32 %v1590, %v1592
        %v1594 = vrot.slane %v1580, %v1593
        %v1595 = vcombine.low %v1571, %v1587
        %v1596 = vcombine.high %v1571, %v1587
        %v1598 = vunpack.c.l.s4 1934713408
        %v1599 = vunpack.c.0.s8 %v1598
        %v1600 = vlaneseq
        %v1601 = vshrl.u32 %v1600, 7
        %v1602 = vsub.s32 %v1599, %v1601
        %v1603 = vrot.slane %v1595, %v1602
        %v1605 = vunpack.c.l.s4 1934713408
        %v1606 = vunpack.c.0.s8 %v1605
        %v1607 = vlaneseq
        %v1608 = vshrl.u32 %v1607, 7
        %v1609 = vsub.s32 %v1606, %v1608
        %v1610 = vrot.slane %v1596, %v1609
        %v1611 = vcombine.low %v1578, %v1594
        %v1612 = vcombine.high %v1578, %v1594
        %v1614 = vunpack.c.l.s4 1934713408
        %v1615 = vunpack.c.0.s8 %v1614
        %v1616 = vlaneseq
        %v1617 = vshrl.u32 %v1616, 7
        %v1618 = vsub.s32 %v1615, %v1617
        %v1619 = vrot.slane %v1611, %v1618
        %v1621 = vunpack.c.l.s4 1934713408
        %v1622 = vunpack.c.0.s8 %v1621
        %v1623 = vlaneseq
        %v1624 = vshrl.u32 %v1623, 7
        %v1625 = vsub.s32 %v1622, %v1624
        %v1626 = vrot.slane %v1612, %v1625
        %v1627 = vcombine.high %v1603, 0.0
        %v1628 = vcombine.high %v1610, 0.0
        %v1629 = vcombine.high %v1619, 0.0
        %v1630 = vcombine.high %v1626, 0.0
        %v1631 = vpack.c.bf16 %v1603, %v1603
        %v1632 = vpack.c.bf16 %v1627, %v1627
        %v1633 = vpack.c.bf16 %v1610, %v1610
        %v1634 = vpack.c.bf16 %v1628, %v1628
        %v1635 = vpack.c.bf16 %v1619, %v1619
        %v1636 = vpack.c.bf16 %v1629, %v1629
        %v1637 = vpack.c.bf16 %v1626, %v1626
        %v1638 = vpack.c.bf16 %v1630, %v1630
        %v1655 = vunpack.c.l.b16 %v1414
        %v1656 = vunpack.c.l.b16 %v1415
        %v1657 = vunpack.c.l.b16 %v1416
        %v1658 = vunpack.c.l.b16 %v1417
        %v1659 = vunpack.c.l.b16 %v1418
        %v1660 = vunpack.c.l.b16 %v1419
        %v1661 = vunpack.c.l.b16 %v1420
        %v1662 = vunpack.c.l.b16 %v1421
        %v1663 = vunpack.c.l.b16 %v1422
        %v1664 = vunpack.c.l.b16 %v1423
        %v1665 = vunpack.c.l.b16 %v1424
        %v1666 = vunpack.c.l.b16 %v1425
        %v1667 = vunpack.c.l.b16 %v1426
        %v1668 = vunpack.c.l.b16 %v1427
        %v1669 = vunpack.c.l.b16 %v1428
        %v1670 = vunpack.c.l.b16 %v1429
        %v1671 = vpack.c.b16 %v1656, %v1655
        %v1672 = vpack.c.b16 %v1658, %v1657
        %v1673 = vpack.c.b16 %v1660, %v1659
        %v1674 = vpack.c.b16 %v1662, %v1661
        %v1675 = vpack.c.b16 %v1664, %v1663
        %v1676 = vpack.c.b16 %v1666, %v1665
        %v1677 = vpack.c.b16 %v1668, %v1667
        %v1678 = vpack.c.b16 %v1670, %v1669
        %1687 = vmatprep.subr.bf16.mxu0 0
        %1688 = vmatpush1.bf16.msra.mxu0 %v1671
        %1689 = vmatprep.subr.bf16.mxu0 0
        %1690 = vmatpush1.bf16.msra.mxu0 %v1672
        %1691 = vmatprep.subr.bf16.mxu0 0
        %1692 = vmatpush1.bf16.msra.mxu0 %v1673
        %1693 = vmatprep.subr.bf16.mxu0 0
        %1694 = vmatpush1.bf16.msra.mxu0 %v1674
        %1695 = vmatprep.subr.bf16.mxu0 0
        %1696 = vmatpush1.bf16.msra.mxu0 %v1675
        %1697 = vmatprep.subr.bf16.mxu0 0
        %1698 = vmatpush1.bf16.msra.mxu0 %v1676
        %1699 = vmatprep.subr.bf16.mxu0 0
        %1700 = vmatpush1.bf16.msra.mxu0 %v1677
        %1701 = vmatprep.subr.bf16.mxu0 0
        %1702 = vmatpush1.bf16.msra.mxu0 %v1678
        %1703 = vmatprep.subr.bf16.mxu0 0
        %1704 = vmatpush1.bf16.msra.mxu0 0
        %1705 = vmatprep.subr.bf16.mxu0 0
        %1706 = vmatpush1.bf16.msra.mxu0 0
        %1707 = vmatprep.subr.bf16.mxu0 0
        %1708 = vmatpush1.bf16.msra.mxu0 0
        %1709 = vmatprep.subr.bf16.mxu0 0
        %1710 = vmatpush1.bf16.msra.mxu0 0
        %1711 = vmatprep.subr.bf16.mxu0 0
        %1712 = vmatpush1.bf16.msra.mxu0 0
        %1713 = vmatprep.subr.bf16.mxu0 0
        %1714 = vmatpush1.bf16.msra.mxu0 0
        %1715 = vmatprep.subr.bf16.mxu0 0
        %1716 = vmatpush1.bf16.msra.mxu0 0
        %1717 = vmatprep.subr.bf16.mxu0 0
        %1718 = vmatpush1.bf16.msra.mxu0 0
        %1719 = vmatprep.mubr.bf16.mxu0 0
        %1720 = vmatmul.mubr.bf16.gmra.mrb[0].mxu0 %v1464
        %v1721 = vpop.f32.mrb[0].mxu0
        %v1722 = vadd.f32 0.0, %v1721
        %v1723 = vpop.f32.mrb[0].mxu0
        %v1724 = vpop.f32.mrb[0].mxu0
        %v1725 = vpop.f32.mrb[0].mxu0
        %1726 = vdwg.mxu0
        %1728 = vrot.lane.b32.xlu0 %v1722, 96
        %v1729 = vpop.permute.xlu0 %1728
        %1731 = vrot.lane.b32.xlu0 %v1722, 64
        %v1732 = vpop.permute.xlu0 %1731
        %1734 = vrot.lane.b32.xlu0 %v1722, 32
        %v1735 = vpop.permute.xlu0 %1734
        %v1737 = vcombine.low %v1722, %v1732
        %v1738 = vcombine.high %v1722, %v1732
        %v1740 = vunpack.c.l.s4 1983009808
        %v1741 = vunpack.c.0.s8 %v1740
        %v1742 = vlaneseq
        %v1743 = vshrl.u32 %v1742, 7
        %v1744 = vsub.s32 %v1741, %v1743
        %v1745 = vrot.slane %v1737, %v1744
        %v1747 = vunpack.c.l.s4 1983009808
        %v1748 = vunpack.c.0.s8 %v1747
        %v1749 = vlaneseq
        %v1750 = vshrl.u32 %v1749, 7
        %v1751 = vsub.s32 %v1748, %v1750
        %v1752 = vrot.slane %v1738, %v1751
        %v1753 = vcombine.low %v1729, %v1735
        %v1754 = vcombine.high %v1729, %v1735
        %v1756 = vunpack.c.l.s4 1983009808
        %v1757 = vunpack.c.0.s8 %v1756
        %v1758 = vlaneseq
        %v1759 = vshrl.u32 %v1758, 7
        %v1760 = vsub.s32 %v1757, %v1759
        %v1761 = vrot.slane %v1753, %v1760
        %v1763 = vunpack.c.l.s4 1983009808
        %v1764 = vunpack.c.0.s8 %v1763
        %v1765 = vlaneseq
        %v1766 = vshrl.u32 %v1765, 7
        %v1767 = vsub.s32 %v1764, %v1766
        %v1768 = vrot.slane %v1754, %v1767
        %v1769 = vcombine.low %v1745, %v1761
        %v1770 = vcombine.high %v1745, %v1761
        %v1772 = vunpack.c.l.s4 1934713408
        %v1773 = vunpack.c.0.s8 %v1772
        %v1774 = vlaneseq
        %v1775 = vshrl.u32 %v1774, 7
        %v1776 = vsub.s32 %v1773, %v1775
        %v1777 = vrot.slane %v1769, %v1776
        %v1779 = vunpack.c.l.s4 1934713408
        %v1780 = vunpack.c.0.s8 %v1779
        %v1781 = vlaneseq
        %v1782 = vshrl.u32 %v1781, 7
        %v1783 = vsub.s32 %v1780, %v1782
        %v1784 = vrot.slane %v1770, %v1783
        %v1785 = vcombine.low %v1752, %v1768
        %v1786 = vcombine.high %v1752, %v1768
        %v1788 = vunpack.c.l.s4 1934713408
        %v1789 = vunpack.c.0.s8 %v1788
        %v1790 = vlaneseq
        %v1791 = vshrl.u32 %v1790, 7
        %v1792 = vsub.s32 %v1789, %v1791
        %v1793 = vrot.slane %v1785, %v1792
        %v1795 = vunpack.c.l.s4 1934713408
        %v1796 = vunpack.c.0.s8 %v1795
        %v1797 = vlaneseq
        %v1798 = vshrl.u32 %v1797, 7
        %v1799 = vsub.s32 %v1796, %v1798
        %v1800 = vrot.slane %v1786, %v1799
        %v1801 = vcombine.high %v1777, 0.0
        %v1802 = vcombine.high %v1784, 0.0
        %v1803 = vcombine.high %v1793, 0.0
        %v1804 = vcombine.high %v1800, 0.0
        %v1805 = vpack.c.bf16 %v1777, %v1777
        %v1806 = vpack.c.bf16 %v1801, %v1801
        %v1807 = vpack.c.bf16 %v1784, %v1784
        %v1808 = vpack.c.bf16 %v1802, %v1802
        %v1809 = vpack.c.bf16 %v1793, %v1793
        %v1810 = vpack.c.bf16 %v1803, %v1803
        %v1811 = vpack.c.bf16 %v1800, %v1800
        %v1812 = vpack.c.bf16 %v1804, %v1804
        %v1829 = vunpack.c.l.b16 %v1430
        %v1830 = vunpack.c.l.b16 %v1431
        %v1831 = vunpack.c.l.b16 %v1432
        %v1832 = vunpack.c.l.b16 %v1433
        %v1833 = vunpack.c.l.b16 %v1434
        %v1834 = vunpack.c.l.b16 %v1435
        %v1835 = vunpack.c.l.b16 %v1436
        %v1836 = vunpack.c.l.b16 %v1437
        %v1837 = vunpack.c.l.b16 %v1438
        %v1838 = vunpack.c.l.b16 %v1439
        %v1839 = vunpack.c.l.b16 %v1440
        %v1840 = vunpack.c.l.b16 %v1441
        %v1841 = vunpack.c.l.b16 %v1442
        %v1842 = vunpack.c.l.b16 %v1443
        %v1843 = vunpack.c.l.b16 %v1444
        %v1844 = vunpack.c.l.b16 %v1445
        %v1845 = vpack.c.b16 %v1830, %v1829
        %v1846 = vpack.c.b16 %v1832, %v1831
        %v1847 = vpack.c.b16 %v1834, %v1833
        %v1848 = vpack.c.b16 %v1836, %v1835
        %v1849 = vpack.c.b16 %v1838, %v1837
        %v1850 = vpack.c.b16 %v1840, %v1839
        %v1851 = vpack.c.b16 %v1842, %v1841
        %v1852 = vpack.c.b16 %v1844, %v1843
        %1861 = vmatprep.subr.bf16.mxu0 0
        %1862 = vmatpush1.bf16.msra.mxu0 %v1845
        %1863 = vmatprep.subr.bf16.mxu0 0
        %1864 = vmatpush1.bf16.msra.mxu0 %v1846
        %1865 = vmatprep.subr.bf16.mxu0 0
        %1866 = vmatpush1.bf16.msra.mxu0 %v1847
        %1867 = vmatprep.subr.bf16.mxu0 0
        %1868 = vmatpush1.bf16.msra.mxu0 %v1848
        %1869 = vmatprep.subr.bf16.mxu0 0
        %1870 = vmatpush1.bf16.msra.mxu0 %v1849
        %1871 = vmatprep.subr.bf16.mxu0 0
        %1872 = vmatpush1.bf16.msra.mxu0 %v1850
        %1873 = vmatprep.subr.bf16.mxu0 0
        %1874 = vmatpush1.bf16.msra.mxu0 %v1851
        %1875 = vmatprep.subr.bf16.mxu0 0
        %1876 = vmatpush1.bf16.msra.mxu0 %v1852
        %1877 = vmatprep.subr.bf16.mxu0 0
        %1878 = vmatpush1.bf16.msra.mxu0 0
        %1879 = vmatprep.subr.bf16.mxu0 0
        %1880 = vmatpush1.bf16.msra.mxu0 0
        %1881 = vmatprep.subr.bf16.mxu0 0
        %1882 = vmatpush1.bf16.msra.mxu0 0
        %1883 = vmatprep.subr.bf16.mxu0 0
        %1884 = vmatpush1.bf16.msra.mxu0 0
        %1885 = vmatprep.subr.bf16.mxu0 0
        %1886 = vmatpush1.bf16.msra.mxu0 0
        %1887 = vmatprep.subr.bf16.mxu0 0
        %1888 = vmatpush1.bf16.msra.mxu0 0
        %1889 = vmatprep.subr.bf16.mxu0 0
        %1890 = vmatpush1.bf16.msra.mxu0 0
        %1891 = vmatprep.subr.bf16.mxu0 0
        %1892 = vmatpush1.bf16.msra.mxu0 0
        %1893 = vmatprep.mubr.bf16.mxu0 0
        %1894 = vmatmul.mubr.bf16.gmra.mrb[0].mxu0 %v1464
        %v1895 = vpop.f32.mrb[0].mxu0
        %v1896 = vadd.f32 0.0, %v1895
        %v1897 = vpop.f32.mrb[0].mxu0
        %v1898 = vpop.f32.mrb[0].mxu0
        %v1899 = vpop.f32.mrb[0].mxu0
        %1900 = vdwg.mxu0
        %1902 = vrot.lane.b32.xlu0 %v1896, 96
        %v1903 = vpop.permute.xlu0 %1902
        %1905 = vrot.lane.b32.xlu0 %v1896, 64
        %v1906 = vpop.permute.xlu0 %1905
        %1908 = vrot.lane.b32.xlu0 %v1896, 32
        %v1909 = vpop.permute.xlu0 %1908
        %v1911 = vcombine.low %v1896, %v1906
        %v1912 = vcombine.high %v1896, %v1906
        %v1914 = vunpack.c.l.s4 1983009808
        %v1915 = vunpack.c.0.s8 %v1914
        %v1916 = vlaneseq
        %v1917 = vshrl.u32 %v1916, 7
        %v1918 = vsub.s32 %v1915, %v1917
        %v1919 = vrot.slane %v1911, %v1918
        %v1921 = vunpack.c.l.s4 1983009808
        %v1922 = vunpack.c.0.s8 %v1921
        %v1923 = vlaneseq
        %v1924 = vshrl.u32 %v1923, 7
        %v1925 = vsub.s32 %v1922, %v1924
        %v1926 = vrot.slane %v1912, %v1925
        %v1927 = vcombine.low %v1903, %v1909
        %v1928 = vcombine.high %v1903, %v1909
        %v1930 = vunpack.c.l.s4 1983009808
        %v1931 = vunpack.c.0.s8 %v1930
        %v1932 = vlaneseq
        %v1933 = vshrl.u32 %v1932, 7
        %v1934 = vsub.s32 %v1931, %v1933
        %v1935 = vrot.slane %v1927, %v1934
        %v1937 = vunpack.c.l.s4 1983009808
        %v1938 = vunpack.c.0.s8 %v1937
        %v1939 = vlaneseq
        %v1940 = vshrl.u32 %v1939, 7
        %v1941 = vsub.s32 %v1938, %v1940
        %v1942 = vrot.slane %v1928, %v1941
        %v1943 = vcombine.low %v1919, %v1935
        %v1944 = vcombine.high %v1919, %v1935
        %v1946 = vunpack.c.l.s4 1934713408
        %v1947 = vunpack.c.0.s8 %v1946
        %v1948 = vlaneseq
        %v1949 = vshrl.u32 %v1948, 7
        %v1950 = vsub.s32 %v1947, %v1949
        %v1951 = vrot.slane %v1943, %v1950
        %v1953 = vunpack.c.l.s4 1934713408
        %v1954 = vunpack.c.0.s8 %v1953
        %v1955 = vlaneseq
        %v1956 = vshrl.u32 %v1955, 7
        %v1957 = vsub.s32 %v1954, %v1956
        %v1958 = vrot.slane %v1944, %v1957
        %v1959 = vcombine.low %v1926, %v1942
        %v1960 = vcombine.high %v1926, %v1942
        %v1962 = vunpack.c.l.s4 1934713408
        %v1963 = vunpack.c.0.s8 %v1962
        %v1964 = vlaneseq
        %v1965 = vshrl.u32 %v1964, 7
        %v1966 = vsub.s32 %v1963, %v1965
        %v1967 = vrot.slane %v1959, %v1966
        %v1969 = vunpack.c.l.s4 1934713408
        %v1970 = vunpack.c.0.s8 %v1969
        %v1971 = vlaneseq
        %v1972 = vshrl.u32 %v1971, 7
        %v1973 = vsub.s32 %v1970, %v1972
        %v1974 = vrot.slane %v1960, %v1973
        %v1975 = vcombine.high %v1951, 0.0
        %v1976 = vcombine.high %v1958, 0.0
        %v1977 = vcombine.high %v1967, 0.0
        %v1978 = vcombine.high %v1974, 0.0
        %v1979 = vpack.c.bf16 %v1951, %v1951
        %v1980 = vpack.c.bf16 %v1975, %v1975
        %v1981 = vpack.c.bf16 %v1958, %v1958
        %v1982 = vpack.c.bf16 %v1976, %v1976
        %v1983 = vpack.c.bf16 %v1967, %v1967
        %v1984 = vpack.c.bf16 %v1977, %v1977
        %v1985 = vpack.c.bf16 %v1974, %v1974
        %v1986 = vpack.c.bf16 %v1978, %v1978
        %v1987 = vcombine.low %v1631, %v1635
        %v1989 = vunpack.c.l.s4 1983009808
        %v1990 = vunpack.c.0.s8 %v1989
        %v1991 = vlaneseq
        %v1992 = vshrl.u32 %v1991, 7
        %v1993 = vsub.s32 %v1990, %v1992
        %v1994 = vrot.slane %v1987, %v1993
        %v1995 = vcombine.low %v1633, %v1637
        %v1997 = vunpack.c.l.s4 1983009808
        %v1998 = vunpack.c.0.s8 %v1997
        %v1999 = vlaneseq
        %v2000 = vshrl.u32 %v1999, 7
        %v2001 = vsub.s32 %v1998, %v2000
        %v2002 = vrot.slane %v1995, %v2001
        %v2003 = vcombine.low %v1994, %v2002
        %v2005 = vunpack.c.l.s4 1934713408
        %v2006 = vunpack.c.0.s8 %v2005
        %v2007 = vlaneseq
        %v2008 = vshrl.u32 %v2007, 7
        %v2009 = vsub.s32 %v2006, %v2008
        %v2010 = vrot.slane %v2003, %v2009
        %v2011 = vcombine.high %v2010, 0
        %v2012 = vcombine.low %v1632, %v1636
        %v2014 = vunpack.c.l.s4 1983009808
        %v2015 = vunpack.c.0.s8 %v2014
        %v2016 = vlaneseq
        %v2017 = vshrl.u32 %v2016, 7
        %v2018 = vsub.s32 %v2015, %v2017
        %v2019 = vrot.slane %v2012, %v2018
        %v2020 = vcombine.low %v1634, %v1638
        %v2022 = vunpack.c.l.s4 1983009808
        %v2023 = vunpack.c.0.s8 %v2022
        %v2024 = vlaneseq
        %v2025 = vshrl.u32 %v2024, 7
        %v2026 = vsub.s32 %v2023, %v2025
        %v2027 = vrot.slane %v2020, %v2026
        %v2028 = vcombine.low %v2019, %v2027
        %v2030 = vunpack.c.l.s4 1934713408
        %v2031 = vunpack.c.0.s8 %v2030
        %v2032 = vlaneseq
        %v2033 = vshrl.u32 %v2032, 7
        %v2034 = vsub.s32 %v2031, %v2033
        %v2035 = vrot.slane %v2028, %v2034
        %v2036 = vcombine.high %v2035, 0
        %v2039 = vpack.i.b16 %v2035, %v2010
        %v2040 = vshrl.u32 %v2010, 16
        %v2041 = vshrl.u32 %v2035, 16
        %v2042 = vpack.i.b16 %v2041, %v2040
        %v2045 = vpack.i.b16 %v2036, %v2011
        %v2046 = vshrl.u32 %v2011, 16
        %v2047 = vshrl.u32 %v2036, 16
        %v2048 = vpack.i.b16 %v2047, %v2046
        %2049 = vxpose.xlu0.c.b16.start [1/8] %v1805, 128
        %2050 = vxpose.xlu0.c.b16.cont [2/8] 0, 128
        %2051 = vxpose.xlu0.c.b16.cont [3/8] 0, 128
        %2052 = vxpose.xlu0.c.b16.cont [4/8] 0, 128
        %2053 = vxpose.xlu0.c.b16.cont [5/8] 0, 128
        %2054 = vxpose.xlu0.c.b16.cont [6/8] 0, 128
        %2055 = vxpose.xlu0.c.b16.cont [7/8] 0, 128
        %2056 = vxpose.xlu0.c.b16.end [8/8] 0, 128
        %v2057 = vpop.trf.xlu0
        %v2058 = vpop.trf.xlu0
        %v2059 = vpop.trf.xlu0
        %v2060 = vpop.trf.xlu0
        %v2061 = vpop.trf.xlu0
        %v2062 = vpop.trf.xlu0
        %v2063 = vpop.trf.xlu0
        %v2064 = vpop.trf.xlu0
        %2065 = vxpose.xlu0.c.b16.start [1/8] %v1806, 128
        %2066 = vxpose.xlu0.c.b16.cont [2/8] 0, 128
        %2067 = vxpose.xlu0.c.b16.cont [3/8] 0, 128
        %2068 = vxpose.xlu0.c.b16.cont [4/8] 0, 128
        %2069 = vxpose.xlu0.c.b16.cont [5/8] 0, 128
        %2070 = vxpose.xlu0.c.b16.cont [6/8] 0, 128
        %2071 = vxpose.xlu0.c.b16.cont [7/8] 0, 128
        %2072 = vxpose.xlu0.c.b16.end [8/8] 0, 128
        %v2073 = vpop.trf.xlu0
        %v2074 = vpop.trf.xlu0
        %v2075 = vpop.trf.xlu0
        %v2076 = vpop.trf.xlu0
        %v2077 = vpop.trf.xlu0
        %v2078 = vpop.trf.xlu0
        %v2079 = vpop.trf.xlu0
        %v2080 = vpop.trf.xlu0
        %2081 = vxpose.xlu0.c.b16.start [1/8] %v1807, 128
        %2082 = vxpose.xlu0.c.b16.cont [2/8] 0, 128
        %2083 = vxpose.xlu0.c.b16.cont [3/8] 0, 128
        %2084 = vxpose.xlu0.c.b16.cont [4/8] 0, 128
        %2085 = vxpose.xlu0.c.b16.cont [5/8] 0, 128
        %2086 = vxpose.xlu0.c.b16.cont [6/8] 0, 128
        %2087 = vxpose.xlu0.c.b16.cont [7/8] 0, 128
        %2088 = vxpose.xlu0.c.b16.end [8/8] 0, 128
        %v2089 = vpop.trf.xlu0
        %v2090 = vpop.trf.xlu0
        %v2091 = vpop.trf.xlu0
        %v2092 = vpop.trf.xlu0
        %v2093 = vpop.trf.xlu0
        %v2094 = vpop.trf.xlu0
        %v2095 = vpop.trf.xlu0
        %v2096 = vpop.trf.xlu0
        %2097 = vxpose.xlu0.c.b16.start [1/8] %v1808, 128
        %2098 = vxpose.xlu0.c.b16.cont [2/8] 0, 128
        %2099 = vxpose.xlu0.c.b16.cont [3/8] 0, 128
        %2100 = vxpose.xlu0.c.b16.cont [4/8] 0, 128
        %2101 = vxpose.xlu0.c.b16.cont [5/8] 0, 128
        %2102 = vxpose.xlu0.c.b16.cont [6/8] 0, 128
        %2103 = vxpose.xlu0.c.b16.cont [7/8] 0, 128
        %2104 = vxpose.xlu0.c.b16.end [8/8] 0, 128
        %v2105 = vpop.trf.xlu0
        %v2106 = vpop.trf.xlu0
        %v2107 = vpop.trf.xlu0
        %v2108 = vpop.trf.xlu0
        %v2109 = vpop.trf.xlu0
        %v2110 = vpop.trf.xlu0
        %v2111 = vpop.trf.xlu0
        %v2112 = vpop.trf.xlu0
        %2113 = vxpose.xlu0.c.b16.start [1/8] %v1809, 128
        %2114 = vxpose.xlu0.c.b16.cont [2/8] 0, 128
        %2115 = vxpose.xlu0.c.b16.cont [3/8] 0, 128
        %2116 = vxpose.xlu0.c.b16.cont [4/8] 0, 128
        %2117 = vxpose.xlu0.c.b16.cont [5/8] 0, 128
        %2118 = vxpose.xlu0.c.b16.cont [6/8] 0, 128
        %2119 = vxpose.xlu0.c.b16.cont [7/8] 0, 128
        %2120 = vxpose.xlu0.c.b16.end [8/8] 0, 128
        %v2121 = vpop.trf.xlu0
        %v2122 = vpop.trf.xlu0
        %v2123 = vpop.trf.xlu0
        %v2124 = vpop.trf.xlu0
        %v2125 = vpop.trf.xlu0
        %v2126 = vpop.trf.xlu0
        %v2127 = vpop.trf.xlu0
        %v2128 = vpop.trf.xlu0
        %2129 = vxpose.xlu0.c.b16.start [1/8] %v1810, 128
        %2130 = vxpose.xlu0.c.b16.cont [2/8] 0, 128
        %2131 = vxpose.xlu0.c.b16.cont [3/8] 0, 128
        %2132 = vxpose.xlu0.c.b16.cont [4/8] 0, 128
        %2133 = vxpose.xlu0.c.b16.cont [5/8] 0, 128
        %2134 = vxpose.xlu0.c.b16.cont [6/8] 0, 128
        %2135 = vxpose.xlu0.c.b16.cont [7/8] 0, 128
        %2136 = vxpose.xlu0.c.b16.end [8/8] 0, 128
        %v2137 = vpop.trf.xlu0
        %v2138 = vpop.trf.xlu0
        %v2139 = vpop.trf.xlu0
        %v2140 = vpop.trf.xlu0
        %v2141 = vpop.trf.xlu0
        %v2142 = vpop.trf.xlu0
        %v2143 = vpop.trf.xlu0
        %v2144 = vpop.trf.xlu0
        %2145 = vxpose.xlu0.c.b16.start [1/8] %v1811, 128
        %2146 = vxpose.xlu0.c.b16.cont [2/8] 0, 128
        %2147 = vxpose.xlu0.c.b16.cont [3/8] 0, 128
        %2148 = vxpose.xlu0.c.b16.cont [4/8] 0, 128
        %2149 = vxpose.xlu0.c.b16.cont [5/8] 0, 128
        %2150 = vxpose.xlu0.c.b16.cont [6/8] 0, 128
        %2151 = vxpose.xlu0.c.b16.cont [7/8] 0, 128
        %2152 = vxpose.xlu0.c.b16.end [8/8] 0, 128
        %v2153 = vpop.trf.xlu0
        %v2154 = vpop.trf.xlu0
        %v2155 = vpop.trf.xlu0
        %v2156 = vpop.trf.xlu0
        %v2157 = vpop.trf.xlu0
        %v2158 = vpop.trf.xlu0
        %v2159 = vpop.trf.xlu0
        %v2160 = vpop.trf.xlu0
        %2161 = vxpose.xlu0.c.b16.start [1/8] %v1812, 128
        %2162 = vxpose.xlu0.c.b16.cont [2/8] 0, 128
        %2163 = vxpose.xlu0.c.b16.cont [3/8] 0, 128
        %2164 = vxpose.xlu0.c.b16.cont [4/8] 0, 128
        %2165 = vxpose.xlu0.c.b16.cont [5/8] 0, 128
        %2166 = vxpose.xlu0.c.b16.cont [6/8] 0, 128
        %2167 = vxpose.xlu0.c.b16.cont [7/8] 0, 128
        %2168 = vxpose.xlu0.c.b16.end [8/8] 0, 128
        %v2169 = vpop.trf.xlu0
        %v2170 = vpop.trf.xlu0
        %v2171 = vpop.trf.xlu0
        %v2172 = vpop.trf.xlu0
        %v2173 = vpop.trf.xlu0
        %v2174 = vpop.trf.xlu0
        %v2175 = vpop.trf.xlu0
        %v2176 = vpop.trf.xlu0
        %v2179 = vpack.i.b16 %v2073, %v2057
        %v2181 = vshrl.u32 %v2057, 16
        %v2182 = vshrl.u32 %v2073, 16
        %v2183 = vpack.i.b16 %v2182, %v2181
        %v2187 = vpack.i.b16 %v2105, %v2089
        %v2189 = vshrl.u32 %v2089, 16
        %v2190 = vshrl.u32 %v2105, 16
        %v2191 = vpack.i.b16 %v2190, %v2189
        %v2195 = vpack.i.b16 %v2137, %v2121
        %v2197 = vshrl.u32 %v2121, 16
        %v2198 = vshrl.u32 %v2137, 16
        %v2199 = vpack.i.b16 %v2198, %v2197
        %v2203 = vpack.i.b16 %v2169, %v2153
        %v2205 = vshrl.u32 %v2153, 16
        %v2206 = vshrl.u32 %v2169, 16
        %v2207 = vpack.i.b16 %v2206, %v2205
        %v2211 = vpack.i.b16 %v2074, %v2058
        %v2213 = vshrl.u32 %v2058, 16
        %v2214 = vshrl.u32 %v2074, 16
        %v2215 = vpack.i.b16 %v2214, %v2213
        %v2219 = vpack.i.b16 %v2106, %v2090
        %v2221 = vshrl.u32 %v2090, 16
        %v2222 = vshrl.u32 %v2106, 16
        %v2223 = vpack.i.b16 %v2222, %v2221
        %v2227 = vpack.i.b16 %v2138, %v2122
        %v2229 = vshrl.u32 %v2122, 16
        %v2230 = vshrl.u32 %v2138, 16
        %v2231 = vpack.i.b16 %v2230, %v2229
        %v2235 = vpack.i.b16 %v2170, %v2154
        %v2237 = vshrl.u32 %v2154, 16
        %v2238 = vshrl.u32 %v2170, 16
        %v2239 = vpack.i.b16 %v2238, %v2237
        %v2241 = vcombine.low %v2179, %v2195
        %v2242 = vcombine.high %v2179, %v2195
        %v2244 = vunpack.c.l.s4 1983009808
        %v2245 = vunpack.c.0.s8 %v2244
        %v2246 = vlaneseq
        %v2247 = vshrl.u32 %v2246, 7
        %v2248 = vsub.s32 %v2245, %v2247
        %v2249 = vrot.slane %v2241, %v2248
        %v2251 = vunpack.c.l.s4 1983009808
        %v2252 = vunpack.c.0.s8 %v2251
        %v2253 = vlaneseq
        %v2254 = vshrl.u32 %v2253, 7
        %v2255 = vsub.s32 %v2252, %v2254
        %v2256 = vrot.slane %v2242, %v2255
        %v2257 = vcombine.low %v2187, %v2203
        %v2258 = vcombine.high %v2187, %v2203
        %v2260 = vunpack.c.l.s4 1983009808
        %v2261 = vunpack.c.0.s8 %v2260
        %v2262 = vlaneseq
        %v2263 = vshrl.u32 %v2262, 7
        %v2264 = vsub.s32 %v2261, %v2263
        %v2265 = vrot.slane %v2257, %v2264
        %v2267 = vunpack.c.l.s4 1983009808
        %v2268 = vunpack.c.0.s8 %v2267
        %v2269 = vlaneseq
        %v2270 = vshrl.u32 %v2269, 7
        %v2271 = vsub.s32 %v2268, %v2270
        %v2272 = vrot.slane %v2258, %v2271
        %v2273 = vcombine.low %v2249, %v2265
        %v2274 = vcombine.high %v2249, %v2265
        %v2276 = vunpack.c.l.s4 1934713408
        %v2277 = vunpack.c.0.s8 %v2276
        %v2278 = vlaneseq
        %v2279 = vshrl.u32 %v2278, 7
        %v2280 = vsub.s32 %v2277, %v2279
        %v2281 = vrot.slane %v2273, %v2280
        %v2283 = vunpack.c.l.s4 1934713408
        %v2284 = vunpack.c.0.s8 %v2283
        %v2285 = vlaneseq
        %v2286 = vshrl.u32 %v2285, 7
        %v2287 = vsub.s32 %v2284, %v2286
        %v2288 = vrot.slane %v2274, %v2287
        %v2289 = vcombine.low %v2256, %v2272
        %v2290 = vcombine.high %v2256, %v2272
        %v2292 = vunpack.c.l.s4 1934713408
        %v2293 = vunpack.c.0.s8 %v2292
        %v2294 = vlaneseq
        %v2295 = vshrl.u32 %v2294, 7
        %v2296 = vsub.s32 %v2293, %v2295
        %v2297 = vrot.slane %v2289, %v2296
        %v2299 = vunpack.c.l.s4 1934713408
        %v2300 = vunpack.c.0.s8 %v2299
        %v2301 = vlaneseq
        %v2302 = vshrl.u32 %v2301, 7
        %v2303 = vsub.s32 %v2300, %v2302
        %v2304 = vrot.slane %v2290, %v2303
        %v2305 = vcombine.high %v2281, 0
        %v2306 = vcombine.high %v2288, 0
        %v2307 = vcombine.high %v2297, 0
        %v2308 = vcombine.high %v2304, 0
        %v2309 = vcombine.low %v2183, %v2199
        %v2310 = vcombine.high %v2183, %v2199
        %v2312 = vunpack.c.l.s4 1983009808
        %v2313 = vunpack.c.0.s8 %v2312
        %v2314 = vlaneseq
        %v2315 = vshrl.u32 %v2314, 7
        %v2316 = vsub.s32 %v2313, %v2315
        %v2317 = vrot.slane %v2309, %v2316
        %v2319 = vunpack.c.l.s4 1983009808
        %v2320 = vunpack.c.0.s8 %v2319
        %v2321 = vlaneseq
        %v2322 = vshrl.u32 %v2321, 7
        %v2323 = vsub.s32 %v2320, %v2322
        %v2324 = vrot.slane %v2310, %v2323
        %v2325 = vcombine.low %v2191, %v2207
        %v2326 = vcombine.high %v2191, %v2207
        %v2328 = vunpack.c.l.s4 1983009808
        %v2329 = vunpack.c.0.s8 %v2328
        %v2330 = vlaneseq
        %v2331 = vshrl.u32 %v2330, 7
        %v2332 = vsub.s32 %v2329, %v2331
        %v2333 = vrot.slane %v2325, %v2332
        %v2335 = vunpack.c.l.s4 1983009808
        %v2336 = vunpack.c.0.s8 %v2335
        %v2337 = vlaneseq
        %v2338 = vshrl.u32 %v2337, 7
        %v2339 = vsub.s32 %v2336, %v2338
        %v2340 = vrot.slane %v2326, %v2339
        %v2341 = vcombine.low %v2317, %v2333
        %v2342 = vcombine.high %v2317, %v2333
        %v2344 = vunpack.c.l.s4 1934713408
        %v2345 = vunpack.c.0.s8 %v2344
        %v2346 = vlaneseq
        %v2347 = vshrl.u32 %v2346, 7
        %v2348 = vsub.s32 %v2345, %v2347
        %v2349 = vrot.slane %v2341, %v2348
        %v2351 = vunpack.c.l.s4 1934713408
        %v2352 = vunpack.c.0.s8 %v2351
        %v2353 = vlaneseq
        %v2354 = vshrl.u32 %v2353, 7
        %v2355 = vsub.s32 %v2352, %v2354
        %v2356 = vrot.slane %v2342, %v2355
        %v2357 = vcombine.low %v2324, %v2340
        %v2358 = vcombine.high %v2324, %v2340
        %v2360 = vunpack.c.l.s4 1934713408
        %v2361 = vunpack.c.0.s8 %v2360
        %v2362 = vlaneseq
        %v2363 = vshrl.u32 %v2362, 7
        %v2364 = vsub.s32 %v2361, %v2363
        %v2365 = vrot.slane %v2357, %v2364
        %v2367 = vunpack.c.l.s4 1934713408
        %v2368 = vunpack.c.0.s8 %v2367
        %v2369 = vlaneseq
        %v2370 = vshrl.u32 %v2369, 7
        %v2371 = vsub.s32 %v2368, %v2370
        %v2372 = vrot.slane %v2358, %v2371
        %v2373 = vcombine.high %v2349, 0
        %v2374 = vcombine.high %v2356, 0
        %v2375 = vcombine.high %v2365, 0
        %v2376 = vcombine.high %v2372, 0
        %v2377 = vcombine.low %v2211, %v2227
        %v2378 = vcombine.high %v2211, %v2227
        %v2380 = vunpack.c.l.s4 1983009808
        %v2381 = vunpack.c.0.s8 %v2380
        %v2382 = vlaneseq
        %v2383 = vshrl.u32 %v2382, 7
        %v2384 = vsub.s32 %v2381, %v2383
        %v2385 = vrot.slane %v2377, %v2384
        %v2387 = vunpack.c.l.s4 1983009808
        %v2388 = vunpack.c.0.s8 %v2387
        %v2389 = vlaneseq
        %v2390 = vshrl.u32 %v2389, 7
        %v2391 = vsub.s32 %v2388, %v2390
        %v2392 = vrot.slane %v2378, %v2391
        %v2393 = vcombine.low %v2219, %v2235
        %v2394 = vcombine.high %v2219, %v2235
        %v2396 = vunpack.c.l.s4 1983009808
        %v2397 = vunpack.c.0.s8 %v2396
        %v2398 = vlaneseq
        %v2399 = vshrl.u32 %v2398, 7
        %v2400 = vsub.s32 %v2397, %v2399
        %v2401 = vrot.slane %v2393, %v2400
        %v2403 = vunpack.c.l.s4 1983009808
        %v2404 = vunpack.c.0.s8 %v2403
        %v2405 = vlaneseq
        %v2406 = vshrl.u32 %v2405, 7
        %v2407 = vsub.s32 %v2404, %v2406
        %v2408 = vrot.slane %v2394, %v2407
        %v2409 = vcombine.low %v2385, %v2401
        %v2410 = vcombine.high %v2385, %v2401
        %v2412 = vunpack.c.l.s4 1934713408
        %v2413 = vunpack.c.0.s8 %v2412
        %v2414 = vlaneseq
        %v2415 = vshrl.u32 %v2414, 7
        %v2416 = vsub.s32 %v2413, %v2415
        %v2417 = vrot.slane %v2409, %v2416
        %v2419 = vunpack.c.l.s4 1934713408
        %v2420 = vunpack.c.0.s8 %v2419
        %v2421 = vlaneseq
        %v2422 = vshrl.u32 %v2421, 7
        %v2423 = vsub.s32 %v2420, %v2422
        %v2424 = vrot.slane %v2410, %v2423
        %v2425 = vcombine.low %v2392, %v2408
        %v2426 = vcombine.high %v2392, %v2408
        %v2428 = vunpack.c.l.s4 1934713408
        %v2429 = vunpack.c.0.s8 %v2428
        %v2430 = vlaneseq
        %v2431 = vshrl.u32 %v2430, 7
        %v2432 = vsub.s32 %v2429, %v2431
        %v2433 = vrot.slane %v2425, %v2432
        %v2435 = vunpack.c.l.s4 1934713408
        %v2436 = vunpack.c.0.s8 %v2435
        %v2437 = vlaneseq
        %v2438 = vshrl.u32 %v2437, 7
        %v2439 = vsub.s32 %v2436, %v2438
        %v2440 = vrot.slane %v2426, %v2439
        %v2441 = vcombine.high %v2417, 0
        %v2442 = vcombine.high %v2424, 0
        %v2443 = vcombine.high %v2433, 0
        %v2444 = vcombine.high %v2440, 0
        %v2445 = vcombine.low %v2215, %v2231
        %v2446 = vcombine.high %v2215, %v2231
        %v2448 = vunpack.c.l.s4 1983009808
        %v2449 = vunpack.c.0.s8 %v2448
        %v2450 = vlaneseq
        %v2451 = vshrl.u32 %v2450, 7
        %v2452 = vsub.s32 %v2449, %v2451
        %v2453 = vrot.slane %v2445, %v2452
        %v2455 = vunpack.c.l.s4 1983009808
        %v2456 = vunpack.c.0.s8 %v2455
        %v2457 = vlaneseq
        %v2458 = vshrl.u32 %v2457, 7
        %v2459 = vsub.s32 %v2456, %v2458
        %v2460 = vrot.slane %v2446, %v2459
        %v2461 = vcombine.low %v2223, %v2239
        %v2462 = vcombine.high %v2223, %v2239
        %v2464 = vunpack.c.l.s4 1983009808
        %v2465 = vunpack.c.0.s8 %v2464
        %v2466 = vlaneseq
        %v2467 = vshrl.u32 %v2466, 7
        %v2468 = vsub.s32 %v2465, %v2467
        %v2469 = vrot.slane %v2461, %v2468
        %v2471 = vunpack.c.l.s4 1983009808
        %v2472 = vunpack.c.0.s8 %v2471
        %v2473 = vlaneseq
        %v2474 = vshrl.u32 %v2473, 7
        %v2475 = vsub.s32 %v2472, %v2474
        %v2476 = vrot.slane %v2462, %v2475
        %v2477 = vcombine.low %v2453, %v2469
        %v2478 = vcombine.high %v2453, %v2469
        %v2480 = vunpack.c.l.s4 1934713408
        %v2481 = vunpack.c.0.s8 %v2480
        %v2482 = vlaneseq
        %v2483 = vshrl.u32 %v2482, 7
        %v2484 = vsub.s32 %v2481, %v2483
        %v2485 = vrot.slane %v2477, %v2484
        %v2487 = vunpack.c.l.s4 1934713408
        %v2488 = vunpack.c.0.s8 %v2487
        %v2489 = vlaneseq
        %v2490 = vshrl.u32 %v2489, 7
        %v2491 = vsub.s32 %v2488, %v2490
        %v2492 = vrot.slane %v2478, %v2491
        %v2493 = vcombine.low %v2460, %v2476
        %v2494 = vcombine.high %v2460, %v2476
        %v2496 = vunpack.c.l.s4 1934713408
        %v2497 = vunpack.c.0.s8 %v2496
        %v2498 = vlaneseq
        %v2499 = vshrl.u32 %v2498, 7
        %v2500 = vsub.s32 %v2497, %v2499
        %v2501 = vrot.slane %v2493, %v2500
        %v2503 = vunpack.c.l.s4 1934713408
        %v2504 = vunpack.c.0.s8 %v2503
        %v2505 = vlaneseq
        %v2506 = vshrl.u32 %v2505, 7
        %v2507 = vsub.s32 %v2504, %v2506
        %v2508 = vrot.slane %v2494, %v2507
        %v2509 = vcombine.high %v2485, 0
        %v2510 = vcombine.high %v2492, 0
        %v2511 = vcombine.high %v2501, 0
        %v2512 = vcombine.high %v2508, 0
        %2513 = vxpose.xlu0.c.b16.start [1/8] %v2281, 128
        %2514 = vxpose.xlu0.c.b16.cont [2/8] 0, 128
        %2515 = vxpose.xlu0.c.b16.cont [3/8] 0, 128
        %2516 = vxpose.xlu0.c.b16.cont [4/8] 0, 128
        %2517 = vxpose.xlu0.c.b16.cont [5/8] 0, 128
        %2518 = vxpose.xlu0.c.b16.cont [6/8] 0, 128
        %2519 = vxpose.xlu0.c.b16.cont [7/8] 0, 128
        %2520 = vxpose.xlu0.c.b16.end [8/8] 0, 128
        %v2521 = vpop.trf.xlu0
        %v2522 = vpop.trf.xlu0
        %v2523 = vpop.trf.xlu0
        %v2524 = vpop.trf.xlu0
        %v2525 = vpop.trf.xlu0
        %v2526 = vpop.trf.xlu0
        %v2527 = vpop.trf.xlu0
        %v2528 = vpop.trf.xlu0
        %2529 = vxpose.xlu0.c.b16.start [1/8] %v2349, 128
        %2530 = vxpose.xlu0.c.b16.cont [2/8] 0, 128
        %2531 = vxpose.xlu0.c.b16.cont [3/8] 0, 128
        %2532 = vxpose.xlu0.c.b16.cont [4/8] 0, 128
        %2533 = vxpose.xlu0.c.b16.cont [5/8] 0, 128
        %2534 = vxpose.xlu0.c.b16.cont [6/8] 0, 128
        %2535 = vxpose.xlu0.c.b16.cont [7/8] 0, 128
        %2536 = vxpose.xlu0.c.b16.end [8/8] 0, 128
        %v2537 = vpop.trf.xlu0
        %v2538 = vpop.trf.xlu0
        %v2539 = vpop.trf.xlu0
        %v2540 = vpop.trf.xlu0
        %v2541 = vpop.trf.xlu0
        %v2542 = vpop.trf.xlu0
        %v2543 = vpop.trf.xlu0
        %v2544 = vpop.trf.xlu0
        %2545 = vxpose.xlu0.c.b16.start [1/8] %v2305, 128
        %2546 = vxpose.xlu0.c.b16.cont [2/8] 0, 128
        %2547 = vxpose.xlu0.c.b16.cont [3/8] 0, 128
        %2548 = vxpose.xlu0.c.b16.cont [4/8] 0, 128
        %2549 = vxpose.xlu0.c.b16.cont [5/8] 0, 128
        %2550 = vxpose.xlu0.c.b16.cont [6/8] 0, 128
        %2551 = vxpose.xlu0.c.b16.cont [7/8] 0, 128
        %2552 = vxpose.xlu0.c.b16.end [8/8] 0, 128
        %v2553 = vpop.trf.xlu0
        %v2554 = vpop.trf.xlu0
        %v2555 = vpop.trf.xlu0
        %v2556 = vpop.trf.xlu0
        %v2557 = vpop.trf.xlu0
        %v2558 = vpop.trf.xlu0
        %v2559 = vpop.trf.xlu0
        %v2560 = vpop.trf.xlu0
        %2561 = vxpose.xlu0.c.b16.start [1/8] %v2373, 128
        %2562 = vxpose.xlu0.c.b16.cont [2/8] 0, 128
        %2563 = vxpose.xlu0.c.b16.cont [3/8] 0, 128
        %2564 = vxpose.xlu0.c.b16.cont [4/8] 0, 128
        %2565 = vxpose.xlu0.c.b16.cont [5/8] 0, 128
        %2566 = vxpose.xlu0.c.b16.cont [6/8] 0, 128
        %2567 = vxpose.xlu0.c.b16.cont [7/8] 0, 128
        %2568 = vxpose.xlu0.c.b16.end [8/8] 0, 128
        %v2569 = vpop.trf.xlu0
        %v2570 = vpop.trf.xlu0
        %v2571 = vpop.trf.xlu0
        %v2572 = vpop.trf.xlu0
        %v2573 = vpop.trf.xlu0
        %v2574 = vpop.trf.xlu0
        %v2575 = vpop.trf.xlu0
        %v2576 = vpop.trf.xlu0
        %2577 = vxpose.xlu0.c.b16.start [1/8] %v2288, 128
        %2578 = vxpose.xlu0.c.b16.cont [2/8] 0, 128
        %2579 = vxpose.xlu0.c.b16.cont [3/8] 0, 128
        %2580 = vxpose.xlu0.c.b16.cont [4/8] 0, 128
        %2581 = vxpose.xlu0.c.b16.cont [5/8] 0, 128
        %2582 = vxpose.xlu0.c.b16.cont [6/8] 0, 128
        %2583 = vxpose.xlu0.c.b16.cont [7/8] 0, 128
        %2584 = vxpose.xlu0.c.b16.end [8/8] 0, 128
        %v2585 = vpop.trf.xlu0
        %v2586 = vpop.trf.xlu0
        %v2587 = vpop.trf.xlu0
        %v2588 = vpop.trf.xlu0
        %v2589 = vpop.trf.xlu0
        %v2590 = vpop.trf.xlu0
        %v2591 = vpop.trf.xlu0
        %v2592 = vpop.trf.xlu0
        %2593 = vxpose.xlu0.c.b16.start [1/8] %v2356, 128
        %2594 = vxpose.xlu0.c.b16.cont [2/8] 0, 128
        %2595 = vxpose.xlu0.c.b16.cont [3/8] 0, 128
        %2596 = vxpose.xlu0.c.b16.cont [4/8] 0, 128
        %2597 = vxpose.xlu0.c.b16.cont [5/8] 0, 128
        %2598 = vxpose.xlu0.c.b16.cont [6/8] 0, 128
        %2599 = vxpose.xlu0.c.b16.cont [7/8] 0, 128
        %2600 = vxpose.xlu0.c.b16.end [8/8] 0, 128
        %v2601 = vpop.trf.xlu0
        %v2602 = vpop.trf.xlu0
        %v2603 = vpop.trf.xlu0
        %v2604 = vpop.trf.xlu0
        %v2605 = vpop.trf.xlu0
        %v2606 = vpop.trf.xlu0
        %v2607 = vpop.trf.xlu0
        %v2608 = vpop.trf.xlu0
        %2609 = vxpose.xlu0.c.b16.start [1/8] %v2306, 128
        %2610 = vxpose.xlu0.c.b16.cont [2/8] 0, 128
        %2611 = vxpose.xlu0.c.b16.cont [3/8] 0, 128
        %2612 = vxpose.xlu0.c.b16.cont [4/8] 0, 128
        %2613 = vxpose.xlu0.c.b16.cont [5/8] 0, 128
        %2614 = vxpose.xlu0.c.b16.cont [6/8] 0, 128
        %2615 = vxpose.xlu0.c.b16.cont [7/8] 0, 128
        %2616 = vxpose.xlu0.c.b16.end [8/8] 0, 128
        %v2617 = vpop.trf.xlu0
        %v2618 = vpop.trf.xlu0
        %v2619 = vpop.trf.xlu0
        %v2620 = vpop.trf.xlu0
        %v2621 = vpop.trf.xlu0
        %v2622 = vpop.trf.xlu0
        %v2623 = vpop.trf.xlu0
        %v2624 = vpop.trf.xlu0
        %2625 = vxpose.xlu0.c.b16.start [1/8] %v2374, 128
        %2626 = vxpose.xlu0.c.b16.cont [2/8] 0, 128
        %2627 = vxpose.xlu0.c.b16.cont [3/8] 0, 128
        %2628 = vxpose.xlu0.c.b16.cont [4/8] 0, 128
        %2629 = vxpose.xlu0.c.b16.cont [5/8] 0, 128
        %2630 = vxpose.xlu0.c.b16.cont [6/8] 0, 128
        %2631 = vxpose.xlu0.c.b16.cont [7/8] 0, 128
        %2632 = vxpose.xlu0.c.b16.end [8/8] 0, 128
        %v2633 = vpop.trf.xlu0
        %v2634 = vpop.trf.xlu0
        %v2635 = vpop.trf.xlu0
        %v2636 = vpop.trf.xlu0
        %v2637 = vpop.trf.xlu0
        %v2638 = vpop.trf.xlu0
        %v2639 = vpop.trf.xlu0
        %v2640 = vpop.trf.xlu0
        %2641 = vxpose.xlu0.c.b16.start [1/8] %v2297, 128
        %2642 = vxpose.xlu0.c.b16.cont [2/8] 0, 128
        %2643 = vxpose.xlu0.c.b16.cont [3/8] 0, 128
        %2644 = vxpose.xlu0.c.b16.cont [4/8] 0, 128
        %2645 = vxpose.xlu0.c.b16.cont [5/8] 0, 128
        %2646 = vxpose.xlu0.c.b16.cont [6/8] 0, 128
        %2647 = vxpose.xlu0.c.b16.cont [7/8] 0, 128
        %2648 = vxpose.xlu0.c.b16.end [8/8] 0, 128
        %v2649 = vpop.trf.xlu0
        %v2650 = vpop.trf.xlu0
        %v2651 = vpop.trf.xlu0
        %v2652 = vpop.trf.xlu0
        %v2653 = vpop.trf.xlu0
        %v2654 = vpop.trf.xlu0
        %v2655 = vpop.trf.xlu0
        %v2656 = vpop.trf.xlu0
        %2657 = vxpose.xlu0.c.b16.start [1/8] %v2365, 128
        %2658 = vxpose.xlu0.c.b16.cont [2/8] 0, 128
        %2659 = vxpose.xlu0.c.b16.cont [3/8] 0, 128
        %2660 = vxpose.xlu0.c.b16.cont [4/8] 0, 128
        %2661 = vxpose.xlu0.c.b16.cont [5/8] 0, 128
        %2662 = vxpose.xlu0.c.b16.cont [6/8] 0, 128
        %2663 = vxpose.xlu0.c.b16.cont [7/8] 0, 128
        %2664 = vxpose.xlu0.c.b16.end [8/8] 0, 128
        %v2665 = vpop.trf.xlu0
        %v2666 = vpop.trf.xlu0
        %v2667 = vpop.trf.xlu0
        %v2668 = vpop.trf.xlu0
        %v2669 = vpop.trf.xlu0
        %v2670 = vpop.trf.xlu0
        %v2671 = vpop.trf.xlu0
        %v2672 = vpop.trf.xlu0
        %2673 = vxpose.xlu0.c.b16.start [1/8] %v2307, 128
        %2674 = vxpose.xlu0.c.b16.cont [2/8] 0, 128
        %2675 = vxpose.xlu0.c.b16.cont [3/8] 0, 128
        %2676 = vxpose.xlu0.c.b16.cont [4/8] 0, 128
        %2677 = vxpose.xlu0.c.b16.cont [5/8] 0, 128
        %2678 = vxpose.xlu0.c.b16.cont [6/8] 0, 128
        %2679 = vxpose.xlu0.c.b16.cont [7/8] 0, 128
        %2680 = vxpose.xlu0.c.b16.end [8/8] 0, 128
        %v2681 = vpop.trf.xlu0
        %v2682 = vpop.trf.xlu0
        %v2683 = vpop.trf.xlu0
        %v2684 = vpop.trf.xlu0
        %v2685 = vpop.trf.xlu0
        %v2686 = vpop.trf.xlu0
        %v2687 = vpop.trf.xlu0
        %v2688 = vpop.trf.xlu0
        %2689 = vxpose.xlu0.c.b16.start [1/8] %v2375, 128
        %2690 = vxpose.xlu0.c.b16.cont [2/8] 0, 128
        %2691 = vxpose.xlu0.c.b16.cont [3/8] 0, 128
        %2692 = vxpose.xlu0.c.b16.cont [4/8] 0, 128
        %2693 = vxpose.xlu0.c.b16.cont [5/8] 0, 128
        %2694 = vxpose.xlu0.c.b16.cont [6/8] 0, 128
        %2695 = vxpose.xlu0.c.b16.cont [7/8] 0, 128
        %2696 = vxpose.xlu0.c.b16.end [8/8] 0, 128
        %v2697 = vpop.trf.xlu0
        %v2698 = vpop.trf.xlu0
        %v2699 = vpop.trf.xlu0
        %v2700 = vpop.trf.xlu0
        %v2701 = vpop.trf.xlu0
        %v2702 = vpop.trf.xlu0
        %v2703 = vpop.trf.xlu0
        %v2704 = vpop.trf.xlu0
        %2705 = vxpose.xlu0.c.b16.start [1/8] %v2304, 128
        %2706 = vxpose.xlu0.c.b16.cont [2/8] 0, 128
        %2707 = vxpose.xlu0.c.b16.cont [3/8] 0, 128
        %2708 = vxpose.xlu0.c.b16.cont [4/8] 0, 128
        %2709 = vxpose.xlu0.c.b16.cont [5/8] 0, 128
        %2710 = vxpose.xlu0.c.b16.cont [6/8] 0, 128
        %2711 = vxpose.xlu0.c.b16.cont [7/8] 0, 128
        %2712 = vxpose.xlu0.c.b16.end [8/8] 0, 128
        %v2713 = vpop.trf.xlu0
        %v2714 = vpop.trf.xlu0
        %v2715 = vpop.trf.xlu0
        %v2716 = vpop.trf.xlu0
        %v2717 = vpop.trf.xlu0
        %v2718 = vpop.trf.xlu0
        %v2719 = vpop.trf.xlu0
        %v2720 = vpop.trf.xlu0
        %2721 = vxpose.xlu0.c.b16.start [1/8] %v2372, 128
        %2722 = vxpose.xlu0.c.b16.cont [2/8] 0, 128
        %2723 = vxpose.xlu0.c.b16.cont [3/8] 0, 128
        %2724 = vxpose.xlu0.c.b16.cont [4/8] 0, 128
        %2725 = vxpose.xlu0.c.b16.cont [5/8] 0, 128
        %2726 = vxpose.xlu0.c.b16.cont [6/8] 0, 128
        %2727 = vxpose.xlu0.c.b16.cont [7/8] 0, 128
        %2728 = vxpose.xlu0.c.b16.end [8/8] 0, 128
        %v2729 = vpop.trf.xlu0
        %v2730 = vpop.trf.xlu0
        %v2731 = vpop.trf.xlu0
        %v2732 = vpop.trf.xlu0
        %v2733 = vpop.trf.xlu0
        %v2734 = vpop.trf.xlu0
        %v2735 = vpop.trf.xlu0
        %v2736 = vpop.trf.xlu0
        %2737 = vxpose.xlu0.c.b16.start [1/8] %v2308, 128
        %2738 = vxpose.xlu0.c.b16.cont [2/8] 0, 128
        %2739 = vxpose.xlu0.c.b16.cont [3/8] 0, 128
        %2740 = vxpose.xlu0.c.b16.cont [4/8] 0, 128
        %2741 = vxpose.xlu0.c.b16.cont [5/8] 0, 128
        %2742 = vxpose.xlu0.c.b16.cont [6/8] 0, 128
        %2743 = vxpose.xlu0.c.b16.cont [7/8] 0, 128
        %2744 = vxpose.xlu0.c.b16.end [8/8] 0, 128
        %v2745 = vpop.trf.xlu0
        %v2746 = vpop.trf.xlu0
        %v2747 = vpop.trf.xlu0
        %v2748 = vpop.trf.xlu0
        %v2749 = vpop.trf.xlu0
        %v2750 = vpop.trf.xlu0
        %v2751 = vpop.trf.xlu0
        %v2752 = vpop.trf.xlu0
        %2753 = vxpose.xlu0.c.b16.start [1/8] %v2376, 128
        %2754 = vxpose.xlu0.c.b16.cont [2/8] 0, 128
        %2755 = vxpose.xlu0.c.b16.cont [3/8] 0, 128
        %2756 = vxpose.xlu0.c.b16.cont [4/8] 0, 128
        %2757 = vxpose.xlu0.c.b16.cont [5/8] 0, 128
        %2758 = vxpose.xlu0.c.b16.cont [6/8] 0, 128
        %2759 = vxpose.xlu0.c.b16.cont [7/8] 0, 128
        %2760 = vxpose.xlu0.c.b16.end [8/8] 0, 128
        %v2761 = vpop.trf.xlu0
        %v2762 = vpop.trf.xlu0
        %v2763 = vpop.trf.xlu0
        %v2764 = vpop.trf.xlu0
        %v2765 = vpop.trf.xlu0
        %v2766 = vpop.trf.xlu0
        %v2767 = vpop.trf.xlu0
        %v2768 = vpop.trf.xlu0
        %2769 = vxpose.xlu0.c.b16.start [1/8] %v2417, 128
        %2770 = vxpose.xlu0.c.b16.cont [2/8] 0, 128
        %2771 = vxpose.xlu0.c.b16.cont [3/8] 0, 128
        %2772 = vxpose.xlu0.c.b16.cont [4/8] 0, 128
        %2773 = vxpose.xlu0.c.b16.cont [5/8] 0, 128
        %2774 = vxpose.xlu0.c.b16.cont [6/8] 0, 128
        %2775 = vxpose.xlu0.c.b16.cont [7/8] 0, 128
        %2776 = vxpose.xlu0.c.b16.end [8/8] 0, 128
        %v2777 = vpop.trf.xlu0
        %v2778 = vpop.trf.xlu0
        %v2779 = vpop.trf.xlu0
        %v2780 = vpop.trf.xlu0
        %v2781 = vpop.trf.xlu0
        %v2782 = vpop.trf.xlu0
        %v2783 = vpop.trf.xlu0
        %v2784 = vpop.trf.xlu0
        %2785 = vxpose.xlu0.c.b16.start [1/8] %v2485, 128
        %2786 = vxpose.xlu0.c.b16.cont [2/8] 0, 128
        %2787 = vxpose.xlu0.c.b16.cont [3/8] 0, 128
        %2788 = vxpose.xlu0.c.b16.cont [4/8] 0, 128
        %2789 = vxpose.xlu0.c.b16.cont [5/8] 0, 128
        %2790 = vxpose.xlu0.c.b16.cont [6/8] 0, 128
        %2791 = vxpose.xlu0.c.b16.cont [7/8] 0, 128
        %2792 = vxpose.xlu0.c.b16.end [8/8] 0, 128
        %v2793 = vpop.trf.xlu0
        %v2794 = vpop.trf.xlu0
        %v2795 = vpop.trf.xlu0
        %v2796 = vpop.trf.xlu0
        %v2797 = vpop.trf.xlu0
        %v2798 = vpop.trf.xlu0
        %v2799 = vpop.trf.xlu0
        %v2800 = vpop.trf.xlu0
        %2801 = vxpose.xlu0.c.b16.start [1/8] %v2441, 128
        %2802 = vxpose.xlu0.c.b16.cont [2/8] 0, 128
        %2803 = vxpose.xlu0.c.b16.cont [3/8] 0, 128
        %2804 = vxpose.xlu0.c.b16.cont [4/8] 0, 128
        %2805 = vxpose.xlu0.c.b16.cont [5/8] 0, 128
        %2806 = vxpose.xlu0.c.b16.cont [6/8] 0, 128
        %2807 = vxpose.xlu0.c.b16.cont [7/8] 0, 128
        %2808 = vxpose.xlu0.c.b16.end [8/8] 0, 128
        %v2809 = vpop.trf.xlu0
        %v2810 = vpop.trf.xlu0
        %v2811 = vpop.trf.xlu0
        %v2812 = vpop.trf.xlu0
        %v2813 = vpop.trf.xlu0
        %v2814 = vpop.trf.xlu0
        %v2815 = vpop.trf.xlu0
        %v2816 = vpop.trf.xlu0
        %2817 = vxpose.xlu0.c.b16.start [1/8] %v2509, 128
        %2818 = vxpose.xlu0.c.b16.cont [2/8] 0, 128
        %2819 = vxpose.xlu0.c.b16.cont [3/8] 0, 128
        %2820 = vxpose.xlu0.c.b16.cont [4/8] 0, 128
        %2821 = vxpose.xlu0.c.b16.cont [5/8] 0, 128
        %2822 = vxpose.xlu0.c.b16.cont [6/8] 0, 128
        %2823 = vxpose.xlu0.c.b16.cont [7/8] 0, 128
        %2824 = vxpose.xlu0.c.b16.end [8/8] 0, 128
        %v2825 = vpop.trf.xlu0
        %v2826 = vpop.trf.xlu0
        %v2827 = vpop.trf.xlu0
        %v2828 = vpop.trf.xlu0
        %v2829 = vpop.trf.xlu0
        %v2830 = vpop.trf.xlu0
        %v2831 = vpop.trf.xlu0
        %v2832 = vpop.trf.xlu0
        %2833 = vxpose.xlu0.c.b16.start [1/8] %v2424, 128
        %2834 = vxpose.xlu0.c.b16.cont [2/8] 0, 128
        %2835 = vxpose.xlu0.c.b16.cont [3/8] 0, 128
        %2836 = vxpose.xlu0.c.b16.cont [4/8] 0, 128
        %2837 = vxpose.xlu0.c.b16.cont [5/8] 0, 128
        %2838 = vxpose.xlu0.c.b16.cont [6/8] 0, 128
        %2839 = vxpose.xlu0.c.b16.cont [7/8] 0, 128
        %2840 = vxpose.xlu0.c.b16.end [8/8] 0, 128
        %v2841 = vpop.trf.xlu0
        %v2842 = vpop.trf.xlu0
        %v2843 = vpop.trf.xlu0
        %v2844 = vpop.trf.xlu0
        %v2845 = vpop.trf.xlu0
        %v2846 = vpop.trf.xlu0
        %v2847 = vpop.trf.xlu0
        %v2848 = vpop.trf.xlu0
        %2849 = vxpose.xlu0.c.b16.start [1/8] %v2492, 128
        %2850 = vxpose.xlu0.c.b16.cont [2/8] 0, 128
        %2851 = vxpose.xlu0.c.b16.cont [3/8] 0, 128
        %2852 = vxpose.xlu0.c.b16.cont [4/8] 0, 128
        %2853 = vxpose.xlu0.c.b16.cont [5/8] 0, 128
        %2854 = vxpose.xlu0.c.b16.cont [6/8] 0, 128
        %2855 = vxpose.xlu0.c.b16.cont [7/8] 0, 128
        %2856 = vxpose.xlu0.c.b16.end [8/8] 0, 128
        %v2857 = vpop.trf.xlu0
        %v2858 = vpop.trf.xlu0
        %v2859 = vpop.trf.xlu0
        %v2860 = vpop.trf.xlu0
        %v2861 = vpop.trf.xlu0
        %v2862 = vpop.trf.xlu0
        %v2863 = vpop.trf.xlu0
        %v2864 = vpop.trf.xlu0
        %2865 = vxpose.xlu0.c.b16.start [1/8] %v2442, 128
        %2866 = vxpose.xlu0.c.b16.cont [2/8] 0, 128
        %2867 = vxpose.xlu0.c.b16.cont [3/8] 0, 128
        %2868 = vxpose.xlu0.c.b16.cont [4/8] 0, 128
        %2869 = vxpose.xlu0.c.b16.cont [5/8] 0, 128
        %2870 = vxpose.xlu0.c.b16.cont [6/8] 0, 128
        %2871 = vxpose.xlu0.c.b16.cont [7/8] 0, 128
        %2872 = vxpose.xlu0.c.b16.end [8/8] 0, 128
        %v2873 = vpop.trf.xlu0
        %v2874 = vpop.trf.xlu0
        %v2875 = vpop.trf.xlu0
        %v2876 = vpop.trf.xlu0
        %v2877 = vpop.trf.xlu0
        %v2878 = vpop.trf.xlu0
        %v2879 = vpop.trf.xlu0
        %v2880 = vpop.trf.xlu0
        %2881 = vxpose.xlu0.c.b16.start [1/8] %v2510, 128
        %2882 = vxpose.xlu0.c.b16.cont [2/8] 0, 128
        %2883 = vxpose.xlu0.c.b16.cont [3/8] 0, 128
        %2884 = vxpose.xlu0.c.b16.cont [4/8] 0, 128
        %2885 = vxpose.xlu0.c.b16.cont [5/8] 0, 128
        %2886 = vxpose.xlu0.c.b16.cont [6/8] 0, 128
        %2887 = vxpose.xlu0.c.b16.cont [7/8] 0, 128
        %2888 = vxpose.xlu0.c.b16.end [8/8] 0, 128
        %v2889 = vpop.trf.xlu0
        %v2890 = vpop.trf.xlu0
        %v2891 = vpop.trf.xlu0
        %v2892 = vpop.trf.xlu0
        %v2893 = vpop.trf.xlu0
        %v2894 = vpop.trf.xlu0
        %v2895 = vpop.trf.xlu0
        %v2896 = vpop.trf.xlu0
        %2897 = vxpose.xlu0.c.b16.start [1/8] %v2433, 128
        %2898 = vxpose.xlu0.c.b16.cont [2/8] 0, 128
        %2899 = vxpose.xlu0.c.b16.cont [3/8] 0, 128
        %2900 = vxpose.xlu0.c.b16.cont [4/8] 0, 128
        %2901 = vxpose.xlu0.c.b16.cont [5/8] 0, 128
        %2902 = vxpose.xlu0.c.b16.cont [6/8] 0, 128
        %2903 = vxpose.xlu0.c.b16.cont [7/8] 0, 128
        %2904 = vxpose.xlu0.c.b16.end [8/8] 0, 128
        %v2905 = vpop.trf.xlu0
        %v2906 = vpop.trf.xlu0
        %v2907 = vpop.trf.xlu0
        %v2908 = vpop.trf.xlu0
        %v2909 = vpop.trf.xlu0
        %v2910 = vpop.trf.xlu0
        %v2911 = vpop.trf.xlu0
        %v2912 = vpop.trf.xlu0
        %2913 = vxpose.xlu0.c.b16.start [1/8] %v2501, 128
        %2914 = vxpose.xlu0.c.b16.cont [2/8] 0, 128
        %2915 = vxpose.xlu0.c.b16.cont [3/8] 0, 128
        %2916 = vxpose.xlu0.c.b16.cont [4/8] 0, 128
        %2917 = vxpose.xlu0.c.b16.cont [5/8] 0, 128
        %2918 = vxpose.xlu0.c.b16.cont [6/8] 0, 128
        %2919 = vxpose.xlu0.c.b16.cont [7/8] 0, 128
        %2920 = vxpose.xlu0.c.b16.end [8/8] 0, 128
        %v2921 = vpop.trf.xlu0
        %v2922 = vpop.trf.xlu0
        %v2923 = vpop.trf.xlu0
        %v2924 = vpop.trf.xlu0
        %v2925 = vpop.trf.xlu0
        %v2926 = vpop.trf.xlu0
        %v2927 = vpop.trf.xlu0
        %v2928 = vpop.trf.xlu0
        %2929 = vxpose.xlu0.c.b16.start [1/8] %v2443, 128
        %2930 = vxpose.xlu0.c.b16.cont [2/8] 0, 128
        %2931 = vxpose.xlu0.c.b16.cont [3/8] 0, 128
        %2932 = vxpose.xlu0.c.b16.cont [4/8] 0, 128
        %2933 = vxpose.xlu0.c.b16.cont [5/8] 0, 128
        %2934 = vxpose.xlu0.c.b16.cont [6/8] 0, 128
        %2935 = vxpose.xlu0.c.b16.cont [7/8] 0, 128
        %2936 = vxpose.xlu0.c.b16.end [8/8] 0, 128
        %v2937 = vpop.trf.xlu0
        %v2938 = vpop.trf.xlu0
        %v2939 = vpop.trf.xlu0
        %v2940 = vpop.trf.xlu0
        %v2941 = vpop.trf.xlu0
        %v2942 = vpop.trf.xlu0
        %v2943 = vpop.trf.xlu0
        %v2944 = vpop.trf.xlu0
        %2945 = vxpose.xlu0.c.b16.start [1/8] %v2511, 128
        %2946 = vxpose.xlu0.c.b16.cont [2/8] 0, 128
        %2947 = vxpose.xlu0.c.b16.cont [3/8] 0, 128
        %2948 = vxpose.xlu0.c.b16.cont [4/8] 0, 128
        %2949 = vxpose.xlu0.c.b16.cont [5/8] 0, 128
        %2950 = vxpose.xlu0.c.b16.cont [6/8] 0, 128
        %2951 = vxpose.xlu0.c.b16.cont [7/8] 0, 128
        %2952 = vxpose.xlu0.c.b16.end [8/8] 0, 128
        %v2953 = vpop.trf.xlu0
        %v2954 = vpop.trf.xlu0
        %v2955 = vpop.trf.xlu0
        %v2956 = vpop.trf.xlu0
        %v2957 = vpop.trf.xlu0
        %v2958 = vpop.trf.xlu0
        %v2959 = vpop.trf.xlu0
        %v2960 = vpop.trf.xlu0
        %2961 = vxpose.xlu0.c.b16.start [1/8] %v2440, 128
        %2962 = vxpose.xlu0.c.b16.cont [2/8] 0, 128
        %2963 = vxpose.xlu0.c.b16.cont [3/8] 0, 128
        %2964 = vxpose.xlu0.c.b16.cont [4/8] 0, 128
        %2965 = vxpose.xlu0.c.b16.cont [5/8] 0, 128
        %2966 = vxpose.xlu0.c.b16.cont [6/8] 0, 128
        %2967 = vxpose.xlu0.c.b16.cont [7/8] 0, 128
        %2968 = vxpose.xlu0.c.b16.end [8/8] 0, 128
        %v2969 = vpop.trf.xlu0
        %v2970 = vpop.trf.xlu0
        %v2971 = vpop.trf.xlu0
        %v2972 = vpop.trf.xlu0
        %v2973 = vpop.trf.xlu0
        %v2974 = vpop.trf.xlu0
        %v2975 = vpop.trf.xlu0
        %v2976 = vpop.trf.xlu0
        %2977 = vxpose.xlu0.c.b16.start [1/8] %v2508, 128
        %2978 = vxpose.xlu0.c.b16.cont [2/8] 0, 128
        %2979 = vxpose.xlu0.c.b16.cont [3/8] 0, 128
        %2980 = vxpose.xlu0.c.b16.cont [4/8] 0, 128
        %2981 = vxpose.xlu0.c.b16.cont [5/8] 0, 128
        %2982 = vxpose.xlu0.c.b16.cont [6/8] 0, 128
        %2983 = vxpose.xlu0.c.b16.cont [7/8] 0, 128
        %2984 = vxpose.xlu0.c.b16.end [8/8] 0, 128
        %v2985 = vpop.trf.xlu0
        %v2986 = vpop.trf.xlu0
        %v2987 = vpop.trf.xlu0
        %v2988 = vpop.trf.xlu0
        %v2989 = vpop.trf.xlu0
        %v2990 = vpop.trf.xlu0
        %v2991 = vpop.trf.xlu0
        %v2992 = vpop.trf.xlu0
        %2993 = vxpose.xlu0.c.b16.start [1/8] %v2444, 128
        %2994 = vxpose.xlu0.c.b16.cont [2/8] 0, 128
        %2995 = vxpose.xlu0.c.b16.cont [3/8] 0, 128
        %2996 = vxpose.xlu0.c.b16.cont [4/8] 0, 128
        %2997 = vxpose.xlu0.c.b16.cont [5/8] 0, 128
        %2998 = vxpose.xlu0.c.b16.cont [6/8] 0, 128
        %2999 = vxpose.xlu0.c.b16.cont [7/8] 0, 128
        %3000 = vxpose.xlu0.c.b16.end [8/8] 0, 128
        %v3001 = vpop.trf.xlu0
        %v3002 = vpop.trf.xlu0
        %v3003 = vpop.trf.xlu0
        %v3004 = vpop.trf.xlu0
        %v3005 = vpop.trf.xlu0
        %v3006 = vpop.trf.xlu0
        %v3007 = vpop.trf.xlu0
        %v3008 = vpop.trf.xlu0
        %3009 = vxpose.xlu0.c.b16.start [1/8] %v2512, 128
        %3010 = vxpose.xlu0.c.b16.cont [2/8] 0, 128
        %3011 = vxpose.xlu0.c.b16.cont [3/8] 0, 128
        %3012 = vxpose.xlu0.c.b16.cont [4/8] 0, 128
        %3013 = vxpose.xlu0.c.b16.cont [5/8] 0, 128
        %3014 = vxpose.xlu0.c.b16.cont [6/8] 0, 128
        %3015 = vxpose.xlu0.c.b16.cont [7/8] 0, 128
        %3016 = vxpose.xlu0.c.b16.end [8/8] 0, 128
        %v3017 = vpop.trf.xlu0
        %v3018 = vpop.trf.xlu0
        %v3019 = vpop.trf.xlu0
        %v3020 = vpop.trf.xlu0
        %v3021 = vpop.trf.xlu0
        %v3022 = vpop.trf.xlu0
        %v3023 = vpop.trf.xlu0
        %v3024 = vpop.trf.xlu0
        %v3025 = vcombine.low %v2521, %v2585
        %v3027 = vunpack.c.l.s4 1983009808
        %v3028 = vunpack.c.0.s8 %v3027
        %v3029 = vlaneseq
        %v3030 = vshrl.u32 %v3029, 7
        %v3031 = vsub.s32 %v3028, %v3030
        %v3032 = vrot.slane %v3025, %v3031
        %v3033 = vcombine.low %v2553, %v2617
        %v3035 = vunpack.c.l.s4 1983009808
        %v3036 = vunpack.c.0.s8 %v3035
        %v3037 = vlaneseq
        %v3038 = vshrl.u32 %v3037, 7
        %v3039 = vsub.s32 %v3036, %v3038
        %v3040 = vrot.slane %v3033, %v3039
        %v3041 = vcombine.low %v2649, %v2713
        %v3043 = vunpack.c.l.s4 1983009808
        %v3044 = vunpack.c.0.s8 %v3043
        %v3045 = vlaneseq
        %v3046 = vshrl.u32 %v3045, 7
        %v3047 = vsub.s32 %v3044, %v3046
        %v3048 = vrot.slane %v3041, %v3047
        %v3049 = vcombine.low %v2681, %v2745
        %v3051 = vunpack.c.l.s4 1983009808
        %v3052 = vunpack.c.0.s8 %v3051
        %v3053 = vlaneseq
        %v3054 = vshrl.u32 %v3053, 7
        %v3055 = vsub.s32 %v3052, %v3054
        %v3056 = vrot.slane %v3049, %v3055
        %v3057 = vcombine.low %v3032, %v3040
        %v3059 = vunpack.c.l.s4 1934713408
        %v3060 = vunpack.c.0.s8 %v3059
        %v3061 = vlaneseq
        %v3062 = vshrl.u32 %v3061, 7
        %v3063 = vsub.s32 %v3060, %v3062
        %v3064 = vrot.slane %v3057, %v3063
        %v3065 = vcombine.low %v3048, %v3056
        %v3067 = vunpack.c.l.s4 1934713408
        %v3068 = vunpack.c.0.s8 %v3067
        %v3069 = vlaneseq
        %v3070 = vshrl.u32 %v3069, 7
        %v3071 = vsub.s32 %v3068, %v3070
        %v3072 = vrot.slane %v3065, %v3071
        %v3073 = vcombine.low %v3064, %v3072
        %v3074 = vcombine.high %v3064, %v3072
        %v3075 = vcombine.low %v2537, %v2601
        %v3077 = vunpack.c.l.s4 1983009808
        %v3078 = vunpack.c.0.s8 %v3077
        %v3079 = vlaneseq
        %v3080 = vshrl.u32 %v3079, 7
        %v3081 = vsub.s32 %v3078, %v3080
        %v3082 = vrot.slane %v3075, %v3081
        %v3083 = vcombine.low %v2569, %v2633
        %v3085 = vunpack.c.l.s4 1983009808
        %v3086 = vunpack.c.0.s8 %v3085
        %v3087 = vlaneseq
        %v3088 = vshrl.u32 %v3087, 7
        %v3089 = vsub.s32 %v3086, %v3088
        %v3090 = vrot.slane %v3083, %v3089
        %v3091 = vcombine.low %v2665, %v2729
        %v3093 = vunpack.c.l.s4 1983009808
        %v3094 = vunpack.c.0.s8 %v3093
        %v3095 = vlaneseq
        %v3096 = vshrl.u32 %v3095, 7
        %v3097 = vsub.s32 %v3094, %v3096
        %v3098 = vrot.slane %v3091, %v3097
        %v3099 = vcombine.low %v2697, %v2761
        %v3101 = vunpack.c.l.s4 1983009808
        %v3102 = vunpack.c.0.s8 %v3101
        %v3103 = vlaneseq
        %v3104 = vshrl.u32 %v3103, 7
        %v3105 = vsub.s32 %v3102, %v3104
        %v3106 = vrot.slane %v3099, %v3105
        %v3107 = vcombine.low %v3082, %v3090
        %v3109 = vunpack.c.l.s4 1934713408
        %v3110 = vunpack.c.0.s8 %v3109
        %v3111 = vlaneseq
        %v3112 = vshrl.u32 %v3111, 7
        %v3113 = vsub.s32 %v3110, %v3112
        %v3114 = vrot.slane %v3107, %v3113
        %v3115 = vcombine.low %v3098, %v3106
        %v3117 = vunpack.c.l.s4 1934713408
        %v3118 = vunpack.c.0.s8 %v3117
        %v3119 = vlaneseq
        %v3120 = vshrl.u32 %v3119, 7
        %v3121 = vsub.s32 %v3118, %v3120
        %v3122 = vrot.slane %v3115, %v3121
        %v3123 = vcombine.low %v3114, %v3122
        %v3124 = vcombine.high %v3114, %v3122
        %v3125 = vcombine.low %v2777, %v2841
        %v3127 = vunpack.c.l.s4 1983009808
        %v3128 = vunpack.c.0.s8 %v3127
        %v3129 = vlaneseq
        %v3130 = vshrl.u32 %v3129, 7
        %v3131 = vsub.s32 %v3128, %v3130
        %v3132 = vrot.slane %v3125, %v3131
        %v3133 = vcombine.low %v2809, %v2873
        %v3135 = vunpack.c.l.s4 1983009808
        %v3136 = vunpack.c.0.s8 %v3135
        %v3137 = vlaneseq
        %v3138 = vshrl.u32 %v3137, 7
        %v3139 = vsub.s32 %v3136, %v3138
        %v3140 = vrot.slane %v3133, %v3139
        %v3141 = vcombine.low %v2905, %v2969
        %v3143 = vunpack.c.l.s4 1983009808
        %v3144 = vunpack.c.0.s8 %v3143
        %v3145 = vlaneseq
        %v3146 = vshrl.u32 %v3145, 7
        %v3147 = vsub.s32 %v3144, %v3146
        %v3148 = vrot.slane %v3141, %v3147
        %v3149 = vcombine.low %v2937, %v3001
        %v3151 = vunpack.c.l.s4 1983009808
        %v3152 = vunpack.c.0.s8 %v3151
        %v3153 = vlaneseq
        %v3154 = vshrl.u32 %v3153, 7
        %v3155 = vsub.s32 %v3152, %v3154
        %v3156 = vrot.slane %v3149, %v3155
        %v3157 = vcombine.low %v3132, %v3140
        %v3159 = vunpack.c.l.s4 1934713408
        %v3160 = vunpack.c.0.s8 %v3159
        %v3161 = vlaneseq
        %v3162 = vshrl.u32 %v3161, 7
        %v3163 = vsub.s32 %v3160, %v3162
        %v3164 = vrot.slane %v3157, %v3163
        %v3165 = vcombine.low %v3148, %v3156
        %v3167 = vunpack.c.l.s4 1934713408
        %v3168 = vunpack.c.0.s8 %v3167
        %v3169 = vlaneseq
        %v3170 = vshrl.u32 %v3169, 7
        %v3171 = vsub.s32 %v3168, %v3170
        %v3172 = vrot.slane %v3165, %v3171
        %v3173 = vcombine.low %v3164, %v3172
        %v3174 = vcombine.high %v3164, %v3172
        %v3175 = vcombine.low %v2793, %v2857
        %v3177 = vunpack.c.l.s4 1983009808
        %v3178 = vunpack.c.0.s8 %v3177
        %v3179 = vlaneseq
        %v3180 = vshrl.u32 %v3179, 7
        %v3181 = vsub.s32 %v3178, %v3180
        %v3182 = vrot.slane %v3175, %v3181
        %v3183 = vcombine.low %v2825, %v2889
        %v3185 = vunpack.c.l.s4 1983009808
        %v3186 = vunpack.c.0.s8 %v3185
        %v3187 = vlaneseq
        %v3188 = vshrl.u32 %v3187, 7
        %v3189 = vsub.s32 %v3186, %v3188
        %v3190 = vrot.slane %v3183, %v3189
        %v3191 = vcombine.low %v2921, %v2985
        %v3193 = vunpack.c.l.s4 1983009808
        %v3194 = vunpack.c.0.s8 %v3193
        %v3195 = vlaneseq
        %v3196 = vshrl.u32 %v3195, 7
        %v3197 = vsub.s32 %v3194, %v3196
        %v3198 = vrot.slane %v3191, %v3197
        %v3199 = vcombine.low %v2953, %v3017
        %v3201 = vunpack.c.l.s4 1983009808
        %v3202 = vunpack.c.0.s8 %v3201
        %v3203 = vlaneseq
        %v3204 = vshrl.u32 %v3203, 7
        %v3205 = vsub.s32 %v3202, %v3204
        %v3206 = vrot.slane %v3199, %v3205
        %v3207 = vcombine.low %v3182, %v3190
        %v3209 = vunpack.c.l.s4 1934713408
        %v3210 = vunpack.c.0.s8 %v3209
        %v3211 = vlaneseq
        %v3212 = vshrl.u32 %v3211, 7
        %v3213 = vsub.s32 %v3210, %v3212
        %v3214 = vrot.slane %v3207, %v3213
        %v3215 = vcombine.low %v3198, %v3206
        %v3217 = vunpack.c.l.s4 1934713408
        %v3218 = vunpack.c.0.s8 %v3217
        %v3219 = vlaneseq
        %v3220 = vshrl.u32 %v3219, 7
        %v3221 = vsub.s32 %v3218, %v3220
        %v3222 = vrot.slane %v3215, %v3221
        %v3223 = vcombine.low %v3214, %v3222
        %v3224 = vcombine.high %v3214, %v3222
        %v3227 = vpack.i.b16 %v3123, %v3073
        %v3229 = vshrl.u32 %v3073, 16
        %v3230 = vshrl.u32 %v3123, 16
        %v3231 = vpack.i.b16 %v3230, %v3229
        %v3235 = vpack.i.b16 %v3124, %v3074
        %v3237 = vshrl.u32 %v3074, 16
        %v3238 = vshrl.u32 %v3124, 16
        %v3239 = vpack.i.b16 %v3238, %v3237
        %v3243 = vpack.i.b16 %v3223, %v3173
        %v3245 = vshrl.u32 %v3173, 16
        %v3246 = vshrl.u32 %v3223, 16
        %v3247 = vpack.i.b16 %v3246, %v3245
        %v3251 = vpack.i.b16 %v3224, %v3174
        %v3253 = vshrl.u32 %v3174, 16
        %v3254 = vshrl.u32 %v3224, 16
        %v3255 = vpack.i.b16 %v3254, %v3253
        %vm3257 = vcmask 261120
        %v3259 = vsel %vm3257, %v2039, 0
        %3261 = vmatprep.subr.bf16.mxu0 0
        %3262 = vmatpush1.bf16.msra.mxu0 %v3227
        %3263 = vmatprep.subr.bf16.mxu0 0
        %3264 = vmatpush1.bf16.msra.mxu0 %v3243
        %3265 = vmatprep.subr.bf16.mxu0 0
        %3266 = vmatpush1.bf16.msra.mxu0 0
        %3267 = vmatprep.subr.bf16.mxu0 0
        %3268 = vmatpush1.bf16.msra.mxu0 0
        %3269 = vmatprep.subr.bf16.mxu0 0
        %3270 = vmatpush1.bf16.msra.mxu0 0
        %3271 = vmatprep.subr.bf16.mxu0 0
        %3272 = vmatpush1.bf16.msra.mxu0 0
        %3273 = vmatprep.subr.bf16.mxu0 0
        %3274 = vmatpush1.bf16.msra.mxu0 0
        %3275 = vmatprep.subr.bf16.mxu0 0
        %3276 = vmatpush1.bf16.msra.mxu0 0
        %3277 = vmatprep.subr.bf16.mxu0 0
        %3278 = vmatpush1.bf16.msra.mxu0 0
        %3279 = vmatprep.subr.bf16.mxu0 0
        %3280 = vmatpush1.bf16.msra.mxu0 0
        %3281 = vmatprep.subr.bf16.mxu0 0
        %3282 = vmatpush1.bf16.msra.mxu0 0
        %3283 = vmatprep.subr.bf16.mxu0 0
        %3284 = vmatpush1.bf16.msra.mxu0 0
        %3285 = vmatprep.subr.bf16.mxu0 0
        %3286 = vmatpush1.bf16.msra.mxu0 0
        %3287 = vmatprep.subr.bf16.mxu0 0
        %3288 = vmatpush1.bf16.msra.mxu0 0
        %3289 = vmatprep.subr.bf16.mxu0 0
        %3290 = vmatpush1.bf16.msra.mxu0 0
        %3291 = vmatprep.subr.bf16.mxu0 0
        %3292 = vmatpush1.bf16.msra.mxu0 0
        %3293 = vmatprep.mubr.bf16.mxu0 0
        %3294 = vmatmul.mubr.bf16.gmra.mrb[0].mxu0 %v3259
        %v3295 = vpop.f32.mrb[0].mxu0
        %v3296 = vadd.f32 0.0, %v3295
        %v3297 = vpop.f32.mrb[0].mxu0
        %v3298 = vpop.f32.mrb[0].mxu0
        %v3299 = vpop.f32.mrb[0].mxu0
        %3300 = vdwg.mxu0
        %v3302 = vsel %vm3257, %v2042, 0
        %3304 = vmatprep.subr.bf16.mxu0 0
        %3305 = vmatpush1.bf16.msra.mxu0 %v3231
        %3306 = vmatprep.subr.bf16.mxu0 0
        %3307 = vmatpush1.bf16.msra.mxu0 %v3247
        %3308 = vmatprep.subr.bf16.mxu0 0
        %3309 = vmatpush1.bf16.msra.mxu0 0
        %3310 = vmatprep.subr.bf16.mxu0 0
        %3311 = vmatpush1.bf16.msra.mxu0 0
        %3312 = vmatprep.subr.bf16.mxu0 0
        %3313 = vmatpush1.bf16.msra.mxu0 0
        %3314 = vmatprep.subr.bf16.mxu0 0
        %3315 = vmatpush1.bf16.msra.mxu0 0
        %3316 = vmatprep.subr.bf16.mxu0 0
        %3317 = vmatpush1.bf16.msra.mxu0 0
        %3318 = vmatprep.subr.bf16.mxu0 0
        %3319 = vmatpush1.bf16.msra.mxu0 0
        %3320 = vmatprep.subr.bf16.mxu0 0
        %3321 = vmatpush1.bf16.msra.mxu0 0
        %3322 = vmatprep.subr.bf16.mxu0 0
        %3323 = vmatpush1.bf16.msra.mxu0 0
        %3324 = vmatprep.subr.bf16.mxu0 0
        %3325 = vmatpush1.bf16.msra.mxu0 0
        %3326 = vmatprep.subr.bf16.mxu0 0
        %3327 = vmatpush1.bf16.msra.mxu0 0
        %3328 = vmatprep.subr.bf16.mxu0 0
        %3329 = vmatpush1.bf16.msra.mxu0 0
        %3330 = vmatprep.subr.bf16.mxu0 0
        %3331 = vmatpush1.bf16.msra.mxu0 0
        %3332 = vmatprep.subr.bf16.mxu0 0
        %3333 = vmatpush1.bf16.msra.mxu0 0
        %3334 = vmatprep.subr.bf16.mxu0 0
        %3335 = vmatpush1.bf16.msra.mxu0 0
        %3336 = vmatprep.mubr.bf16.mxu0 0
        %3337 = vmatmul.mubr.bf16.gmra.mrb[0].mxu0 %v3302
        %v3338 = vpop.f32.mrb[0].mxu0
        %v3339 = vadd.f32 0.0, %v3338
        %v3340 = vpop.f32.mrb[0].mxu0
        %v3341 = vpop.f32.mrb[0].mxu0
        %v3342 = vpop.f32.mrb[0].mxu0
        %3343 = vdwg.mxu0
        %v3345 = vsel %vm3257, %v2045, 0
        %3347 = vmatprep.subr.bf16.mxu0 0
        %3348 = vmatpush1.bf16.msra.mxu0 %v3235
        %3349 = vmatprep.subr.bf16.mxu0 0
        %3350 = vmatpush1.bf16.msra.mxu0 %v3251
        %3351 = vmatprep.subr.bf16.mxu0 0
        %3352 = vmatpush1.bf16.msra.mxu0 0
        %3353 = vmatprep.subr.bf16.mxu0 0
        %3354 = vmatpush1.bf16.msra.mxu0 0
        %3355 = vmatprep.subr.bf16.mxu0 0
        %3356 = vmatpush1.bf16.msra.mxu0 0
        %3357 = vmatprep.subr.bf16.mxu0 0
        %3358 = vmatpush1.bf16.msra.mxu0 0
        %3359 = vmatprep.subr.bf16.mxu0 0
        %3360 = vmatpush1.bf16.msra.mxu0 0
        %3361 = vmatprep.subr.bf16.mxu0 0
        %3362 = vmatpush1.bf16.msra.mxu0 0
        %3363 = vmatprep.subr.bf16.mxu0 0
        %3364 = vmatpush1.bf16.msra.mxu0 0
        %3365 = vmatprep.subr.bf16.mxu0 0
        %3366 = vmatpush1.bf16.msra.mxu0 0
        %3367 = vmatprep.subr.bf16.mxu0 0
        %3368 = vmatpush1.bf16.msra.mxu0 0
        %3369 = vmatprep.subr.bf16.mxu0 0
        %3370 = vmatpush1.bf16.msra.mxu0 0
        %3371 = vmatprep.subr.bf16.mxu0 0
        %3372 = vmatpush1.bf16.msra.mxu0 0
        %3373 = vmatprep.subr.bf16.mxu0 0
        %3374 = vmatpush1.bf16.msra.mxu0 0
        %3375 = vmatprep.subr.bf16.mxu0 0
        %3376 = vmatpush1.bf16.msra.mxu0 0
        %3377 = vmatprep.subr.bf16.mxu0 0
        %3378 = vmatpush1.bf16.msra.mxu0 0
        %3379 = vmatprep.mubr.bf16.mxu0 0
        %3380 = vmatmul.mubr.bf16.gmra.mrb[0].mxu0 %v3345
        %v3381 = vpop.f32.mrb[0].mxu0
        %v3382 = vadd.f32 0.0, %v3381
        %v3383 = vpop.f32.mrb[0].mxu0
        %v3384 = vpop.f32.mrb[0].mxu0
        %v3385 = vpop.f32.mrb[0].mxu0
        %3386 = vdwg.mxu0
        %v3388 = vsel %vm3257, %v2048, 0
        %3390 = vmatprep.subr.bf16.mxu0 0
        %3391 = vmatpush1.bf16.msra.mxu0 %v3239
        %3392 = vmatprep.subr.bf16.mxu0 0
        %3393 = vmatpush1.bf16.msra.mxu0 %v3255
        %3394 = vmatprep.subr.bf16.mxu0 0
        %3395 = vmatpush1.bf16.msra.mxu0 0
        %3396 = vmatprep.subr.bf16.mxu0 0
        %3397 = vmatpush1.bf16.msra.mxu0 0
        %3398 = vmatprep.subr.bf16.mxu0 0
        %3399 = vmatpush1.bf16.msra.mxu0 0
        %3400 = vmatprep.subr.bf16.mxu0 0
        %3401 = vmatpush1.bf16.msra.mxu0 0
        %3402 = vmatprep.subr.bf16.mxu0 0
        %3403 = vmatpush1.bf16.msra.mxu0 0
        %3404 = vmatprep.subr.bf16.mxu0 0
        %3405 = vmatpush1.bf16.msra.mxu0 0
        %3406 = vmatprep.subr.bf16.mxu0 0
        %3407 = vmatpush1.bf16.msra.mxu0 0
        %3408 = vmatprep.subr.bf16.mxu0 0
        %3409 = vmatpush1.bf16.msra.mxu0 0
        %3410 = vmatprep.subr.bf16.mxu0 0
        %3411 = vmatpush1.bf16.msra.mxu0 0
        %3412 = vmatprep.subr.bf16.mxu0 0
        %3413 = vmatpush1.bf16.msra.mxu0 0
        %3414 = vmatprep.subr.bf16.mxu0 0
        %3415 = vmatpush1.bf16.msra.mxu0 0
        %3416 = vmatprep.subr.bf16.mxu0 0
        %3417 = vmatpush1.bf16.msra.mxu0 0
        %3418 = vmatprep.subr.bf16.mxu0 0
        %3419 = vmatpush1.bf16.msra.mxu0 0
        %3420 = vmatprep.subr.bf16.mxu0 0
        %3421 = vmatpush1.bf16.msra.mxu0 0
        %3422 = vmatprep.mubr.bf16.mxu0 0
        %3423 = vmatmul.mubr.bf16.gmra.mrb[0].mxu0 %v3388
        %v3424 = vpop.f32.mrb[0].mxu0
        %v3425 = vadd.f32 0.0, %v3424
        %v3426 = vpop.f32.mrb[0].mxu0
        %v3427 = vpop.f32.mrb[0].mxu0
        %v3428 = vpop.f32.mrb[0].mxu0
        %3429 = vdwg.mxu0
        %v3430 = vmul.f32 %v3296, 0.17677669
        %v3431 = vmul.f32 %v3339, 0.17677669
        %v3432 = vmul.f32 %v3382, 0.17677669
        %v3433 = vmul.f32 %v3425, 0.17677669
        %v3434 = vadd.f32 %v3430, %v1394
        %v3435 = vadd.f32 %v3431, %v1394
        %v3436 = vadd.f32 %v3432, %v1394
        %v3437 = vadd.f32 %v3433, %v1394
        %vm3438 = vcmask 64512
        %v3439 = vsel %vm3438, %v3434, -inf
        %3440 = vmax.xlane.f32.xlu0 %v3439
        %v3441 = vpop.xlane.xlu0 %3440
        %v3442 = vsel %vm3438, %v3435, -inf
        %3443 = vmax.xlane.f32.xlu0 %v3442
        %v3444 = vpop.xlane.xlu0 %3443
        %v3445 = vsel %vm3438, %v3436, -inf
        %3446 = vmax.xlane.f32.xlu0 %v3445
        %v3447 = vpop.xlane.xlu0 %3446
        %v3448 = vsel %vm3438, %v3437, -inf
        %3449 = vmax.xlane.f32.xlu0 %v3448
        %v3450 = vpop.xlane.xlu0 %3449
        %v3451 = vsub.f32 %v3434, %v3441
        %v3452 = vsub.f32 %v3435, %v3444
        %v3453 = vsub.f32 %v3436, %v3447
        %v3454 = vsub.f32 %v3437, %v3450
        %v3455 = vmul.f32 %v3451, 1.442695
        %v3456 = vpow.pop %v3455
        %v3457 = vmul.f32 %v3452, 1.442695
        %v3458 = vpow.pop %v3457
        %v3459 = vmul.f32 %v3453, 1.442695
        %v3460 = vpow.pop %v3459
        %v3461 = vmul.f32 %v3454, 1.442695
        %v3462 = vpow.pop %v3461
        %v3463 = vsel %vm3438, %v3456, 0.0
        %3464 = vadd.xlane.f32.xlu0 %v3463
        %v3465 = vpop.xlane.xlu0 %3464
        %v3466 = vsel %vm3438, %v3458, 0.0
        %3467 = vadd.xlane.f32.xlu0 %v3466
        %v3468 = vpop.xlane.xlu0 %3467
        %v3469 = vsel %vm3438, %v3460, 0.0
        %3470 = vadd.xlane.f32.xlu0 %v3469
        %v3471 = vpop.xlane.xlu0 %3470
        %v3472 = vsel %vm3438, %v3462, 0.0
        %3473 = vadd.xlane.f32.xlu0 %v3472
        %v3474 = vpop.xlane.xlu0 %3473
        %v3475 = vrcp.pop %v3465
        %v3476 = vrcp.pop %v3468
        %v3477 = vrcp.pop %v3471
        %v3478 = vrcp.pop %v3474
        %v3479 = vmul.f32 %v3456, %v3475
        %v3480 = vmul.f32 %v3458, %v3476
        %v3481 = vmul.f32 %v3460, %v3477
        %v3482 = vmul.f32 %v3462, %v3478
        %v3483 = vpack.c.bf16 %v3479, %v3479
        %v3484 = vpack.c.bf16 %v3480, %v3480
        %v3485 = vpack.c.bf16 %v3481, %v3481
        %v3486 = vpack.c.bf16 %v3482, %v3482
        %3487 = vxpose.xlu0.c.b16.start [1/8] %v1979, 128
        %3488 = vxpose.xlu0.c.b16.cont [2/8] 0, 128
        %3489 = vxpose.xlu0.c.b16.cont [3/8] 0, 128
        %3490 = vxpose.xlu0.c.b16.cont [4/8] 0, 128
        %3491 = vxpose.xlu0.c.b16.cont [5/8] 0, 128
        %3492 = vxpose.xlu0.c.b16.cont [6/8] 0, 128
        %3493 = vxpose.xlu0.c.b16.cont [7/8] 0, 128
        %3494 = vxpose.xlu0.c.b16.end [8/8] 0, 128
        %v3495 = vpop.trf.xlu0
        %v3496 = vpop.trf.xlu0
        %v3497 = vpop.trf.xlu0
        %v3498 = vpop.trf.xlu0
        %v3499 = vpop.trf.xlu0
        %v3500 = vpop.trf.xlu0
        %v3501 = vpop.trf.xlu0
        %v3502 = vpop.trf.xlu0
        %3503 = vxpose.xlu0.c.b16.start [1/8] %v1980, 128
        %3504 = vxpose.xlu0.c.b16.cont [2/8] 0, 128
        %3505 = vxpose.xlu0.c.b16.cont [3/8] 0, 128
        %3506 = vxpose.xlu0.c.b16.cont [4/8] 0, 128
        %3507 = vxpose.xlu0.c.b16.cont [5/8] 0, 128
        %3508 = vxpose.xlu0.c.b16.cont [6/8] 0, 128
        %3509 = vxpose.xlu0.c.b16.cont [7/8] 0, 128
        %3510 = vxpose.xlu0.c.b16.end [8/8] 0, 128
        %v3511 = vpop.trf.xlu0
        %v3512 = vpop.trf.xlu0
        %v3513 = vpop.trf.xlu0
        %v3514 = vpop.trf.xlu0
        %v3515 = vpop.trf.xlu0
        %v3516 = vpop.trf.xlu0
        %v3517 = vpop.trf.xlu0
        %v3518 = vpop.trf.xlu0
        %3519 = vxpose.xlu0.c.b16.start [1/8] %v1981, 128
        %3520 = vxpose.xlu0.c.b16.cont [2/8] 0, 128
        %3521 = vxpose.xlu0.c.b16.cont [3/8] 0, 128
        %3522 = vxpose.xlu0.c.b16.cont [4/8] 0, 128
        %3523 = vxpose.xlu0.c.b16.cont [5/8] 0, 128
        %3524 = vxpose.xlu0.c.b16.cont [6/8] 0, 128
        %3525 = vxpose.xlu0.c.b16.cont [7/8] 0, 128
        %3526 = vxpose.xlu0.c.b16.end [8/8] 0, 128
        %v3527 = vpop.trf.xlu0
        %v3528 = vpop.trf.xlu0
        %v3529 = vpop.trf.xlu0
        %v3530 = vpop.trf.xlu0
        %v3531 = vpop.trf.xlu0
        %v3532 = vpop.trf.xlu0
        %v3533 = vpop.trf.xlu0
        %v3534 = vpop.trf.xlu0
        %3535 = vxpose.xlu0.c.b16.start [1/8] %v1982, 128
        %3536 = vxpose.xlu0.c.b16.cont [2/8] 0, 128
        %3537 = vxpose.xlu0.c.b16.cont [3/8] 0, 128
        %3538 = vxpose.xlu0.c.b16.cont [4/8] 0, 128
        %3539 = vxpose.xlu0.c.b16.cont [5/8] 0, 128
        %3540 = vxpose.xlu0.c.b16.cont [6/8] 0, 128
        %3541 = vxpose.xlu0.c.b16.cont [7/8] 0, 128
        %3542 = vxpose.xlu0.c.b16.end [8/8] 0, 128
        %v3543 = vpop.trf.xlu0
        %v3544 = vpop.trf.xlu0
        %v3545 = vpop.trf.xlu0
        %v3546 = vpop.trf.xlu0
        %v3547 = vpop.trf.xlu0
        %v3548 = vpop.trf.xlu0
        %v3549 = vpop.trf.xlu0
        %v3550 = vpop.trf.xlu0
        %3551 = vxpose.xlu0.c.b16.start [1/8] %v1983, 128
        %3552 = vxpose.xlu0.c.b16.cont [2/8] 0, 128
        %3553 = vxpose.xlu0.c.b16.cont [3/8] 0, 128
        %3554 = vxpose.xlu0.c.b16.cont [4/8] 0, 128
        %3555 = vxpose.xlu0.c.b16.cont [5/8] 0, 128
        %3556 = vxpose.xlu0.c.b16.cont [6/8] 0, 128
        %3557 = vxpose.xlu0.c.b16.cont [7/8] 0, 128
        %3558 = vxpose.xlu0.c.b16.end [8/8] 0, 128
        %v3559 = vpop.trf.xlu0
        %v3560 = vpop.trf.xlu0
        %v3561 = vpop.trf.xlu0
        %v3562 = vpop.trf.xlu0
        %v3563 = vpop.trf.xlu0
        %v3564 = vpop.trf.xlu0
        %v3565 = vpop.trf.xlu0
        %v3566 = vpop.trf.xlu0
        %3567 = vxpose.xlu0.c.b16.start [1/8] %v1984, 128
        %3568 = vxpose.xlu0.c.b16.cont [2/8] 0, 128
        %3569 = vxpose.xlu0.c.b16.cont [3/8] 0, 128
        %3570 = vxpose.xlu0.c.b16.cont [4/8] 0, 128
        %3571 = vxpose.xlu0.c.b16.cont [5/8] 0, 128
        %3572 = vxpose.xlu0.c.b16.cont [6/8] 0, 128
        %3573 = vxpose.xlu0.c.b16.cont [7/8] 0, 128
        %3574 = vxpose.xlu0.c.b16.end [8/8] 0, 128
        %v3575 = vpop.trf.xlu0
        %v3576 = vpop.trf.xlu0
        %v3577 = vpop.trf.xlu0
        %v3578 = vpop.trf.xlu0
        %v3579 = vpop.trf.xlu0
        %v3580 = vpop.trf.xlu0
        %v3581 = vpop.trf.xlu0
        %v3582 = vpop.trf.xlu0
        %3583 = vxpose.xlu0.c.b16.start [1/8] %v1985, 128
        %3584 = vxpose.xlu0.c.b16.cont [2/8] 0, 128
        %3585 = vxpose.xlu0.c.b16.cont [3/8] 0, 128
        %3586 = vxpose.xlu0.c.b16.cont [4/8] 0, 128
        %3587 = vxpose.xlu0.c.b16.cont [5/8] 0, 128
        %3588 = vxpose.xlu0.c.b16.cont [6/8] 0, 128
        %3589 = vxpose.xlu0.c.b16.cont [7/8] 0, 128
        %3590 = vxpose.xlu0.c.b16.end [8/8] 0, 128
        %v3591 = vpop.trf.xlu0
        %v3592 = vpop.trf.xlu0
        %v3593 = vpop.trf.xlu0
        %v3594 = vpop.trf.xlu0
        %v3595 = vpop.trf.xlu0
        %v3596 = vpop.trf.xlu0
        %v3597 = vpop.trf.xlu0
        %v3598 = vpop.trf.xlu0
        %3599 = vxpose.xlu0.c.b16.start [1/8] %v1986, 128
        %3600 = vxpose.xlu0.c.b16.cont [2/8] 0, 128
        %3601 = vxpose.xlu0.c.b16.cont [3/8] 0, 128
        %3602 = vxpose.xlu0.c.b16.cont [4/8] 0, 128
        %3603 = vxpose.xlu0.c.b16.cont [5/8] 0, 128
        %3604 = vxpose.xlu0.c.b16.cont [6/8] 0, 128
        %3605 = vxpose.xlu0.c.b16.cont [7/8] 0, 128
        %3606 = vxpose.xlu0.c.b16.end [8/8] 0, 128
        %v3607 = vpop.trf.xlu0
        %v3608 = vpop.trf.xlu0
        %v3609 = vpop.trf.xlu0
        %v3610 = vpop.trf.xlu0
        %v3611 = vpop.trf.xlu0
        %v3612 = vpop.trf.xlu0
        %v3613 = vpop.trf.xlu0
        %v3614 = vpop.trf.xlu0
        %v3617 = vpack.i.b16 %v3511, %v3495
        %v3619 = vshrl.u32 %v3495, 16
        %v3620 = vshrl.u32 %v3511, 16
        %v3621 = vpack.i.b16 %v3620, %v3619
        %v3625 = vpack.i.b16 %v3543, %v3527
        %v3627 = vshrl.u32 %v3527, 16
        %v3628 = vshrl.u32 %v3543, 16
        %v3629 = vpack.i.b16 %v3628, %v3627
        %v3633 = vpack.i.b16 %v3575, %v3559
        %v3635 = vshrl.u32 %v3559, 16
        %v3636 = vshrl.u32 %v3575, 16
        %v3637 = vpack.i.b16 %v3636, %v3635
        %v3641 = vpack.i.b16 %v3607, %v3591
        %v3643 = vshrl.u32 %v3591, 16
        %v3644 = vshrl.u32 %v3607, 16
        %v3645 = vpack.i.b16 %v3644, %v3643
        %v3649 = vpack.i.b16 %v3512, %v3496
        %v3651 = vshrl.u32 %v3496, 16
        %v3652 = vshrl.u32 %v3512, 16
        %v3653 = vpack.i.b16 %v3652, %v3651
        %v3657 = vpack.i.b16 %v3544, %v3528
        %v3659 = vshrl.u32 %v3528, 16
        %v3660 = vshrl.u32 %v3544, 16
        %v3661 = vpack.i.b16 %v3660, %v3659
        %v3665 = vpack.i.b16 %v3576, %v3560
        %v3667 = vshrl.u32 %v3560, 16
        %v3668 = vshrl.u32 %v3576, 16
        %v3669 = vpack.i.b16 %v3668, %v3667
        %v3673 = vpack.i.b16 %v3608, %v3592
        %v3675 = vshrl.u32 %v3592, 16
        %v3676 = vshrl.u32 %v3608, 16
        %v3677 = vpack.i.b16 %v3676, %v3675
        %v3679 = vcombine.low %v3617, %v3633
        %v3680 = vcombine.high %v3617, %v3633
        %v3682 = vunpack.c.l.s4 1983009808
        %v3683 = vunpack.c.0.s8 %v3682
        %v3684 = vlaneseq
        %v3685 = vshrl.u32 %v3684, 7
        %v3686 = vsub.s32 %v3683, %v3685
        %v3687 = vrot.slane %v3679, %v3686
        %v3689 = vunpack.c.l.s4 1983009808
        %v3690 = vunpack.c.0.s8 %v3689
        %v3691 = vlaneseq
        %v3692 = vshrl.u32 %v3691, 7
        %v3693 = vsub.s32 %v3690, %v3692
        %v3694 = vrot.slane %v3680, %v3693
        %v3695 = vcombine.low %v3625, %v3641
        %v3696 = vcombine.high %v3625, %v3641
        %v3698 = vunpack.c.l.s4 1983009808
        %v3699 = vunpack.c.0.s8 %v3698
        %v3700 = vlaneseq
        %v3701 = vshrl.u32 %v3700, 7
        %v3702 = vsub.s32 %v3699, %v3701
        %v3703 = vrot.slane %v3695, %v3702
        %v3705 = vunpack.c.l.s4 1983009808
        %v3706 = vunpack.c.0.s8 %v3705
        %v3707 = vlaneseq
        %v3708 = vshrl.u32 %v3707, 7
        %v3709 = vsub.s32 %v3706, %v3708
        %v3710 = vrot.slane %v3696, %v3709
        %v3711 = vcombine.low %v3687, %v3703
        %v3712 = vcombine.high %v3687, %v3703
        %v3714 = vunpack.c.l.s4 1934713408
        %v3715 = vunpack.c.0.s8 %v3714
        %v3716 = vlaneseq
        %v3717 = vshrl.u32 %v3716, 7
        %v3718 = vsub.s32 %v3715, %v3717
        %v3719 = vrot.slane %v3711, %v3718
        %v3721 = vunpack.c.l.s4 1934713408
        %v3722 = vunpack.c.0.s8 %v3721
        %v3723 = vlaneseq
        %v3724 = vshrl.u32 %v3723, 7
        %v3725 = vsub.s32 %v3722, %v3724
        %v3726 = vrot.slane %v3712, %v3725
        %v3727 = vcombine.low %v3694, %v3710
        %v3728 = vcombine.high %v3694, %v3710
        %v3730 = vunpack.c.l.s4 1934713408
        %v3731 = vunpack.c.0.s8 %v3730
        %v3732 = vlaneseq
        %v3733 = vshrl.u32 %v3732, 7
        %v3734 = vsub.s32 %v3731, %v3733
        %v3735 = vrot.slane %v3727, %v3734
        %v3737 = vunpack.c.l.s4 1934713408
        %v3738 = vunpack.c.0.s8 %v3737
        %v3739 = vlaneseq
        %v3740 = vshrl.u32 %v3739, 7
        %v3741 = vsub.s32 %v3738, %v3740
        %v3742 = vrot.slane %v3728, %v3741
        %v3743 = vcombine.high %v3719, 0
        %v3744 = vcombine.high %v3726, 0
        %v3745 = vcombine.high %v3735, 0
        %v3746 = vcombine.high %v3742, 0
        %v3747 = vcombine.low %v3621, %v3637
        %v3748 = vcombine.high %v3621, %v3637
        %v3750 = vunpack.c.l.s4 1983009808
        %v3751 = vunpack.c.0.s8 %v3750
        %v3752 = vlaneseq
        %v3753 = vshrl.u32 %v3752, 7
        %v3754 = vsub.s32 %v3751, %v3753
        %v3755 = vrot.slane %v3747, %v3754
        %v3757 = vunpack.c.l.s4 1983009808
        %v3758 = vunpack.c.0.s8 %v3757
        %v3759 = vlaneseq
        %v3760 = vshrl.u32 %v3759, 7
        %v3761 = vsub.s32 %v3758, %v3760
        %v3762 = vrot.slane %v3748, %v3761
        %v3763 = vcombine.low %v3629, %v3645
        %v3764 = vcombine.high %v3629, %v3645
        %v3766 = vunpack.c.l.s4 1983009808
        %v3767 = vunpack.c.0.s8 %v3766
        %v3768 = vlaneseq
        %v3769 = vshrl.u32 %v3768, 7
        %v3770 = vsub.s32 %v3767, %v3769
        %v3771 = vrot.slane %v3763, %v3770
        %v3773 = vunpack.c.l.s4 1983009808
        %v3774 = vunpack.c.0.s8 %v3773
        %v3775 = vlaneseq
        %v3776 = vshrl.u32 %v3775, 7
        %v3777 = vsub.s32 %v3774, %v3776
        %v3778 = vrot.slane %v3764, %v3777
        %v3779 = vcombine.low %v3755, %v3771
        %v3780 = vcombine.high %v3755, %v3771
        %v3782 = vunpack.c.l.s4 1934713408
        %v3783 = vunpack.c.0.s8 %v3782
        %v3784 = vlaneseq
        %v3785 = vshrl.u32 %v3784, 7
        %v3786 = vsub.s32 %v3783, %v3785
        %v3787 = vrot.slane %v3779, %v3786
        %v3789 = vunpack.c.l.s4 1934713408
        %v3790 = vunpack.c.0.s8 %v3789
        %v3791 = vlaneseq
        %v3792 = vshrl.u32 %v3791, 7
        %v3793 = vsub.s32 %v3790, %v3792
        %v3794 = vrot.slane %v3780, %v3793
        %v3795 = vcombine.low %v3762, %v3778
        %v3796 = vcombine.high %v3762, %v3778
        %v3798 = vunpack.c.l.s4 1934713408
        %v3799 = vunpack.c.0.s8 %v3798
        %v3800 = vlaneseq
        %v3801 = vshrl.u32 %v3800, 7
        %v3802 = vsub.s32 %v3799, %v3801
        %v3803 = vrot.slane %v3795, %v3802
        %v3805 = vunpack.c.l.s4 1934713408
        %v3806 = vunpack.c.0.s8 %v3805
        %v3807 = vlaneseq
        %v3808 = vshrl.u32 %v3807, 7
        %v3809 = vsub.s32 %v3806, %v3808
        %v3810 = vrot.slane %v3796, %v3809
        %v3811 = vcombine.high %v3787, 0
        %v3812 = vcombine.high %v3794, 0
        %v3813 = vcombine.high %v3803, 0
        %v3814 = vcombine.high %v3810, 0
        %v3815 = vcombine.low %v3649, %v3665
        %v3816 = vcombine.high %v3649, %v3665
        %v3818 = vunpack.c.l.s4 1983009808
        %v3819 = vunpack.c.0.s8 %v3818
        %v3820 = vlaneseq
        %v3821 = vshrl.u32 %v3820, 7
        %v3822 = vsub.s32 %v3819, %v3821
        %v3823 = vrot.slane %v3815, %v3822
        %v3825 = vunpack.c.l.s4 1983009808
        %v3826 = vunpack.c.0.s8 %v3825
        %v3827 = vlaneseq
        %v3828 = vshrl.u32 %v3827, 7
        %v3829 = vsub.s32 %v3826, %v3828
        %v3830 = vrot.slane %v3816, %v3829
        %v3831 = vcombine.low %v3657, %v3673
        %v3832 = vcombine.high %v3657, %v3673
        %v3834 = vunpack.c.l.s4 1983009808
        %v3835 = vunpack.c.0.s8 %v3834
        %v3836 = vlaneseq
        %v3837 = vshrl.u32 %v3836, 7
        %v3838 = vsub.s32 %v3835, %v3837
        %v3839 = vrot.slane %v3831, %v3838
        %v3841 = vunpack.c.l.s4 1983009808
        %v3842 = vunpack.c.0.s8 %v3841
        %v3843 = vlaneseq
        %v3844 = vshrl.u32 %v3843, 7
        %v3845 = vsub.s32 %v3842, %v3844
        %v3846 = vrot.slane %v3832, %v3845
        %v3847 = vcombine.low %v3823, %v3839
        %v3848 = vcombine.high %v3823, %v3839
        %v3850 = vunpack.c.l.s4 1934713408
        %v3851 = vunpack.c.0.s8 %v3850
        %v3852 = vlaneseq
        %v3853 = vshrl.u32 %v3852, 7
        %v3854 = vsub.s32 %v3851, %v3853
        %v3855 = vrot.slane %v3847, %v3854
        %v3857 = vunpack.c.l.s4 1934713408
        %v3858 = vunpack.c.0.s8 %v3857
        %v3859 = vlaneseq
        %v3860 = vshrl.u32 %v3859, 7
        %v3861 = vsub.s32 %v3858, %v3860
        %v3862 = vrot.slane %v3848, %v3861
        %v3863 = vcombine.low %v3830, %v3846
        %v3864 = vcombine.high %v3830, %v3846
        %v3866 = vunpack.c.l.s4 1934713408
        %v3867 = vunpack.c.0.s8 %v3866
        %v3868 = vlaneseq
        %v3869 = vshrl.u32 %v3868, 7
        %v3870 = vsub.s32 %v3867, %v3869
        %v3871 = vrot.slane %v3863, %v3870
        %v3873 = vunpack.c.l.s4 1934713408
        %v3874 = vunpack.c.0.s8 %v3873
        %v3875 = vlaneseq
        %v3876 = vshrl.u32 %v3875, 7
        %v3877 = vsub.s32 %v3874, %v3876
        %v3878 = vrot.slane %v3864, %v3877
        %v3879 = vcombine.high %v3855, 0
        %v3880 = vcombine.high %v3862, 0
        %v3881 = vcombine.high %v3871, 0
        %v3882 = vcombine.high %v3878, 0
        %v3883 = vcombine.low %v3653, %v3669
        %v3884 = vcombine.high %v3653, %v3669
        %v3886 = vunpack.c.l.s4 1983009808
        %v3887 = vunpack.c.0.s8 %v3886
        %v3888 = vlaneseq
        %v3889 = vshrl.u32 %v3888, 7
        %v3890 = vsub.s32 %v3887, %v3889
        %v3891 = vrot.slane %v3883, %v3890
        %v3893 = vunpack.c.l.s4 1983009808
        %v3894 = vunpack.c.0.s8 %v3893
        %v3895 = vlaneseq
        %v3896 = vshrl.u32 %v3895, 7
        %v3897 = vsub.s32 %v3894, %v3896
        %v3898 = vrot.slane %v3884, %v3897
        %v3899 = vcombine.low %v3661, %v3677
        %v3900 = vcombine.high %v3661, %v3677
        %v3902 = vunpack.c.l.s4 1983009808
        %v3903 = vunpack.c.0.s8 %v3902
        %v3904 = vlaneseq
        %v3905 = vshrl.u32 %v3904, 7
        %v3906 = vsub.s32 %v3903, %v3905
        %v3907 = vrot.slane %v3899, %v3906
        %v3909 = vunpack.c.l.s4 1983009808
        %v3910 = vunpack.c.0.s8 %v3909
        %v3911 = vlaneseq
        %v3912 = vshrl.u32 %v3911, 7
        %v3913 = vsub.s32 %v3910, %v3912
        %v3914 = vrot.slane %v3900, %v3913
        %v3915 = vcombine.low %v3891, %v3907
        %v3916 = vcombine.high %v3891, %v3907
        %v3918 = vunpack.c.l.s4 1934713408
        %v3919 = vunpack.c.0.s8 %v3918
        %v3920 = vlaneseq
        %v3921 = vshrl.u32 %v3920, 7
        %v3922 = vsub.s32 %v3919, %v3921
        %v3923 = vrot.slane %v3915, %v3922
        %v3925 = vunpack.c.l.s4 1934713408
        %v3926 = vunpack.c.0.s8 %v3925
        %v3927 = vlaneseq
        %v3928 = vshrl.u32 %v3927, 7
        %v3929 = vsub.s32 %v3926, %v3928
        %v3930 = vrot.slane %v3916, %v3929
        %v3931 = vcombine.low %v3898, %v3914
        %v3932 = vcombine.high %v3898, %v3914
        %v3934 = vunpack.c.l.s4 1934713408
        %v3935 = vunpack.c.0.s8 %v3934
        %v3936 = vlaneseq
        %v3937 = vshrl.u32 %v3936, 7
        %v3938 = vsub.s32 %v3935, %v3937
        %v3939 = vrot.slane %v3931, %v3938
        %v3941 = vunpack.c.l.s4 1934713408
        %v3942 = vunpack.c.0.s8 %v3941
        %v3943 = vlaneseq
        %v3944 = vshrl.u32 %v3943, 7
        %v3945 = vsub.s32 %v3942, %v3944
        %v3946 = vrot.slane %v3932, %v3945
        %v3947 = vcombine.high %v3923, 0
        %v3948 = vcombine.high %v3930, 0
        %v3949 = vcombine.high %v3939, 0
        %v3950 = vcombine.high %v3946, 0
        %3951 = vxpose.xlu0.c.b16.start [1/8] %v3719, 128
        %3952 = vxpose.xlu0.c.b16.cont [2/8] 0, 128
        %3953 = vxpose.xlu0.c.b16.cont [3/8] 0, 128
        %3954 = vxpose.xlu0.c.b16.cont [4/8] 0, 128
        %3955 = vxpose.xlu0.c.b16.cont [5/8] 0, 128
        %3956 = vxpose.xlu0.c.b16.cont [6/8] 0, 128
        %3957 = vxpose.xlu0.c.b16.cont [7/8] 0, 128
        %3958 = vxpose.xlu0.c.b16.end [8/8] 0, 128
        %v3959 = vpop.trf.xlu0
        %v3960 = vpop.trf.xlu0
        %v3961 = vpop.trf.xlu0
        %v3962 = vpop.trf.xlu0
        %v3963 = vpop.trf.xlu0
        %v3964 = vpop.trf.xlu0
        %v3965 = vpop.trf.xlu0
        %v3966 = vpop.trf.xlu0
        %3967 = vxpose.xlu0.c.b16.start [1/8] %v3787, 128
        %3968 = vxpose.xlu0.c.b16.cont [2/8] 0, 128
        %3969 = vxpose.xlu0.c.b16.cont [3/8] 0, 128
        %3970 = vxpose.xlu0.c.b16.cont [4/8] 0, 128
        %3971 = vxpose.xlu0.c.b16.cont [5/8] 0, 128
        %3972 = vxpose.xlu0.c.b16.cont [6/8] 0, 128
        %3973 = vxpose.xlu0.c.b16.cont [7/8] 0, 128
        %3974 = vxpose.xlu0.c.b16.end [8/8] 0, 128
        %v3975 = vpop.trf.xlu0
        %v3976 = vpop.trf.xlu0
        %v3977 = vpop.trf.xlu0
        %v3978 = vpop.trf.xlu0
        %v3979 = vpop.trf.xlu0
        %v3980 = vpop.trf.xlu0
        %v3981 = vpop.trf.xlu0
        %v3982 = vpop.trf.xlu0
        %3983 = vxpose.xlu0.c.b16.start [1/8] %v3743, 128
        %3984 = vxpose.xlu0.c.b16.cont [2/8] 0, 128
        %3985 = vxpose.xlu0.c.b16.cont [3/8] 0, 128
        %3986 = vxpose.xlu0.c.b16.cont [4/8] 0, 128
        %3987 = vxpose.xlu0.c.b16.cont [5/8] 0, 128
        %3988 = vxpose.xlu0.c.b16.cont [6/8] 0, 128
        %3989 = vxpose.xlu0.c.b16.cont [7/8] 0, 128
        %3990 = vxpose.xlu0.c.b16.end [8/8] 0, 128
        %v3991 = vpop.trf.xlu0
        %v3992 = vpop.trf.xlu0
        %v3993 = vpop.trf.xlu0
        %v3994 = vpop.trf.xlu0
        %v3995 = vpop.trf.xlu0
        %v3996 = vpop.trf.xlu0
        %v3997 = vpop.trf.xlu0
        %v3998 = vpop.trf.xlu0
        %3999 = vxpose.xlu0.c.b16.start [1/8] %v3811, 128
        %4000 = vxpose.xlu0.c.b16.cont [2/8] 0, 128
        %4001 = vxpose.xlu0.c.b16.cont [3/8] 0, 128
        %4002 = vxpose.xlu0.c.b16.cont [4/8] 0, 128
        %4003 = vxpose.xlu0.c.b16.cont [5/8] 0, 128
        %4004 = vxpose.xlu0.c.b16.cont [6/8] 0, 128
        %4005 = vxpose.xlu0.c.b16.cont [7/8] 0, 128
        %4006 = vxpose.xlu0.c.b16.end [8/8] 0, 128
        %v4007 = vpop.trf.xlu0
        %v4008 = vpop.trf.xlu0
        %v4009 = vpop.trf.xlu0
        %v4010 = vpop.trf.xlu0
        %v4011 = vpop.trf.xlu0
        %v4012 = vpop.trf.xlu0
        %v4013 = vpop.trf.xlu0
        %v4014 = vpop.trf.xlu0
        %4015 = vxpose.xlu0.c.b16.start [1/8] %v3726, 128
        %4016 = vxpose.xlu0.c.b16.cont [2/8] 0, 128
        %4017 = vxpose.xlu0.c.b16.cont [3/8] 0, 128
        %4018 = vxpose.xlu0.c.b16.cont [4/8] 0, 128
        %4019 = vxpose.xlu0.c.b16.cont [5/8] 0, 128
        %4020 = vxpose.xlu0.c.b16.cont [6/8] 0, 128
        %4021 = vxpose.xlu0.c.b16.cont [7/8] 0, 128
        %4022 = vxpose.xlu0.c.b16.end [8/8] 0, 128
        %v4023 = vpop.trf.xlu0
        %v4024 = vpop.trf.xlu0
        %v4025 = vpop.trf.xlu0
        %v4026 = vpop.trf.xlu0
        %v4027 = vpop.trf.xlu0
        %v4028 = vpop.trf.xlu0
        %v4029 = vpop.trf.xlu0
        %v4030 = vpop.trf.xlu0
        %4031 = vxpose.xlu0.c.b16.start [1/8] %v3794, 128
        %4032 = vxpose.xlu0.c.b16.cont [2/8] 0, 128
        %4033 = vxpose.xlu0.c.b16.cont [3/8] 0, 128
        %4034 = vxpose.xlu0.c.b16.cont [4/8] 0, 128
        %4035 = vxpose.xlu0.c.b16.cont [5/8] 0, 128
        %4036 = vxpose.xlu0.c.b16.cont [6/8] 0, 128
        %4037 = vxpose.xlu0.c.b16.cont [7/8] 0, 128
        %4038 = vxpose.xlu0.c.b16.end [8/8] 0, 128
        %v4039 = vpop.trf.xlu0
        %v4040 = vpop.trf.xlu0
        %v4041 = vpop.trf.xlu0
        %v4042 = vpop.trf.xlu0
        %v4043 = vpop.trf.xlu0
        %v4044 = vpop.trf.xlu0
        %v4045 = vpop.trf.xlu0
        %v4046 = vpop.trf.xlu0
        %4047 = vxpose.xlu0.c.b16.start [1/8] %v3744, 128
        %4048 = vxpose.xlu0.c.b16.cont [2/8] 0, 128
        %4049 = vxpose.xlu0.c.b16.cont [3/8] 0, 128
        %4050 = vxpose.xlu0.c.b16.cont [4/8] 0, 128
        %4051 = vxpose.xlu0.c.b16.cont [5/8] 0, 128
        %4052 = vxpose.xlu0.c.b16.cont [6/8] 0, 128
        %4053 = vxpose.xlu0.c.b16.cont [7/8] 0, 128
        %4054 = vxpose.xlu0.c.b16.end [8/8] 0, 128
        %v4055 = vpop.trf.xlu0
        %v4056 = vpop.trf.xlu0
        %v4057 = vpop.trf.xlu0
        %v4058 = vpop.trf.xlu0
        %v4059 = vpop.trf.xlu0
        %v4060 = vpop.trf.xlu0
        %v4061 = vpop.trf.xlu0
        %v4062 = vpop.trf.xlu0
        %4063 = vxpose.xlu0.c.b16.start [1/8] %v3812, 128
        %4064 = vxpose.xlu0.c.b16.cont [2/8] 0, 128
        %4065 = vxpose.xlu0.c.b16.cont [3/8] 0, 128
        %4066 = vxpose.xlu0.c.b16.cont [4/8] 0, 128
        %4067 = vxpose.xlu0.c.b16.cont [5/8] 0, 128
        %4068 = vxpose.xlu0.c.b16.cont [6/8] 0, 128
        %4069 = vxpose.xlu0.c.b16.cont [7/8] 0, 128
        %4070 = vxpose.xlu0.c.b16.end [8/8] 0, 128
        %v4071 = vpop.trf.xlu0
        %v4072 = vpop.trf.xlu0
        %v4073 = vpop.trf.xlu0
        %v4074 = vpop.trf.xlu0
        %v4075 = vpop.trf.xlu0
        %v4076 = vpop.trf.xlu0
        %v4077 = vpop.trf.xlu0
        %v4078 = vpop.trf.xlu0
        %4079 = vxpose.xlu0.c.b16.start [1/8] %v3735, 128
        %4080 = vxpose.xlu0.c.b16.cont [2/8] 0, 128
        %4081 = vxpose.xlu0.c.b16.cont [3/8] 0, 128
        %4082 = vxpose.xlu0.c.b16.cont [4/8] 0, 128
        %4083 = vxpose.xlu0.c.b16.cont [5/8] 0, 128
        %4084 = vxpose.xlu0.c.b16.cont [6/8] 0, 128
        %4085 = vxpose.xlu0.c.b16.cont [7/8] 0, 128
        %4086 = vxpose.xlu0.c.b16.end [8/8] 0, 128
        %v4087 = vpop.trf.xlu0
        %v4088 = vpop.trf.xlu0
        %v4089 = vpop.trf.xlu0
        %v4090 = vpop.trf.xlu0
        %v4091 = vpop.trf.xlu0
        %v4092 = vpop.trf.xlu0
        %v4093 = vpop.trf.xlu0
        %v4094 = vpop.trf.xlu0
        %4095 = vxpose.xlu0.c.b16.start [1/8] %v3803, 128
        %4096 = vxpose.xlu0.c.b16.cont [2/8] 0, 128
        %4097 = vxpose.xlu0.c.b16.cont [3/8] 0, 128
        %4098 = vxpose.xlu0.c.b16.cont [4/8] 0, 128
        %4099 = vxpose.xlu0.c.b16.cont [5/8] 0, 128
        %4100 = vxpose.xlu0.c.b16.cont [6/8] 0, 128
        %4101 = vxpose.xlu0.c.b16.cont [7/8] 0, 128
        %4102 = vxpose.xlu0.c.b16.end [8/8] 0, 128
        %v4103 = vpop.trf.xlu0
        %v4104 = vpop.trf.xlu0
        %v4105 = vpop.trf.xlu0
        %v4106 = vpop.trf.xlu0
        %v4107 = vpop.trf.xlu0
        %v4108 = vpop.trf.xlu0
        %v4109 = vpop.trf.xlu0
        %v4110 = vpop.trf.xlu0
        %4111 = vxpose.xlu0.c.b16.start [1/8] %v3745, 128
        %4112 = vxpose.xlu0.c.b16.cont [2/8] 0, 128
        %4113 = vxpose.xlu0.c.b16.cont [3/8] 0, 128
        %4114 = vxpose.xlu0.c.b16.cont [4/8] 0, 128
        %4115 = vxpose.xlu0.c.b16.cont [5/8] 0, 128
        %4116 = vxpose.xlu0.c.b16.cont [6/8] 0, 128
        %4117 = vxpose.xlu0.c.b16.cont [7/8] 0, 128
        %4118 = vxpose.xlu0.c.b16.end [8/8] 0, 128
        %v4119 = vpop.trf.xlu0
        %v4120 = vpop.trf.xlu0
        %v4121 = vpop.trf.xlu0
        %v4122 = vpop.trf.xlu0
        %v4123 = vpop.trf.xlu0
        %v4124 = vpop.trf.xlu0
        %v4125 = vpop.trf.xlu0
        %v4126 = vpop.trf.xlu0
        %4127 = vxpose.xlu0.c.b16.start [1/8] %v3813, 128
        %4128 = vxpose.xlu0.c.b16.cont [2/8] 0, 128
        %4129 = vxpose.xlu0.c.b16.cont [3/8] 0, 128
        %4130 = vxpose.xlu0.c.b16.cont [4/8] 0, 128
        %4131 = vxpose.xlu0.c.b16.cont [5/8] 0, 128
        %4132 = vxpose.xlu0.c.b16.cont [6/8] 0, 128
        %4133 = vxpose.xlu0.c.b16.cont [7/8] 0, 128
        %4134 = vxpose.xlu0.c.b16.end [8/8] 0, 128
        %v4135 = vpop.trf.xlu0
        %v4136 = vpop.trf.xlu0
        %v4137 = vpop.trf.xlu0
        %v4138 = vpop.trf.xlu0
        %v4139 = vpop.trf.xlu0
        %v4140 = vpop.trf.xlu0
        %v4141 = vpop.trf.xlu0
        %v4142 = vpop.trf.xlu0
        %4143 = vxpose.xlu0.c.b16.start [1/8] %v3742, 128
        %4144 = vxpose.xlu0.c.b16.cont [2/8] 0, 128
        %4145 = vxpose.xlu0.c.b16.cont [3/8] 0, 128
        %4146 = vxpose.xlu0.c.b16.cont [4/8] 0, 128
        %4147 = vxpose.xlu0.c.b16.cont [5/8] 0, 128
        %4148 = vxpose.xlu0.c.b16.cont [6/8] 0, 128
        %4149 = vxpose.xlu0.c.b16.cont [7/8] 0, 128
        %4150 = vxpose.xlu0.c.b16.end [8/8] 0, 128
        %v4151 = vpop.trf.xlu0
        %v4152 = vpop.trf.xlu0
        %v4153 = vpop.trf.xlu0
        %v4154 = vpop.trf.xlu0
        %v4155 = vpop.trf.xlu0
        %v4156 = vpop.trf.xlu0
        %v4157 = vpop.trf.xlu0
        %v4158 = vpop.trf.xlu0
        %4159 = vxpose.xlu0.c.b16.start [1/8] %v3810, 128
        %4160 = vxpose.xlu0.c.b16.cont [2/8] 0, 128
        %4161 = vxpose.xlu0.c.b16.cont [3/8] 0, 128
        %4162 = vxpose.xlu0.c.b16.cont [4/8] 0, 128
        %4163 = vxpose.xlu0.c.b16.cont [5/8] 0, 128
        %4164 = vxpose.xlu0.c.b16.cont [6/8] 0, 128
        %4165 = vxpose.xlu0.c.b16.cont [7/8] 0, 128
        %4166 = vxpose.xlu0.c.b16.end [8/8] 0, 128
        %v4167 = vpop.trf.xlu0
        %v4168 = vpop.trf.xlu0
        %v4169 = vpop.trf.xlu0
        %v4170 = vpop.trf.xlu0
        %v4171 = vpop.trf.xlu0
        %v4172 = vpop.trf.xlu0
        %v4173 = vpop.trf.xlu0
        %v4174 = vpop.trf.xlu0
        %4175 = vxpose.xlu0.c.b16.start [1/8] %v3746, 128
        %4176 = vxpose.xlu0.c.b16.cont [2/8] 0, 128
        %4177 = vxpose.xlu0.c.b16.cont [3/8] 0, 128
        %4178 = vxpose.xlu0.c.b16.cont [4/8] 0, 128
        %4179 = vxpose.xlu0.c.b16.cont [5/8] 0, 128
        %4180 = vxpose.xlu0.c.b16.cont [6/8] 0, 128
        %4181 = vxpose.xlu0.c.b16.cont [7/8] 0, 128
        %4182 = vxpose.xlu0.c.b16.end [8/8] 0, 128
        %v4183 = vpop.trf.xlu0
        %v4184 = vpop.trf.xlu0
        %v4185 = vpop.trf.xlu0
        %v4186 = vpop.trf.xlu0
        %v4187 = vpop.trf.xlu0
        %v4188 = vpop.trf.xlu0
        %v4189 = vpop.trf.xlu0
        %v4190 = vpop.trf.xlu0
        %4191 = vxpose.xlu0.c.b16.start [1/8] %v3814, 128
        %4192 = vxpose.xlu0.c.b16.cont [2/8] 0, 128
        %4193 = vxpose.xlu0.c.b16.cont [3/8] 0, 128
        %4194 = vxpose.xlu0.c.b16.cont [4/8] 0, 128
        %4195 = vxpose.xlu0.c.b16.cont [5/8] 0, 128
        %4196 = vxpose.xlu0.c.b16.cont [6/8] 0, 128
        %4197 = vxpose.xlu0.c.b16.cont [7/8] 0, 128
        %4198 = vxpose.xlu0.c.b16.end [8/8] 0, 128
        %v4199 = vpop.trf.xlu0
        %v4200 = vpop.trf.xlu0
        %v4201 = vpop.trf.xlu0
        %v4202 = vpop.trf.xlu0
        %v4203 = vpop.trf.xlu0
        %v4204 = vpop.trf.xlu0
        %v4205 = vpop.trf.xlu0
        %v4206 = vpop.trf.xlu0
        %4207 = vxpose.xlu0.c.b16.start [1/8] %v3855, 128
        %4208 = vxpose.xlu0.c.b16.cont [2/8] 0, 128
        %4209 = vxpose.xlu0.c.b16.cont [3/8] 0, 128
        %4210 = vxpose.xlu0.c.b16.cont [4/8] 0, 128
        %4211 = vxpose.xlu0.c.b16.cont [5/8] 0, 128
        %4212 = vxpose.xlu0.c.b16.cont [6/8] 0, 128
        %4213 = vxpose.xlu0.c.b16.cont [7/8] 0, 128
        %4214 = vxpose.xlu0.c.b16.end [8/8] 0, 128
        %v4215 = vpop.trf.xlu0
        %v4216 = vpop.trf.xlu0
        %v4217 = vpop.trf.xlu0
        %v4218 = vpop.trf.xlu0
        %v4219 = vpop.trf.xlu0
        %v4220 = vpop.trf.xlu0
        %v4221 = vpop.trf.xlu0
        %v4222 = vpop.trf.xlu0
        %4223 = vxpose.xlu0.c.b16.start [1/8] %v3923, 128
        %4224 = vxpose.xlu0.c.b16.cont [2/8] 0, 128
        %4225 = vxpose.xlu0.c.b16.cont [3/8] 0, 128
        %4226 = vxpose.xlu0.c.b16.cont [4/8] 0, 128
        %4227 = vxpose.xlu0.c.b16.cont [5/8] 0, 128
        %4228 = vxpose.xlu0.c.b16.cont [6/8] 0, 128
        %4229 = vxpose.xlu0.c.b16.cont [7/8] 0, 128
        %4230 = vxpose.xlu0.c.b16.end [8/8] 0, 128
        %v4231 = vpop.trf.xlu0
        %v4232 = vpop.trf.xlu0
        %v4233 = vpop.trf.xlu0
        %v4234 = vpop.trf.xlu0
        %v4235 = vpop.trf.xlu0
        %v4236 = vpop.trf.xlu0
        %v4237 = vpop.trf.xlu0
        %v4238 = vpop.trf.xlu0
        %4239 = vxpose.xlu0.c.b16.start [1/8] %v3879, 128
        %4240 = vxpose.xlu0.c.b16.cont [2/8] 0, 128
        %4241 = vxpose.xlu0.c.b16.cont [3/8] 0, 128
        %4242 = vxpose.xlu0.c.b16.cont [4/8] 0, 128
        %4243 = vxpose.xlu0.c.b16.cont [5/8] 0, 128
        %4244 = vxpose.xlu0.c.b16.cont [6/8] 0, 128
        %4245 = vxpose.xlu0.c.b16.cont [7/8] 0, 128
        %4246 = vxpose.xlu0.c.b16.end [8/8] 0, 128
        %v4247 = vpop.trf.xlu0
        %v4248 = vpop.trf.xlu0
        %v4249 = vpop.trf.xlu0
        %v4250 = vpop.trf.xlu0
        %v4251 = vpop.trf.xlu0
        %v4252 = vpop.trf.xlu0
        %v4253 = vpop.trf.xlu0
        %v4254 = vpop.trf.xlu0
        %4255 = vxpose.xlu0.c.b16.start [1/8] %v3947, 128
        %4256 = vxpose.xlu0.c.b16.cont [2/8] 0, 128
        %4257 = vxpose.xlu0.c.b16.cont [3/8] 0, 128
        %4258 = vxpose.xlu0.c.b16.cont [4/8] 0, 128
        %4259 = vxpose.xlu0.c.b16.cont [5/8] 0, 128
        %4260 = vxpose.xlu0.c.b16.cont [6/8] 0, 128
        %4261 = vxpose.xlu0.c.b16.cont [7/8] 0, 128
        %4262 = vxpose.xlu0.c.b16.end [8/8] 0, 128
        %v4263 = vpop.trf.xlu0
        %v4264 = vpop.trf.xlu0
        %v4265 = vpop.trf.xlu0
        %v4266 = vpop.trf.xlu0
        %v4267 = vpop.trf.xlu0
        %v4268 = vpop.trf.xlu0
        %v4269 = vpop.trf.xlu0
        %v4270 = vpop.trf.xlu0
        %4271 = vxpose.xlu0.c.b16.start [1/8] %v3862, 128
        %4272 = vxpose.xlu0.c.b16.cont [2/8] 0, 128
        %4273 = vxpose.xlu0.c.b16.cont [3/8] 0, 128
        %4274 = vxpose.xlu0.c.b16.cont [4/8] 0, 128
        %4275 = vxpose.xlu0.c.b16.cont [5/8] 0, 128
        %4276 = vxpose.xlu0.c.b16.cont [6/8] 0, 128
        %4277 = vxpose.xlu0.c.b16.cont [7/8] 0, 128
        %4278 = vxpose.xlu0.c.b16.end [8/8] 0, 128
        %v4279 = vpop.trf.xlu0
        %v4280 = vpop.trf.xlu0
        %v4281 = vpop.trf.xlu0
        %v4282 = vpop.trf.xlu0
        %v4283 = vpop.trf.xlu0
        %v4284 = vpop.trf.xlu0
        %v4285 = vpop.trf.xlu0
        %v4286 = vpop.trf.xlu0
        %4287 = vxpose.xlu0.c.b16.start [1/8] %v3930, 128
        %4288 = vxpose.xlu0.c.b16.cont [2/8] 0, 128
        %4289 = vxpose.xlu0.c.b16.cont [3/8] 0, 128
        %4290 = vxpose.xlu0.c.b16.cont [4/8] 0, 128
        %4291 = vxpose.xlu0.c.b16.cont [5/8] 0, 128
        %4292 = vxpose.xlu0.c.b16.cont [6/8] 0, 128
        %4293 = vxpose.xlu0.c.b16.cont [7/8] 0, 128
        %4294 = vxpose.xlu0.c.b16.end [8/8] 0, 128
        %v4295 = vpop.trf.xlu0
        %v4296 = vpop.trf.xlu0
        %v4297 = vpop.trf.xlu0
        %v4298 = vpop.trf.xlu0
        %v4299 = vpop.trf.xlu0
        %v4300 = vpop.trf.xlu0
        %v4301 = vpop.trf.xlu0
        %v4302 = vpop.trf.xlu0
        %4303 = vxpose.xlu0.c.b16.start [1/8] %v3880, 128
        %4304 = vxpose.xlu0.c.b16.cont [2/8] 0, 128
        %4305 = vxpose.xlu0.c.b16.cont [3/8] 0, 128
        %4306 = vxpose.xlu0.c.b16.cont [4/8] 0, 128
        %4307 = vxpose.xlu0.c.b16.cont [5/8] 0, 128
        %4308 = vxpose.xlu0.c.b16.cont [6/8] 0, 128
        %4309 = vxpose.xlu0.c.b16.cont [7/8] 0, 128
        %4310 = vxpose.xlu0.c.b16.end [8/8] 0, 128
        %v4311 = vpop.trf.xlu0
        %v4312 = vpop.trf.xlu0
        %v4313 = vpop.trf.xlu0
        %v4314 = vpop.trf.xlu0
        %v4315 = vpop.trf.xlu0
        %v4316 = vpop.trf.xlu0
        %v4317 = vpop.trf.xlu0
        %v4318 = vpop.trf.xlu0
        %4319 = vxpose.xlu0.c.b16.start [1/8] %v3948, 128
        %4320 = vxpose.xlu0.c.b16.cont [2/8] 0, 128
        %4321 = vxpose.xlu0.c.b16.cont [3/8] 0, 128
        %4322 = vxpose.xlu0.c.b16.cont [4/8] 0, 128
        %4323 = vxpose.xlu0.c.b16.cont [5/8] 0, 128
        %4324 = vxpose.xlu0.c.b16.cont [6/8] 0, 128
        %4325 = vxpose.xlu0.c.b16.cont [7/8] 0, 128
        %4326 = vxpose.xlu0.c.b16.end [8/8] 0, 128
        %v4327 = vpop.trf.xlu0
        %v4328 = vpop.trf.xlu0
        %v4329 = vpop.trf.xlu0
        %v4330 = vpop.trf.xlu0
        %v4331 = vpop.trf.xlu0
        %v4332 = vpop.trf.xlu0
        %v4333 = vpop.trf.xlu0
        %v4334 = vpop.trf.xlu0
        %4335 = vxpose.xlu0.c.b16.start [1/8] %v3871, 128
        %4336 = vxpose.xlu0.c.b16.cont [2/8] 0, 128
        %4337 = vxpose.xlu0.c.b16.cont [3/8] 0, 128
        %4338 = vxpose.xlu0.c.b16.cont [4/8] 0, 128
        %4339 = vxpose.xlu0.c.b16.cont [5/8] 0, 128
        %4340 = vxpose.xlu0.c.b16.cont [6/8] 0, 128
        %4341 = vxpose.xlu0.c.b16.cont [7/8] 0, 128
        %4342 = vxpose.xlu0.c.b16.end [8/8] 0, 128
        %v4343 = vpop.trf.xlu0
        %v4344 = vpop.trf.xlu0
        %v4345 = vpop.trf.xlu0
        %v4346 = vpop.trf.xlu0
        %v4347 = vpop.trf.xlu0
        %v4348 = vpop.trf.xlu0
        %v4349 = vpop.trf.xlu0
        %v4350 = vpop.trf.xlu0
        %4351 = vxpose.xlu0.c.b16.start [1/8] %v3939, 128
        %4352 = vxpose.xlu0.c.b16.cont [2/8] 0, 128
        %4353 = vxpose.xlu0.c.b16.cont [3/8] 0, 128
        %4354 = vxpose.xlu0.c.b16.cont [4/8] 0, 128
        %4355 = vxpose.xlu0.c.b16.cont [5/8] 0, 128
        %4356 = vxpose.xlu0.c.b16.cont [6/8] 0, 128
        %4357 = vxpose.xlu0.c.b16.cont [7/8] 0, 128
        %4358 = vxpose.xlu0.c.b16.end [8/8] 0, 128
        %v4359 = vpop.trf.xlu0
        %v4360 = vpop.trf.xlu0
        %v4361 = vpop.trf.xlu0
        %v4362 = vpop.trf.xlu0
        %v4363 = vpop.trf.xlu0
        %v4364 = vpop.trf.xlu0
        %v4365 = vpop.trf.xlu0
        %v4366 = vpop.trf.xlu0
        %4367 = vxpose.xlu0.c.b16.start [1/8] %v3881, 128
        %4368 = vxpose.xlu0.c.b16.cont [2/8] 0, 128
        %4369 = vxpose.xlu0.c.b16.cont [3/8] 0, 128
        %4370 = vxpose.xlu0.c.b16.cont [4/8] 0, 128
        %4371 = vxpose.xlu0.c.b16.cont [5/8] 0, 128
        %4372 = vxpose.xlu0.c.b16.cont [6/8] 0, 128
        %4373 = vxpose.xlu0.c.b16.cont [7/8] 0, 128
        %4374 = vxpose.xlu0.c.b16.end [8/8] 0, 128
        %v4375 = vpop.trf.xlu0
        %v4376 = vpop.trf.xlu0
        %v4377 = vpop.trf.xlu0
        %v4378 = vpop.trf.xlu0
        %v4379 = vpop.trf.xlu0
        %v4380 = vpop.trf.xlu0
        %v4381 = vpop.trf.xlu0
        %v4382 = vpop.trf.xlu0
        %4383 = vxpose.xlu0.c.b16.start [1/8] %v3949, 128
        %4384 = vxpose.xlu0.c.b16.cont [2/8] 0, 128
        %4385 = vxpose.xlu0.c.b16.cont [3/8] 0, 128
        %4386 = vxpose.xlu0.c.b16.cont [4/8] 0, 128
        %4387 = vxpose.xlu0.c.b16.cont [5/8] 0, 128
        %4388 = vxpose.xlu0.c.b16.cont [6/8] 0, 128
        %4389 = vxpose.xlu0.c.b16.cont [7/8] 0, 128
        %4390 = vxpose.xlu0.c.b16.end [8/8] 0, 128
        %v4391 = vpop.trf.xlu0
        %v4392 = vpop.trf.xlu0
        %v4393 = vpop.trf.xlu0
        %v4394 = vpop.trf.xlu0
        %v4395 = vpop.trf.xlu0
        %v4396 = vpop.trf.xlu0
        %v4397 = vpop.trf.xlu0
        %v4398 = vpop.trf.xlu0
        %4399 = vxpose.xlu0.c.b16.start [1/8] %v3878, 128
        %4400 = vxpose.xlu0.c.b16.cont [2/8] 0, 128
        %4401 = vxpose.xlu0.c.b16.cont [3/8] 0, 128
        %4402 = vxpose.xlu0.c.b16.cont [4/8] 0, 128
        %4403 = vxpose.xlu0.c.b16.cont [5/8] 0, 128
        %4404 = vxpose.xlu0.c.b16.cont [6/8] 0, 128
        %4405 = vxpose.xlu0.c.b16.cont [7/8] 0, 128
        %4406 = vxpose.xlu0.c.b16.end [8/8] 0, 128
        %v4407 = vpop.trf.xlu0
        %v4408 = vpop.trf.xlu0
        %v4409 = vpop.trf.xlu0
        %v4410 = vpop.trf.xlu0
        %v4411 = vpop.trf.xlu0
        %v4412 = vpop.trf.xlu0
        %v4413 = vpop.trf.xlu0
        %v4414 = vpop.trf.xlu0
        %4415 = vxpose.xlu0.c.b16.start [1/8] %v3946, 128
        %4416 = vxpose.xlu0.c.b16.cont [2/8] 0, 128
        %4417 = vxpose.xlu0.c.b16.cont [3/8] 0, 128
        %4418 = vxpose.xlu0.c.b16.cont [4/8] 0, 128
        %4419 = vxpose.xlu0.c.b16.cont [5/8] 0, 128
        %4420 = vxpose.xlu0.c.b16.cont [6/8] 0, 128
        %4421 = vxpose.xlu0.c.b16.cont [7/8] 0, 128
        %4422 = vxpose.xlu0.c.b16.end [8/8] 0, 128
        %v4423 = vpop.trf.xlu0
        %v4424 = vpop.trf.xlu0
        %v4425 = vpop.trf.xlu0
        %v4426 = vpop.trf.xlu0
        %v4427 = vpop.trf.xlu0
        %v4428 = vpop.trf.xlu0
        %v4429 = vpop.trf.xlu0
        %v4430 = vpop.trf.xlu0
        %4431 = vxpose.xlu0.c.b16.start [1/8] %v3882, 128
        %4432 = vxpose.xlu0.c.b16.cont [2/8] 0, 128
        %4433 = vxpose.xlu0.c.b16.cont [3/8] 0, 128
        %4434 = vxpose.xlu0.c.b16.cont [4/8] 0, 128
        %4435 = vxpose.xlu0.c.b16.cont [5/8] 0, 128
        %4436 = vxpose.xlu0.c.b16.cont [6/8] 0, 128
        %4437 = vxpose.xlu0.c.b16.cont [7/8] 0, 128
        %4438 = vxpose.xlu0.c.b16.end [8/8] 0, 128
        %v4439 = vpop.trf.xlu0
        %v4440 = vpop.trf.xlu0
        %v4441 = vpop.trf.xlu0
        %v4442 = vpop.trf.xlu0
        %v4443 = vpop.trf.xlu0
        %v4444 = vpop.trf.xlu0
        %v4445 = vpop.trf.xlu0
        %v4446 = vpop.trf.xlu0
        %4447 = vxpose.xlu0.c.b16.start [1/8] %v3950, 128
        %4448 = vxpose.xlu0.c.b16.cont [2/8] 0, 128
        %4449 = vxpose.xlu0.c.b16.cont [3/8] 0, 128
        %4450 = vxpose.xlu0.c.b16.cont [4/8] 0, 128
        %4451 = vxpose.xlu0.c.b16.cont [5/8] 0, 128
        %4452 = vxpose.xlu0.c.b16.cont [6/8] 0, 128
        %4453 = vxpose.xlu0.c.b16.cont [7/8] 0, 128
        %4454 = vxpose.xlu0.c.b16.end [8/8] 0, 128
        %v4455 = vpop.trf.xlu0
        %v4456 = vpop.trf.xlu0
        %v4457 = vpop.trf.xlu0
        %v4458 = vpop.trf.xlu0
        %v4459 = vpop.trf.xlu0
        %v4460 = vpop.trf.xlu0
        %v4461 = vpop.trf.xlu0
        %v4462 = vpop.trf.xlu0
        %v4463 = vcombine.low %v3959, %v4023
        %v4465 = vunpack.c.l.s4 1983009808
        %v4466 = vunpack.c.0.s8 %v4465
        %v4467 = vlaneseq
        %v4468 = vshrl.u32 %v4467, 7
        %v4469 = vsub.s32 %v4466, %v4468
        %v4470 = vrot.slane %v4463, %v4469
        %v4471 = vcombine.low %v3991, %v4055
        %v4473 = vunpack.c.l.s4 1983009808
        %v4474 = vunpack.c.0.s8 %v4473
        %v4475 = vlaneseq
        %v4476 = vshrl.u32 %v4475, 7
        %v4477 = vsub.s32 %v4474, %v4476
        %v4478 = vrot.slane %v4471, %v4477
        %v4479 = vcombine.low %v4087, %v4151
        %v4481 = vunpack.c.l.s4 1983009808
        %v4482 = vunpack.c.0.s8 %v4481
        %v4483 = vlaneseq
        %v4484 = vshrl.u32 %v4483, 7
        %v4485 = vsub.s32 %v4482, %v4484
        %v4486 = vrot.slane %v4479, %v4485
        %v4487 = vcombine.low %v4119, %v4183
        %v4489 = vunpack.c.l.s4 1983009808
        %v4490 = vunpack.c.0.s8 %v4489
        %v4491 = vlaneseq
        %v4492 = vshrl.u32 %v4491, 7
        %v4493 = vsub.s32 %v4490, %v4492
        %v4494 = vrot.slane %v4487, %v4493
        %v4495 = vcombine.low %v4470, %v4478
        %v4497 = vunpack.c.l.s4 1934713408
        %v4498 = vunpack.c.0.s8 %v4497
        %v4499 = vlaneseq
        %v4500 = vshrl.u32 %v4499, 7
        %v4501 = vsub.s32 %v4498, %v4500
        %v4502 = vrot.slane %v4495, %v4501
        %v4503 = vcombine.low %v4486, %v4494
        %v4505 = vunpack.c.l.s4 1934713408
        %v4506 = vunpack.c.0.s8 %v4505
        %v4507 = vlaneseq
        %v4508 = vshrl.u32 %v4507, 7
        %v4509 = vsub.s32 %v4506, %v4508
        %v4510 = vrot.slane %v4503, %v4509
        %v4511 = vcombine.low %v4502, %v4510
        %v4512 = vcombine.high %v4502, %v4510
        %v4513 = vcombine.low %v3975, %v4039
        %v4515 = vunpack.c.l.s4 1983009808
        %v4516 = vunpack.c.0.s8 %v4515
        %v4517 = vlaneseq
        %v4518 = vshrl.u32 %v4517, 7
        %v4519 = vsub.s32 %v4516, %v4518
        %v4520 = vrot.slane %v4513, %v4519
        %v4521 = vcombine.low %v4007, %v4071
        %v4523 = vunpack.c.l.s4 1983009808
        %v4524 = vunpack.c.0.s8 %v4523
        %v4525 = vlaneseq
        %v4526 = vshrl.u32 %v4525, 7
        %v4527 = vsub.s32 %v4524, %v4526
        %v4528 = vrot.slane %v4521, %v4527
        %v4529 = vcombine.low %v4103, %v4167
        %v4531 = vunpack.c.l.s4 1983009808
        %v4532 = vunpack.c.0.s8 %v4531
        %v4533 = vlaneseq
        %v4534 = vshrl.u32 %v4533, 7
        %v4535 = vsub.s32 %v4532, %v4534
        %v4536 = vrot.slane %v4529, %v4535
        %v4537 = vcombine.low %v4135, %v4199
        %v4539 = vunpack.c.l.s4 1983009808
        %v4540 = vunpack.c.0.s8 %v4539
        %v4541 = vlaneseq
        %v4542 = vshrl.u32 %v4541, 7
        %v4543 = vsub.s32 %v4540, %v4542
        %v4544 = vrot.slane %v4537, %v4543
        %v4545 = vcombine.low %v4520, %v4528
        %v4547 = vunpack.c.l.s4 1934713408
        %v4548 = vunpack.c.0.s8 %v4547
        %v4549 = vlaneseq
        %v4550 = vshrl.u32 %v4549, 7
        %v4551 = vsub.s32 %v4548, %v4550
        %v4552 = vrot.slane %v4545, %v4551
        %v4553 = vcombine.low %v4536, %v4544
        %v4555 = vunpack.c.l.s4 1934713408
        %v4556 = vunpack.c.0.s8 %v4555
        %v4557 = vlaneseq
        %v4558 = vshrl.u32 %v4557, 7
        %v4559 = vsub.s32 %v4556, %v4558
        %v4560 = vrot.slane %v4553, %v4559
        %v4561 = vcombine.low %v4552, %v4560
        %v4562 = vcombine.high %v4552, %v4560
        %v4563 = vcombine.low %v4215, %v4279
        %v4565 = vunpack.c.l.s4 1983009808
        %v4566 = vunpack.c.0.s8 %v4565
        %v4567 = vlaneseq
        %v4568 = vshrl.u32 %v4567, 7
        %v4569 = vsub.s32 %v4566, %v4568
        %v4570 = vrot.slane %v4563, %v4569
        %v4571 = vcombine.low %v4247, %v4311
        %v4573 = vunpack.c.l.s4 1983009808
        %v4574 = vunpack.c.0.s8 %v4573
        %v4575 = vlaneseq
        %v4576 = vshrl.u32 %v4575, 7
        %v4577 = vsub.s32 %v4574, %v4576
        %v4578 = vrot.slane %v4571, %v4577
        %v4579 = vcombine.low %v4343, %v4407
        %v4581 = vunpack.c.l.s4 1983009808
        %v4582 = vunpack.c.0.s8 %v4581
        %v4583 = vlaneseq
        %v4584 = vshrl.u32 %v4583, 7
        %v4585 = vsub.s32 %v4582, %v4584
        %v4586 = vrot.slane %v4579, %v4585
        %v4587 = vcombine.low %v4375, %v4439
        %v4589 = vunpack.c.l.s4 1983009808
        %v4590 = vunpack.c.0.s8 %v4589
        %v4591 = vlaneseq
        %v4592 = vshrl.u32 %v4591, 7
        %v4593 = vsub.s32 %v4590, %v4592
        %v4594 = vrot.slane %v4587, %v4593
        %v4595 = vcombine.low %v4570, %v4578
        %v4597 = vunpack.c.l.s4 1934713408
        %v4598 = vunpack.c.0.s8 %v4597
        %v4599 = vlaneseq
        %v4600 = vshrl.u32 %v4599, 7
        %v4601 = vsub.s32 %v4598, %v4600
        %v4602 = vrot.slane %v4595, %v4601
        %v4603 = vcombine.low %v4586, %v4594
        %v4605 = vunpack.c.l.s4 1934713408
        %v4606 = vunpack.c.0.s8 %v4605
        %v4607 = vlaneseq
        %v4608 = vshrl.u32 %v4607, 7
        %v4609 = vsub.s32 %v4606, %v4608
        %v4610 = vrot.slane %v4603, %v4609
        %v4611 = vcombine.low %v4602, %v4610
        %v4612 = vcombine.high %v4602, %v4610
        %v4613 = vcombine.low %v4231, %v4295
        %v4615 = vunpack.c.l.s4 1983009808
        %v4616 = vunpack.c.0.s8 %v4615
        %v4617 = vlaneseq
        %v4618 = vshrl.u32 %v4617, 7
        %v4619 = vsub.s32 %v4616, %v4618
        %v4620 = vrot.slane %v4613, %v4619
        %v4621 = vcombine.low %v4263, %v4327
        %v4623 = vunpack.c.l.s4 1983009808
        %v4624 = vunpack.c.0.s8 %v4623
        %v4625 = vlaneseq
        %v4626 = vshrl.u32 %v4625, 7
        %v4627 = vsub.s32 %v4624, %v4626
        %v4628 = vrot.slane %v4621, %v4627
        %v4629 = vcombine.low %v4359, %v4423
        %v4631 = vunpack.c.l.s4 1983009808
        %v4632 = vunpack.c.0.s8 %v4631
        %v4633 = vlaneseq
        %v4634 = vshrl.u32 %v4633, 7
        %v4635 = vsub.s32 %v4632, %v4634
        %v4636 = vrot.slane %v4629, %v4635
        %v4637 = vcombine.low %v4391, %v4455
        %v4639 = vunpack.c.l.s4 1983009808
        %v4640 = vunpack.c.0.s8 %v4639
        %v4641 = vlaneseq
        %v4642 = vshrl.u32 %v4641, 7
        %v4643 = vsub.s32 %v4640, %v4642
        %v4644 = vrot.slane %v4637, %v4643
        %v4645 = vcombine.low %v4620, %v4628
        %v4647 = vunpack.c.l.s4 1934713408
        %v4648 = vunpack.c.0.s8 %v4647
        %v4649 = vlaneseq
        %v4650 = vshrl.u32 %v4649, 7
        %v4651 = vsub.s32 %v4648, %v4650
        %v4652 = vrot.slane %v4645, %v4651
        %v4653 = vcombine.low %v4636, %v4644
        %v4655 = vunpack.c.l.s4 1934713408
        %v4656 = vunpack.c.0.s8 %v4655
        %v4657 = vlaneseq
        %v4658 = vshrl.u32 %v4657, 7
        %v4659 = vsub.s32 %v4656, %v4658
        %v4660 = vrot.slane %v4653, %v4659
        %v4661 = vcombine.low %v4652, %v4660
        %v4662 = vcombine.high %v4652, %v4660
        %v4665 = vpack.i.b16 %v4561, %v4511
        %v4666 = vshrl.u32 %v4511, 16
        %v4667 = vshrl.u32 %v4561, 16
        %v4668 = vpack.i.b16 %v4667, %v4666
        %v4671 = vpack.i.b16 %v4562, %v4512
        %v4672 = vshrl.u32 %v4512, 16
        %v4673 = vshrl.u32 %v4562, 16
        %v4674 = vpack.i.b16 %v4673, %v4672
        %v4677 = vpack.i.b16 %v4661, %v4611
        %v4678 = vshrl.u32 %v4611, 16
        %v4679 = vshrl.u32 %v4661, 16
        %v4680 = vpack.i.b16 %v4679, %v4678
        %v4683 = vpack.i.b16 %v4662, %v4612
        %v4684 = vshrl.u32 %v4612, 16
        %v4685 = vshrl.u32 %v4662, 16
        %v4686 = vpack.i.b16 %v4685, %v4684
        %v4688 = vsel %vm3438, %v4665, 0
        %v4691 = vsel %vm3438, %v4677, 0
        %v4694 = vsel %vm3438, %v3483, 0
        %4696 = vmatprep.subr.bf16.mxu0 0
        %4697 = vmatpush1.bf16.xpose.msra.mxu0 %v4694
        %4698 = vmatprep.subr.bf16.mxu0 0
        %4699 = vmatpush1.bf16.xpose.msra.mxu0 0
        %4700 = vmatprep.subr.bf16.mxu0 0
        %4701 = vmatpush1.bf16.xpose.msra.mxu0 0
        %4702 = vmatprep.subr.bf16.mxu0 0
        %4703 = vmatpush1.bf16.xpose.msra.mxu0 0
        %4704 = vmatprep.subr.bf16.mxu0 0
        %4705 = vmatpush1.bf16.xpose.msra.mxu0 0
        %4706 = vmatprep.subr.bf16.mxu0 0
        %4707 = vmatpush1.bf16.xpose.msra.mxu0 0
        %4708 = vmatprep.subr.bf16.mxu0 0
        %4709 = vmatpush1.bf16.xpose.msra.mxu0 0
        %4710 = vmatprep.subr.bf16.mxu0 0
        %4711 = vmatpush1.bf16.xpose.msra.mxu0 0
        %4712 = vmatprep.subr.bf16.mxu0 0
        %4713 = vmatpush1.bf16.xpose.msra.mxu0 0
        %4714 = vmatprep.subr.bf16.mxu0 0
        %4715 = vmatpush1.bf16.xpose.msra.mxu0 0
        %4716 = vmatprep.subr.bf16.mxu0 0
        %4717 = vmatpush1.bf16.xpose.msra.mxu0 0
        %4718 = vmatprep.subr.bf16.mxu0 0
        %4719 = vmatpush1.bf16.xpose.msra.mxu0 0
        %4720 = vmatprep.subr.bf16.mxu0 0
        %4721 = vmatpush1.bf16.xpose.msra.mxu0 0
        %4722 = vmatprep.subr.bf16.mxu0 0
        %4723 = vmatpush1.bf16.xpose.msra.mxu0 0
        %4724 = vmatprep.subr.bf16.mxu0 0
        %4725 = vmatpush1.bf16.xpose.msra.mxu0 0
        %4726 = vmatprep.subr.bf16.mxu0 0
        %4727 = vmatpush1.bf16.xpose.msra.mxu0 0
        %4728 = vmatprep.mubr.bf16.mxu0 0
        %4729 = vmatmul.mubr.bf16.gmra.mrb[0].mxu0 %v4688
        %v4730 = vpop.f32.mrb[0].mxu0
        %v4731 = vadd.f32 0.0, %v4730
        %v4732 = vpop.f32.mrb[0].mxu0
        %v4733 = vpop.f32.mrb[0].mxu0
        %v4734 = vadd.f32 0.0, %v4733
        %v4735 = vpop.f32.mrb[0].mxu0
        %4736 = vmatprep.mubr.bf16.mxu0 0
        %4737 = vmatmul.mubr.bf16.gmra.mrb[0].mxu0 %v4691
        %v4738 = vpop.f32.mrb[0].mxu0
        %v4739 = vadd.f32 0.0, %v4738
        %v4740 = vpop.f32.mrb[0].mxu0
        %v4741 = vpop.f32.mrb[0].mxu0
        %v4742 = vadd.f32 0.0, %v4741
        %v4743 = vpop.f32.mrb[0].mxu0
        %4744 = vdwg.mxu0
        %v4746 = vsel %vm3438, %v4668, 0
        %v4749 = vsel %vm3438, %v4680, 0
        %v4752 = vsel %vm3438, %v3484, 0
        %4754 = vmatprep.subr.bf16.mxu0 0
        %4755 = vmatpush1.bf16.xpose.msra.mxu0 %v4752
        %4756 = vmatprep.subr.bf16.mxu0 0
        %4757 = vmatpush1.bf16.xpose.msra.mxu0 0
        %4758 = vmatprep.subr.bf16.mxu0 0
        %4759 = vmatpush1.bf16.xpose.msra.mxu0 0
        %4760 = vmatprep.subr.bf16.mxu0 0
        %4761 = vmatpush1.bf16.xpose.msra.mxu0 0
        %4762 = vmatprep.subr.bf16.mxu0 0
        %4763 = vmatpush1.bf16.xpose.msra.mxu0 0
        %4764 = vmatprep.subr.bf16.mxu0 0
        %4765 = vmatpush1.bf16.xpose.msra.mxu0 0
        %4766 = vmatprep.subr.bf16.mxu0 0
        %4767 = vmatpush1.bf16.xpose.msra.mxu0 0
        %4768 = vmatprep.subr.bf16.mxu0 0
        %4769 = vmatpush1.bf16.xpose.msra.mxu0 0
        %4770 = vmatprep.subr.bf16.mxu0 0
        %4771 = vmatpush1.bf16.xpose.msra.mxu0 0
        %4772 = vmatprep.subr.bf16.mxu0 0
        %4773 = vmatpush1.bf16.xpose.msra.mxu0 0
        %4774 = vmatprep.subr.bf16.mxu0 0
        %4775 = vmatpush1.bf16.xpose.msra.mxu0 0
        %4776 = vmatprep.subr.bf16.mxu0 0
        %4777 = vmatpush1.bf16.xpose.msra.mxu0 0
        %4778 = vmatprep.subr.bf16.mxu0 0
        %4779 = vmatpush1.bf16.xpose.msra.mxu0 0
        %4780 = vmatprep.subr.bf16.mxu0 0
        %4781 = vmatpush1.bf16.xpose.msra.mxu0 0
        %4782 = vmatprep.subr.bf16.mxu0 0
        %4783 = vmatpush1.bf16.xpose.msra.mxu0 0
        %4784 = vmatprep.subr.bf16.mxu0 0
        %4785 = vmatpush1.bf16.xpose.msra.mxu0 0
        %4786 = vmatprep.mubr.bf16.mxu0 0
        %4787 = vmatmul.mubr.bf16.gmra.mrb[0].mxu0 %v4746
        %v4788 = vpop.f32.mrb[0].mxu0
        %v4789 = vadd.f32 0.0, %v4788
        %v4790 = vpop.f32.mrb[0].mxu0
        %v4791 = vpop.f32.mrb[0].mxu0
        %v4792 = vadd.f32 0.0, %v4791
        %v4793 = vpop.f32.mrb[0].mxu0
        %4794 = vmatprep.mubr.bf16.mxu0 0
        %4795 = vmatmul.mubr.bf16.gmra.mrb[0].mxu0 %v4749
        %v4796 = vpop.f32.mrb[0].mxu0
        %v4797 = vadd.f32 0.0, %v4796
        %v4798 = vpop.f32.mrb[0].mxu0
        %v4799 = vpop.f32.mrb[0].mxu0
        %v4800 = vadd.f32 0.0, %v4799
        %v4801 = vpop.f32.mrb[0].mxu0
        %4802 = vdwg.mxu0
        %v4804 = vsel %vm3438, %v4671, 0
        %v4807 = vsel %vm3438, %v4683, 0
        %v4810 = vsel %vm3438, %v3485, 0
        %4812 = vmatprep.subr.bf16.mxu0 0
        %4813 = vmatpush1.bf16.xpose.msra.mxu0 %v4810
        %4814 = vmatprep.subr.bf16.mxu0 0
        %4815 = vmatpush1.bf16.xpose.msra.mxu0 0
        %4816 = vmatprep.subr.bf16.mxu0 0
        %4817 = vmatpush1.bf16.xpose.msra.mxu0 0
        %4818 = vmatprep.subr.bf16.mxu0 0
        %4819 = vmatpush1.bf16.xpose.msra.mxu0 0
        %4820 = vmatprep.subr.bf16.mxu0 0
        %4821 = vmatpush1.bf16.xpose.msra.mxu0 0
        %4822 = vmatprep.subr.bf16.mxu0 0
        %4823 = vmatpush1.bf16.xpose.msra.mxu0 0
        %4824 = vmatprep.subr.bf16.mxu0 0
        %4825 = vmatpush1.bf16.xpose.msra.mxu0 0
        %4826 = vmatprep.subr.bf16.mxu0 0
        %4827 = vmatpush1.bf16.xpose.msra.mxu0 0
        %4828 = vmatprep.subr.bf16.mxu0 0
        %4829 = vmatpush1.bf16.xpose.msra.mxu0 0
        %4830 = vmatprep.subr.bf16.mxu0 0
        %4831 = vmatpush1.bf16.xpose.msra.mxu0 0
        %4832 = vmatprep.subr.bf16.mxu0 0
        %4833 = vmatpush1.bf16.xpose.msra.mxu0 0
        %4834 = vmatprep.subr.bf16.mxu0 0
        %4835 = vmatpush1.bf16.xpose.msra.mxu0 0
        %4836 = vmatprep.subr.bf16.mxu0 0
        %4837 = vmatpush1.bf16.xpose.msra.mxu0 0
        %4838 = vmatprep.subr.bf16.mxu0 0
        %4839 = vmatpush1.bf16.xpose.msra.mxu0 0
        %4840 = vmatprep.subr.bf16.mxu0 0
        %4841 = vmatpush1.bf16.xpose.msra.mxu0 0
        %4842 = vmatprep.subr.bf16.mxu0 0
        %4843 = vmatpush1.bf16.xpose.msra.mxu0 0
        %4844 = vmatprep.mubr.bf16.mxu0 0
        %4845 = vmatmul.mubr.bf16.gmra.mrb[0].mxu0 %v4804
        %v4846 = vpop.f32.mrb[0].mxu0
        %v4847 = vadd.f32 0.0, %v4846
        %v4848 = vpop.f32.mrb[0].mxu0
        %v4849 = vpop.f32.mrb[0].mxu0
        %v4850 = vadd.f32 0.0, %v4849
        %v4851 = vpop.f32.mrb[0].mxu0
        %4852 = vmatprep.mubr.bf16.mxu0 0
        %4853 = vmatmul.mubr.bf16.gmra.mrb[0].mxu0 %v4807
        %v4854 = vpop.f32.mrb[0].mxu0
        %v4855 = vadd.f32 0.0, %v4854
        %v4856 = vpop.f32.mrb[0].mxu0
        %v4857 = vpop.f32.mrb[0].mxu0
        %v4858 = vadd.f32 0.0, %v4857
        %v4859 = vpop.f32.mrb[0].mxu0
        %4860 = vdwg.mxu0
        %v4862 = vsel %vm3438, %v4674, 0
        %v4865 = vsel %vm3438, %v4686, 0
        %v4868 = vsel %vm3438, %v3486, 0
        %4870 = vmatprep.subr.bf16.mxu0 0
        %4871 = vmatpush1.bf16.xpose.msra.mxu0 %v4868
        %4872 = vmatprep.subr.bf16.mxu0 0
        %4873 = vmatpush1.bf16.xpose.msra.mxu0 0
        %4874 = vmatprep.subr.bf16.mxu0 0
        %4875 = vmatpush1.bf16.xpose.msra.mxu0 0
        %4876 = vmatprep.subr.bf16.mxu0 0
        %4877 = vmatpush1.bf16.xpose.msra.mxu0 0
        %4878 = vmatprep.subr.bf16.mxu0 0
        %4879 = vmatpush1.bf16.xpose.msra.mxu0 0
        %4880 = vmatprep.subr.bf16.mxu0 0
        %4881 = vmatpush1.bf16.xpose.msra.mxu0 0
        %4882 = vmatprep.subr.bf16.mxu0 0
        %4883 = vmatpush1.bf16.xpose.msra.mxu0 0
        %4884 = vmatprep.subr.bf16.mxu0 0
        %4885 = vmatpush1.bf16.xpose.msra.mxu0 0
        %4886 = vmatprep.subr.bf16.mxu0 0
        %4887 = vmatpush1.bf16.xpose.msra.mxu0 0
        %4888 = vmatprep.subr.bf16.mxu0 0
        %4889 = vmatpush1.bf16.xpose.msra.mxu0 0
        %4890 = vmatprep.subr.bf16.mxu0 0
        %4891 = vmatpush1.bf16.xpose.msra.mxu0 0
        %4892 = vmatprep.subr.bf16.mxu0 0
        %4893 = vmatpush1.bf16.xpose.msra.mxu0 0
        %4894 = vmatprep.subr.bf16.mxu0 0
        %4895 = vmatpush1.bf16.xpose.msra.mxu0 0
        %4896 = vmatprep.subr.bf16.mxu0 0
        %4897 = vmatpush1.bf16.xpose.msra.mxu0 0
        %4898 = vmatprep.subr.bf16.mxu0 0
        %4899 = vmatpush1.bf16.xpose.msra.mxu0 0
        %4900 = vmatprep.subr.bf16.mxu0 0
        %4901 = vmatpush1.bf16.xpose.msra.mxu0 0
        %4902 = vmatprep.mubr.bf16.mxu0 0
        %4903 = vmatmul.mubr.bf16.gmra.mrb[0].mxu0 %v4862
        %v4904 = vpop.f32.mrb[0].mxu0
        %v4905 = vadd.f32 0.0, %v4904
        %v4906 = vpop.f32.mrb[0].mxu0
        %v4907 = vpop.f32.mrb[0].mxu0
        %v4908 = vadd.f32 0.0, %v4907
        %v4909 = vpop.f32.mrb[0].mxu0
        %4910 = vmatprep.mubr.bf16.mxu0 0
        %4911 = vmatmul.mubr.bf16.gmra.mrb[0].mxu0 %v4865
        %v4912 = vpop.f32.mrb[0].mxu0
        %v4913 = vadd.f32 0.0, %v4912
        %v4914 = vpop.f32.mrb[0].mxu0
        %v4915 = vpop.f32.mrb[0].mxu0
        %v4916 = vadd.f32 0.0, %v4915
        %v4917 = vpop.f32.mrb[0].mxu0
        %4918 = vdwg.mxu0
        %4919 = vxpose.xlu0.b32.start [1/16] %v4731, 128
        %4920 = vxpose.xlu0.b32.cont [2/16] %v4734, 128
        %4921 = vxpose.xlu0.b32.cont [3/16] %v4739, 128
        %4922 = vxpose.xlu0.b32.cont [4/16] %v4742, 128
        %4923 = vxpose.xlu0.b32.cont [5/16] 0.0, 128
        %4924 = vxpose.xlu0.b32.cont [6/16] 0.0, 128
        %4925 = vxpose.xlu0.b32.cont [7/16] 0.0, 128
        %4926 = vxpose.xlu0.b32.cont [8/16] 0.0, 128
        %4927 = vxpose.xlu0.b32.cont [9/16] 0.0, 128
        %4928 = vxpose.xlu0.b32.cont [10/16] 0.0, 128
        %4929 = vxpose.xlu0.b32.cont [11/16] 0.0, 128
        %4930 = vxpose.xlu0.b32.cont [12/16] 0.0, 128
        %4931 = vxpose.xlu0.b32.cont [13/16] 0.0, 128
        %4932 = vxpose.xlu0.b32.cont [14/16] 0.0, 128
        %4933 = vxpose.xlu0.b32.cont [15/16] 0.0, 128
        %4934 = vxpose.xlu0.b32.end [16/16] 0.0, 128
        %v4935 = vpop.trf.xlu0
        %v4936 = vpop.trf.xlu0
        %v4937 = vpop.trf.xlu0
        %v4938 = vpop.trf.xlu0
        %v4939 = vpop.trf.xlu0
        %v4940 = vpop.trf.xlu0
        %v4941 = vpop.trf.xlu0
        %v4942 = vpop.trf.xlu0
        %v4943 = vpop.trf.xlu0
        %v4944 = vpop.trf.xlu0
        %v4945 = vpop.trf.xlu0
        %v4946 = vpop.trf.xlu0
        %v4947 = vpop.trf.xlu0
        %v4948 = vpop.trf.xlu0
        %v4949 = vpop.trf.xlu0
        %v4950 = vpop.trf.xlu0
        %4951 = vxpose.xlu0.b32.start [1/16] %v4789, 128
        %4952 = vxpose.xlu0.b32.cont [2/16] %v4792, 128
        %4953 = vxpose.xlu0.b32.cont [3/16] %v4797, 128
        %4954 = vxpose.xlu0.b32.cont [4/16] %v4800, 128
        %4955 = vxpose.xlu0.b32.cont [5/16] 0.0, 128
        %4956 = vxpose.xlu0.b32.cont [6/16] 0.0, 128
        %4957 = vxpose.xlu0.b32.cont [7/16] 0.0, 128
        %4958 = vxpose.xlu0.b32.cont [8/16] 0.0, 128
        %4959 = vxpose.xlu0.b32.cont [9/16] 0.0, 128
        %4960 = vxpose.xlu0.b32.cont [10/16] 0.0, 128
        %4961 = vxpose.xlu0.b32.cont [11/16] 0.0, 128
        %4962 = vxpose.xlu0.b32.cont [12/16] 0.0, 128
        %4963 = vxpose.xlu0.b32.cont [13/16] 0.0, 128
        %4964 = vxpose.xlu0.b32.cont [14/16] 0.0, 128
        %4965 = vxpose.xlu0.b32.cont [15/16] 0.0, 128
        %4966 = vxpose.xlu0.b32.end [16/16] 0.0, 128
        %v4967 = vpop.trf.xlu0
        %v4968 = vpop.trf.xlu0
        %v4969 = vpop.trf.xlu0
        %v4970 = vpop.trf.xlu0
        %v4971 = vpop.trf.xlu0
        %v4972 = vpop.trf.xlu0
        %v4973 = vpop.trf.xlu0
        %v4974 = vpop.trf.xlu0
        %v4975 = vpop.trf.xlu0
        %v4976 = vpop.trf.xlu0
        %v4977 = vpop.trf.xlu0
        %v4978 = vpop.trf.xlu0
        %v4979 = vpop.trf.xlu0
        %v4980 = vpop.trf.xlu0
        %v4981 = vpop.trf.xlu0
        %v4982 = vpop.trf.xlu0
        %4983 = vxpose.xlu0.b32.start [1/16] %v4847, 128
        %4984 = vxpose.xlu0.b32.cont [2/16] %v4850, 128
        %4985 = vxpose.xlu0.b32.cont [3/16] %v4855, 128
        %4986 = vxpose.xlu0.b32.cont [4/16] %v4858, 128
        %4987 = vxpose.xlu0.b32.cont [5/16] 0.0, 128
        %4988 = vxpose.xlu0.b32.cont [6/16] 0.0, 128
        %4989 = vxpose.xlu0.b32.cont [7/16] 0.0, 128
        %4990 = vxpose.xlu0.b32.cont [8/16] 0.0, 128
        %4991 = vxpose.xlu0.b32.cont [9/16] 0.0, 128
        %4992 = vxpose.xlu0.b32.cont [10/16] 0.0, 128
        %4993 = vxpose.xlu0.b32.cont [11/16] 0.0, 128
        %4994 = vxpose.xlu0.b32.cont [12/16] 0.0, 128
        %4995 = vxpose.xlu0.b32.cont [13/16] 0.0, 128
        %4996 = vxpose.xlu0.b32.cont [14/16] 0.0, 128
        %4997 = vxpose.xlu0.b32.cont [15/16] 0.0, 128
        %4998 = vxpose.xlu0.b32.end [16/16] 0.0, 128
        %v4999 = vpop.trf.xlu0
        %v5000 = vpop.trf.xlu0
        %v5001 = vpop.trf.xlu0
        %v5002 = vpop.trf.xlu0
        %v5003 = vpop.trf.xlu0
        %v5004 = vpop.trf.xlu0
        %v5005 = vpop.trf.xlu0
        %v5006 = vpop.trf.xlu0
        %v5007 = vpop.trf.xlu0
        %v5008 = vpop.trf.xlu0
        %v5009 = vpop.trf.xlu0
        %v5010 = vpop.trf.xlu0
        %v5011 = vpop.trf.xlu0
        %v5012 = vpop.trf.xlu0
        %v5013 = vpop.trf.xlu0
        %v5014 = vpop.trf.xlu0
        %5015 = vxpose.xlu0.b32.start [1/16] %v4905, 128
        %5016 = vxpose.xlu0.b32.cont [2/16] %v4908, 128
        %5017 = vxpose.xlu0.b32.cont [3/16] %v4913, 128
        %5018 = vxpose.xlu0.b32.cont [4/16] %v4916, 128
        %5019 = vxpose.xlu0.b32.cont [5/16] 0.0, 128
        %5020 = vxpose.xlu0.b32.cont [6/16] 0.0, 128
        %5021 = vxpose.xlu0.b32.cont [7/16] 0.0, 128
        %5022 = vxpose.xlu0.b32.cont [8/16] 0.0, 128
        %5023 = vxpose.xlu0.b32.cont [9/16] 0.0, 128
        %5024 = vxpose.xlu0.b32.cont [10/16] 0.0, 128
        %5025 = vxpose.xlu0.b32.cont [11/16] 0.0, 128
        %5026 = vxpose.xlu0.b32.cont [12/16] 0.0, 128
        %5027 = vxpose.xlu0.b32.cont [13/16] 0.0, 128
        %5028 = vxpose.xlu0.b32.cont [14/16] 0.0, 128
        %5029 = vxpose.xlu0.b32.cont [15/16] 0.0, 128
        %5030 = vxpose.xlu0.b32.end [16/16] 0.0, 128
        %v5031 = vpop.trf.xlu0
        %v5032 = vpop.trf.xlu0
        %v5033 = vpop.trf.xlu0
        %v5034 = vpop.trf.xlu0
        %v5035 = vpop.trf.xlu0
        %v5036 = vpop.trf.xlu0
        %v5037 = vpop.trf.xlu0
        %v5038 = vpop.trf.xlu0
        %v5039 = vpop.trf.xlu0
        %v5040 = vpop.trf.xlu0
        %v5041 = vpop.trf.xlu0
        %v5042 = vpop.trf.xlu0
        %v5043 = vpop.trf.xlu0
        %v5044 = vpop.trf.xlu0
        %v5045 = vpop.trf.xlu0
        %v5046 = vpop.trf.xlu0
        %v5047 = vcombine.low %v4935, %v4999
        %v5048 = vcombine.high %v4935, %v4999
        %v5050 = vunpack.c.l.s4 1983009808
        %v5051 = vunpack.c.0.s8 %v5050
        %v5052 = vlaneseq
        %v5053 = vshrl.u32 %v5052, 7
        %v5054 = vsub.s32 %v5051, %v5053
        %v5055 = vrot.slane %v5047, %v5054
        %v5057 = vunpack.c.l.s4 1983009808
        %v5058 = vunpack.c.0.s8 %v5057
        %v5059 = vlaneseq
        %v5060 = vshrl.u32 %v5059, 7
        %v5061 = vsub.s32 %v5058, %v5060
        %v5062 = vrot.slane %v5048, %v5061
        %v5063 = vcombine.low %v4967, %v5031
        %v5064 = vcombine.high %v4967, %v5031
        %v5066 = vunpack.c.l.s4 1983009808
        %v5067 = vunpack.c.0.s8 %v5066
        %v5068 = vlaneseq
        %v5069 = vshrl.u32 %v5068, 7
        %v5070 = vsub.s32 %v5067, %v5069
        %v5071 = vrot.slane %v5063, %v5070
        %v5073 = vunpack.c.l.s4 1983009808
        %v5074 = vunpack.c.0.s8 %v5073
        %v5075 = vlaneseq
        %v5076 = vshrl.u32 %v5075, 7
        %v5077 = vsub.s32 %v5074, %v5076
        %v5078 = vrot.slane %v5064, %v5077
        %v5079 = vcombine.low %v5055, %v5071
        %v5080 = vcombine.high %v5055, %v5071
        %v5082 = vunpack.c.l.s4 1934713408
        %v5083 = vunpack.c.0.s8 %v5082
        %v5084 = vlaneseq
        %v5085 = vshrl.u32 %v5084, 7
        %v5086 = vsub.s32 %v5083, %v5085
        %v5087 = vrot.slane %v5079, %v5086
        %v5089 = vunpack.c.l.s4 1934713408
        %v5090 = vunpack.c.0.s8 %v5089
        %v5091 = vlaneseq
        %v5092 = vshrl.u32 %v5091, 7
        %v5093 = vsub.s32 %v5090, %v5092
        %v5094 = vrot.slane %v5080, %v5093
        %v5095 = vcombine.low %v5062, %v5078
        %v5096 = vcombine.high %v5062, %v5078
        %v5098 = vunpack.c.l.s4 1934713408
        %v5099 = vunpack.c.0.s8 %v5098
        %v5100 = vlaneseq
        %v5101 = vshrl.u32 %v5100, 7
        %v5102 = vsub.s32 %v5099, %v5101
        %v5103 = vrot.slane %v5095, %v5102
        %v5105 = vunpack.c.l.s4 1934713408
        %v5106 = vunpack.c.0.s8 %v5105
        %v5107 = vlaneseq
        %v5108 = vshrl.u32 %v5107, 7
        %v5109 = vsub.s32 %v5106, %v5108
        %v5110 = vrot.slane %v5096, %v5109
        %v5111 = vcombine.high %v5087, 0.0
        %v5112 = vcombine.high %v5094, 0.0
        %v5113 = vcombine.high %v5103, 0.0
        %v5114 = vcombine.high %v5110, 0.0
        %v5115 = vcombine.low %v5087, %v5094
        %v5117 = vunpack.c.l.s4 1983009808
        %v5118 = vunpack.c.0.s8 %v5117
        %v5119 = vlaneseq
        %v5120 = vshrl.u32 %v5119, 7
        %v5121 = vsub.s32 %v5118, %v5120
        %v5122 = vrot.slane %v5115, %v5121
        %v5123 = vcombine.low %v5111, %v5112
        %v5125 = vunpack.c.l.s4 1983009808
        %v5126 = vunpack.c.0.s8 %v5125
        %v5127 = vlaneseq
        %v5128 = vshrl.u32 %v5127, 7
        %v5129 = vsub.s32 %v5126, %v5128
        %v5130 = vrot.slane %v5123, %v5129
        %v5131 = vcombine.low %v5103, %v5110
        %v5133 = vunpack.c.l.s4 1983009808
        %v5134 = vunpack.c.0.s8 %v5133
        %v5135 = vlaneseq
        %v5136 = vshrl.u32 %v5135, 7
        %v5137 = vsub.s32 %v5134, %v5136
        %v5138 = vrot.slane %v5131, %v5137
        %v5139 = vcombine.low %v5113, %v5114
        %v5141 = vunpack.c.l.s4 1983009808
        %v5142 = vunpack.c.0.s8 %v5141
        %v5143 = vlaneseq
        %v5144 = vshrl.u32 %v5143, 7
        %v5145 = vsub.s32 %v5142, %v5144
        %v5146 = vrot.slane %v5139, %v5145
        %v5147 = vcombine.low %v5122, %v5130
        %v5148 = vcombine.high %v5122, %v5130
        %v5150 = vunpack.c.l.s4 1934713408
        %v5151 = vunpack.c.0.s8 %v5150
        %v5152 = vlaneseq
        %v5153 = vshrl.u32 %v5152, 7
        %v5154 = vsub.s32 %v5151, %v5153
        %v5155 = vrot.slane %v5147, %v5154
        %v5157 = vunpack.c.l.s4 1934713408
        %v5158 = vunpack.c.0.s8 %v5157
        %v5159 = vlaneseq
        %v5160 = vshrl.u32 %v5159, 7
        %v5161 = vsub.s32 %v5158, %v5160
        %v5162 = vrot.slane %v5148, %v5161
        %v5163 = vcombine.low %v5138, %v5146
        %v5164 = vcombine.high %v5138, %v5146
        %v5166 = vunpack.c.l.s4 1934713408
        %v5167 = vunpack.c.0.s8 %v5166
        %v5168 = vlaneseq
        %v5169 = vshrl.u32 %v5168, 7
        %v5170 = vsub.s32 %v5167, %v5169
        %v5171 = vrot.slane %v5163, %v5170
        %v5173 = vunpack.c.l.s4 1934713408
        %v5174 = vunpack.c.0.s8 %v5173
        %v5175 = vlaneseq
        %v5176 = vshrl.u32 %v5175, 7
        %v5177 = vsub.s32 %v5174, %v5176
        %v5178 = vrot.slane %v5164, %v5177
        %v5179 = vcombine.low %v5155, %v5171
        %v5180 = vcombine.high %v5155, %v5171
        %v5181 = vcombine.low %v5162, %v5178
        %v5182 = vcombine.high %v5162, %v5178
        %5184 = vrot.lane.b32.xlu0 %v5180, 32
        %v5185 = vpop.permute.xlu0 %5184
        %5188 = vrot.lane.b32.xlu0 %v5181, 64
        %v5189 = vpop.permute.xlu0 %5188
        %5192 = vrot.lane.b32.xlu0 %v5182, 96
        %v5193 = vpop.permute.xlu0 %5192
        %v5195 = vsel %vm3257, %v5179, %v5185
        %vm5196 = vcmask 523264
        %v5197 = vsel %vm5196, %v5195, %v5189
        %vm5198 = vcmask 785408
        %v5199 = vsel %vm5198, %v5197, %v5193
        %v5200 = vpack.c.bf16 %v5199, %v5199
        %v5217 = vunpack.c.l.b16 %v1446
        %v5218 = vunpack.c.l.b16 %v1447
        %v5219 = vunpack.c.l.b16 %v1448
        %v5220 = vunpack.c.l.b16 %v1449
        %v5221 = vunpack.c.l.b16 %v1450
        %v5222 = vunpack.c.l.b16 %v1451
        %v5223 = vunpack.c.l.b16 %v1452
        %v5224 = vunpack.c.l.b16 %v1453
        %v5225 = vunpack.c.l.b16 %v1454
        %v5226 = vunpack.c.l.b16 %v1455
        %v5227 = vunpack.c.l.b16 %v1456
        %v5228 = vunpack.c.l.b16 %v1457
        %v5229 = vunpack.c.l.b16 %v1458
        %v5230 = vunpack.c.l.b16 %v1459
        %v5231 = vunpack.c.l.b16 %v1460
        %v5232 = vunpack.c.l.b16 %v1461
        %v5233 = vpack.c.b16 %v5218, %v5217
        %v5234 = vpack.c.b16 %v5220, %v5219
        %v5235 = vpack.c.b16 %v5222, %v5221
        %v5236 = vpack.c.b16 %v5224, %v5223
        %v5237 = vpack.c.b16 %v5226, %v5225
        %v5238 = vpack.c.b16 %v5228, %v5227
        %v5239 = vpack.c.b16 %v5230, %v5229
        %v5240 = vpack.c.b16 %v5232, %v5231
        %5249 = vmatprep.subr.bf16.mxu0 0
        %5250 = vmatpush1.bf16.msra.mxu0 %v5233
        %5251 = vmatprep.subr.bf16.mxu0 0
        %5252 = vmatpush1.bf16.msra.mxu0 %v5234
        %5253 = vmatprep.subr.bf16.mxu0 0
        %5254 = vmatpush1.bf16.msra.mxu0 %v5235
        %5255 = vmatprep.subr.bf16.mxu0 0
        %5256 = vmatpush1.bf16.msra.mxu0 %v5236
        %5257 = vmatprep.subr.bf16.mxu0 0
        %5258 = vmatpush1.bf16.msra.mxu0 %v5237
        %5259 = vmatprep.subr.bf16.mxu0 0
        %5260 = vmatpush1.bf16.msra.mxu0 %v5238
        %5261 = vmatprep.subr.bf16.mxu0 0
        %5262 = vmatpush1.bf16.msra.mxu0 %v5239
        %5263 = vmatprep.subr.bf16.mxu0 0
        %5264 = vmatpush1.bf16.msra.mxu0 %v5240
        %5265 = vmatprep.subr.bf16.mxu0 0
        %5266 = vmatpush1.bf16.msra.mxu0 0
        %5267 = vmatprep.subr.bf16.mxu0 0
        %5268 = vmatpush1.bf16.msra.mxu0 0
        %5269 = vmatprep.subr.bf16.mxu0 0
        %5270 = vmatpush1.bf16.msra.mxu0 0
        %5271 = vmatprep.subr.bf16.mxu0 0
        %5272 = vmatpush1.bf16.msra.mxu0 0
        %5273 = vmatprep.subr.bf16.mxu0 0
        %5274 = vmatpush1.bf16.msra.mxu0 0
        %5275 = vmatprep.subr.bf16.mxu0 0
        %5276 = vmatpush1.bf16.msra.mxu0 0
        %5277 = vmatprep.subr.bf16.mxu0 0
        %5278 = vmatpush1.bf16.msra.mxu0 0
        %5279 = vmatprep.subr.bf16.mxu0 0
        %5280 = vmatpush1.bf16.msra.mxu0 0
        %5281 = vmatprep.mubr.bf16.mxu0 0
        %5282 = vmatmul.mubr.bf16.gmra.mrb[0].mxu0 %v5200
        %v5283 = vpop.f32.mrb[0].mxu0
        %v5284 = vadd.f32 %v1389, %v5283
        %v5285 = vpop.f32.mrb[0].mxu0
        %v5286 = vpop.f32.mrb[0].mxu0
        %v5287 = vpop.f32.mrb[0].mxu0
        %5288 = vdwg.mxu0
        %5289 = vadd.xlane.f32.xlu0 %v5284
        %v5290 = vpop.xlane.xlu0 %5289
        %v5291 = vrcp.pop 128.0
        %v5292 = vmul.f32 %v5290, %v5291
        %v5293 = vsub.f32 %v5284, %v5292
        %v5294 = vmul.f32 %v5293, %v5293
        %5295 = vadd.xlane.f32.xlu0 %v5294
        %v5296 = vpop.xlane.xlu0 %5295
        %v5297 = vmul.f32 %v5296, %v5291
        %v5298 = vadd.f32 %v5297, 1e-06
        %v5299 = vrsqrt.pop %v5298
        %v5300 = vmul.f32 %v5293, %v5299
        %v5302 = vlaneseq
        %v5303 = vshrl.u32 %v5302, 7
        %v5304 = vsub.s32 0, %v5303
        %v5305 = vrot.slane %v1462, %v5304
        %v5307 = vmul.f32 %v5300, %v5305
        %v5309 = vlaneseq
        %v5310 = vshrl.u32 %v5309, 7
        %v5311 = vsub.s32 0, %v5310
        %v5312 = vrot.slane %v1463, %v5311
        %v5314 = vadd.f32 %v5307, %v5312
        %v5315 = vld [vmem:[%s1152] sm:$0xf]
        %v5316 = vld [vmem:[%s1152 + $0x4] sm:$0xf]
        %v5317 = vld [vmem:[%s1152 + $0x8] sm:$0xf]
        %v5318 = vld [vmem:[%s1152 + $0xc] sm:$0xf]
        %v5319 = vld [vmem:[%s1152 + $0x10] sm:$0xf]
        %v5320 = vld [vmem:[%s1152 + $0x14] sm:$0xf]
        %v5321 = vld [vmem:[%s1152 + $0x18] sm:$0xf]
        %v5322 = vld [vmem:[%s1152 + $0x1c] sm:$0xf]
        %v5323 = vld [vmem:[%s1152 + $0x20] sm:$0xf]
        %v5324 = vld [vmem:[%s1152 + $0x24] sm:$0xf]
        %v5325 = vld [vmem:[%s1152 + $0x28] sm:$0xf]
        %v5326 = vld [vmem:[%s1152 + $0x2c] sm:$0xf]
        %v5327 = vld [vmem:[%s1152 + $0x30] sm:$0xf]
        %v5328 = vld [vmem:[%s1152 + $0x34] sm:$0xf]
        %v5329 = vld [vmem:[%s1152 + $0x38] sm:$0xf]
        %v5330 = vld [vmem:[%s1152 + $0x3c] sm:$0xf]
        %v5331 = vld [vmem:[%s1161] sm:$0xf]
        %v5332 = vld [vmem:[%s1161 + $0x4] sm:$0xf]
        %v5333 = vld [vmem:[%s1161 + $0x8] sm:$0xf]
        %v5334 = vld [vmem:[%s1161 + $0xc] sm:$0xf]
        %v5335 = vld [vmem:[%s1161 + $0x10] sm:$0xf]
        %v5336 = vld [vmem:[%s1161 + $0x14] sm:$0xf]
        %v5337 = vld [vmem:[%s1161 + $0x18] sm:$0xf]
        %v5338 = vld [vmem:[%s1161 + $0x1c] sm:$0xf]
        %v5339 = vld [vmem:[%s1161 + $0x20] sm:$0xf]
        %v5340 = vld [vmem:[%s1161 + $0x24] sm:$0xf]
        %v5341 = vld [vmem:[%s1161 + $0x28] sm:$0xf]
        %v5342 = vld [vmem:[%s1161 + $0x2c] sm:$0xf]
        %v5343 = vld [vmem:[%s1161 + $0x30] sm:$0xf]
        %v5344 = vld [vmem:[%s1161 + $0x34] sm:$0xf]
        %v5345 = vld [vmem:[%s1161 + $0x38] sm:$0xf]
        %v5346 = vld [vmem:[%s1161 + $0x3c] sm:$0xf]
        %v5347 = vld [vmem:[%s1170] sm:$0xf]
        %v5348 = vld [vmem:[%s1170 + $0x4] sm:$0xf]
        %v5349 = vld [vmem:[%s1170 + $0x8] sm:$0xf]
        %v5350 = vld [vmem:[%s1170 + $0xc] sm:$0xf]
        %v5351 = vld [vmem:[%s1170 + $0x10] sm:$0xf]
        %v5352 = vld [vmem:[%s1170 + $0x14] sm:$0xf]
        %v5353 = vld [vmem:[%s1170 + $0x18] sm:$0xf]
        %v5354 = vld [vmem:[%s1170 + $0x1c] sm:$0xf]
        %v5355 = vld [vmem:[%s1170 + $0x20] sm:$0xf]
        %v5356 = vld [vmem:[%s1170 + $0x24] sm:$0xf]
        %v5357 = vld [vmem:[%s1170 + $0x28] sm:$0xf]
        %v5358 = vld [vmem:[%s1170 + $0x2c] sm:$0xf]
        %v5359 = vld [vmem:[%s1170 + $0x30] sm:$0xf]
        %v5360 = vld [vmem:[%s1170 + $0x34] sm:$0xf]
        %v5361 = vld [vmem:[%s1170 + $0x38] sm:$0xf]
        %v5362 = vld [vmem:[%s1170 + $0x3c] sm:$0xf]
        %v5363 = vld [vmem:[%s1179] sm:$0xf]
        %v5364 = vld [vmem:[%s1179 + $0x4] sm:$0xf]
        %v5365 = vld [vmem:[%s1179 + $0x8] sm:$0xf]
        %v5366 = vld [vmem:[%s1179 + $0xc] sm:$0xf]
        %v5367 = vld [vmem:[%s1179 + $0x10] sm:$0xf]
        %v5368 = vld [vmem:[%s1179 + $0x14] sm:$0xf]
        %v5369 = vld [vmem:[%s1179 + $0x18] sm:$0xf]
        %v5370 = vld [vmem:[%s1179 + $0x1c] sm:$0xf]
        %v5371 = vld [vmem:[%s1179 + $0x20] sm:$0xf]
        %v5372 = vld [vmem:[%s1179 + $0x24] sm:$0xf]
        %v5373 = vld [vmem:[%s1179 + $0x28] sm:$0xf]
        %v5374 = vld [vmem:[%s1179 + $0x2c] sm:$0xf]
        %v5375 = vld [vmem:[%s1179 + $0x30] sm:$0xf]
        %v5376 = vld [vmem:[%s1179 + $0x34] sm:$0xf]
        %v5377 = vld [vmem:[%s1179 + $0x38] sm:$0xf]
        %v5378 = vld [vmem:[%s1179 + $0x3c] sm:$0xf]
        %v5379 = vld [vmem:[%s1363] sm:$0x1]
        %v5380 = vld [vmem:[%s1366] sm:$0x1]
        %v5381 = vpack.c.bf16 %v5314, %v5314
        %v5398 = vunpack.c.l.b16 %v5315
        %v5399 = vunpack.c.l.b16 %v5316
        %v5400 = vunpack.c.l.b16 %v5317
        %v5401 = vunpack.c.l.b16 %v5318
        %v5402 = vunpack.c.l.b16 %v5319
        %v5403 = vunpack.c.l.b16 %v5320
        %v5404 = vunpack.c.l.b16 %v5321
        %v5405 = vunpack.c.l.b16 %v5322
        %v5406 = vunpack.c.l.b16 %v5323
        %v5407 = vunpack.c.l.b16 %v5324
        %v5408 = vunpack.c.l.b16 %v5325
        %v5409 = vunpack.c.l.b16 %v5326
        %v5410 = vunpack.c.l.b16 %v5327
        %v5411 = vunpack.c.l.b16 %v5328
        %v5412 = vunpack.c.l.b16 %v5329
        %v5413 = vunpack.c.l.b16 %v5330
        %v5414 = vpack.c.b16 %v5399, %v5398
        %v5415 = vpack.c.b16 %v5401, %v5400
        %v5416 = vpack.c.b16 %v5403, %v5402
        %v5417 = vpack.c.b16 %v5405, %v5404
        %v5418 = vpack.c.b16 %v5407, %v5406
        %v5419 = vpack.c.b16 %v5409, %v5408
        %v5420 = vpack.c.b16 %v5411, %v5410
        %v5421 = vpack.c.b16 %v5413, %v5412
        %5430 = vmatprep.subr.bf16.mxu0 0
        %5431 = vmatpush1.bf16.msra.mxu0 %v5414
        %5432 = vmatprep.subr.bf16.mxu0 0
        %5433 = vmatpush1.bf16.msra.mxu0 %v5415
        %5434 = vmatprep.subr.bf16.mxu0 0
        %5435 = vmatpush1.bf16.msra.mxu0 %v5416
        %5436 = vmatprep.subr.bf16.mxu0 0
        %5437 = vmatpush1.bf16.msra.mxu0 %v5417
        %5438 = vmatprep.subr.bf16.mxu0 0
        %5439 = vmatpush1.bf16.msra.mxu0 %v5418
        %5440 = vmatprep.subr.bf16.mxu0 0
        %5441 = vmatpush1.bf16.msra.mxu0 %v5419
        %5442 = vmatprep.subr.bf16.mxu0 0
        %5443 = vmatpush1.bf16.msra.mxu0 %v5420
        %5444 = vmatprep.subr.bf16.mxu0 0
        %5445 = vmatpush1.bf16.msra.mxu0 %v5421
        %5446 = vmatprep.subr.bf16.mxu0 0
        %5447 = vmatpush1.bf16.msra.mxu0 0
        %5448 = vmatprep.subr.bf16.mxu0 0
        %5449 = vmatpush1.bf16.msra.mxu0 0
        %5450 = vmatprep.subr.bf16.mxu0 0
        %5451 = vmatpush1.bf16.msra.mxu0 0
        %5452 = vmatprep.subr.bf16.mxu0 0
        %5453 = vmatpush1.bf16.msra.mxu0 0
        %5454 = vmatprep.subr.bf16.mxu0 0
        %5455 = vmatpush1.bf16.msra.mxu0 0
        %5456 = vmatprep.subr.bf16.mxu0 0
        %5457 = vmatpush1.bf16.msra.mxu0 0
        %5458 = vmatprep.subr.bf16.mxu0 0
        %5459 = vmatpush1.bf16.msra.mxu0 0
        %5460 = vmatprep.subr.bf16.mxu0 0
        %5461 = vmatpush1.bf16.msra.mxu0 0
        %5462 = vmatprep.mubr.bf16.mxu0 0
        %5463 = vmatmul.mubr.bf16.gmra.mrb[0].mxu0 %v5381
        %v5464 = vpop.f32.mrb[0].mxu0
        %v5465 = vadd.f32 0.0, %v5464
        %v5466 = vpop.f32.mrb[0].mxu0
        %v5467 = vpop.f32.mrb[0].mxu0
        %v5468 = vpop.f32.mrb[0].mxu0
        %5469 = vdwg.mxu0
        %5471 = vrot.lane.b32.xlu0 %v5465, 96
        %v5472 = vpop.permute.xlu0 %5471
        %5474 = vrot.lane.b32.xlu0 %v5465, 64
        %v5475 = vpop.permute.xlu0 %5474
        %5477 = vrot.lane.b32.xlu0 %v5465, 32
        %v5478 = vpop.permute.xlu0 %5477
        %v5480 = vcombine.low %v5465, %v5475
        %v5481 = vcombine.high %v5465, %v5475
        %v5483 = vunpack.c.l.s4 1983009808
        %v5484 = vunpack.c.0.s8 %v5483
        %v5485 = vlaneseq
        %v5486 = vshrl.u32 %v5485, 7
        %v5487 = vsub.s32 %v5484, %v5486
        %v5488 = vrot.slane %v5480, %v5487
        %v5490 = vunpack.c.l.s4 1983009808
        %v5491 = vunpack.c.0.s8 %v5490
        %v5492 = vlaneseq
        %v5493 = vshrl.u32 %v5492, 7
        %v5494 = vsub.s32 %v5491, %v5493
        %v5495 = vrot.slane %v5481, %v5494
        %v5496 = vcombine.low %v5472, %v5478
        %v5497 = vcombine.high %v5472, %v5478
        %v5499 = vunpack.c.l.s4 1983009808
        %v5500 = vunpack.c.0.s8 %v5499
        %v5501 = vlaneseq
        %v5502 = vshrl.u32 %v5501, 7
        %v5503 = vsub.s32 %v5500, %v5502
        %v5504 = vrot.slane %v5496, %v5503
        %v5506 = vunpack.c.l.s4 1983009808
        %v5507 = vunpack.c.0.s8 %v5506
        %v5508 = vlaneseq
        %v5509 = vshrl.u32 %v5508, 7
        %v5510 = vsub.s32 %v5507, %v5509
        %v5511 = vrot.slane %v5497, %v5510
        %v5512 = vcombine.low %v5488, %v5504
        %v5513 = vcombine.high %v5488, %v5504
        %v5515 = vunpack.c.l.s4 1934713408
        %v5516 = vunpack.c.0.s8 %v5515
        %v5517 = vlaneseq
        %v5518 = vshrl.u32 %v5517, 7
        %v5519 = vsub.s32 %v5516, %v5518
        %v5520 = vrot.slane %v5512, %v5519
        %v5522 = vunpack.c.l.s4 1934713408
        %v5523 = vunpack.c.0.s8 %v5522
        %v5524 = vlaneseq
        %v5525 = vshrl.u32 %v5524, 7
        %v5526 = vsub.s32 %v5523, %v5525
        %v5527 = vrot.slane %v5513, %v5526
        %v5528 = vcombine.low %v5495, %v5511
        %v5529 = vcombine.high %v5495, %v5511
        %v5531 = vunpack.c.l.s4 1934713408
        %v5532 = vunpack.c.0.s8 %v5531
        %v5533 = vlaneseq
        %v5534 = vshrl.u32 %v5533, 7
        %v5535 = vsub.s32 %v5532, %v5534
        %v5536 = vrot.slane %v5528, %v5535
        %v5538 = vunpack.c.l.s4 1934713408
        %v5539 = vunpack.c.0.s8 %v5538
        %v5540 = vlaneseq
        %v5541 = vshrl.u32 %v5540, 7
        %v5542 = vsub.s32 %v5539, %v5541
        %v5543 = vrot.slane %v5529, %v5542
        %v5544 = vcombine.high %v5520, 0.0
        %v5545 = vcombine.high %v5527, 0.0
        %v5546 = vcombine.high %v5536, 0.0
        %v5547 = vcombine.high %v5543, 0.0
        %v5548 = vpack.c.bf16 %v5520, %v5520
        %v5549 = vpack.c.bf16 %v5544, %v5544
        %v5550 = vpack.c.bf16 %v5527, %v5527
        %v5551 = vpack.c.bf16 %v5545, %v5545
        %v5552 = vpack.c.bf16 %v5536, %v5536
        %v5553 = vpack.c.bf16 %v5546, %v5546
        %v5554 = vpack.c.bf16 %v5543, %v5543
        %v5555 = vpack.c.bf16 %v5547, %v5547
        %v5556 = vpack.c.bf16 %v1391, %v1390
        %v5573 = vunpack.c.l.b16 %v5331
        %v5574 = vunpack.c.l.b16 %v5332
        %v5575 = vunpack.c.l.b16 %v5333
        %v5576 = vunpack.c.l.b16 %v5334
        %v5577 = vunpack.c.l.b16 %v5335
        %v5578 = vunpack.c.l.b16 %v5336
        %v5579 = vunpack.c.l.b16 %v5337
        %v5580 = vunpack.c.l.b16 %v5338
        %v5581 = vunpack.c.l.b16 %v5339
        %v5582 = vunpack.c.l.b16 %v5340
        %v5583 = vunpack.c.l.b16 %v5341
        %v5584 = vunpack.c.l.b16 %v5342
        %v5585 = vunpack.c.l.b16 %v5343
        %v5586 = vunpack.c.l.b16 %v5344
        %v5587 = vunpack.c.l.b16 %v5345
        %v5588 = vunpack.c.l.b16 %v5346
        %v5589 = vpack.c.b16 %v5574, %v5573
        %v5590 = vpack.c.b16 %v5576, %v5575
        %v5591 = vpack.c.b16 %v5578, %v5577
        %v5592 = vpack.c.b16 %v5580, %v5579
        %v5593 = vpack.c.b16 %v5582, %v5581
        %v5594 = vpack.c.b16 %v5584, %v5583
        %v5595 = vpack.c.b16 %v5586, %v5585
        %v5596 = vpack.c.b16 %v5588, %v5587
        %5605 = vmatprep.subr.bf16.mxu0 0
        %5606 = vmatpush1.bf16.msra.mxu0 %v5589
        %5607 = vmatprep.subr.bf16.mxu0 0
        %5608 = vmatpush1.bf16.msra.mxu0 %v5590
        %5609 = vmatprep.subr.bf16.mxu0 0
        %5610 = vmatpush1.bf16.msra.mxu0 %v5591
        %5611 = vmatprep.subr.bf16.mxu0 0
        %5612 = vmatpush1.bf16.msra.mxu0 %v5592
        %5613 = vmatprep.subr.bf16.mxu0 0
        %5614 = vmatpush1.bf16.msra.mxu0 %v5593
        %5615 = vmatprep.subr.bf16.mxu0 0
        %5616 = vmatpush1.bf16.msra.mxu0 %v5594
        %5617 = vmatprep.subr.bf16.mxu0 0
        %5618 = vmatpush1.bf16.msra.mxu0 %v5595
        %5619 = vmatprep.subr.bf16.mxu0 0
        %5620 = vmatpush1.bf16.msra.mxu0 %v5596
        %5621 = vmatprep.subr.bf16.mxu0 0
        %5622 = vmatpush1.bf16.msra.mxu0 0
        %5623 = vmatprep.subr.bf16.mxu0 0
        %5624 = vmatpush1.bf16.msra.mxu0 0
        %5625 = vmatprep.subr.bf16.mxu0 0
        %5626 = vmatpush1.bf16.msra.mxu0 0
        %5627 = vmatprep.subr.bf16.mxu0 0
        %5628 = vmatpush1.bf16.msra.mxu0 0
        %5629 = vmatprep.subr.bf16.mxu0 0
        %5630 = vmatpush1.bf16.msra.mxu0 0
        %5631 = vmatprep.subr.bf16.mxu0 0
        %5632 = vmatpush1.bf16.msra.mxu0 0
        %5633 = vmatprep.subr.bf16.mxu0 0
        %5634 = vmatpush1.bf16.msra.mxu0 0
        %5635 = vmatprep.subr.bf16.mxu0 0
        %5636 = vmatpush1.bf16.msra.mxu0 0
        %5637 = vmatprep.mubr.bf16.mxu0 0
        %5638 = vmatmul.mubr.bf16.gmra.mrb[0].mxu0 %v5556
        %v5639 = vpop.f32.mrb[0].mxu0
        %v5640 = vadd.f32 0.0, %v5639
        %v5641 = vpop.f32.mrb[0].mxu0
        %v5642 = vpop.f32.mrb[0].mxu0
        %v5643 = vadd.f32 0.0, %v5642
        %v5644 = vpop.f32.mrb[0].mxu0
        %5645 = vdwg.mxu0
        %5648 = vrot.lane.b32.xlu0 %v5640, 96
        %v5649 = vpop.permute.xlu0 %5648
        %5650 = vrot.lane.b32.xlu0 %v5643, 96
        %v5651 = vpop.permute.xlu0 %5650
        %5654 = vrot.lane.b32.xlu0 %v5640, 64
        %v5655 = vpop.permute.xlu0 %5654
        %5656 = vrot.lane.b32.xlu0 %v5643, 64
        %v5657 = vpop.permute.xlu0 %5656
        %5660 = vrot.lane.b32.xlu0 %v5640, 32
        %v5661 = vpop.permute.xlu0 %5660
        %5662 = vrot.lane.b32.xlu0 %v5643, 32
        %v5663 = vpop.permute.xlu0 %5662
        %v5666 = vcombine.low %v5640, %v5655
        %v5667 = vcombine.high %v5640, %v5655
        %v5669 = vunpack.c.l.s4 1983009808
        %v5670 = vunpack.c.0.s8 %v5669
        %v5671 = vlaneseq
        %v5672 = vshrl.u32 %v5671, 7
        %v5673 = vsub.s32 %v5670, %v5672
        %v5674 = vrot.slane %v5666, %v5673
        %v5676 = vunpack.c.l.s4 1983009808
        %v5677 = vunpack.c.0.s8 %v5676
        %v5678 = vlaneseq
        %v5679 = vshrl.u32 %v5678, 7
        %v5680 = vsub.s32 %v5677, %v5679
        %v5681 = vrot.slane %v5667, %v5680
        %v5682 = vcombine.low %v5649, %v5661
        %v5683 = vcombine.high %v5649, %v5661
        %v5685 = vunpack.c.l.s4 1983009808
        %v5686 = vunpack.c.0.s8 %v5685
        %v5687 = vlaneseq
        %v5688 = vshrl.u32 %v5687, 7
        %v5689 = vsub.s32 %v5686, %v5688
        %v5690 = vrot.slane %v5682, %v5689
        %v5692 = vunpack.c.l.s4 1983009808
        %v5693 = vunpack.c.0.s8 %v5692
        %v5694 = vlaneseq
        %v5695 = vshrl.u32 %v5694, 7
        %v5696 = vsub.s32 %v5693, %v5695
        %v5697 = vrot.slane %v5683, %v5696
        %v5698 = vcombine.low %v5674, %v5690
        %v5699 = vcombine.high %v5674, %v5690
        %v5701 = vunpack.c.l.s4 1934713408
        %v5702 = vunpack.c.0.s8 %v5701
        %v5703 = vlaneseq
        %v5704 = vshrl.u32 %v5703, 7
        %v5705 = vsub.s32 %v5702, %v5704
        %v5706 = vrot.slane %v5698, %v5705
        %v5708 = vunpack.c.l.s4 1934713408
        %v5709 = vunpack.c.0.s8 %v5708
        %v5710 = vlaneseq
        %v5711 = vshrl.u32 %v5710, 7
        %v5712 = vsub.s32 %v5709, %v5711
        %v5713 = vrot.slane %v5699, %v5712
        %v5714 = vcombine.low %v5681, %v5697
        %v5715 = vcombine.high %v5681, %v5697
        %v5717 = vunpack.c.l.s4 1934713408
        %v5718 = vunpack.c.0.s8 %v5717
        %v5719 = vlaneseq
        %v5720 = vshrl.u32 %v5719, 7
        %v5721 = vsub.s32 %v5718, %v5720
        %v5722 = vrot.slane %v5714, %v5721
        %v5724 = vunpack.c.l.s4 1934713408
        %v5725 = vunpack.c.0.s8 %v5724
        %v5726 = vlaneseq
        %v5727 = vshrl.u32 %v5726, 7
        %v5728 = vsub.s32 %v5725, %v5727
        %v5729 = vrot.slane %v5715, %v5728
        %v5730 = vcombine.high %v5706, 0.0
        %v5731 = vcombine.high %v5713, 0.0
        %v5732 = vcombine.high %v5722, 0.0
        %v5733 = vcombine.high %v5729, 0.0
        %v5734 = vcombine.low %v5643, %v5657
        %v5735 = vcombine.high %v5643, %v5657
        %v5737 = vunpack.c.l.s4 1983009808
        %v5738 = vunpack.c.0.s8 %v5737
        %v5739 = vlaneseq
        %v5740 = vshrl.u32 %v5739, 7
        %v5741 = vsub.s32 %v5738, %v5740
        %v5742 = vrot.slane %v5734, %v5741
        %v5744 = vunpack.c.l.s4 1983009808
        %v5745 = vunpack.c.0.s8 %v5744
        %v5746 = vlaneseq
        %v5747 = vshrl.u32 %v5746, 7
        %v5748 = vsub.s32 %v5745, %v5747
        %v5749 = vrot.slane %v5735, %v5748
        %v5750 = vcombine.low %v5651, %v5663
        %v5751 = vcombine.high %v5651, %v5663
        %v5753 = vunpack.c.l.s4 1983009808
        %v5754 = vunpack.c.0.s8 %v5753
        %v5755 = vlaneseq
        %v5756 = vshrl.u32 %v5755, 7
        %v5757 = vsub.s32 %v5754, %v5756
        %v5758 = vrot.slane %v5750, %v5757
        %v5760 = vunpack.c.l.s4 1983009808
        %v5761 = vunpack.c.0.s8 %v5760
        %v5762 = vlaneseq
        %v5763 = vshrl.u32 %v5762, 7
        %v5764 = vsub.s32 %v5761, %v5763
        %v5765 = vrot.slane %v5751, %v5764
        %v5766 = vcombine.low %v5742, %v5758
        %v5767 = vcombine.high %v5742, %v5758
        %v5769 = vunpack.c.l.s4 1934713408
        %v5770 = vunpack.c.0.s8 %v5769
        %v5771 = vlaneseq
        %v5772 = vshrl.u32 %v5771, 7
        %v5773 = vsub.s32 %v5770, %v5772
        %v5774 = vrot.slane %v5766, %v5773
        %v5776 = vunpack.c.l.s4 1934713408
        %v5777 = vunpack.c.0.s8 %v5776
        %v5778 = vlaneseq
        %v5779 = vshrl.u32 %v5778, 7
        %v5780 = vsub.s32 %v5777, %v5779
        %v5781 = vrot.slane %v5767, %v5780
        %v5782 = vcombine.low %v5749, %v5765
        %v5783 = vcombine.high %v5749, %v5765
        %v5785 = vunpack.c.l.s4 1934713408
        %v5786 = vunpack.c.0.s8 %v5785
        %v5787 = vlaneseq
        %v5788 = vshrl.u32 %v5787, 7
        %v5789 = vsub.s32 %v5786, %v5788
        %v5790 = vrot.slane %v5782, %v5789
        %v5792 = vunpack.c.l.s4 1934713408
        %v5793 = vunpack.c.0.s8 %v5792
        %v5794 = vlaneseq
        %v5795 = vshrl.u32 %v5794, 7
        %v5796 = vsub.s32 %v5793, %v5795
        %v5797 = vrot.slane %v5783, %v5796
        %v5798 = vcombine.high %v5774, 0.0
        %v5799 = vcombine.high %v5781, 0.0
        %v5800 = vcombine.high %v5790, 0.0
        %v5801 = vcombine.high %v5797, 0.0
        %v5802 = vpack.c.bf16 %v5706, %v5706
        %v5803 = vpack.c.bf16 %v5730, %v5730
        %v5804 = vpack.c.bf16 %v5713, %v5713
        %v5805 = vpack.c.bf16 %v5731, %v5731
        %v5806 = vpack.c.bf16 %v5722, %v5722
        %v5807 = vpack.c.bf16 %v5732, %v5732
        %v5808 = vpack.c.bf16 %v5729, %v5729
        %v5809 = vpack.c.bf16 %v5733, %v5733
        %v5810 = vpack.c.bf16 %v5774, %v5774
        %v5811 = vpack.c.bf16 %v5798, %v5798
        %v5812 = vpack.c.bf16 %v5781, %v5781
        %v5813 = vpack.c.bf16 %v5799, %v5799
        %v5814 = vpack.c.bf16 %v5790, %v5790
        %v5815 = vpack.c.bf16 %v5800, %v5800
        %v5816 = vpack.c.bf16 %v5797, %v5797
        %v5817 = vpack.c.bf16 %v5801, %v5801
        %v5834 = vunpack.c.l.b16 %v5347
        %v5835 = vunpack.c.l.b16 %v5348
        %v5836 = vunpack.c.l.b16 %v5349
        %v5837 = vunpack.c.l.b16 %v5350
        %v5838 = vunpack.c.l.b16 %v5351
        %v5839 = vunpack.c.l.b16 %v5352
        %v5840 = vunpack.c.l.b16 %v5353
        %v5841 = vunpack.c.l.b16 %v5354
        %v5842 = vunpack.c.l.b16 %v5355
        %v5843 = vunpack.c.l.b16 %v5356
        %v5844 = vunpack.c.l.b16 %v5357
        %v5845 = vunpack.c.l.b16 %v5358
        %v5846 = vunpack.c.l.b16 %v5359
        %v5847 = vunpack.c.l.b16 %v5360
        %v5848 = vunpack.c.l.b16 %v5361
        %v5849 = vunpack.c.l.b16 %v5362
        %v5850 = vpack.c.b16 %v5835, %v5834
        %v5851 = vpack.c.b16 %v5837, %v5836
        %v5852 = vpack.c.b16 %v5839, %v5838
        %v5853 = vpack.c.b16 %v5841, %v5840
        %v5854 = vpack.c.b16 %v5843, %v5842
        %v5855 = vpack.c.b16 %v5845, %v5844
        %v5856 = vpack.c.b16 %v5847, %v5846
        %v5857 = vpack.c.b16 %v5849, %v5848
        %5866 = vmatprep.subr.bf16.mxu0 0
        %5867 = vmatpush1.bf16.msra.mxu0 %v5850
        %5868 = vmatprep.subr.bf16.mxu0 0
        %5869 = vmatpush1.bf16.msra.mxu0 %v5851
        %5870 = vmatprep.subr.bf16.mxu0 0
        %5871 = vmatpush1.bf16.msra.mxu0 %v5852
        %5872 = vmatprep.subr.bf16.mxu0 0
        %5873 = vmatpush1.bf16.msra.mxu0 %v5853
        %5874 = vmatprep.subr.bf16.mxu0 0
        %5875 = vmatpush1.bf16.msra.mxu0 %v5854
        %5876 = vmatprep.subr.bf16.mxu0 0
        %5877 = vmatpush1.bf16.msra.mxu0 %v5855
        %5878 = vmatprep.subr.bf16.mxu0 0
        %5879 = vmatpush1.bf16.msra.mxu0 %v5856
        %5880 = vmatprep.subr.bf16.mxu0 0
        %5881 = vmatpush1.bf16.msra.mxu0 %v5857
        %5882 = vmatprep.subr.bf16.mxu0 0
        %5883 = vmatpush1.bf16.msra.mxu0 0
        %5884 = vmatprep.subr.bf16.mxu0 0
        %5885 = vmatpush1.bf16.msra.mxu0 0
        %5886 = vmatprep.subr.bf16.mxu0 0
        %5887 = vmatpush1.bf16.msra.mxu0 0
        %5888 = vmatprep.subr.bf16.mxu0 0
        %5889 = vmatpush1.bf16.msra.mxu0 0
        %5890 = vmatprep.subr.bf16.mxu0 0
        %5891 = vmatpush1.bf16.msra.mxu0 0
        %5892 = vmatprep.subr.bf16.mxu0 0
        %5893 = vmatpush1.bf16.msra.mxu0 0
        %5894 = vmatprep.subr.bf16.mxu0 0
        %5895 = vmatpush1.bf16.msra.mxu0 0
        %5896 = vmatprep.subr.bf16.mxu0 0
        %5897 = vmatpush1.bf16.msra.mxu0 0
        %5898 = vmatprep.mubr.bf16.mxu0 0
        %5899 = vmatmul.mubr.bf16.gmra.mrb[0].mxu0 %v5556
        %v5900 = vpop.f32.mrb[0].mxu0
        %v5901 = vadd.f32 0.0, %v5900
        %v5902 = vpop.f32.mrb[0].mxu0
        %v5903 = vpop.f32.mrb[0].mxu0
        %v5904 = vadd.f32 0.0, %v5903
        %v5905 = vpop.f32.mrb[0].mxu0
        %5906 = vdwg.mxu0
        %5909 = vrot.lane.b32.xlu0 %v5901, 96
        %v5910 = vpop.permute.xlu0 %5909
        %5911 = vrot.lane.b32.xlu0 %v5904, 96
        %v5912 = vpop.permute.xlu0 %5911
        %5915 = vrot.lane.b32.xlu0 %v5901, 64
        %v5916 = vpop.permute.xlu0 %5915
        %5917 = vrot.lane.b32.xlu0 %v5904, 64
        %v5918 = vpop.permute.xlu0 %5917
        %5921 = vrot.lane.b32.xlu0 %v5901, 32
        %v5922 = vpop.permute.xlu0 %5921
        %5923 = vrot.lane.b32.xlu0 %v5904, 32
        %v5924 = vpop.permute.xlu0 %5923
        %v5927 = vcombine.low %v5901, %v5916
        %v5928 = vcombine.high %v5901, %v5916
        %v5930 = vunpack.c.l.s4 1983009808
        %v5931 = vunpack.c.0.s8 %v5930
        %v5932 = vlaneseq
        %v5933 = vshrl.u32 %v5932, 7
        %v5934 = vsub.s32 %v5931, %v5933
        %v5935 = vrot.slane %v5927, %v5934
        %v5937 = vunpack.c.l.s4 1983009808
        %v5938 = vunpack.c.0.s8 %v5937
        %v5939 = vlaneseq
        %v5940 = vshrl.u32 %v5939, 7
        %v5941 = vsub.s32 %v5938, %v5940
        %v5942 = vrot.slane %v5928, %v5941
        %v5943 = vcombine.low %v5910, %v5922
        %v5944 = vcombine.high %v5910, %v5922
        %v5946 = vunpack.c.l.s4 1983009808
        %v5947 = vunpack.c.0.s8 %v5946
        %v5948 = vlaneseq
        %v5949 = vshrl.u32 %v5948, 7
        %v5950 = vsub.s32 %v5947, %v5949
        %v5951 = vrot.slane %v5943, %v5950
        %v5953 = vunpack.c.l.s4 1983009808
        %v5954 = vunpack.c.0.s8 %v5953
        %v5955 = vlaneseq
        %v5956 = vshrl.u32 %v5955, 7
        %v5957 = vsub.s32 %v5954, %v5956
        %v5958 = vrot.slane %v5944, %v5957
        %v5959 = vcombine.low %v5935, %v5951
        %v5960 = vcombine.high %v5935, %v5951
        %v5962 = vunpack.c.l.s4 1934713408
        %v5963 = vunpack.c.0.s8 %v5962
        %v5964 = vlaneseq
        %v5965 = vshrl.u32 %v5964, 7
        %v5966 = vsub.s32 %v5963, %v5965
        %v5967 = vrot.slane %v5959, %v5966
        %v5969 = vunpack.c.l.s4 1934713408
        %v5970 = vunpack.c.0.s8 %v5969
        %v5971 = vlaneseq
        %v5972 = vshrl.u32 %v5971, 7
        %v5973 = vsub.s32 %v5970, %v5972
        %v5974 = vrot.slane %v5960, %v5973
        %v5975 = vcombine.low %v5942, %v5958
        %v5976 = vcombine.high %v5942, %v5958
        %v5978 = vunpack.c.l.s4 1934713408
        %v5979 = vunpack.c.0.s8 %v5978
        %v5980 = vlaneseq
        %v5981 = vshrl.u32 %v5980, 7
        %v5982 = vsub.s32 %v5979, %v5981
        %v5983 = vrot.slane %v5975, %v5982
        %v5985 = vunpack.c.l.s4 1934713408
        %v5986 = vunpack.c.0.s8 %v5985
        %v5987 = vlaneseq
        %v5988 = vshrl.u32 %v5987, 7
        %v5989 = vsub.s32 %v5986, %v5988
        %v5990 = vrot.slane %v5976, %v5989
        %v5991 = vcombine.high %v5967, 0.0
        %v5992 = vcombine.high %v5974, 0.0
        %v5993 = vcombine.high %v5983, 0.0
        %v5994 = vcombine.high %v5990, 0.0
        %v5995 = vcombine.low %v5904, %v5918
        %v5996 = vcombine.high %v5904, %v5918
        %v5998 = vunpack.c.l.s4 1983009808
        %v5999 = vunpack.c.0.s8 %v5998
        %v6000 = vlaneseq
        %v6001 = vshrl.u32 %v6000, 7
        %v6002 = vsub.s32 %v5999, %v6001
        %v6003 = vrot.slane %v5995, %v6002
        %v6005 = vunpack.c.l.s4 1983009808
        %v6006 = vunpack.c.0.s8 %v6005
        %v6007 = vlaneseq
        %v6008 = vshrl.u32 %v6007, 7
        %v6009 = vsub.s32 %v6006, %v6008
        %v6010 = vrot.slane %v5996, %v6009
        %v6011 = vcombine.low %v5912, %v5924
        %v6012 = vcombine.high %v5912, %v5924
        %v6014 = vunpack.c.l.s4 1983009808
        %v6015 = vunpack.c.0.s8 %v6014
        %v6016 = vlaneseq
        %v6017 = vshrl.u32 %v6016, 7
        %v6018 = vsub.s32 %v6015, %v6017
        %v6019 = vrot.slane %v6011, %v6018
        %v6021 = vunpack.c.l.s4 1983009808
        %v6022 = vunpack.c.0.s8 %v6021
        %v6023 = vlaneseq
        %v6024 = vshrl.u32 %v6023, 7
        %v6025 = vsub.s32 %v6022, %v6024
        %v6026 = vrot.slane %v6012, %v6025
        %v6027 = vcombine.low %v6003, %v6019
        %v6028 = vcombine.high %v6003, %v6019
        %v6030 = vunpack.c.l.s4 1934713408
        %v6031 = vunpack.c.0.s8 %v6030
        %v6032 = vlaneseq
        %v6033 = vshrl.u32 %v6032, 7
        %v6034 = vsub.s32 %v6031, %v6033
        %v6035 = vrot.slane %v6027, %v6034
        %v6037 = vunpack.c.l.s4 1934713408
        %v6038 = vunpack.c.0.s8 %v6037
        %v6039 = vlaneseq
        %v6040 = vshrl.u32 %v6039, 7
        %v6041 = vsub.s32 %v6038, %v6040
        %v6042 = vrot.slane %v6028, %v6041
        %v6043 = vcombine.low %v6010, %v6026
        %v6044 = vcombine.high %v6010, %v6026
        %v6046 = vunpack.c.l.s4 1934713408
        %v6047 = vunpack.c.0.s8 %v6046
        %v6048 = vlaneseq
        %v6049 = vshrl.u32 %v6048, 7
        %v6050 = vsub.s32 %v6047, %v6049
        %v6051 = vrot.slane %v6043, %v6050
        %v6053 = vunpack.c.l.s4 1934713408
        %v6054 = vunpack.c.0.s8 %v6053
        %v6055 = vlaneseq
        %v6056 = vshrl.u32 %v6055, 7
        %v6057 = vsub.s32 %v6054, %v6056
        %v6058 = vrot.slane %v6044, %v6057
        %v6059 = vcombine.high %v6035, 0.0
        %v6060 = vcombine.high %v6042, 0.0
        %v6061 = vcombine.high %v6051, 0.0
        %v6062 = vcombine.high %v6058, 0.0
        %v6063 = vpack.c.bf16 %v5967, %v5967
        %v6064 = vpack.c.bf16 %v5991, %v5991
        %v6065 = vpack.c.bf16 %v5974, %v5974
        %v6066 = vpack.c.bf16 %v5992, %v5992
        %v6067 = vpack.c.bf16 %v5983, %v5983
        %v6068 = vpack.c.bf16 %v5993, %v5993
        %v6069 = vpack.c.bf16 %v5990, %v5990
        %v6070 = vpack.c.bf16 %v5994, %v5994
        %v6071 = vpack.c.bf16 %v6035, %v6035
        %v6072 = vpack.c.bf16 %v6059, %v6059
        %v6073 = vpack.c.bf16 %v6042, %v6042
        %v6074 = vpack.c.bf16 %v6060, %v6060
        %v6075 = vpack.c.bf16 %v6051, %v6051
        %v6076 = vpack.c.bf16 %v6061, %v6061
        %v6077 = vpack.c.bf16 %v6058, %v6058
        %v6078 = vpack.c.bf16 %v6062, %v6062
        %v6079 = vcombine.low %v5548, %v5552
        %v6081 = vunpack.c.l.s4 1983009808
        %v6082 = vunpack.c.0.s8 %v6081
        %v6083 = vlaneseq
        %v6084 = vshrl.u32 %v6083, 7
        %v6085 = vsub.s32 %v6082, %v6084
        %v6086 = vrot.slane %v6079, %v6085
        %v6087 = vcombine.low %v5550, %v5554
        %v6089 = vunpack.c.l.s4 1983009808
        %v6090 = vunpack.c.0.s8 %v6089
        %v6091 = vlaneseq
        %v6092 = vshrl.u32 %v6091, 7
        %v6093 = vsub.s32 %v6090, %v6092
        %v6094 = vrot.slane %v6087, %v6093
        %v6095 = vcombine.low %v6086, %v6094
        %v6097 = vunpack.c.l.s4 1934713408
        %v6098 = vunpack.c.0.s8 %v6097
        %v6099 = vlaneseq
        %v6100 = vshrl.u32 %v6099, 7
        %v6101 = vsub.s32 %v6098, %v6100
        %v6102 = vrot.slane %v6095, %v6101
        %v6103 = vcombine.high %v6102, 0
        %v6104 = vcombine.low %v5549, %v5553
        %v6106 = vunpack.c.l.s4 1983009808
        %v6107 = vunpack.c.0.s8 %v6106
        %v6108 = vlaneseq
        %v6109 = vshrl.u32 %v6108, 7
        %v6110 = vsub.s32 %v6107, %v6109
        %v6111 = vrot.slane %v6104, %v6110
        %v6112 = vcombine.low %v5551, %v5555
        %v6114 = vunpack.c.l.s4 1983009808
        %v6115 = vunpack.c.0.s8 %v6114
        %v6116 = vlaneseq
        %v6117 = vshrl.u32 %v6116, 7
        %v6118 = vsub.s32 %v6115, %v6117
        %v6119 = vrot.slane %v6112, %v6118
        %v6120 = vcombine.low %v6111, %v6119
        %v6122 = vunpack.c.l.s4 1934713408
        %v6123 = vunpack.c.0.s8 %v6122
        %v6124 = vlaneseq
        %v6125 = vshrl.u32 %v6124, 7
        %v6126 = vsub.s32 %v6123, %v6125
        %v6127 = vrot.slane %v6120, %v6126
        %v6128 = vcombine.high %v6127, 0
        %v6131 = vpack.i.b16 %v6127, %v6102
        %v6132 = vshrl.u32 %v6102, 16
        %v6133 = vshrl.u32 %v6127, 16
        %v6134 = vpack.i.b16 %v6133, %v6132
        %v6137 = vpack.i.b16 %v6128, %v6103
        %v6138 = vshrl.u32 %v6103, 16
        %v6139 = vshrl.u32 %v6128, 16
        %v6140 = vpack.i.b16 %v6139, %v6138
        %6141 = vxpose.xlu0.c.b16.start [1/8] %v5802, 128
        %6142 = vxpose.xlu0.c.b16.cont [2/8] 0, 128
        %6143 = vxpose.xlu0.c.b16.cont [3/8] 0, 128
        %6144 = vxpose.xlu0.c.b16.cont [4/8] 0, 128
        %6145 = vxpose.xlu0.c.b16.cont [5/8] 0, 128
        %6146 = vxpose.xlu0.c.b16.cont [6/8] 0, 128
        %6147 = vxpose.xlu0.c.b16.cont [7/8] 0, 128
        %6148 = vxpose.xlu0.c.b16.end [8/8] 0, 128
        %v6149 = vpop.trf.xlu0
        %v6150 = vpop.trf.xlu0
        %v6151 = vpop.trf.xlu0
        %v6152 = vpop.trf.xlu0
        %v6153 = vpop.trf.xlu0
        %v6154 = vpop.trf.xlu0
        %v6155 = vpop.trf.xlu0
        %v6156 = vpop.trf.xlu0
        %6157 = vxpose.xlu0.c.b16.start [1/8] %v5803, 128
        %6158 = vxpose.xlu0.c.b16.cont [2/8] 0, 128
        %6159 = vxpose.xlu0.c.b16.cont [3/8] 0, 128
        %6160 = vxpose.xlu0.c.b16.cont [4/8] 0, 128
        %6161 = vxpose.xlu0.c.b16.cont [5/8] 0, 128
        %6162 = vxpose.xlu0.c.b16.cont [6/8] 0, 128
        %6163 = vxpose.xlu0.c.b16.cont [7/8] 0, 128
        %6164 = vxpose.xlu0.c.b16.end [8/8] 0, 128
        %v6165 = vpop.trf.xlu0
        %v6166 = vpop.trf.xlu0
        %v6167 = vpop.trf.xlu0
        %v6168 = vpop.trf.xlu0
        %v6169 = vpop.trf.xlu0
        %v6170 = vpop.trf.xlu0
        %v6171 = vpop.trf.xlu0
        %v6172 = vpop.trf.xlu0
        %6173 = vxpose.xlu0.c.b16.start [1/8] %v5804, 128
        %6174 = vxpose.xlu0.c.b16.cont [2/8] 0, 128
        %6175 = vxpose.xlu0.c.b16.cont [3/8] 0, 128
        %6176 = vxpose.xlu0.c.b16.cont [4/8] 0, 128
        %6177 = vxpose.xlu0.c.b16.cont [5/8] 0, 128
        %6178 = vxpose.xlu0.c.b16.cont [6/8] 0, 128
        %6179 = vxpose.xlu0.c.b16.cont [7/8] 0, 128
        %6180 = vxpose.xlu0.c.b16.end [8/8] 0, 128
        %v6181 = vpop.trf.xlu0
        %v6182 = vpop.trf.xlu0
        %v6183 = vpop.trf.xlu0
        %v6184 = vpop.trf.xlu0
        %v6185 = vpop.trf.xlu0
        %v6186 = vpop.trf.xlu0
        %v6187 = vpop.trf.xlu0
        %v6188 = vpop.trf.xlu0
        %6189 = vxpose.xlu0.c.b16.start [1/8] %v5805, 128
        %6190 = vxpose.xlu0.c.b16.cont [2/8] 0, 128
        %6191 = vxpose.xlu0.c.b16.cont [3/8] 0, 128
        %6192 = vxpose.xlu0.c.b16.cont [4/8] 0, 128
        %6193 = vxpose.xlu0.c.b16.cont [5/8] 0, 128
        %6194 = vxpose.xlu0.c.b16.cont [6/8] 0, 128
        %6195 = vxpose.xlu0.c.b16.cont [7/8] 0, 128
        %6196 = vxpose.xlu0.c.b16.end [8/8] 0, 128
        %v6197 = vpop.trf.xlu0
        %v6198 = vpop.trf.xlu0
        %v6199 = vpop.trf.xlu0
        %v6200 = vpop.trf.xlu0
        %v6201 = vpop.trf.xlu0
        %v6202 = vpop.trf.xlu0
        %v6203 = vpop.trf.xlu0
        %v6204 = vpop.trf.xlu0
        %6205 = vxpose.xlu0.c.b16.start [1/8] %v5806, 128
        %6206 = vxpose.xlu0.c.b16.cont [2/8] 0, 128
        %6207 = vxpose.xlu0.c.b16.cont [3/8] 0, 128
        %6208 = vxpose.xlu0.c.b16.cont [4/8] 0, 128
        %6209 = vxpose.xlu0.c.b16.cont [5/8] 0, 128
        %6210 = vxpose.xlu0.c.b16.cont [6/8] 0, 128
        %6211 = vxpose.xlu0.c.b16.cont [7/8] 0, 128
        %6212 = vxpose.xlu0.c.b16.end [8/8] 0, 128
        %v6213 = vpop.trf.xlu0
        %v6214 = vpop.trf.xlu0
        %v6215 = vpop.trf.xlu0
        %v6216 = vpop.trf.xlu0
        %v6217 = vpop.trf.xlu0
        %v6218 = vpop.trf.xlu0
        %v6219 = vpop.trf.xlu0
        %v6220 = vpop.trf.xlu0
        %6221 = vxpose.xlu0.c.b16.start [1/8] %v5807, 128
        %6222 = vxpose.xlu0.c.b16.cont [2/8] 0, 128
        %6223 = vxpose.xlu0.c.b16.cont [3/8] 0, 128
        %6224 = vxpose.xlu0.c.b16.cont [4/8] 0, 128
        %6225 = vxpose.xlu0.c.b16.cont [5/8] 0, 128
        %6226 = vxpose.xlu0.c.b16.cont [6/8] 0, 128
        %6227 = vxpose.xlu0.c.b16.cont [7/8] 0, 128
        %6228 = vxpose.xlu0.c.b16.end [8/8] 0, 128
        %v6229 = vpop.trf.xlu0
        %v6230 = vpop.trf.xlu0
        %v6231 = vpop.trf.xlu0
        %v6232 = vpop.trf.xlu0
        %v6233 = vpop.trf.xlu0
        %v6234 = vpop.trf.xlu0
        %v6235 = vpop.trf.xlu0
        %v6236 = vpop.trf.xlu0
        %6237 = vxpose.xlu0.c.b16.start [1/8] %v5808, 128
        %6238 = vxpose.xlu0.c.b16.cont [2/8] 0, 128
        %6239 = vxpose.xlu0.c.b16.cont [3/8] 0, 128
        %6240 = vxpose.xlu0.c.b16.cont [4/8] 0, 128
        %6241 = vxpose.xlu0.c.b16.cont [5/8] 0, 128
        %6242 = vxpose.xlu0.c.b16.cont [6/8] 0, 128
        %6243 = vxpose.xlu0.c.b16.cont [7/8] 0, 128
        %6244 = vxpose.xlu0.c.b16.end [8/8] 0, 128
        %v6245 = vpop.trf.xlu0
        %v6246 = vpop.trf.xlu0
        %v6247 = vpop.trf.xlu0
        %v6248 = vpop.trf.xlu0
        %v6249 = vpop.trf.xlu0
        %v6250 = vpop.trf.xlu0
        %v6251 = vpop.trf.xlu0
        %v6252 = vpop.trf.xlu0
        %6253 = vxpose.xlu0.c.b16.start [1/8] %v5809, 128
        %6254 = vxpose.xlu0.c.b16.cont [2/8] 0, 128
        %6255 = vxpose.xlu0.c.b16.cont [3/8] 0, 128
        %6256 = vxpose.xlu0.c.b16.cont [4/8] 0, 128
        %6257 = vxpose.xlu0.c.b16.cont [5/8] 0, 128
        %6258 = vxpose.xlu0.c.b16.cont [6/8] 0, 128
        %6259 = vxpose.xlu0.c.b16.cont [7/8] 0, 128
        %6260 = vxpose.xlu0.c.b16.end [8/8] 0, 128
        %v6261 = vpop.trf.xlu0
        %v6262 = vpop.trf.xlu0
        %v6263 = vpop.trf.xlu0
        %v6264 = vpop.trf.xlu0
        %v6265 = vpop.trf.xlu0
        %v6266 = vpop.trf.xlu0
        %v6267 = vpop.trf.xlu0
        %v6268 = vpop.trf.xlu0
        %6269 = vxpose.xlu0.c.b16.start [1/8] %v5810, 128
        %6270 = vxpose.xlu0.c.b16.cont [2/8] 0, 128
        %6271 = vxpose.xlu0.c.b16.cont [3/8] 0, 128
        %6272 = vxpose.xlu0.c.b16.cont [4/8] 0, 128
        %6273 = vxpose.xlu0.c.b16.cont [5/8] 0, 128
        %6274 = vxpose.xlu0.c.b16.cont [6/8] 0, 128
        %6275 = vxpose.xlu0.c.b16.cont [7/8] 0, 128
        %6276 = vxpose.xlu0.c.b16.end [8/8] 0, 128
        %v6277 = vpop.trf.xlu0
        %v6278 = vpop.trf.xlu0
        %v6279 = vpop.trf.xlu0
        %v6280 = vpop.trf.xlu0
        %v6281 = vpop.trf.xlu0
        %v6282 = vpop.trf.xlu0
        %v6283 = vpop.trf.xlu0
        %v6284 = vpop.trf.xlu0
        %6285 = vxpose.xlu0.c.b16.start [1/8] %v5811, 128
        %6286 = vxpose.xlu0.c.b16.cont [2/8] 0, 128
        %6287 = vxpose.xlu0.c.b16.cont [3/8] 0, 128
        %6288 = vxpose.xlu0.c.b16.cont [4/8] 0, 128
        %6289 = vxpose.xlu0.c.b16.cont [5/8] 0, 128
        %6290 = vxpose.xlu0.c.b16.cont [6/8] 0, 128
        %6291 = vxpose.xlu0.c.b16.cont [7/8] 0, 128
        %6292 = vxpose.xlu0.c.b16.end [8/8] 0, 128
        %v6293 = vpop.trf.xlu0
        %v6294 = vpop.trf.xlu0
        %v6295 = vpop.trf.xlu0
        %v6296 = vpop.trf.xlu0
        %v6297 = vpop.trf.xlu0
        %v6298 = vpop.trf.xlu0
        %v6299 = vpop.trf.xlu0
        %v6300 = vpop.trf.xlu0
        %6301 = vxpose.xlu0.c.b16.start [1/8] %v5812, 128
        %6302 = vxpose.xlu0.c.b16.cont [2/8] 0, 128
        %6303 = vxpose.xlu0.c.b16.cont [3/8] 0, 128
        %6304 = vxpose.xlu0.c.b16.cont [4/8] 0, 128
        %6305 = vxpose.xlu0.c.b16.cont [5/8] 0, 128
        %6306 = vxpose.xlu0.c.b16.cont [6/8] 0, 128
        %6307 = vxpose.xlu0.c.b16.cont [7/8] 0, 128
        %6308 = vxpose.xlu0.c.b16.end [8/8] 0, 128
        %v6309 = vpop.trf.xlu0
        %v6310 = vpop.trf.xlu0
        %v6311 = vpop.trf.xlu0
        %v6312 = vpop.trf.xlu0
        %v6313 = vpop.trf.xlu0
        %v6314 = vpop.trf.xlu0
        %v6315 = vpop.trf.xlu0
        %v6316 = vpop.trf.xlu0
        %6317 = vxpose.xlu0.c.b16.start [1/8] %v5813, 128
        %6318 = vxpose.xlu0.c.b16.cont [2/8] 0, 128
        %6319 = vxpose.xlu0.c.b16.cont [3/8] 0, 128
        %6320 = vxpose.xlu0.c.b16.cont [4/8] 0, 128
        %6321 = vxpose.xlu0.c.b16.cont [5/8] 0, 128
        %6322 = vxpose.xlu0.c.b16.cont [6/8] 0, 128
        %6323 = vxpose.xlu0.c.b16.cont [7/8] 0, 128
        %6324 = vxpose.xlu0.c.b16.end [8/8] 0, 128
        %v6325 = vpop.trf.xlu0
        %v6326 = vpop.trf.xlu0
        %v6327 = vpop.trf.xlu0
        %v6328 = vpop.trf.xlu0
        %v6329 = vpop.trf.xlu0
        %v6330 = vpop.trf.xlu0
        %v6331 = vpop.trf.xlu0
        %v6332 = vpop.trf.xlu0
        %6333 = vxpose.xlu0.c.b16.start [1/8] %v5814, 128
        %6334 = vxpose.xlu0.c.b16.cont [2/8] 0, 128
        %6335 = vxpose.xlu0.c.b16.cont [3/8] 0, 128
        %6336 = vxpose.xlu0.c.b16.cont [4/8] 0, 128
        %6337 = vxpose.xlu0.c.b16.cont [5/8] 0, 128
        %6338 = vxpose.xlu0.c.b16.cont [6/8] 0, 128
        %6339 = vxpose.xlu0.c.b16.cont [7/8] 0, 128
        %6340 = vxpose.xlu0.c.b16.end [8/8] 0, 128
        %v6341 = vpop.trf.xlu0
        %v6342 = vpop.trf.xlu0
        %v6343 = vpop.trf.xlu0
        %v6344 = vpop.trf.xlu0
        %v6345 = vpop.trf.xlu0
        %v6346 = vpop.trf.xlu0
        %v6347 = vpop.trf.xlu0
        %v6348 = vpop.trf.xlu0
        %6349 = vxpose.xlu0.c.b16.start [1/8] %v5815, 128
        %6350 = vxpose.xlu0.c.b16.cont [2/8] 0, 128
        %6351 = vxpose.xlu0.c.b16.cont [3/8] 0, 128
        %6352 = vxpose.xlu0.c.b16.cont [4/8] 0, 128
        %6353 = vxpose.xlu0.c.b16.cont [5/8] 0, 128
        %6354 = vxpose.xlu0.c.b16.cont [6/8] 0, 128
        %6355 = vxpose.xlu0.c.b16.cont [7/8] 0, 128
        %6356 = vxpose.xlu0.c.b16.end [8/8] 0, 128
        %v6357 = vpop.trf.xlu0
        %v6358 = vpop.trf.xlu0
        %v6359 = vpop.trf.xlu0
        %v6360 = vpop.trf.xlu0
        %v6361 = vpop.trf.xlu0
        %v6362 = vpop.trf.xlu0
        %v6363 = vpop.trf.xlu0
        %v6364 = vpop.trf.xlu0
        %6365 = vxpose.xlu0.c.b16.start [1/8] %v5816, 128
        %6366 = vxpose.xlu0.c.b16.cont [2/8] 0, 128
        %6367 = vxpose.xlu0.c.b16.cont [3/8] 0, 128
        %6368 = vxpose.xlu0.c.b16.cont [4/8] 0, 128
        %6369 = vxpose.xlu0.c.b16.cont [5/8] 0, 128
        %6370 = vxpose.xlu0.c.b16.cont [6/8] 0, 128
        %6371 = vxpose.xlu0.c.b16.cont [7/8] 0, 128
        %6372 = vxpose.xlu0.c.b16.end [8/8] 0, 128
        %v6373 = vpop.trf.xlu0
        %v6374 = vpop.trf.xlu0
        %v6375 = vpop.trf.xlu0
        %v6376 = vpop.trf.xlu0
        %v6377 = vpop.trf.xlu0
        %v6378 = vpop.trf.xlu0
        %v6379 = vpop.trf.xlu0
        %v6380 = vpop.trf.xlu0
        %6381 = vxpose.xlu0.c.b16.start [1/8] %v5817, 128
        %6382 = vxpose.xlu0.c.b16.cont [2/8] 0, 128
        %6383 = vxpose.xlu0.c.b16.cont [3/8] 0, 128
        %6384 = vxpose.xlu0.c.b16.cont [4/8] 0, 128
        %6385 = vxpose.xlu0.c.b16.cont [5/8] 0, 128
        %6386 = vxpose.xlu0.c.b16.cont [6/8] 0, 128
        %6387 = vxpose.xlu0.c.b16.cont [7/8] 0, 128
        %6388 = vxpose.xlu0.c.b16.end [8/8] 0, 128
        %v6389 = vpop.trf.xlu0
        %v6390 = vpop.trf.xlu0
        %v6391 = vpop.trf.xlu0
        %v6392 = vpop.trf.xlu0
        %v6393 = vpop.trf.xlu0
        %v6394 = vpop.trf.xlu0
        %v6395 = vpop.trf.xlu0
        %v6396 = vpop.trf.xlu0
        %v6397 = vcombine.low %v6149, %v6213
        %v6398 = vcombine.high %v6149, %v6213
        %v6400 = vunpack.c.l.s4 1983009808
        %v6401 = vunpack.c.0.s8 %v6400
        %v6402 = vlaneseq
        %v6403 = vshrl.u32 %v6402, 7
        %v6404 = vsub.s32 %v6401, %v6403
        %v6405 = vrot.slane %v6397, %v6404
        %v6407 = vunpack.c.l.s4 1983009808
        %v6408 = vunpack.c.0.s8 %v6407
        %v6409 = vlaneseq
        %v6410 = vshrl.u32 %v6409, 7
        %v6411 = vsub.s32 %v6408, %v6410
        %v6412 = vrot.slane %v6398, %v6411
        %v6413 = vcombine.low %v6181, %v6245
        %v6414 = vcombine.high %v6181, %v6245
        %v6416 = vunpack.c.l.s4 1983009808
        %v6417 = vunpack.c.0.s8 %v6416
        %v6418 = vlaneseq
        %v6419 = vshrl.u32 %v6418, 7
        %v6420 = vsub.s32 %v6417, %v6419
        %v6421 = vrot.slane %v6413, %v6420
        %v6423 = vunpack.c.l.s4 1983009808
        %v6424 = vunpack.c.0.s8 %v6423
        %v6425 = vlaneseq
        %v6426 = vshrl.u32 %v6425, 7
        %v6427 = vsub.s32 %v6424, %v6426
        %v6428 = vrot.slane %v6414, %v6427
        %v6429 = vcombine.low %v6277, %v6341
        %v6430 = vcombine.high %v6277, %v6341
        %v6432 = vunpack.c.l.s4 1983009808
        %v6433 = vunpack.c.0.s8 %v6432
        %v6434 = vlaneseq
        %v6435 = vshrl.u32 %v6434, 7
        %v6436 = vsub.s32 %v6433, %v6435
        %v6437 = vrot.slane %v6429, %v6436
        %v6439 = vunpack.c.l.s4 1983009808
        %v6440 = vunpack.c.0.s8 %v6439
        %v6441 = vlaneseq
        %v6442 = vshrl.u32 %v6441, 7
        %v6443 = vsub.s32 %v6440, %v6442
        %v6444 = vrot.slane %v6430, %v6443
        %v6445 = vcombine.low %v6309, %v6373
        %v6446 = vcombine.high %v6309, %v6373
        %v6448 = vunpack.c.l.s4 1983009808
        %v6449 = vunpack.c.0.s8 %v6448
        %v6450 = vlaneseq
        %v6451 = vshrl.u32 %v6450, 7
        %v6452 = vsub.s32 %v6449, %v6451
        %v6453 = vrot.slane %v6445, %v6452
        %v6455 = vunpack.c.l.s4 1983009808
        %v6456 = vunpack.c.0.s8 %v6455
        %v6457 = vlaneseq
        %v6458 = vshrl.u32 %v6457, 7
        %v6459 = vsub.s32 %v6456, %v6458
        %v6460 = vrot.slane %v6446, %v6459
        %v6461 = vcombine.low %v6405, %v6421
        %v6462 = vcombine.high %v6405, %v6421
        %v6464 = vunpack.c.l.s4 1934713408
        %v6465 = vunpack.c.0.s8 %v6464
        %v6466 = vlaneseq
        %v6467 = vshrl.u32 %v6466, 7
        %v6468 = vsub.s32 %v6465, %v6467
        %v6469 = vrot.slane %v6461, %v6468
        %v6471 = vunpack.c.l.s4 1934713408
        %v6472 = vunpack.c.0.s8 %v6471
        %v6473 = vlaneseq
        %v6474 = vshrl.u32 %v6473, 7
        %v6475 = vsub.s32 %v6472, %v6474
        %v6476 = vrot.slane %v6462, %v6475
        %v6477 = vcombine.low %v6412, %v6428
        %v6478 = vcombine.high %v6412, %v6428
        %v6480 = vunpack.c.l.s4 1934713408
        %v6481 = vunpack.c.0.s8 %v6480
        %v6482 = vlaneseq
        %v6483 = vshrl.u32 %v6482, 7
        %v6484 = vsub.s32 %v6481, %v6483
        %v6485 = vrot.slane %v6477, %v6484
        %v6487 = vunpack.c.l.s4 1934713408
        %v6488 = vunpack.c.0.s8 %v6487
        %v6489 = vlaneseq
        %v6490 = vshrl.u32 %v6489, 7
        %v6491 = vsub.s32 %v6488, %v6490
        %v6492 = vrot.slane %v6478, %v6491
        %v6493 = vcombine.low %v6437, %v6453
        %v6494 = vcombine.high %v6437, %v6453
        %v6496 = vunpack.c.l.s4 1934713408
        %v6497 = vunpack.c.0.s8 %v6496
        %v6498 = vlaneseq
        %v6499 = vshrl.u32 %v6498, 7
        %v6500 = vsub.s32 %v6497, %v6499
        %v6501 = vrot.slane %v6493, %v6500
        %v6503 = vunpack.c.l.s4 1934713408
        %v6504 = vunpack.c.0.s8 %v6503
        %v6505 = vlaneseq
        %v6506 = vshrl.u32 %v6505, 7
        %v6507 = vsub.s32 %v6504, %v6506
        %v6508 = vrot.slane %v6494, %v6507
        %v6509 = vcombine.low %v6444, %v6460
        %v6510 = vcombine.high %v6444, %v6460
        %v6512 = vunpack.c.l.s4 1934713408
        %v6513 = vunpack.c.0.s8 %v6512
        %v6514 = vlaneseq
        %v6515 = vshrl.u32 %v6514, 7
        %v6516 = vsub.s32 %v6513, %v6515
        %v6517 = vrot.slane %v6509, %v6516
        %v6519 = vunpack.c.l.s4 1934713408
        %v6520 = vunpack.c.0.s8 %v6519
        %v6521 = vlaneseq
        %v6522 = vshrl.u32 %v6521, 7
        %v6523 = vsub.s32 %v6520, %v6522
        %v6524 = vrot.slane %v6510, %v6523
        %v6525 = vcombine.low %v6469, %v6501
        %v6526 = vcombine.high %v6469, %v6501
        %v6527 = vcombine.low %v6476, %v6508
        %v6528 = vcombine.high %v6476, %v6508
        %v6529 = vcombine.low %v6485, %v6517
        %v6530 = vcombine.high %v6485, %v6517
        %v6531 = vcombine.low %v6492, %v6524
        %v6532 = vcombine.high %v6492, %v6524
        %v6533 = vcombine.low %v6165, %v6229
        %v6534 = vcombine.high %v6165, %v6229
        %v6536 = vunpack.c.l.s4 1983009808
        %v6537 = vunpack.c.0.s8 %v6536
        %v6538 = vlaneseq
        %v6539 = vshrl.u32 %v6538, 7
        %v6540 = vsub.s32 %v6537, %v6539
        %v6541 = vrot.slane %v6533, %v6540
        %v6543 = vunpack.c.l.s4 1983009808
        %v6544 = vunpack.c.0.s8 %v6543
        %v6545 = vlaneseq
        %v6546 = vshrl.u32 %v6545, 7
        %v6547 = vsub.s32 %v6544, %v6546
        %v6548 = vrot.slane %v6534, %v6547
        %v6549 = vcombine.low %v6197, %v6261
        %v6550 = vcombine.high %v6197, %v6261
        %v6552 = vunpack.c.l.s4 1983009808
        %v6553 = vunpack.c.0.s8 %v6552
        %v6554 = vlaneseq
        %v6555 = vshrl.u32 %v6554, 7
        %v6556 = vsub.s32 %v6553, %v6555
        %v6557 = vrot.slane %v6549, %v6556
        %v6559 = vunpack.c.l.s4 1983009808
        %v6560 = vunpack.c.0.s8 %v6559
        %v6561 = vlaneseq
        %v6562 = vshrl.u32 %v6561, 7
        %v6563 = vsub.s32 %v6560, %v6562
        %v6564 = vrot.slane %v6550, %v6563
        %v6565 = vcombine.low %v6293, %v6357
        %v6566 = vcombine.high %v6293, %v6357
        %v6568 = vunpack.c.l.s4 1983009808
        %v6569 = vunpack.c.0.s8 %v6568
        %v6570 = vlaneseq
        %v6571 = vshrl.u32 %v6570, 7
        %v6572 = vsub.s32 %v6569, %v6571
        %v6573 = vrot.slane %v6565, %v6572
        %v6575 = vunpack.c.l.s4 1983009808
        %v6576 = vunpack.c.0.s8 %v6575
        %v6577 = vlaneseq
        %v6578 = vshrl.u32 %v6577, 7
        %v6579 = vsub.s32 %v6576, %v6578
        %v6580 = vrot.slane %v6566, %v6579
        %v6581 = vcombine.low %v6325, %v6389
        %v6582 = vcombine.high %v6325, %v6389
        %v6584 = vunpack.c.l.s4 1983009808
        %v6585 = vunpack.c.0.s8 %v6584
        %v6586 = vlaneseq
        %v6587 = vshrl.u32 %v6586, 7
        %v6588 = vsub.s32 %v6585, %v6587
        %v6589 = vrot.slane %v6581, %v6588
        %v6591 = vunpack.c.l.s4 1983009808
        %v6592 = vunpack.c.0.s8 %v6591
        %v6593 = vlaneseq
        %v6594 = vshrl.u32 %v6593, 7
        %v6595 = vsub.s32 %v6592, %v6594
        %v6596 = vrot.slane %v6582, %v6595
        %v6597 = vcombine.low %v6541, %v6557
        %v6598 = vcombine.high %v6541, %v6557
        %v6600 = vunpack.c.l.s4 1934713408
        %v6601 = vunpack.c.0.s8 %v6600
        %v6602 = vlaneseq
        %v6603 = vshrl.u32 %v6602, 7
        %v6604 = vsub.s32 %v6601, %v6603
        %v6605 = vrot.slane %v6597, %v6604
        %v6607 = vunpack.c.l.s4 1934713408
        %v6608 = vunpack.c.0.s8 %v6607
        %v6609 = vlaneseq
        %v6610 = vshrl.u32 %v6609, 7
        %v6611 = vsub.s32 %v6608, %v6610
        %v6612 = vrot.slane %v6598, %v6611
        %v6613 = vcombine.low %v6548, %v6564
        %v6614 = vcombine.high %v6548, %v6564
        %v6616 = vunpack.c.l.s4 1934713408
        %v6617 = vunpack.c.0.s8 %v6616
        %v6618 = vlaneseq
        %v6619 = vshrl.u32 %v6618, 7
        %v6620 = vsub.s32 %v6617, %v6619
        %v6621 = vrot.slane %v6613, %v6620
        %v6623 = vunpack.c.l.s4 1934713408
        %v6624 = vunpack.c.0.s8 %v6623
        %v6625 = vlaneseq
        %v6626 = vshrl.u32 %v6625, 7
        %v6627 = vsub.s32 %v6624, %v6626
        %v6628 = vrot.slane %v6614, %v6627
        %v6629 = vcombine.low %v6573, %v6589
        %v6630 = vcombine.high %v6573, %v6589
        %v6632 = vunpack.c.l.s4 1934713408
        %v6633 = vunpack.c.0.s8 %v6632
        %v6634 = vlaneseq
        %v6635 = vshrl.u32 %v6634, 7
        %v6636 = vsub.s32 %v6633, %v6635
        %v6637 = vrot.slane %v6629, %v6636
        %v6639 = vunpack.c.l.s4 1934713408
        %v6640 = vunpack.c.0.s8 %v6639
        %v6641 = vlaneseq
        %v6642 = vshrl.u32 %v6641, 7
        %v6643 = vsub.s32 %v6640, %v6642
        %v6644 = vrot.slane %v6630, %v6643
        %v6645 = vcombine.low %v6580, %v6596
        %v6646 = vcombine.high %v6580, %v6596
        %v6648 = vunpack.c.l.s4 1934713408
        %v6649 = vunpack.c.0.s8 %v6648
        %v6650 = vlaneseq
        %v6651 = vshrl.u32 %v6650, 7
        %v6652 = vsub.s32 %v6649, %v6651
        %v6653 = vrot.slane %v6645, %v6652
        %v6655 = vunpack.c.l.s4 1934713408
        %v6656 = vunpack.c.0.s8 %v6655
        %v6657 = vlaneseq
        %v6658 = vshrl.u32 %v6657, 7
        %v6659 = vsub.s32 %v6656, %v6658
        %v6660 = vrot.slane %v6646, %v6659
        %v6661 = vcombine.low %v6605, %v6637
        %v6662 = vcombine.high %v6605, %v6637
        %v6663 = vcombine.low %v6612, %v6644
        %v6664 = vcombine.high %v6612, %v6644
        %v6665 = vcombine.low %v6621, %v6653
        %v6666 = vcombine.high %v6621, %v6653
        %v6667 = vcombine.low %v6628, %v6660
        %v6668 = vcombine.high %v6628, %v6660
        %v6669 = vcombine.low %v6150, %v6214
        %v6670 = vcombine.high %v6150, %v6214
        %v6672 = vunpack.c.l.s4 1983009808
        %v6673 = vunpack.c.0.s8 %v6672
        %v6674 = vlaneseq
        %v6675 = vshrl.u32 %v6674, 7
        %v6676 = vsub.s32 %v6673, %v6675
        %v6677 = vrot.slane %v6669, %v6676
        %v6679 = vunpack.c.l.s4 1983009808
        %v6680 = vunpack.c.0.s8 %v6679
        %v6681 = vlaneseq
        %v6682 = vshrl.u32 %v6681, 7
        %v6683 = vsub.s32 %v6680, %v6682
        %v6684 = vrot.slane %v6670, %v6683
        %v6685 = vcombine.low %v6182, %v6246
        %v6686 = vcombine.high %v6182, %v6246
        %v6688 = vunpack.c.l.s4 1983009808
        %v6689 = vunpack.c.0.s8 %v6688
        %v6690 = vlaneseq
        %v6691 = vshrl.u32 %v6690, 7
        %v6692 = vsub.s32 %v6689, %v6691
        %v6693 = vrot.slane %v6685, %v6692
        %v6695 = vunpack.c.l.s4 1983009808
        %v6696 = vunpack.c.0.s8 %v6695
        %v6697 = vlaneseq
        %v6698 = vshrl.u32 %v6697, 7
        %v6699 = vsub.s32 %v6696, %v6698
        %v6700 = vrot.slane %v6686, %v6699
        %v6701 = vcombine.low %v6278, %v6342
        %v6702 = vcombine.high %v6278, %v6342
        %v6704 = vunpack.c.l.s4 1983009808
        %v6705 = vunpack.c.0.s8 %v6704
        %v6706 = vlaneseq
        %v6707 = vshrl.u32 %v6706, 7
        %v6708 = vsub.s32 %v6705, %v6707
        %v6709 = vrot.slane %v6701, %v6708
        %v6711 = vunpack.c.l.s4 1983009808
        %v6712 = vunpack.c.0.s8 %v6711
        %v6713 = vlaneseq
        %v6714 = vshrl.u32 %v6713, 7
        %v6715 = vsub.s32 %v6712, %v6714
        %v6716 = vrot.slane %v6702, %v6715
        %v6717 = vcombine.low %v6310, %v6374
        %v6718 = vcombine.high %v6310, %v6374
        %v6720 = vunpack.c.l.s4 1983009808
        %v6721 = vunpack.c.0.s8 %v6720
        %v6722 = vlaneseq
        %v6723 = vshrl.u32 %v6722, 7
        %v6724 = vsub.s32 %v6721, %v6723
        %v6725 = vrot.slane %v6717, %v6724
        %v6727 = vunpack.c.l.s4 1983009808
        %v6728 = vunpack.c.0.s8 %v6727
        %v6729 = vlaneseq
        %v6730 = vshrl.u32 %v6729, 7
        %v6731 = vsub.s32 %v6728, %v6730
        %v6732 = vrot.slane %v6718, %v6731
        %v6733 = vcombine.low %v6677, %v6693
        %v6734 = vcombine.high %v6677, %v6693
        %v6736 = vunpack.c.l.s4 1934713408
        %v6737 = vunpack.c.0.s8 %v6736
        %v6738 = vlaneseq
        %v6739 = vshrl.u32 %v6738, 7
        %v6740 = vsub.s32 %v6737, %v6739
        %v6741 = vrot.slane %v6733, %v6740
        %v6743 = vunpack.c.l.s4 1934713408
        %v6744 = vunpack.c.0.s8 %v6743
        %v6745 = vlaneseq
        %v6746 = vshrl.u32 %v6745, 7
        %v6747 = vsub.s32 %v6744, %v6746
        %v6748 = vrot.slane %v6734, %v6747
        %v6749 = vcombine.low %v6684, %v6700
        %v6750 = vcombine.high %v6684, %v6700
        %v6752 = vunpack.c.l.s4 1934713408
        %v6753 = vunpack.c.0.s8 %v6752
        %v6754 = vlaneseq
        %v6755 = vshrl.u32 %v6754, 7
        %v6756 = vsub.s32 %v6753, %v6755
        %v6757 = vrot.slane %v6749, %v6756
        %v6759 = vunpack.c.l.s4 1934713408
        %v6760 = vunpack.c.0.s8 %v6759
        %v6761 = vlaneseq
        %v6762 = vshrl.u32 %v6761, 7
        %v6763 = vsub.s32 %v6760, %v6762
        %v6764 = vrot.slane %v6750, %v6763
        %v6765 = vcombine.low %v6709, %v6725
        %v6766 = vcombine.high %v6709, %v6725
        %v6768 = vunpack.c.l.s4 1934713408
        %v6769 = vunpack.c.0.s8 %v6768
        %v6770 = vlaneseq
        %v6771 = vshrl.u32 %v6770, 7
        %v6772 = vsub.s32 %v6769, %v6771
        %v6773 = vrot.slane %v6765, %v6772
        %v6775 = vunpack.c.l.s4 1934713408
        %v6776 = vunpack.c.0.s8 %v6775
        %v6777 = vlaneseq
        %v6778 = vshrl.u32 %v6777, 7
        %v6779 = vsub.s32 %v6776, %v6778
        %v6780 = vrot.slane %v6766, %v6779
        %v6781 = vcombine.low %v6716, %v6732
        %v6782 = vcombine.high %v6716, %v6732
        %v6784 = vunpack.c.l.s4 1934713408
        %v6785 = vunpack.c.0.s8 %v6784
        %v6786 = vlaneseq
        %v6787 = vshrl.u32 %v6786, 7
        %v6788 = vsub.s32 %v6785, %v6787
        %v6789 = vrot.slane %v6781, %v6788
        %v6791 = vunpack.c.l.s4 1934713408
        %v6792 = vunpack.c.0.s8 %v6791
        %v6793 = vlaneseq
        %v6794 = vshrl.u32 %v6793, 7
        %v6795 = vsub.s32 %v6792, %v6794
        %v6796 = vrot.slane %v6782, %v6795
        %v6797 = vcombine.low %v6741, %v6773
        %v6798 = vcombine.high %v6741, %v6773
        %v6799 = vcombine.low %v6748, %v6780
        %v6800 = vcombine.high %v6748, %v6780
        %v6801 = vcombine.low %v6757, %v6789
        %v6802 = vcombine.high %v6757, %v6789
        %v6803 = vcombine.low %v6764, %v6796
        %v6804 = vcombine.high %v6764, %v6796
        %v6805 = vcombine.low %v6166, %v6230
        %v6806 = vcombine.high %v6166, %v6230
        %v6808 = vunpack.c.l.s4 1983009808
        %v6809 = vunpack.c.0.s8 %v6808
        %v6810 = vlaneseq
        %v6811 = vshrl.u32 %v6810, 7
        %v6812 = vsub.s32 %v6809, %v6811
        %v6813 = vrot.slane %v6805, %v6812
        %v6815 = vunpack.c.l.s4 1983009808
        %v6816 = vunpack.c.0.s8 %v6815
        %v6817 = vlaneseq
        %v6818 = vshrl.u32 %v6817, 7
        %v6819 = vsub.s32 %v6816, %v6818
        %v6820 = vrot.slane %v6806, %v6819
        %v6821 = vcombine.low %v6198, %v6262
        %v6822 = vcombine.high %v6198, %v6262
        %v6824 = vunpack.c.l.s4 1983009808
        %v6825 = vunpack.c.0.s8 %v6824
        %v6826 = vlaneseq
        %v6827 = vshrl.u32 %v6826, 7
        %v6828 = vsub.s32 %v6825, %v6827
        %v6829 = vrot.slane %v6821, %v6828
        %v6831 = vunpack.c.l.s4 1983009808
        %v6832 = vunpack.c.0.s8 %v6831
        %v6833 = vlaneseq
        %v6834 = vshrl.u32 %v6833, 7
        %v6835 = vsub.s32 %v6832, %v6834
        %v6836 = vrot.slane %v6822, %v6835
        %v6837 = vcombine.low %v6294, %v6358
        %v6838 = vcombine.high %v6294, %v6358
        %v6840 = vunpack.c.l.s4 1983009808
        %v6841 = vunpack.c.0.s8 %v6840
        %v6842 = vlaneseq
        %v6843 = vshrl.u32 %v6842, 7
        %v6844 = vsub.s32 %v6841, %v6843
        %v6845 = vrot.slane %v6837, %v6844
        %v6847 = vunpack.c.l.s4 1983009808
        %v6848 = vunpack.c.0.s8 %v6847
        %v6849 = vlaneseq
        %v6850 = vshrl.u32 %v6849, 7
        %v6851 = vsub.s32 %v6848, %v6850
        %v6852 = vrot.slane %v6838, %v6851
        %v6853 = vcombine.low %v6326, %v6390
        %v6854 = vcombine.high %v6326, %v6390
        %v6856 = vunpack.c.l.s4 1983009808
        %v6857 = vunpack.c.0.s8 %v6856
        %v6858 = vlaneseq
        %v6859 = vshrl.u32 %v6858, 7
        %v6860 = vsub.s32 %v6857, %v6859
        %v6861 = vrot.slane %v6853, %v6860
        %v6863 = vunpack.c.l.s4 1983009808
        %v6864 = vunpack.c.0.s8 %v6863
        %v6865 = vlaneseq
        %v6866 = vshrl.u32 %v6865, 7
        %v6867 = vsub.s32 %v6864, %v6866
        %v6868 = vrot.slane %v6854, %v6867
        %v6869 = vcombine.low %v6813, %v6829
        %v6870 = vcombine.high %v6813, %v6829
        %v6872 = vunpack.c.l.s4 1934713408
        %v6873 = vunpack.c.0.s8 %v6872
        %v6874 = vlaneseq
        %v6875 = vshrl.u32 %v6874, 7
        %v6876 = vsub.s32 %v6873, %v6875
        %v6877 = vrot.slane %v6869, %v6876
        %v6879 = vunpack.c.l.s4 1934713408
        %v6880 = vunpack.c.0.s8 %v6879
        %v6881 = vlaneseq
        %v6882 = vshrl.u32 %v6881, 7
        %v6883 = vsub.s32 %v6880, %v6882
        %v6884 = vrot.slane %v6870, %v6883
        %v6885 = vcombine.low %v6820, %v6836
        %v6886 = vcombine.high %v6820, %v6836
        %v6888 = vunpack.c.l.s4 1934713408
        %v6889 = vunpack.c.0.s8 %v6888
        %v6890 = vlaneseq
        %v6891 = vshrl.u32 %v6890, 7
        %v6892 = vsub.s32 %v6889, %v6891
        %v6893 = vrot.slane %v6885, %v6892
        %v6895 = vunpack.c.l.s4 1934713408
        %v6896 = vunpack.c.0.s8 %v6895
        %v6897 = vlaneseq
        %v6898 = vshrl.u32 %v6897, 7
        %v6899 = vsub.s32 %v6896, %v6898
        %v6900 = vrot.slane %v6886, %v6899
        %v6901 = vcombine.low %v6845, %v6861
        %v6902 = vcombine.high %v6845, %v6861
        %v6904 = vunpack.c.l.s4 1934713408
        %v6905 = vunpack.c.0.s8 %v6904
        %v6906 = vlaneseq
        %v6907 = vshrl.u32 %v6906, 7
        %v6908 = vsub.s32 %v6905, %v6907
        %v6909 = vrot.slane %v6901, %v6908
        %v6911 = vunpack.c.l.s4 1934713408
        %v6912 = vunpack.c.0.s8 %v6911
        %v6913 = vlaneseq
        %v6914 = vshrl.u32 %v6913, 7
        %v6915 = vsub.s32 %v6912, %v6914
        %v6916 = vrot.slane %v6902, %v6915
        %v6917 = vcombine.low %v6852, %v6868
        %v6918 = vcombine.high %v6852, %v6868
        %v6920 = vunpack.c.l.s4 1934713408
        %v6921 = vunpack.c.0.s8 %v6920
        %v6922 = vlaneseq
        %v6923 = vshrl.u32 %v6922, 7
        %v6924 = vsub.s32 %v6921, %v6923
        %v6925 = vrot.slane %v6917, %v6924
        %v6927 = vunpack.c.l.s4 1934713408
        %v6928 = vunpack.c.0.s8 %v6927
        %v6929 = vlaneseq
        %v6930 = vshrl.u32 %v6929, 7
        %v6931 = vsub.s32 %v6928, %v6930
        %v6932 = vrot.slane %v6918, %v6931
        %v6933 = vcombine.low %v6877, %v6909
        %v6934 = vcombine.high %v6877, %v6909
        %v6935 = vcombine.low %v6884, %v6916
        %v6936 = vcombine.high %v6884, %v6916
        %v6937 = vcombine.low %v6893, %v6925
        %v6938 = vcombine.high %v6893, %v6925
        %v6939 = vcombine.low %v6900, %v6932
        %v6940 = vcombine.high %v6900, %v6932
        %v6943 = vpack.i.b16 %v6661, %v6525
        %v6945 = vshrl.u32 %v6525, 16
        %v6946 = vshrl.u32 %v6661, 16
        %v6947 = vpack.i.b16 %v6946, %v6945
        %v6951 = vpack.i.b16 %v6662, %v6526
        %v6953 = vshrl.u32 %v6526, 16
        %v6954 = vshrl.u32 %v6662, 16
        %v6955 = vpack.i.b16 %v6954, %v6953
        %v6959 = vpack.i.b16 %v6663, %v6527
        %v6961 = vshrl.u32 %v6527, 16
        %v6962 = vshrl.u32 %v6663, 16
        %v6963 = vpack.i.b16 %v6962, %v6961
        %v6967 = vpack.i.b16 %v6664, %v6528
        %v6969 = vshrl.u32 %v6528, 16
        %v6970 = vshrl.u32 %v6664, 16
        %v6971 = vpack.i.b16 %v6970, %v6969
        %v6975 = vpack.i.b16 %v6665, %v6529
        %v6977 = vshrl.u32 %v6529, 16
        %v6978 = vshrl.u32 %v6665, 16
        %v6979 = vpack.i.b16 %v6978, %v6977
        %v6983 = vpack.i.b16 %v6666, %v6530
        %v6985 = vshrl.u32 %v6530, 16
        %v6986 = vshrl.u32 %v6666, 16
        %v6987 = vpack.i.b16 %v6986, %v6985
        %v6991 = vpack.i.b16 %v6667, %v6531
        %v6993 = vshrl.u32 %v6531, 16
        %v6994 = vshrl.u32 %v6667, 16
        %v6995 = vpack.i.b16 %v6994, %v6993
        %v6999 = vpack.i.b16 %v6668, %v6532
        %v7001 = vshrl.u32 %v6532, 16
        %v7002 = vshrl.u32 %v6668, 16
        %v7003 = vpack.i.b16 %v7002, %v7001
        %v7007 = vpack.i.b16 %v6933, %v6797
        %v7009 = vshrl.u32 %v6797, 16
        %v7010 = vshrl.u32 %v6933, 16
        %v7011 = vpack.i.b16 %v7010, %v7009
        %v7015 = vpack.i.b16 %v6934, %v6798
        %v7017 = vshrl.u32 %v6798, 16
        %v7018 = vshrl.u32 %v6934, 16
        %v7019 = vpack.i.b16 %v7018, %v7017
        %v7023 = vpack.i.b16 %v6935, %v6799
        %v7025 = vshrl.u32 %v6799, 16
        %v7026 = vshrl.u32 %v6935, 16
        %v7027 = vpack.i.b16 %v7026, %v7025
        %v7031 = vpack.i.b16 %v6936, %v6800
        %v7033 = vshrl.u32 %v6800, 16
        %v7034 = vshrl.u32 %v6936, 16
        %v7035 = vpack.i.b16 %v7034, %v7033
        %v7039 = vpack.i.b16 %v6937, %v6801
        %v7041 = vshrl.u32 %v6801, 16
        %v7042 = vshrl.u32 %v6937, 16
        %v7043 = vpack.i.b16 %v7042, %v7041
        %v7047 = vpack.i.b16 %v6938, %v6802
        %v7049 = vshrl.u32 %v6802, 16
        %v7050 = vshrl.u32 %v6938, 16
        %v7051 = vpack.i.b16 %v7050, %v7049
        %v7055 = vpack.i.b16 %v6939, %v6803
        %v7057 = vshrl.u32 %v6803, 16
        %v7058 = vshrl.u32 %v6939, 16
        %v7059 = vpack.i.b16 %v7058, %v7057
        %v7063 = vpack.i.b16 %v6940, %v6804
        %v7065 = vshrl.u32 %v6804, 16
        %v7066 = vshrl.u32 %v6940, 16
        %v7067 = vpack.i.b16 %v7066, %v7065
        %7069 = vxpose.xlu0.c.b16.start [1/8] %v6943, 128
        %7070 = vxpose.xlu0.c.b16.cont [2/8] 0, 128
        %7071 = vxpose.xlu0.c.b16.cont [3/8] 0, 128
        %7072 = vxpose.xlu0.c.b16.cont [4/8] 0, 128
        %7073 = vxpose.xlu0.c.b16.cont [5/8] 0, 128
        %7074 = vxpose.xlu0.c.b16.cont [6/8] 0, 128
        %7075 = vxpose.xlu0.c.b16.cont [7/8] 0, 128
        %7076 = vxpose.xlu0.c.b16.end [8/8] 0, 128
        %v7077 = vpop.trf.xlu0
        %v7078 = vpop.trf.xlu0
        %v7079 = vpop.trf.xlu0
        %v7080 = vpop.trf.xlu0
        %v7081 = vpop.trf.xlu0
        %v7082 = vpop.trf.xlu0
        %v7083 = vpop.trf.xlu0
        %v7084 = vpop.trf.xlu0
        %7085 = vxpose.xlu0.c.b16.start [1/8] %v6947, 128
        %7086 = vxpose.xlu0.c.b16.cont [2/8] 0, 128
        %7087 = vxpose.xlu0.c.b16.cont [3/8] 0, 128
        %7088 = vxpose.xlu0.c.b16.cont [4/8] 0, 128
        %7089 = vxpose.xlu0.c.b16.cont [5/8] 0, 128
        %7090 = vxpose.xlu0.c.b16.cont [6/8] 0, 128
        %7091 = vxpose.xlu0.c.b16.cont [7/8] 0, 128
        %7092 = vxpose.xlu0.c.b16.end [8/8] 0, 128
        %v7093 = vpop.trf.xlu0
        %v7094 = vpop.trf.xlu0
        %v7095 = vpop.trf.xlu0
        %v7096 = vpop.trf.xlu0
        %v7097 = vpop.trf.xlu0
        %v7098 = vpop.trf.xlu0
        %v7099 = vpop.trf.xlu0
        %v7100 = vpop.trf.xlu0
        %7101 = vxpose.xlu0.c.b16.start [1/8] %v6951, 128
        %7102 = vxpose.xlu0.c.b16.cont [2/8] 0, 128
        %7103 = vxpose.xlu0.c.b16.cont [3/8] 0, 128
        %7104 = vxpose.xlu0.c.b16.cont [4/8] 0, 128
        %7105 = vxpose.xlu0.c.b16.cont [5/8] 0, 128
        %7106 = vxpose.xlu0.c.b16.cont [6/8] 0, 128
        %7107 = vxpose.xlu0.c.b16.cont [7/8] 0, 128
        %7108 = vxpose.xlu0.c.b16.end [8/8] 0, 128
        %v7109 = vpop.trf.xlu0
        %v7110 = vpop.trf.xlu0
        %v7111 = vpop.trf.xlu0
        %v7112 = vpop.trf.xlu0
        %v7113 = vpop.trf.xlu0
        %v7114 = vpop.trf.xlu0
        %v7115 = vpop.trf.xlu0
        %v7116 = vpop.trf.xlu0
        %7117 = vxpose.xlu0.c.b16.start [1/8] %v6955, 128
        %7118 = vxpose.xlu0.c.b16.cont [2/8] 0, 128
        %7119 = vxpose.xlu0.c.b16.cont [3/8] 0, 128
        %7120 = vxpose.xlu0.c.b16.cont [4/8] 0, 128
        %7121 = vxpose.xlu0.c.b16.cont [5/8] 0, 128
        %7122 = vxpose.xlu0.c.b16.cont [6/8] 0, 128
        %7123 = vxpose.xlu0.c.b16.cont [7/8] 0, 128
        %7124 = vxpose.xlu0.c.b16.end [8/8] 0, 128
        %v7125 = vpop.trf.xlu0
        %v7126 = vpop.trf.xlu0
        %v7127 = vpop.trf.xlu0
        %v7128 = vpop.trf.xlu0
        %v7129 = vpop.trf.xlu0
        %v7130 = vpop.trf.xlu0
        %v7131 = vpop.trf.xlu0
        %v7132 = vpop.trf.xlu0
        %7133 = vxpose.xlu0.c.b16.start [1/8] %v6959, 128
        %7134 = vxpose.xlu0.c.b16.cont [2/8] 0, 128
        %7135 = vxpose.xlu0.c.b16.cont [3/8] 0, 128
        %7136 = vxpose.xlu0.c.b16.cont [4/8] 0, 128
        %7137 = vxpose.xlu0.c.b16.cont [5/8] 0, 128
        %7138 = vxpose.xlu0.c.b16.cont [6/8] 0, 128
        %7139 = vxpose.xlu0.c.b16.cont [7/8] 0, 128
        %7140 = vxpose.xlu0.c.b16.end [8/8] 0, 128
        %v7141 = vpop.trf.xlu0
        %v7142 = vpop.trf.xlu0
        %v7143 = vpop.trf.xlu0
        %v7144 = vpop.trf.xlu0
        %v7145 = vpop.trf.xlu0
        %v7146 = vpop.trf.xlu0
        %v7147 = vpop.trf.xlu0
        %v7148 = vpop.trf.xlu0
        %7149 = vxpose.xlu0.c.b16.start [1/8] %v6963, 128
        %7150 = vxpose.xlu0.c.b16.cont [2/8] 0, 128
        %7151 = vxpose.xlu0.c.b16.cont [3/8] 0, 128
        %7152 = vxpose.xlu0.c.b16.cont [4/8] 0, 128
        %7153 = vxpose.xlu0.c.b16.cont [5/8] 0, 128
        %7154 = vxpose.xlu0.c.b16.cont [6/8] 0, 128
        %7155 = vxpose.xlu0.c.b16.cont [7/8] 0, 128
        %7156 = vxpose.xlu0.c.b16.end [8/8] 0, 128
        %v7157 = vpop.trf.xlu0
        %v7158 = vpop.trf.xlu0
        %v7159 = vpop.trf.xlu0
        %v7160 = vpop.trf.xlu0
        %v7161 = vpop.trf.xlu0
        %v7162 = vpop.trf.xlu0
        %v7163 = vpop.trf.xlu0
        %v7164 = vpop.trf.xlu0
        %7165 = vxpose.xlu0.c.b16.start [1/8] %v6967, 128
        %7166 = vxpose.xlu0.c.b16.cont [2/8] 0, 128
        %7167 = vxpose.xlu0.c.b16.cont [3/8] 0, 128
        %7168 = vxpose.xlu0.c.b16.cont [4/8] 0, 128
        %7169 = vxpose.xlu0.c.b16.cont [5/8] 0, 128
        %7170 = vxpose.xlu0.c.b16.cont [6/8] 0, 128
        %7171 = vxpose.xlu0.c.b16.cont [7/8] 0, 128
        %7172 = vxpose.xlu0.c.b16.end [8/8] 0, 128
        %v7173 = vpop.trf.xlu0
        %v7174 = vpop.trf.xlu0
        %v7175 = vpop.trf.xlu0
        %v7176 = vpop.trf.xlu0
        %v7177 = vpop.trf.xlu0
        %v7178 = vpop.trf.xlu0
        %v7179 = vpop.trf.xlu0
        %v7180 = vpop.trf.xlu0
        %7181 = vxpose.xlu0.c.b16.start [1/8] %v6971, 128
        %7182 = vxpose.xlu0.c.b16.cont [2/8] 0, 128
        %7183 = vxpose.xlu0.c.b16.cont [3/8] 0, 128
        %7184 = vxpose.xlu0.c.b16.cont [4/8] 0, 128
        %7185 = vxpose.xlu0.c.b16.cont [5/8] 0, 128
        %7186 = vxpose.xlu0.c.b16.cont [6/8] 0, 128
        %7187 = vxpose.xlu0.c.b16.cont [7/8] 0, 128
        %7188 = vxpose.xlu0.c.b16.end [8/8] 0, 128
        %v7189 = vpop.trf.xlu0
        %v7190 = vpop.trf.xlu0
        %v7191 = vpop.trf.xlu0
        %v7192 = vpop.trf.xlu0
        %v7193 = vpop.trf.xlu0
        %v7194 = vpop.trf.xlu0
        %v7195 = vpop.trf.xlu0
        %v7196 = vpop.trf.xlu0
        %7197 = vxpose.xlu0.c.b16.start [1/8] %v6975, 128
        %7198 = vxpose.xlu0.c.b16.cont [2/8] 0, 128
        %7199 = vxpose.xlu0.c.b16.cont [3/8] 0, 128
        %7200 = vxpose.xlu0.c.b16.cont [4/8] 0, 128
        %7201 = vxpose.xlu0.c.b16.cont [5/8] 0, 128
        %7202 = vxpose.xlu0.c.b16.cont [6/8] 0, 128
        %7203 = vxpose.xlu0.c.b16.cont [7/8] 0, 128
        %7204 = vxpose.xlu0.c.b16.end [8/8] 0, 128
        %v7205 = vpop.trf.xlu0
        %v7206 = vpop.trf.xlu0
        %v7207 = vpop.trf.xlu0
        %v7208 = vpop.trf.xlu0
        %v7209 = vpop.trf.xlu0
        %v7210 = vpop.trf.xlu0
        %v7211 = vpop.trf.xlu0
        %v7212 = vpop.trf.xlu0
        %7213 = vxpose.xlu0.c.b16.start [1/8] %v6979, 128
        %7214 = vxpose.xlu0.c.b16.cont [2/8] 0, 128
        %7215 = vxpose.xlu0.c.b16.cont [3/8] 0, 128
        %7216 = vxpose.xlu0.c.b16.cont [4/8] 0, 128
        %7217 = vxpose.xlu0.c.b16.cont [5/8] 0, 128
        %7218 = vxpose.xlu0.c.b16.cont [6/8] 0, 128
        %7219 = vxpose.xlu0.c.b16.cont [7/8] 0, 128
        %7220 = vxpose.xlu0.c.b16.end [8/8] 0, 128
        %v7221 = vpop.trf.xlu0
        %v7222 = vpop.trf.xlu0
        %v7223 = vpop.trf.xlu0
        %v7224 = vpop.trf.xlu0
        %v7225 = vpop.trf.xlu0
        %v7226 = vpop.trf.xlu0
        %v7227 = vpop.trf.xlu0
        %v7228 = vpop.trf.xlu0
        %7229 = vxpose.xlu0.c.b16.start [1/8] %v6983, 128
        %7230 = vxpose.xlu0.c.b16.cont [2/8] 0, 128
        %7231 = vxpose.xlu0.c.b16.cont [3/8] 0, 128
        %7232 = vxpose.xlu0.c.b16.cont [4/8] 0, 128
        %7233 = vxpose.xlu0.c.b16.cont [5/8] 0, 128
        %7234 = vxpose.xlu0.c.b16.cont [6/8] 0, 128
        %7235 = vxpose.xlu0.c.b16.cont [7/8] 0, 128
        %7236 = vxpose.xlu0.c.b16.end [8/8] 0, 128
        %v7237 = vpop.trf.xlu0
        %v7238 = vpop.trf.xlu0
        %v7239 = vpop.trf.xlu0
        %v7240 = vpop.trf.xlu0
        %v7241 = vpop.trf.xlu0
        %v7242 = vpop.trf.xlu0
        %v7243 = vpop.trf.xlu0
        %v7244 = vpop.trf.xlu0
        %7245 = vxpose.xlu0.c.b16.start [1/8] %v6987, 128
        %7246 = vxpose.xlu0.c.b16.cont [2/8] 0, 128
        %7247 = vxpose.xlu0.c.b16.cont [3/8] 0, 128
        %7248 = vxpose.xlu0.c.b16.cont [4/8] 0, 128
        %7249 = vxpose.xlu0.c.b16.cont [5/8] 0, 128
        %7250 = vxpose.xlu0.c.b16.cont [6/8] 0, 128
        %7251 = vxpose.xlu0.c.b16.cont [7/8] 0, 128
        %7252 = vxpose.xlu0.c.b16.end [8/8] 0, 128
        %v7253 = vpop.trf.xlu0
        %v7254 = vpop.trf.xlu0
        %v7255 = vpop.trf.xlu0
        %v7256 = vpop.trf.xlu0
        %v7257 = vpop.trf.xlu0
        %v7258 = vpop.trf.xlu0
        %v7259 = vpop.trf.xlu0
        %v7260 = vpop.trf.xlu0
        %7261 = vxpose.xlu0.c.b16.start [1/8] %v6991, 128
        %7262 = vxpose.xlu0.c.b16.cont [2/8] 0, 128
        %7263 = vxpose.xlu0.c.b16.cont [3/8] 0, 128
        %7264 = vxpose.xlu0.c.b16.cont [4/8] 0, 128
        %7265 = vxpose.xlu0.c.b16.cont [5/8] 0, 128
        %7266 = vxpose.xlu0.c.b16.cont [6/8] 0, 128
        %7267 = vxpose.xlu0.c.b16.cont [7/8] 0, 128
        %7268 = vxpose.xlu0.c.b16.end [8/8] 0, 128
        %v7269 = vpop.trf.xlu0
        %v7270 = vpop.trf.xlu0
        %v7271 = vpop.trf.xlu0
        %v7272 = vpop.trf.xlu0
        %v7273 = vpop.trf.xlu0
        %v7274 = vpop.trf.xlu0
        %v7275 = vpop.trf.xlu0
        %v7276 = vpop.trf.xlu0
        %7277 = vxpose.xlu0.c.b16.start [1/8] %v6995, 128
        %7278 = vxpose.xlu0.c.b16.cont [2/8] 0, 128
        %7279 = vxpose.xlu0.c.b16.cont [3/8] 0, 128
        %7280 = vxpose.xlu0.c.b16.cont [4/8] 0, 128
        %7281 = vxpose.xlu0.c.b16.cont [5/8] 0, 128
        %7282 = vxpose.xlu0.c.b16.cont [6/8] 0, 128
        %7283 = vxpose.xlu0.c.b16.cont [7/8] 0, 128
        %7284 = vxpose.xlu0.c.b16.end [8/8] 0, 128
        %v7285 = vpop.trf.xlu0
        %v7286 = vpop.trf.xlu0
        %v7287 = vpop.trf.xlu0
        %v7288 = vpop.trf.xlu0
        %v7289 = vpop.trf.xlu0
        %v7290 = vpop.trf.xlu0
        %v7291 = vpop.trf.xlu0
        %v7292 = vpop.trf.xlu0
        %7293 = vxpose.xlu0.c.b16.start [1/8] %v6999, 128
        %7294 = vxpose.xlu0.c.b16.cont [2/8] 0, 128
        %7295 = vxpose.xlu0.c.b16.cont [3/8] 0, 128
        %7296 = vxpose.xlu0.c.b16.cont [4/8] 0, 128
        %7297 = vxpose.xlu0.c.b16.cont [5/8] 0, 128
        %7298 = vxpose.xlu0.c.b16.cont [6/8] 0, 128
        %7299 = vxpose.xlu0.c.b16.cont [7/8] 0, 128
        %7300 = vxpose.xlu0.c.b16.end [8/8] 0, 128
        %v7301 = vpop.trf.xlu0
        %v7302 = vpop.trf.xlu0
        %v7303 = vpop.trf.xlu0
        %v7304 = vpop.trf.xlu0
        %v7305 = vpop.trf.xlu0
        %v7306 = vpop.trf.xlu0
        %v7307 = vpop.trf.xlu0
        %v7308 = vpop.trf.xlu0
        %7309 = vxpose.xlu0.c.b16.start [1/8] %v7003, 128
        %7310 = vxpose.xlu0.c.b16.cont [2/8] 0, 128
        %7311 = vxpose.xlu0.c.b16.cont [3/8] 0, 128
        %7312 = vxpose.xlu0.c.b16.cont [4/8] 0, 128
        %7313 = vxpose.xlu0.c.b16.cont [5/8] 0, 128
        %7314 = vxpose.xlu0.c.b16.cont [6/8] 0, 128
        %7315 = vxpose.xlu0.c.b16.cont [7/8] 0, 128
        %7316 = vxpose.xlu0.c.b16.end [8/8] 0, 128
        %v7317 = vpop.trf.xlu0
        %v7318 = vpop.trf.xlu0
        %v7319 = vpop.trf.xlu0
        %v7320 = vpop.trf.xlu0
        %v7321 = vpop.trf.xlu0
        %v7322 = vpop.trf.xlu0
        %v7323 = vpop.trf.xlu0
        %v7324 = vpop.trf.xlu0
        %7325 = vxpose.xlu0.c.b16.start [1/8] %v7007, 128
        %7326 = vxpose.xlu0.c.b16.cont [2/8] 0, 128
        %7327 = vxpose.xlu0.c.b16.cont [3/8] 0, 128
        %7328 = vxpose.xlu0.c.b16.cont [4/8] 0, 128
        %7329 = vxpose.xlu0.c.b16.cont [5/8] 0, 128
        %7330 = vxpose.xlu0.c.b16.cont [6/8] 0, 128
        %7331 = vxpose.xlu0.c.b16.cont [7/8] 0, 128
        %7332 = vxpose.xlu0.c.b16.end [8/8] 0, 128
        %v7333 = vpop.trf.xlu0
        %v7334 = vpop.trf.xlu0
        %v7335 = vpop.trf.xlu0
        %v7336 = vpop.trf.xlu0
        %v7337 = vpop.trf.xlu0
        %v7338 = vpop.trf.xlu0
        %v7339 = vpop.trf.xlu0
        %v7340 = vpop.trf.xlu0
        %7341 = vxpose.xlu0.c.b16.start [1/8] %v7011, 128
        %7342 = vxpose.xlu0.c.b16.cont [2/8] 0, 128
        %7343 = vxpose.xlu0.c.b16.cont [3/8] 0, 128
        %7344 = vxpose.xlu0.c.b16.cont [4/8] 0, 128
        %7345 = vxpose.xlu0.c.b16.cont [5/8] 0, 128
        %7346 = vxpose.xlu0.c.b16.cont [6/8] 0, 128
        %7347 = vxpose.xlu0.c.b16.cont [7/8] 0, 128
        %7348 = vxpose.xlu0.c.b16.end [8/8] 0, 128
        %v7349 = vpop.trf.xlu0
        %v7350 = vpop.trf.xlu0
        %v7351 = vpop.trf.xlu0
        %v7352 = vpop.trf.xlu0
        %v7353 = vpop.trf.xlu0
        %v7354 = vpop.trf.xlu0
        %v7355 = vpop.trf.xlu0
        %v7356 = vpop.trf.xlu0
        %7357 = vxpose.xlu0.c.b16.start [1/8] %v7015, 128
        %7358 = vxpose.xlu0.c.b16.cont [2/8] 0, 128
        %7359 = vxpose.xlu0.c.b16.cont [3/8] 0, 128
        %7360 = vxpose.xlu0.c.b16.cont [4/8] 0, 128
        %7361 = vxpose.xlu0.c.b16.cont [5/8] 0, 128
        %7362 = vxpose.xlu0.c.b16.cont [6/8] 0, 128
        %7363 = vxpose.xlu0.c.b16.cont [7/8] 0, 128
        %7364 = vxpose.xlu0.c.b16.end [8/8] 0, 128
        %v7365 = vpop.trf.xlu0
        %v7366 = vpop.trf.xlu0
        %v7367 = vpop.trf.xlu0
        %v7368 = vpop.trf.xlu0
        %v7369 = vpop.trf.xlu0
        %v7370 = vpop.trf.xlu0
        %v7371 = vpop.trf.xlu0
        %v7372 = vpop.trf.xlu0
        %7373 = vxpose.xlu0.c.b16.start [1/8] %v7019, 128
        %7374 = vxpose.xlu0.c.b16.cont [2/8] 0, 128
        %7375 = vxpose.xlu0.c.b16.cont [3/8] 0, 128
        %7376 = vxpose.xlu0.c.b16.cont [4/8] 0, 128
        %7377 = vxpose.xlu0.c.b16.cont [5/8] 0, 128
        %7378 = vxpose.xlu0.c.b16.cont [6/8] 0, 128
        %7379 = vxpose.xlu0.c.b16.cont [7/8] 0, 128
        %7380 = vxpose.xlu0.c.b16.end [8/8] 0, 128
        %v7381 = vpop.trf.xlu0
        %v7382 = vpop.trf.xlu0
        %v7383 = vpop.trf.xlu0
        %v7384 = vpop.trf.xlu0
        %v7385 = vpop.trf.xlu0
        %v7386 = vpop.trf.xlu0
        %v7387 = vpop.trf.xlu0
        %v7388 = vpop.trf.xlu0
        %7389 = vxpose.xlu0.c.b16.start [1/8] %v7023, 128
        %7390 = vxpose.xlu0.c.b16.cont [2/8] 0, 128
        %7391 = vxpose.xlu0.c.b16.cont [3/8] 0, 128
        %7392 = vxpose.xlu0.c.b16.cont [4/8] 0, 128
        %7393 = vxpose.xlu0.c.b16.cont [5/8] 0, 128
        %7394 = vxpose.xlu0.c.b16.cont [6/8] 0, 128
        %7395 = vxpose.xlu0.c.b16.cont [7/8] 0, 128
        %7396 = vxpose.xlu0.c.b16.end [8/8] 0, 128
        %v7397 = vpop.trf.xlu0
        %v7398 = vpop.trf.xlu0
        %v7399 = vpop.trf.xlu0
        %v7400 = vpop.trf.xlu0
        %v7401 = vpop.trf.xlu0
        %v7402 = vpop.trf.xlu0
        %v7403 = vpop.trf.xlu0
        %v7404 = vpop.trf.xlu0
        %7405 = vxpose.xlu0.c.b16.start [1/8] %v7027, 128
        %7406 = vxpose.xlu0.c.b16.cont [2/8] 0, 128
        %7407 = vxpose.xlu0.c.b16.cont [3/8] 0, 128
        %7408 = vxpose.xlu0.c.b16.cont [4/8] 0, 128
        %7409 = vxpose.xlu0.c.b16.cont [5/8] 0, 128
        %7410 = vxpose.xlu0.c.b16.cont [6/8] 0, 128
        %7411 = vxpose.xlu0.c.b16.cont [7/8] 0, 128
        %7412 = vxpose.xlu0.c.b16.end [8/8] 0, 128
        %v7413 = vpop.trf.xlu0
        %v7414 = vpop.trf.xlu0
        %v7415 = vpop.trf.xlu0
        %v7416 = vpop.trf.xlu0
        %v7417 = vpop.trf.xlu0
        %v7418 = vpop.trf.xlu0
        %v7419 = vpop.trf.xlu0
        %v7420 = vpop.trf.xlu0
        %7421 = vxpose.xlu0.c.b16.start [1/8] %v7031, 128
        %7422 = vxpose.xlu0.c.b16.cont [2/8] 0, 128
        %7423 = vxpose.xlu0.c.b16.cont [3/8] 0, 128
        %7424 = vxpose.xlu0.c.b16.cont [4/8] 0, 128
        %7425 = vxpose.xlu0.c.b16.cont [5/8] 0, 128
        %7426 = vxpose.xlu0.c.b16.cont [6/8] 0, 128
        %7427 = vxpose.xlu0.c.b16.cont [7/8] 0, 128
        %7428 = vxpose.xlu0.c.b16.end [8/8] 0, 128
        %v7429 = vpop.trf.xlu0
        %v7430 = vpop.trf.xlu0
        %v7431 = vpop.trf.xlu0
        %v7432 = vpop.trf.xlu0
        %v7433 = vpop.trf.xlu0
        %v7434 = vpop.trf.xlu0
        %v7435 = vpop.trf.xlu0
        %v7436 = vpop.trf.xlu0
        %7437 = vxpose.xlu0.c.b16.start [1/8] %v7035, 128
        %7438 = vxpose.xlu0.c.b16.cont [2/8] 0, 128
        %7439 = vxpose.xlu0.c.b16.cont [3/8] 0, 128
        %7440 = vxpose.xlu0.c.b16.cont [4/8] 0, 128
        %7441 = vxpose.xlu0.c.b16.cont [5/8] 0, 128
        %7442 = vxpose.xlu0.c.b16.cont [6/8] 0, 128
        %7443 = vxpose.xlu0.c.b16.cont [7/8] 0, 128
        %7444 = vxpose.xlu0.c.b16.end [8/8] 0, 128
        %v7445 = vpop.trf.xlu0
        %v7446 = vpop.trf.xlu0
        %v7447 = vpop.trf.xlu0
        %v7448 = vpop.trf.xlu0
        %v7449 = vpop.trf.xlu0
        %v7450 = vpop.trf.xlu0
        %v7451 = vpop.trf.xlu0
        %v7452 = vpop.trf.xlu0
        %7453 = vxpose.xlu0.c.b16.start [1/8] %v7039, 128
        %7454 = vxpose.xlu0.c.b16.cont [2/8] 0, 128
        %7455 = vxpose.xlu0.c.b16.cont [3/8] 0, 128
        %7456 = vxpose.xlu0.c.b16.cont [4/8] 0, 128
        %7457 = vxpose.xlu0.c.b16.cont [5/8] 0, 128
        %7458 = vxpose.xlu0.c.b16.cont [6/8] 0, 128
        %7459 = vxpose.xlu0.c.b16.cont [7/8] 0, 128
        %7460 = vxpose.xlu0.c.b16.end [8/8] 0, 128
        %v7461 = vpop.trf.xlu0
        %v7462 = vpop.trf.xlu0
        %v7463 = vpop.trf.xlu0
        %v7464 = vpop.trf.xlu0
        %v7465 = vpop.trf.xlu0
        %v7466 = vpop.trf.xlu0
        %v7467 = vpop.trf.xlu0
        %v7468 = vpop.trf.xlu0
        %7469 = vxpose.xlu0.c.b16.start [1/8] %v7043, 128
        %7470 = vxpose.xlu0.c.b16.cont [2/8] 0, 128
        %7471 = vxpose.xlu0.c.b16.cont [3/8] 0, 128
        %7472 = vxpose.xlu0.c.b16.cont [4/8] 0, 128
        %7473 = vxpose.xlu0.c.b16.cont [5/8] 0, 128
        %7474 = vxpose.xlu0.c.b16.cont [6/8] 0, 128
        %7475 = vxpose.xlu0.c.b16.cont [7/8] 0, 128
        %7476 = vxpose.xlu0.c.b16.end [8/8] 0, 128
        %v7477 = vpop.trf.xlu0
        %v7478 = vpop.trf.xlu0
        %v7479 = vpop.trf.xlu0
        %v7480 = vpop.trf.xlu0
        %v7481 = vpop.trf.xlu0
        %v7482 = vpop.trf.xlu0
        %v7483 = vpop.trf.xlu0
        %v7484 = vpop.trf.xlu0
        %7485 = vxpose.xlu0.c.b16.start [1/8] %v7047, 128
        %7486 = vxpose.xlu0.c.b16.cont [2/8] 0, 128
        %7487 = vxpose.xlu0.c.b16.cont [3/8] 0, 128
        %7488 = vxpose.xlu0.c.b16.cont [4/8] 0, 128
        %7489 = vxpose.xlu0.c.b16.cont [5/8] 0, 128
        %7490 = vxpose.xlu0.c.b16.cont [6/8] 0, 128
        %7491 = vxpose.xlu0.c.b16.cont [7/8] 0, 128
        %7492 = vxpose.xlu0.c.b16.end [8/8] 0, 128
        %v7493 = vpop.trf.xlu0
        %v7494 = vpop.trf.xlu0
        %v7495 = vpop.trf.xlu0
        %v7496 = vpop.trf.xlu0
        %v7497 = vpop.trf.xlu0
        %v7498 = vpop.trf.xlu0
        %v7499 = vpop.trf.xlu0
        %v7500 = vpop.trf.xlu0
        %7501 = vxpose.xlu0.c.b16.start [1/8] %v7051, 128
        %7502 = vxpose.xlu0.c.b16.cont [2/8] 0, 128
        %7503 = vxpose.xlu0.c.b16.cont [3/8] 0, 128
        %7504 = vxpose.xlu0.c.b16.cont [4/8] 0, 128
        %7505 = vxpose.xlu0.c.b16.cont [5/8] 0, 128
        %7506 = vxpose.xlu0.c.b16.cont [6/8] 0, 128
        %7507 = vxpose.xlu0.c.b16.cont [7/8] 0, 128
        %7508 = vxpose.xlu0.c.b16.end [8/8] 0, 128
        %v7509 = vpop.trf.xlu0
        %v7510 = vpop.trf.xlu0
        %v7511 = vpop.trf.xlu0
        %v7512 = vpop.trf.xlu0
        %v7513 = vpop.trf.xlu0
        %v7514 = vpop.trf.xlu0
        %v7515 = vpop.trf.xlu0
        %v7516 = vpop.trf.xlu0
        %7517 = vxpose.xlu0.c.b16.start [1/8] %v7055, 128
        %7518 = vxpose.xlu0.c.b16.cont [2/8] 0, 128
        %7519 = vxpose.xlu0.c.b16.cont [3/8] 0, 128
        %7520 = vxpose.xlu0.c.b16.cont [4/8] 0, 128
        %7521 = vxpose.xlu0.c.b16.cont [5/8] 0, 128
        %7522 = vxpose.xlu0.c.b16.cont [6/8] 0, 128
        %7523 = vxpose.xlu0.c.b16.cont [7/8] 0, 128
        %7524 = vxpose.xlu0.c.b16.end [8/8] 0, 128
        %v7525 = vpop.trf.xlu0
        %v7526 = vpop.trf.xlu0
        %v7527 = vpop.trf.xlu0
        %v7528 = vpop.trf.xlu0
        %v7529 = vpop.trf.xlu0
        %v7530 = vpop.trf.xlu0
        %v7531 = vpop.trf.xlu0
        %v7532 = vpop.trf.xlu0
        %7533 = vxpose.xlu0.c.b16.start [1/8] %v7059, 128
        %7534 = vxpose.xlu0.c.b16.cont [2/8] 0, 128
        %7535 = vxpose.xlu0.c.b16.cont [3/8] 0, 128
        %7536 = vxpose.xlu0.c.b16.cont [4/8] 0, 128
        %7537 = vxpose.xlu0.c.b16.cont [5/8] 0, 128
        %7538 = vxpose.xlu0.c.b16.cont [6/8] 0, 128
        %7539 = vxpose.xlu0.c.b16.cont [7/8] 0, 128
        %7540 = vxpose.xlu0.c.b16.end [8/8] 0, 128
        %v7541 = vpop.trf.xlu0
        %v7542 = vpop.trf.xlu0
        %v7543 = vpop.trf.xlu0
        %v7544 = vpop.trf.xlu0
        %v7545 = vpop.trf.xlu0
        %v7546 = vpop.trf.xlu0
        %v7547 = vpop.trf.xlu0
        %v7548 = vpop.trf.xlu0
        %7549 = vxpose.xlu0.c.b16.start [1/8] %v7063, 128
        %7550 = vxpose.xlu0.c.b16.cont [2/8] 0, 128
        %7551 = vxpose.xlu0.c.b16.cont [3/8] 0, 128
        %7552 = vxpose.xlu0.c.b16.cont [4/8] 0, 128
        %7553 = vxpose.xlu0.c.b16.cont [5/8] 0, 128
        %7554 = vxpose.xlu0.c.b16.cont [6/8] 0, 128
        %7555 = vxpose.xlu0.c.b16.cont [7/8] 0, 128
        %7556 = vxpose.xlu0.c.b16.end [8/8] 0, 128
        %v7557 = vpop.trf.xlu0
        %v7558 = vpop.trf.xlu0
        %v7559 = vpop.trf.xlu0
        %v7560 = vpop.trf.xlu0
        %v7561 = vpop.trf.xlu0
        %v7562 = vpop.trf.xlu0
        %v7563 = vpop.trf.xlu0
        %v7564 = vpop.trf.xlu0
        %7565 = vxpose.xlu0.c.b16.start [1/8] %v7067, 128
        %7566 = vxpose.xlu0.c.b16.cont [2/8] 0, 128
        %7567 = vxpose.xlu0.c.b16.cont [3/8] 0, 128
        %7568 = vxpose.xlu0.c.b16.cont [4/8] 0, 128
        %7569 = vxpose.xlu0.c.b16.cont [5/8] 0, 128
        %7570 = vxpose.xlu0.c.b16.cont [6/8] 0, 128
        %7571 = vxpose.xlu0.c.b16.cont [7/8] 0, 128
        %7572 = vxpose.xlu0.c.b16.end [8/8] 0, 128
        %v7573 = vpop.trf.xlu0
        %v7574 = vpop.trf.xlu0
        %v7575 = vpop.trf.xlu0
        %v7576 = vpop.trf.xlu0
        %v7577 = vpop.trf.xlu0
        %v7578 = vpop.trf.xlu0
        %v7579 = vpop.trf.xlu0
        %v7580 = vpop.trf.xlu0
        %v7581 = vcombine.low %v7077, %v7141
        %v7583 = vunpack.c.l.s4 1983009808
        %v7584 = vunpack.c.0.s8 %v7583
        %v7585 = vlaneseq
        %v7586 = vshrl.u32 %v7585, 7
        %v7587 = vsub.s32 %v7584, %v7586
        %v7588 = vrot.slane %v7581, %v7587
        %v7589 = vcombine.low %v7109, %v7173
        %v7591 = vunpack.c.l.s4 1983009808
        %v7592 = vunpack.c.0.s8 %v7591
        %v7593 = vlaneseq
        %v7594 = vshrl.u32 %v7593, 7
        %v7595 = vsub.s32 %v7592, %v7594
        %v7596 = vrot.slane %v7589, %v7595
        %v7597 = vcombine.low %v7205, %v7269
        %v7599 = vunpack.c.l.s4 1983009808
        %v7600 = vunpack.c.0.s8 %v7599
        %v7601 = vlaneseq
        %v7602 = vshrl.u32 %v7601, 7
        %v7603 = vsub.s32 %v7600, %v7602
        %v7604 = vrot.slane %v7597, %v7603
        %v7605 = vcombine.low %v7237, %v7301
        %v7607 = vunpack.c.l.s4 1983009808
        %v7608 = vunpack.c.0.s8 %v7607
        %v7609 = vlaneseq
        %v7610 = vshrl.u32 %v7609, 7
        %v7611 = vsub.s32 %v7608, %v7610
        %v7612 = vrot.slane %v7605, %v7611
        %v7613 = vcombine.low %v7588, %v7596
        %v7615 = vunpack.c.l.s4 1934713408
        %v7616 = vunpack.c.0.s8 %v7615
        %v7617 = vlaneseq
        %v7618 = vshrl.u32 %v7617, 7
        %v7619 = vsub.s32 %v7616, %v7618
        %v7620 = vrot.slane %v7613, %v7619
        %v7621 = vcombine.low %v7604, %v7612
        %v7623 = vunpack.c.l.s4 1934713408
        %v7624 = vunpack.c.0.s8 %v7623
        %v7625 = vlaneseq
        %v7626 = vshrl.u32 %v7625, 7
        %v7627 = vsub.s32 %v7624, %v7626
        %v7628 = vrot.slane %v7621, %v7627
        %v7629 = vcombine.low %v7620, %v7628
        %v7630 = vcombine.high %v7620, %v7628
        %v7631 = vcombine.low %v7093, %v7157
        %v7633 = vunpack.c.l.s4 1983009808
        %v7634 = vunpack.c.0.s8 %v7633
        %v7635 = vlaneseq
        %v7636 = vshrl.u32 %v7635, 7
        %v7637 = vsub.s32 %v7634, %v7636
        %v7638 = vrot.slane %v7631, %v7637
        %v7639 = vcombine.low %v7125, %v7189
        %v7641 = vunpack.c.l.s4 1983009808
        %v7642 = vunpack.c.0.s8 %v7641
        %v7643 = vlaneseq
        %v7644 = vshrl.u32 %v7643, 7
        %v7645 = vsub.s32 %v7642, %v7644
        %v7646 = vrot.slane %v7639, %v7645
        %v7647 = vcombine.low %v7221, %v7285
        %v7649 = vunpack.c.l.s4 1983009808
        %v7650 = vunpack.c.0.s8 %v7649
        %v7651 = vlaneseq
        %v7652 = vshrl.u32 %v7651, 7
        %v7653 = vsub.s32 %v7650, %v7652
        %v7654 = vrot.slane %v7647, %v7653
        %v7655 = vcombine.low %v7253, %v7317
        %v7657 = vunpack.c.l.s4 1983009808
        %v7658 = vunpack.c.0.s8 %v7657
        %v7659 = vlaneseq
        %v7660 = vshrl.u32 %v7659, 7
        %v7661 = vsub.s32 %v7658, %v7660
        %v7662 = vrot.slane %v7655, %v7661
        %v7663 = vcombine.low %v7638, %v7646
        %v7665 = vunpack.c.l.s4 1934713408
        %v7666 = vunpack.c.0.s8 %v7665
        %v7667 = vlaneseq
        %v7668 = vshrl.u32 %v7667, 7
        %v7669 = vsub.s32 %v7666, %v7668
        %v7670 = vrot.slane %v7663, %v7669
        %v7671 = vcombine.low %v7654, %v7662
        %v7673 = vunpack.c.l.s4 1934713408
        %v7674 = vunpack.c.0.s8 %v7673
        %v7675 = vlaneseq
        %v7676 = vshrl.u32 %v7675, 7
        %v7677 = vsub.s32 %v7674, %v7676
        %v7678 = vrot.slane %v7671, %v7677
        %v7679 = vcombine.low %v7670, %v7678
        %v7680 = vcombine.high %v7670, %v7678
        %v7681 = vcombine.low %v7333, %v7397
        %v7683 = vunpack.c.l.s4 1983009808
        %v7684 = vunpack.c.0.s8 %v7683
        %v7685 = vlaneseq
        %v7686 = vshrl.u32 %v7685, 7
        %v7687 = vsub.s32 %v7684, %v7686
        %v7688 = vrot.slane %v7681, %v7687
        %v7689 = vcombine.low %v7365, %v7429
        %v7691 = vunpack.c.l.s4 1983009808
        %v7692 = vunpack.c.0.s8 %v7691
        %v7693 = vlaneseq
        %v7694 = vshrl.u32 %v7693, 7
        %v7695 = vsub.s32 %v7692, %v7694
        %v7696 = vrot.slane %v7689, %v7695
        %v7697 = vcombine.low %v7461, %v7525
        %v7699 = vunpack.c.l.s4 1983009808
        %v7700 = vunpack.c.0.s8 %v7699
        %v7701 = vlaneseq
        %v7702 = vshrl.u32 %v7701, 7
        %v7703 = vsub.s32 %v7700, %v7702
        %v7704 = vrot.slane %v7697, %v7703
        %v7705 = vcombine.low %v7493, %v7557
        %v7707 = vunpack.c.l.s4 1983009808
        %v7708 = vunpack.c.0.s8 %v7707
        %v7709 = vlaneseq
        %v7710 = vshrl.u32 %v7709, 7
        %v7711 = vsub.s32 %v7708, %v7710
        %v7712 = vrot.slane %v7705, %v7711
        %v7713 = vcombine.low %v7688, %v7696
        %v7715 = vunpack.c.l.s4 1934713408
        %v7716 = vunpack.c.0.s8 %v7715
        %v7717 = vlaneseq
        %v7718 = vshrl.u32 %v7717, 7
        %v7719 = vsub.s32 %v7716, %v7718
        %v7720 = vrot.slane %v7713, %v7719
        %v7721 = vcombine.low %v7704, %v7712
        %v7723 = vunpack.c.l.s4 1934713408
        %v7724 = vunpack.c.0.s8 %v7723
        %v7725 = vlaneseq
        %v7726 = vshrl.u32 %v7725, 7
        %v7727 = vsub.s32 %v7724, %v7726
        %v7728 = vrot.slane %v7721, %v7727
        %v7729 = vcombine.low %v7720, %v7728
        %v7730 = vcombine.high %v7720, %v7728
        %v7731 = vcombine.low %v7349, %v7413
        %v7733 = vunpack.c.l.s4 1983009808
        %v7734 = vunpack.c.0.s8 %v7733
        %v7735 = vlaneseq
        %v7736 = vshrl.u32 %v7735, 7
        %v7737 = vsub.s32 %v7734, %v7736
        %v7738 = vrot.slane %v7731, %v7737
        %v7739 = vcombine.low %v7381, %v7445
        %v7741 = vunpack.c.l.s4 1983009808
        %v7742 = vunpack.c.0.s8 %v7741
        %v7743 = vlaneseq
        %v7744 = vshrl.u32 %v7743, 7
        %v7745 = vsub.s32 %v7742, %v7744
        %v7746 = vrot.slane %v7739, %v7745
        %v7747 = vcombine.low %v7477, %v7541
        %v7749 = vunpack.c.l.s4 1983009808
        %v7750 = vunpack.c.0.s8 %v7749
        %v7751 = vlaneseq
        %v7752 = vshrl.u32 %v7751, 7
        %v7753 = vsub.s32 %v7750, %v7752
        %v7754 = vrot.slane %v7747, %v7753
        %v7755 = vcombine.low %v7509, %v7573
        %v7757 = vunpack.c.l.s4 1983009808
        %v7758 = vunpack.c.0.s8 %v7757
        %v7759 = vlaneseq
        %v7760 = vshrl.u32 %v7759, 7
        %v7761 = vsub.s32 %v7758, %v7760
        %v7762 = vrot.slane %v7755, %v7761
        %v7763 = vcombine.low %v7738, %v7746
        %v7765 = vunpack.c.l.s4 1934713408
        %v7766 = vunpack.c.0.s8 %v7765
        %v7767 = vlaneseq
        %v7768 = vshrl.u32 %v7767, 7
        %v7769 = vsub.s32 %v7766, %v7768
        %v7770 = vrot.slane %v7763, %v7769
        %v7771 = vcombine.low %v7754, %v7762
        %v7773 = vunpack.c.l.s4 1934713408
        %v7774 = vunpack.c.0.s8 %v7773
        %v7775 = vlaneseq
        %v7776 = vshrl.u32 %v7775, 7
        %v7777 = vsub.s32 %v7774, %v7776
        %v7778 = vrot.slane %v7771, %v7777
        %v7779 = vcombine.low %v7770, %v7778
        %v7780 = vcombine.high %v7770, %v7778
        %v7783 = vpack.i.b16 %v7679, %v7629
        %v7785 = vshrl.u32 %v7629, 16
        %v7786 = vshrl.u32 %v7679, 16
        %v7787 = vpack.i.b16 %v7786, %v7785
        %v7791 = vpack.i.b16 %v7680, %v7630
        %v7793 = vshrl.u32 %v7630, 16
        %v7794 = vshrl.u32 %v7680, 16
        %v7795 = vpack.i.b16 %v7794, %v7793
        %v7799 = vpack.i.b16 %v7779, %v7729
        %v7801 = vshrl.u32 %v7729, 16
        %v7802 = vshrl.u32 %v7779, 16
        %v7803 = vpack.i.b16 %v7802, %v7801
        %v7807 = vpack.i.b16 %v7780, %v7730
        %v7809 = vshrl.u32 %v7730, 16
        %v7810 = vshrl.u32 %v7780, 16
        %v7811 = vpack.i.b16 %v7810, %v7809
        %v7814 = vsel %vm3257, %v6131, 0
        %7816 = vmatprep.subr.bf16.mxu0 0
        %7817 = vmatpush1.bf16.msra.mxu0 %v7783
        %7818 = vmatprep.subr.bf16.mxu0 0
        %7819 = vmatpush1.bf16.msra.mxu0 %v7799
        %7820 = vmatprep.subr.bf16.mxu0 0
        %7821 = vmatpush1.bf16.msra.mxu0 0
        %7822 = vmatprep.subr.bf16.mxu0 0
        %7823 = vmatpush1.bf16.msra.mxu0 0
        %7824 = vmatprep.subr.bf16.mxu0 0
        %7825 = vmatpush1.bf16.msra.mxu0 0
        %7826 = vmatprep.subr.bf16.mxu0 0
        %7827 = vmatpush1.bf16.msra.mxu0 0
        %7828 = vmatprep.subr.bf16.mxu0 0
        %7829 = vmatpush1.bf16.msra.mxu0 0
        %7830 = vmatprep.subr.bf16.mxu0 0
        %7831 = vmatpush1.bf16.msra.mxu0 0
        %7832 = vmatprep.subr.bf16.mxu0 0
        %7833 = vmatpush1.bf16.msra.mxu0 0
        %7834 = vmatprep.subr.bf16.mxu0 0
        %7835 = vmatpush1.bf16.msra.mxu0 0
        %7836 = vmatprep.subr.bf16.mxu0 0
        %7837 = vmatpush1.bf16.msra.mxu0 0
        %7838 = vmatprep.subr.bf16.mxu0 0
        %7839 = vmatpush1.bf16.msra.mxu0 0
        %7840 = vmatprep.subr.bf16.mxu0 0
        %7841 = vmatpush1.bf16.msra.mxu0 0
        %7842 = vmatprep.subr.bf16.mxu0 0
        %7843 = vmatpush1.bf16.msra.mxu0 0
        %7844 = vmatprep.subr.bf16.mxu0 0
        %7845 = vmatpush1.bf16.msra.mxu0 0
        %7846 = vmatprep.subr.bf16.mxu0 0
        %7847 = vmatpush1.bf16.msra.mxu0 0
        %7848 = vmatprep.mubr.bf16.mxu0 0
        %7849 = vmatmul.mubr.bf16.gmra.mrb[0].mxu0 %v7814
        %v7850 = vpop.f32.mrb[0].mxu0
        %v7851 = vadd.f32 0.0, %v7850
        %v7852 = vpop.f32.mrb[0].mxu0
        %v7853 = vpop.f32.mrb[0].mxu0
        %v7854 = vpop.f32.mrb[0].mxu0
        %7855 = vdwg.mxu0
        %v7857 = vsel %vm3257, %v6134, 0
        %7859 = vmatprep.subr.bf16.mxu0 0
        %7860 = vmatpush1.bf16.msra.mxu0 %v7787
        %7861 = vmatprep.subr.bf16.mxu0 0
        %7862 = vmatpush1.bf16.msra.mxu0 %v7803
        %7863 = vmatprep.subr.bf16.mxu0 0
        %7864 = vmatpush1.bf16.msra.mxu0 0
        %7865 = vmatprep.subr.bf16.mxu0 0
        %7866 = vmatpush1.bf16.msra.mxu0 0
        %7867 = vmatprep.subr.bf16.mxu0 0
        %7868 = vmatpush1.bf16.msra.mxu0 0
        %7869 = vmatprep.subr.bf16.mxu0 0
        %7870 = vmatpush1.bf16.msra.mxu0 0
        %7871 = vmatprep.subr.bf16.mxu0 0
        %7872 = vmatpush1.bf16.msra.mxu0 0
        %7873 = vmatprep.subr.bf16.mxu0 0
        %7874 = vmatpush1.bf16.msra.mxu0 0
        %7875 = vmatprep.subr.bf16.mxu0 0
        %7876 = vmatpush1.bf16.msra.mxu0 0
        %7877 = vmatprep.subr.bf16.mxu0 0
        %7878 = vmatpush1.bf16.msra.mxu0 0
        %7879 = vmatprep.subr.bf16.mxu0 0
        %7880 = vmatpush1.bf16.msra.mxu0 0
        %7881 = vmatprep.subr.bf16.mxu0 0
        %7882 = vmatpush1.bf16.msra.mxu0 0
        %7883 = vmatprep.subr.bf16.mxu0 0
        %7884 = vmatpush1.bf16.msra.mxu0 0
        %7885 = vmatprep.subr.bf16.mxu0 0
        %7886 = vmatpush1.bf16.msra.mxu0 0
        %7887 = vmatprep.subr.bf16.mxu0 0
        %7888 = vmatpush1.bf16.msra.mxu0 0
        %7889 = vmatprep.subr.bf16.mxu0 0
        %7890 = vmatpush1.bf16.msra.mxu0 0
        %7891 = vmatprep.mubr.bf16.mxu0 0
        %7892 = vmatmul.mubr.bf16.gmra.mrb[0].mxu0 %v7857
        %v7893 = vpop.f32.mrb[0].mxu0
        %v7894 = vadd.f32 0.0, %v7893
        %v7895 = vpop.f32.mrb[0].mxu0
        %v7896 = vpop.f32.mrb[0].mxu0
        %v7897 = vpop.f32.mrb[0].mxu0
        %7898 = vdwg.mxu0
        %v7900 = vsel %vm3257, %v6137, 0
        %7902 = vmatprep.subr.bf16.mxu0 0
        %7903 = vmatpush1.bf16.msra.mxu0 %v7791
        %7904 = vmatprep.subr.bf16.mxu0 0
        %7905 = vmatpush1.bf16.msra.mxu0 %v7807
        %7906 = vmatprep.subr.bf16.mxu0 0
        %7907 = vmatpush1.bf16.msra.mxu0 0
        %7908 = vmatprep.subr.bf16.mxu0 0
        %7909 = vmatpush1.bf16.msra.mxu0 0
        %7910 = vmatprep.subr.bf16.mxu0 0
        %7911 = vmatpush1.bf16.msra.mxu0 0
        %7912 = vmatprep.subr.bf16.mxu0 0
        %7913 = vmatpush1.bf16.msra.mxu0 0
        %7914 = vmatprep.subr.bf16.mxu0 0
        %7915 = vmatpush1.bf16.msra.mxu0 0
        %7916 = vmatprep.subr.bf16.mxu0 0
        %7917 = vmatpush1.bf16.msra.mxu0 0
        %7918 = vmatprep.subr.bf16.mxu0 0
        %7919 = vmatpush1.bf16.msra.mxu0 0
        %7920 = vmatprep.subr.bf16.mxu0 0
        %7921 = vmatpush1.bf16.msra.mxu0 0
        %7922 = vmatprep.subr.bf16.mxu0 0
        %7923 = vmatpush1.bf16.msra.mxu0 0
        %7924 = vmatprep.subr.bf16.mxu0 0
        %7925 = vmatpush1.bf16.msra.mxu0 0
        %7926 = vmatprep.subr.bf16.mxu0 0
        %7927 = vmatpush1.bf16.msra.mxu0 0
        %7928 = vmatprep.subr.bf16.mxu0 0
        %7929 = vmatpush1.bf16.msra.mxu0 0
        %7930 = vmatprep.subr.bf16.mxu0 0
        %7931 = vmatpush1.bf16.msra.mxu0 0
        %7932 = vmatprep.subr.bf16.mxu0 0
        %7933 = vmatpush1.bf16.msra.mxu0 0
        %7934 = vmatprep.mubr.bf16.mxu0 0
        %7935 = vmatmul.mubr.bf16.gmra.mrb[0].mxu0 %v7900
        %v7936 = vpop.f32.mrb[0].mxu0
        %v7937 = vadd.f32 0.0, %v7936
        %v7938 = vpop.f32.mrb[0].mxu0
        %v7939 = vpop.f32.mrb[0].mxu0
        %v7940 = vpop.f32.mrb[0].mxu0
        %7941 = vdwg.mxu0
        %v7943 = vsel %vm3257, %v6140, 0
        %7945 = vmatprep.subr.bf16.mxu0 0
        %7946 = vmatpush1.bf16.msra.mxu0 %v7795
        %7947 = vmatprep.subr.bf16.mxu0 0
        %7948 = vmatpush1.bf16.msra.mxu0 %v7811
        %7949 = vmatprep.subr.bf16.mxu0 0
        %7950 = vmatpush1.bf16.msra.mxu0 0
        %7951 = vmatprep.subr.bf16.mxu0 0
        %7952 = vmatpush1.bf16.msra.mxu0 0
        %7953 = vmatprep.subr.bf16.mxu0 0
        %7954 = vmatpush1.bf16.msra.mxu0 0
        %7955 = vmatprep.subr.bf16.mxu0 0
        %7956 = vmatpush1.bf16.msra.mxu0 0
        %7957 = vmatprep.subr.bf16.mxu0 0
        %7958 = vmatpush1.bf16.msra.mxu0 0
        %7959 = vmatprep.subr.bf16.mxu0 0
        %7960 = vmatpush1.bf16.msra.mxu0 0
        %7961 = vmatprep.subr.bf16.mxu0 0
        %7962 = vmatpush1.bf16.msra.mxu0 0
        %7963 = vmatprep.subr.bf16.mxu0 0
        %7964 = vmatpush1.bf16.msra.mxu0 0
        %7965 = vmatprep.subr.bf16.mxu0 0
        %7966 = vmatpush1.bf16.msra.mxu0 0
        %7967 = vmatprep.subr.bf16.mxu0 0
        %7968 = vmatpush1.bf16.msra.mxu0 0
        %7969 = vmatprep.subr.bf16.mxu0 0
        %7970 = vmatpush1.bf16.msra.mxu0 0
        %7971 = vmatprep.subr.bf16.mxu0 0
        %7972 = vmatpush1.bf16.msra.mxu0 0
        %7973 = vmatprep.subr.bf16.mxu0 0
        %7974 = vmatpush1.bf16.msra.mxu0 0
        %7975 = vmatprep.subr.bf16.mxu0 0
        %7976 = vmatpush1.bf16.msra.mxu0 0
        %7977 = vmatprep.mubr.bf16.mxu0 0
        %7978 = vmatmul.mubr.bf16.gmra.mrb[0].mxu0 %v7943
        %v7979 = vpop.f32.mrb[0].mxu0
        %v7980 = vadd.f32 0.0, %v7979
        %v7981 = vpop.f32.mrb[0].mxu0
        %v7982 = vpop.f32.mrb[0].mxu0
        %v7983 = vpop.f32.mrb[0].mxu0
        %7984 = vdwg.mxu0
        %v7985 = vmul.f32 %v7851, 0.17677669
        %v7986 = vmul.f32 %v7894, 0.17677669
        %v7987 = vmul.f32 %v7937, 0.17677669
        %v7988 = vmul.f32 %v7980, 0.17677669
        %v7990 = vlaneseq
        %v7991 = vshrl.u32 %v7990, 7
        %v7992 = vsub.s32 0, %v7991
        %v7993 = vrot.slane %v1397, %v7992
        %v7995 = vadd.f32 %v7985, %v7993
        %v7996 = vadd.f32 %v7986, %v7993
        %v7997 = vadd.f32 %v7987, %v7993
        %v7998 = vadd.f32 %v7988, %v7993
        %vm7999 = vcmask 130048
        %v8000 = vsel %vm7999, %v7995, -inf
        %8001 = vmax.xlane.f32.xlu0 %v8000
        %v8002 = vpop.xlane.xlu0 %8001
        %v8003 = vsel %vm7999, %v7996, -inf
        %8004 = vmax.xlane.f32.xlu0 %v8003
        %v8005 = vpop.xlane.xlu0 %8004
        %v8006 = vsel %vm7999, %v7997, -inf
        %8007 = vmax.xlane.f32.xlu0 %v8006
        %v8008 = vpop.xlane.xlu0 %8007
        %v8009 = vsel %vm7999, %v7998, -inf
        %8010 = vmax.xlane.f32.xlu0 %v8009
        %v8011 = vpop.xlane.xlu0 %8010
        %v8012 = vsub.f32 %v7995, %v8002
        %v8013 = vsub.f32 %v7996, %v8005
        %v8014 = vsub.f32 %v7997, %v8008
        %v8015 = vsub.f32 %v7998, %v8011
        %v8016 = vmul.f32 %v8012, 1.442695
        %v8017 = vpow.pop %v8016
        %v8018 = vmul.f32 %v8013, 1.442695
        %v8019 = vpow.pop %v8018
        %v8020 = vmul.f32 %v8014, 1.442695
        %v8021 = vpow.pop %v8020
        %v8022 = vmul.f32 %v8015, 1.442695
        %v8023 = vpow.pop %v8022
        %v8024 = vsel %vm7999, %v8017, 0.0
        %8025 = vadd.xlane.f32.xlu0 %v8024
        %v8026 = vpop.xlane.xlu0 %8025
        %v8027 = vsel %vm7999, %v8019, 0.0
        %8028 = vadd.xlane.f32.xlu0 %v8027
        %v8029 = vpop.xlane.xlu0 %8028
        %v8030 = vsel %vm7999, %v8021, 0.0
        %8031 = vadd.xlane.f32.xlu0 %v8030
        %v8032 = vpop.xlane.xlu0 %8031
        %v8033 = vsel %vm7999, %v8023, 0.0
        %8034 = vadd.xlane.f32.xlu0 %v8033
        %v8035 = vpop.xlane.xlu0 %8034
        %v8036 = vrcp.pop %v8026
        %v8037 = vrcp.pop %v8029
        %v8038 = vrcp.pop %v8032
        %v8039 = vrcp.pop %v8035
        %v8040 = vmul.f32 %v8017, %v8036
        %v8041 = vmul.f32 %v8019, %v8037
        %v8042 = vmul.f32 %v8021, %v8038
        %v8043 = vmul.f32 %v8023, %v8039
        %v8044 = vpack.c.bf16 %v8040, %v8040
        %v8045 = vpack.c.bf16 %v8041, %v8041
        %v8046 = vpack.c.bf16 %v8042, %v8042
        %v8047 = vpack.c.bf16 %v8043, %v8043
        %8048 = vxpose.xlu0.c.b16.start [1/8] %v6063, 128
        %8049 = vxpose.xlu0.c.b16.cont [2/8] 0, 128
        %8050 = vxpose.xlu0.c.b16.cont [3/8] 0, 128
        %8051 = vxpose.xlu0.c.b16.cont [4/8] 0, 128
        %8052 = vxpose.xlu0.c.b16.cont [5/8] 0, 128
        %8053 = vxpose.xlu0.c.b16.cont [6/8] 0, 128
        %8054 = vxpose.xlu0.c.b16.cont [7/8] 0, 128
        %8055 = vxpose.xlu0.c.b16.end [8/8] 0, 128
        %v8056 = vpop.trf.xlu0
        %v8057 = vpop.trf.xlu0
        %v8058 = vpop.trf.xlu0
        %v8059 = vpop.trf.xlu0
        %v8060 = vpop.trf.xlu0
        %v8061 = vpop.trf.xlu0
        %v8062 = vpop.trf.xlu0
        %v8063 = vpop.trf.xlu0
        %8064 = vxpose.xlu0.c.b16.start [1/8] %v6064, 128
        %8065 = vxpose.xlu0.c.b16.cont [2/8] 0, 128
        %8066 = vxpose.xlu0.c.b16.cont [3/8] 0, 128
        %8067 = vxpose.xlu0.c.b16.cont [4/8] 0, 128
        %8068 = vxpose.xlu0.c.b16.cont [5/8] 0, 128
        %8069 = vxpose.xlu0.c.b16.cont [6/8] 0, 128
        %8070 = vxpose.xlu0.c.b16.cont [7/8] 0, 128
        %8071 = vxpose.xlu0.c.b16.end [8/8] 0, 128
        %v8072 = vpop.trf.xlu0
        %v8073 = vpop.trf.xlu0
        %v8074 = vpop.trf.xlu0
        %v8075 = vpop.trf.xlu0
        %v8076 = vpop.trf.xlu0
        %v8077 = vpop.trf.xlu0
        %v8078 = vpop.trf.xlu0
        %v8079 = vpop.trf.xlu0
        %8080 = vxpose.xlu0.c.b16.start [1/8] %v6065, 128
        %8081 = vxpose.xlu0.c.b16.cont [2/8] 0, 128
        %8082 = vxpose.xlu0.c.b16.cont [3/8] 0, 128
        %8083 = vxpose.xlu0.c.b16.cont [4/8] 0, 128
        %8084 = vxpose.xlu0.c.b16.cont [5/8] 0, 128
        %8085 = vxpose.xlu0.c.b16.cont [6/8] 0, 128
        %8086 = vxpose.xlu0.c.b16.cont [7/8] 0, 128
        %8087 = vxpose.xlu0.c.b16.end [8/8] 0, 128
        %v8088 = vpop.trf.xlu0
        %v8089 = vpop.trf.xlu0
        %v8090 = vpop.trf.xlu0
        %v8091 = vpop.trf.xlu0
        %v8092 = vpop.trf.xlu0
        %v8093 = vpop.trf.xlu0
        %v8094 = vpop.trf.xlu0
        %v8095 = vpop.trf.xlu0
        %8096 = vxpose.xlu0.c.b16.start [1/8] %v6066, 128
        %8097 = vxpose.xlu0.c.b16.cont [2/8] 0, 128
        %8098 = vxpose.xlu0.c.b16.cont [3/8] 0, 128
        %8099 = vxpose.xlu0.c.b16.cont [4/8] 0, 128
        %8100 = vxpose.xlu0.c.b16.cont [5/8] 0, 128
        %8101 = vxpose.xlu0.c.b16.cont [6/8] 0, 128
        %8102 = vxpose.xlu0.c.b16.cont [7/8] 0, 128
        %8103 = vxpose.xlu0.c.b16.end [8/8] 0, 128
        %v8104 = vpop.trf.xlu0
        %v8105 = vpop.trf.xlu0
        %v8106 = vpop.trf.xlu0
        %v8107 = vpop.trf.xlu0
        %v8108 = vpop.trf.xlu0
        %v8109 = vpop.trf.xlu0
        %v8110 = vpop.trf.xlu0
        %v8111 = vpop.trf.xlu0
        %8112 = vxpose.xlu0.c.b16.start [1/8] %v6067, 128
        %8113 = vxpose.xlu0.c.b16.cont [2/8] 0, 128
        %8114 = vxpose.xlu0.c.b16.cont [3/8] 0, 128
        %8115 = vxpose.xlu0.c.b16.cont [4/8] 0, 128
        %8116 = vxpose.xlu0.c.b16.cont [5/8] 0, 128
        %8117 = vxpose.xlu0.c.b16.cont [6/8] 0, 128
        %8118 = vxpose.xlu0.c.b16.cont [7/8] 0, 128
        %8119 = vxpose.xlu0.c.b16.end [8/8] 0, 128
        %v8120 = vpop.trf.xlu0
        %v8121 = vpop.trf.xlu0
        %v8122 = vpop.trf.xlu0
        %v8123 = vpop.trf.xlu0
        %v8124 = vpop.trf.xlu0
        %v8125 = vpop.trf.xlu0
        %v8126 = vpop.trf.xlu0
        %v8127 = vpop.trf.xlu0
        %8128 = vxpose.xlu0.c.b16.start [1/8] %v6068, 128
        %8129 = vxpose.xlu0.c.b16.cont [2/8] 0, 128
        %8130 = vxpose.xlu0.c.b16.cont [3/8] 0, 128
        %8131 = vxpose.xlu0.c.b16.cont [4/8] 0, 128
        %8132 = vxpose.xlu0.c.b16.cont [5/8] 0, 128
        %8133 = vxpose.xlu0.c.b16.cont [6/8] 0, 128
        %8134 = vxpose.xlu0.c.b16.cont [7/8] 0, 128
        %8135 = vxpose.xlu0.c.b16.end [8/8] 0, 128
        %v8136 = vpop.trf.xlu0
        %v8137 = vpop.trf.xlu0
        %v8138 = vpop.trf.xlu0
        %v8139 = vpop.trf.xlu0
        %v8140 = vpop.trf.xlu0
        %v8141 = vpop.trf.xlu0
        %v8142 = vpop.trf.xlu0
        %v8143 = vpop.trf.xlu0
        %8144 = vxpose.xlu0.c.b16.start [1/8] %v6069, 128
        %8145 = vxpose.xlu0.c.b16.cont [2/8] 0, 128
        %8146 = vxpose.xlu0.c.b16.cont [3/8] 0, 128
        %8147 = vxpose.xlu0.c.b16.cont [4/8] 0, 128
        %8148 = vxpose.xlu0.c.b16.cont [5/8] 0, 128
        %8149 = vxpose.xlu0.c.b16.cont [6/8] 0, 128
        %8150 = vxpose.xlu0.c.b16.cont [7/8] 0, 128
        %8151 = vxpose.xlu0.c.b16.end [8/8] 0, 128
        %v8152 = vpop.trf.xlu0
        %v8153 = vpop.trf.xlu0
        %v8154 = vpop.trf.xlu0
        %v8155 = vpop.trf.xlu0
        %v8156 = vpop.trf.xlu0
        %v8157 = vpop.trf.xlu0
        %v8158 = vpop.trf.xlu0
        %v8159 = vpop.trf.xlu0
        %8160 = vxpose.xlu0.c.b16.start [1/8] %v6070, 128
        %8161 = vxpose.xlu0.c.b16.cont [2/8] 0, 128
        %8162 = vxpose.xlu0.c.b16.cont [3/8] 0, 128
        %8163 = vxpose.xlu0.c.b16.cont [4/8] 0, 128
        %8164 = vxpose.xlu0.c.b16.cont [5/8] 0, 128
        %8165 = vxpose.xlu0.c.b16.cont [6/8] 0, 128
        %8166 = vxpose.xlu0.c.b16.cont [7/8] 0, 128
        %8167 = vxpose.xlu0.c.b16.end [8/8] 0, 128
        %v8168 = vpop.trf.xlu0
        %v8169 = vpop.trf.xlu0
        %v8170 = vpop.trf.xlu0
        %v8171 = vpop.trf.xlu0
        %v8172 = vpop.trf.xlu0
        %v8173 = vpop.trf.xlu0
        %v8174 = vpop.trf.xlu0
        %v8175 = vpop.trf.xlu0
        %8176 = vxpose.xlu0.c.b16.start [1/8] %v6071, 128
        %8177 = vxpose.xlu0.c.b16.cont [2/8] 0, 128
        %8178 = vxpose.xlu0.c.b16.cont [3/8] 0, 128
        %8179 = vxpose.xlu0.c.b16.cont [4/8] 0, 128
        %8180 = vxpose.xlu0.c.b16.cont [5/8] 0, 128
        %8181 = vxpose.xlu0.c.b16.cont [6/8] 0, 128
        %8182 = vxpose.xlu0.c.b16.cont [7/8] 0, 128
        %8183 = vxpose.xlu0.c.b16.end [8/8] 0, 128
        %v8184 = vpop.trf.xlu0
        %v8185 = vpop.trf.xlu0
        %v8186 = vpop.trf.xlu0
        %v8187 = vpop.trf.xlu0
        %v8188 = vpop.trf.xlu0
        %v8189 = vpop.trf.xlu0
        %v8190 = vpop.trf.xlu0
        %v8191 = vpop.trf.xlu0
        %8192 = vxpose.xlu0.c.b16.start [1/8] %v6072, 128
        %8193 = vxpose.xlu0.c.b16.cont [2/8] 0, 128
        %8194 = vxpose.xlu0.c.b16.cont [3/8] 0, 128
        %8195 = vxpose.xlu0.c.b16.cont [4/8] 0, 128
        %8196 = vxpose.xlu0.c.b16.cont [5/8] 0, 128
        %8197 = vxpose.xlu0.c.b16.cont [6/8] 0, 128
        %8198 = vxpose.xlu0.c.b16.cont [7/8] 0, 128
        %8199 = vxpose.xlu0.c.b16.end [8/8] 0, 128
        %v8200 = vpop.trf.xlu0
        %v8201 = vpop.trf.xlu0
        %v8202 = vpop.trf.xlu0
        %v8203 = vpop.trf.xlu0
        %v8204 = vpop.trf.xlu0
        %v8205 = vpop.trf.xlu0
        %v8206 = vpop.trf.xlu0
        %v8207 = vpop.trf.xlu0
        %8208 = vxpose.xlu0.c.b16.start [1/8] %v6073, 128
        %8209 = vxpose.xlu0.c.b16.cont [2/8] 0, 128
        %8210 = vxpose.xlu0.c.b16.cont [3/8] 0, 128
        %8211 = vxpose.xlu0.c.b16.cont [4/8] 0, 128
        %8212 = vxpose.xlu0.c.b16.cont [5/8] 0, 128
        %8213 = vxpose.xlu0.c.b16.cont [6/8] 0, 128
        %8214 = vxpose.xlu0.c.b16.cont [7/8] 0, 128
        %8215 = vxpose.xlu0.c.b16.end [8/8] 0, 128
        %v8216 = vpop.trf.xlu0
        %v8217 = vpop.trf.xlu0
        %v8218 = vpop.trf.xlu0
        %v8219 = vpop.trf.xlu0
        %v8220 = vpop.trf.xlu0
        %v8221 = vpop.trf.xlu0
        %v8222 = vpop.trf.xlu0
        %v8223 = vpop.trf.xlu0
        %8224 = vxpose.xlu0.c.b16.start [1/8] %v6074, 128
        %8225 = vxpose.xlu0.c.b16.cont [2/8] 0, 128
        %8226 = vxpose.xlu0.c.b16.cont [3/8] 0, 128
        %8227 = vxpose.xlu0.c.b16.cont [4/8] 0, 128
        %8228 = vxpose.xlu0.c.b16.cont [5/8] 0, 128
        %8229 = vxpose.xlu0.c.b16.cont [6/8] 0, 128
        %8230 = vxpose.xlu0.c.b16.cont [7/8] 0, 128
        %8231 = vxpose.xlu0.c.b16.end [8/8] 0, 128
        %v8232 = vpop.trf.xlu0
        %v8233 = vpop.trf.xlu0
        %v8234 = vpop.trf.xlu0
        %v8235 = vpop.trf.xlu0
        %v8236 = vpop.trf.xlu0
        %v8237 = vpop.trf.xlu0
        %v8238 = vpop.trf.xlu0
        %v8239 = vpop.trf.xlu0
        %8240 = vxpose.xlu0.c.b16.start [1/8] %v6075, 128
        %8241 = vxpose.xlu0.c.b16.cont [2/8] 0, 128
        %8242 = vxpose.xlu0.c.b16.cont [3/8] 0, 128
        %8243 = vxpose.xlu0.c.b16.cont [4/8] 0, 128
        %8244 = vxpose.xlu0.c.b16.cont [5/8] 0, 128
        %8245 = vxpose.xlu0.c.b16.cont [6/8] 0, 128
        %8246 = vxpose.xlu0.c.b16.cont [7/8] 0, 128
        %8247 = vxpose.xlu0.c.b16.end [8/8] 0, 128
        %v8248 = vpop.trf.xlu0
        %v8249 = vpop.trf.xlu0
        %v8250 = vpop.trf.xlu0
        %v8251 = vpop.trf.xlu0
        %v8252 = vpop.trf.xlu0
        %v8253 = vpop.trf.xlu0
        %v8254 = vpop.trf.xlu0
        %v8255 = vpop.trf.xlu0
        %8256 = vxpose.xlu0.c.b16.start [1/8] %v6076, 128
        %8257 = vxpose.xlu0.c.b16.cont [2/8] 0, 128
        %8258 = vxpose.xlu0.c.b16.cont [3/8] 0, 128
        %8259 = vxpose.xlu0.c.b16.cont [4/8] 0, 128
        %8260 = vxpose.xlu0.c.b16.cont [5/8] 0, 128
        %8261 = vxpose.xlu0.c.b16.cont [6/8] 0, 128
        %8262 = vxpose.xlu0.c.b16.cont [7/8] 0, 128
        %8263 = vxpose.xlu0.c.b16.end [8/8] 0, 128
        %v8264 = vpop.trf.xlu0
        %v8265 = vpop.trf.xlu0
        %v8266 = vpop.trf.xlu0
        %v8267 = vpop.trf.xlu0
        %v8268 = vpop.trf.xlu0
        %v8269 = vpop.trf.xlu0
        %v8270 = vpop.trf.xlu0
        %v8271 = vpop.trf.xlu0
        %8272 = vxpose.xlu0.c.b16.start [1/8] %v6077, 128
        %8273 = vxpose.xlu0.c.b16.cont [2/8] 0, 128
        %8274 = vxpose.xlu0.c.b16.cont [3/8] 0, 128
        %8275 = vxpose.xlu0.c.b16.cont [4/8] 0, 128
        %8276 = vxpose.xlu0.c.b16.cont [5/8] 0, 128
        %8277 = vxpose.xlu0.c.b16.cont [6/8] 0, 128
        %8278 = vxpose.xlu0.c.b16.cont [7/8] 0, 128
        %8279 = vxpose.xlu0.c.b16.end [8/8] 0, 128
        %v8280 = vpop.trf.xlu0
        %v8281 = vpop.trf.xlu0
        %v8282 = vpop.trf.xlu0
        %v8283 = vpop.trf.xlu0
        %v8284 = vpop.trf.xlu0
        %v8285 = vpop.trf.xlu0
        %v8286 = vpop.trf.xlu0
        %v8287 = vpop.trf.xlu0
        %8288 = vxpose.xlu0.c.b16.start [1/8] %v6078, 128
        %8289 = vxpose.xlu0.c.b16.cont [2/8] 0, 128
        %8290 = vxpose.xlu0.c.b16.cont [3/8] 0, 128
        %8291 = vxpose.xlu0.c.b16.cont [4/8] 0, 128
        %8292 = vxpose.xlu0.c.b16.cont [5/8] 0, 128
        %8293 = vxpose.xlu0.c.b16.cont [6/8] 0, 128
        %8294 = vxpose.xlu0.c.b16.cont [7/8] 0, 128
        %8295 = vxpose.xlu0.c.b16.end [8/8] 0, 128
        %v8296 = vpop.trf.xlu0
        %v8297 = vpop.trf.xlu0
        %v8298 = vpop.trf.xlu0
        %v8299 = vpop.trf.xlu0
        %v8300 = vpop.trf.xlu0
        %v8301 = vpop.trf.xlu0
        %v8302 = vpop.trf.xlu0
        %v8303 = vpop.trf.xlu0
        %v8304 = vcombine.low %v8056, %v8120
        %v8305 = vcombine.high %v8056, %v8120
        %v8307 = vunpack.c.l.s4 1983009808
        %v8308 = vunpack.c.0.s8 %v8307
        %v8309 = vlaneseq
        %v8310 = vshrl.u32 %v8309, 7
        %v8311 = vsub.s32 %v8308, %v8310
        %v8312 = vrot.slane %v8304, %v8311
        %v8314 = vunpack.c.l.s4 1983009808
        %v8315 = vunpack.c.0.s8 %v8314
        %v8316 = vlaneseq
        %v8317 = vshrl.u32 %v8316, 7
        %v8318 = vsub.s32 %v8315, %v8317
        %v8319 = vrot.slane %v8305, %v8318
        %v8320 = vcombine.low %v8088, %v8152
        %v8321 = vcombine.high %v8088, %v8152
        %v8323 = vunpack.c.l.s4 1983009808
        %v8324 = vunpack.c.0.s8 %v8323
        %v8325 = vlaneseq
        %v8326 = vshrl.u32 %v8325, 7
        %v8327 = vsub.s32 %v8324, %v8326
        %v8328 = vrot.slane %v8320, %v8327
        %v8330 = vunpack.c.l.s4 1983009808
        %v8331 = vunpack.c.0.s8 %v8330
        %v8332 = vlaneseq
        %v8333 = vshrl.u32 %v8332, 7
        %v8334 = vsub.s32 %v8331, %v8333
        %v8335 = vrot.slane %v8321, %v8334
        %v8336 = vcombine.low %v8184, %v8248
        %v8337 = vcombine.high %v8184, %v8248
        %v8339 = vunpack.c.l.s4 1983009808
        %v8340 = vunpack.c.0.s8 %v8339
        %v8341 = vlaneseq
        %v8342 = vshrl.u32 %v8341, 7
        %v8343 = vsub.s32 %v8340, %v8342
        %v8344 = vrot.slane %v8336, %v8343
        %v8346 = vunpack.c.l.s4 1983009808
        %v8347 = vunpack.c.0.s8 %v8346
        %v8348 = vlaneseq
        %v8349 = vshrl.u32 %v8348, 7
        %v8350 = vsub.s32 %v8347, %v8349
        %v8351 = vrot.slane %v8337, %v8350
        %v8352 = vcombine.low %v8216, %v8280
        %v8353 = vcombine.high %v8216, %v8280
        %v8355 = vunpack.c.l.s4 1983009808
        %v8356 = vunpack.c.0.s8 %v8355
        %v8357 = vlaneseq
        %v8358 = vshrl.u32 %v8357, 7
        %v8359 = vsub.s32 %v8356, %v8358
        %v8360 = vrot.slane %v8352, %v8359
        %v8362 = vunpack.c.l.s4 1983009808
        %v8363 = vunpack.c.0.s8 %v8362
        %v8364 = vlaneseq
        %v8365 = vshrl.u32 %v8364, 7
        %v8366 = vsub.s32 %v8363, %v8365
        %v8367 = vrot.slane %v8353, %v8366
        %v8368 = vcombine.low %v8312, %v8328
        %v8369 = vcombine.high %v8312, %v8328
        %v8371 = vunpack.c.l.s4 1934713408
        %v8372 = vunpack.c.0.s8 %v8371
        %v8373 = vlaneseq
        %v8374 = vshrl.u32 %v8373, 7
        %v8375 = vsub.s32 %v8372, %v8374
        %v8376 = vrot.slane %v8368, %v8375
        %v8378 = vunpack.c.l.s4 1934713408
        %v8379 = vunpack.c.0.s8 %v8378
        %v8380 = vlaneseq
        %v8381 = vshrl.u32 %v8380, 7
        %v8382 = vsub.s32 %v8379, %v8381
        %v8383 = vrot.slane %v8369, %v8382
        %v8384 = vcombine.low %v8319, %v8335
        %v8385 = vcombine.high %v8319, %v8335
        %v8387 = vunpack.c.l.s4 1934713408
        %v8388 = vunpack.c.0.s8 %v8387
        %v8389 = vlaneseq
        %v8390 = vshrl.u32 %v8389, 7
        %v8391 = vsub.s32 %v8388, %v8390
        %v8392 = vrot.slane %v8384, %v8391
        %v8394 = vunpack.c.l.s4 1934713408
        %v8395 = vunpack.c.0.s8 %v8394
        %v8396 = vlaneseq
        %v8397 = vshrl.u32 %v8396, 7
        %v8398 = vsub.s32 %v8395, %v8397
        %v8399 = vrot.slane %v8385, %v8398
        %v8400 = vcombine.low %v8344, %v8360
        %v8401 = vcombine.high %v8344, %v8360
        %v8403 = vunpack.c.l.s4 1934713408
        %v8404 = vunpack.c.0.s8 %v8403
        %v8405 = vlaneseq
        %v8406 = vshrl.u32 %v8405, 7
        %v8407 = vsub.s32 %v8404, %v8406
        %v8408 = vrot.slane %v8400, %v8407
        %v8410 = vunpack.c.l.s4 1934713408
        %v8411 = vunpack.c.0.s8 %v8410
        %v8412 = vlaneseq
        %v8413 = vshrl.u32 %v8412, 7
        %v8414 = vsub.s32 %v8411, %v8413
        %v8415 = vrot.slane %v8401, %v8414
        %v8416 = vcombine.low %v8351, %v8367
        %v8417 = vcombine.high %v8351, %v8367
        %v8419 = vunpack.c.l.s4 1934713408
        %v8420 = vunpack.c.0.s8 %v8419
        %v8421 = vlaneseq
        %v8422 = vshrl.u32 %v8421, 7
        %v8423 = vsub.s32 %v8420, %v8422
        %v8424 = vrot.slane %v8416, %v8423
        %v8426 = vunpack.c.l.s4 1934713408
        %v8427 = vunpack.c.0.s8 %v8426
        %v8428 = vlaneseq
        %v8429 = vshrl.u32 %v8428, 7
        %v8430 = vsub.s32 %v8427, %v8429
        %v8431 = vrot.slane %v8417, %v8430
        %v8432 = vcombine.low %v8376, %v8408
        %v8433 = vcombine.high %v8376, %v8408
        %v8434 = vcombine.low %v8383, %v8415
        %v8435 = vcombine.high %v8383, %v8415
        %v8436 = vcombine.low %v8392, %v8424
        %v8437 = vcombine.high %v8392, %v8424
        %v8438 = vcombine.low %v8399, %v8431
        %v8439 = vcombine.high %v8399, %v8431
        %v8440 = vcombine.low %v8072, %v8136
        %v8441 = vcombine.high %v8072, %v8136
        %v8443 = vunpack.c.l.s4 1983009808
        %v8444 = vunpack.c.0.s8 %v8443
        %v8445 = vlaneseq
        %v8446 = vshrl.u32 %v8445, 7
        %v8447 = vsub.s32 %v8444, %v8446
        %v8448 = vrot.slane %v8440, %v8447
        %v8450 = vunpack.c.l.s4 1983009808
        %v8451 = vunpack.c.0.s8 %v8450
        %v8452 = vlaneseq
        %v8453 = vshrl.u32 %v8452, 7
        %v8454 = vsub.s32 %v8451, %v8453
        %v8455 = vrot.slane %v8441, %v8454
        %v8456 = vcombine.low %v8104, %v8168
        %v8457 = vcombine.high %v8104, %v8168
        %v8459 = vunpack.c.l.s4 1983009808
        %v8460 = vunpack.c.0.s8 %v8459
        %v8461 = vlaneseq
        %v8462 = vshrl.u32 %v8461, 7
        %v8463 = vsub.s32 %v8460, %v8462
        %v8464 = vrot.slane %v8456, %v8463
        %v8466 = vunpack.c.l.s4 1983009808
        %v8467 = vunpack.c.0.s8 %v8466
        %v8468 = vlaneseq
        %v8469 = vshrl.u32 %v8468, 7
        %v8470 = vsub.s32 %v8467, %v8469
        %v8471 = vrot.slane %v8457, %v8470
        %v8472 = vcombine.low %v8200, %v8264
        %v8473 = vcombine.high %v8200, %v8264
        %v8475 = vunpack.c.l.s4 1983009808
        %v8476 = vunpack.c.0.s8 %v8475
        %v8477 = vlaneseq
        %v8478 = vshrl.u32 %v8477, 7
        %v8479 = vsub.s32 %v8476, %v8478
        %v8480 = vrot.slane %v8472, %v8479
        %v8482 = vunpack.c.l.s4 1983009808
        %v8483 = vunpack.c.0.s8 %v8482
        %v8484 = vlaneseq
        %v8485 = vshrl.u32 %v8484, 7
        %v8486 = vsub.s32 %v8483, %v8485
        %v8487 = vrot.slane %v8473, %v8486
        %v8488 = vcombine.low %v8232, %v8296
        %v8489 = vcombine.high %v8232, %v8296
        %v8491 = vunpack.c.l.s4 1983009808
        %v8492 = vunpack.c.0.s8 %v8491
        %v8493 = vlaneseq
        %v8494 = vshrl.u32 %v8493, 7
        %v8495 = vsub.s32 %v8492, %v8494
        %v8496 = vrot.slane %v8488, %v8495
        %v8498 = vunpack.c.l.s4 1983009808
        %v8499 = vunpack.c.0.s8 %v8498
        %v8500 = vlaneseq
        %v8501 = vshrl.u32 %v8500, 7
        %v8502 = vsub.s32 %v8499, %v8501
        %v8503 = vrot.slane %v8489, %v8502
        %v8504 = vcombine.low %v8448, %v8464
        %v8505 = vcombine.high %v8448, %v8464
        %v8507 = vunpack.c.l.s4 1934713408
        %v8508 = vunpack.c.0.s8 %v8507
        %v8509 = vlaneseq
        %v8510 = vshrl.u32 %v8509, 7
        %v8511 = vsub.s32 %v8508, %v8510
        %v8512 = vrot.slane %v8504, %v8511
        %v8514 = vunpack.c.l.s4 1934713408
        %v8515 = vunpack.c.0.s8 %v8514
        %v8516 = vlaneseq
        %v8517 = vshrl.u32 %v8516, 7
        %v8518 = vsub.s32 %v8515, %v8517
        %v8519 = vrot.slane %v8505, %v8518
        %v8520 = vcombine.low %v8455, %v8471
        %v8521 = vcombine.high %v8455, %v8471
        %v8523 = vunpack.c.l.s4 1934713408
        %v8524 = vunpack.c.0.s8 %v8523
        %v8525 = vlaneseq
        %v8526 = vshrl.u32 %v8525, 7
        %v8527 = vsub.s32 %v8524, %v8526
        %v8528 = vrot.slane %v8520, %v8527
        %v8530 = vunpack.c.l.s4 1934713408
        %v8531 = vunpack.c.0.s8 %v8530
        %v8532 = vlaneseq
        %v8533 = vshrl.u32 %v8532, 7
        %v8534 = vsub.s32 %v8531, %v8533
        %v8535 = vrot.slane %v8521, %v8534
        %v8536 = vcombine.low %v8480, %v8496
        %v8537 = vcombine.high %v8480, %v8496
        %v8539 = vunpack.c.l.s4 1934713408
        %v8540 = vunpack.c.0.s8 %v8539
        %v8541 = vlaneseq
        %v8542 = vshrl.u32 %v8541, 7
        %v8543 = vsub.s32 %v8540, %v8542
        %v8544 = vrot.slane %v8536, %v8543
        %v8546 = vunpack.c.l.s4 1934713408
        %v8547 = vunpack.c.0.s8 %v8546
        %v8548 = vlaneseq
        %v8549 = vshrl.u32 %v8548, 7
        %v8550 = vsub.s32 %v8547, %v8549
        %v8551 = vrot.slane %v8537, %v8550
        %v8552 = vcombine.low %v8487, %v8503
        %v8553 = vcombine.high %v8487, %v8503
        %v8555 = vunpack.c.l.s4 1934713408
        %v8556 = vunpack.c.0.s8 %v8555
        %v8557 = vlaneseq
        %v8558 = vshrl.u32 %v8557, 7
        %v8559 = vsub.s32 %v8556, %v8558
        %v8560 = vrot.slane %v8552, %v8559
        %v8562 = vunpack.c.l.s4 1934713408
        %v8563 = vunpack.c.0.s8 %v8562
        %v8564 = vlaneseq
        %v8565 = vshrl.u32 %v8564, 7
        %v8566 = vsub.s32 %v8563, %v8565
        %v8567 = vrot.slane %v8553, %v8566
        %v8568 = vcombine.low %v8512, %v8544
        %v8569 = vcombine.high %v8512, %v8544
        %v8570 = vcombine.low %v8519, %v8551
        %v8571 = vcombine.high %v8519, %v8551
        %v8572 = vcombine.low %v8528, %v8560
        %v8573 = vcombine.high %v8528, %v8560
        %v8574 = vcombine.low %v8535, %v8567
        %v8575 = vcombine.high %v8535, %v8567
        %v8576 = vcombine.low %v8057, %v8121
        %v8577 = vcombine.high %v8057, %v8121
        %v8579 = vunpack.c.l.s4 1983009808
        %v8580 = vunpack.c.0.s8 %v8579
        %v8581 = vlaneseq
        %v8582 = vshrl.u32 %v8581, 7
        %v8583 = vsub.s32 %v8580, %v8582
        %v8584 = vrot.slane %v8576, %v8583
        %v8586 = vunpack.c.l.s4 1983009808
        %v8587 = vunpack.c.0.s8 %v8586
        %v8588 = vlaneseq
        %v8589 = vshrl.u32 %v8588, 7
        %v8590 = vsub.s32 %v8587, %v8589
        %v8591 = vrot.slane %v8577, %v8590
        %v8592 = vcombine.low %v8089, %v8153
        %v8593 = vcombine.high %v8089, %v8153
        %v8595 = vunpack.c.l.s4 1983009808
        %v8596 = vunpack.c.0.s8 %v8595
        %v8597 = vlaneseq
        %v8598 = vshrl.u32 %v8597, 7
        %v8599 = vsub.s32 %v8596, %v8598
        %v8600 = vrot.slane %v8592, %v8599
        %v8602 = vunpack.c.l.s4 1983009808
        %v8603 = vunpack.c.0.s8 %v8602
        %v8604 = vlaneseq
        %v8605 = vshrl.u32 %v8604, 7
        %v8606 = vsub.s32 %v8603, %v8605
        %v8607 = vrot.slane %v8593, %v8606
        %v8608 = vcombine.low %v8185, %v8249
        %v8609 = vcombine.high %v8185, %v8249
        %v8611 = vunpack.c.l.s4 1983009808
        %v8612 = vunpack.c.0.s8 %v8611
        %v8613 = vlaneseq
        %v8614 = vshrl.u32 %v8613, 7
        %v8615 = vsub.s32 %v8612, %v8614
        %v8616 = vrot.slane %v8608, %v8615
        %v8618 = vunpack.c.l.s4 1983009808
        %v8619 = vunpack.c.0.s8 %v8618
        %v8620 = vlaneseq
        %v8621 = vshrl.u32 %v8620, 7
        %v8622 = vsub.s32 %v8619, %v8621
        %v8623 = vrot.slane %v8609, %v8622
        %v8624 = vcombine.low %v8217, %v8281
        %v8625 = vcombine.high %v8217, %v8281
        %v8627 = vunpack.c.l.s4 1983009808
        %v8628 = vunpack.c.0.s8 %v8627
        %v8629 = vlaneseq
        %v8630 = vshrl.u32 %v8629, 7
        %v8631 = vsub.s32 %v8628, %v8630
        %v8632 = vrot.slane %v8624, %v8631
        %v8634 = vunpack.c.l.s4 1983009808
        %v8635 = vunpack.c.0.s8 %v8634
        %v8636 = vlaneseq
        %v8637 = vshrl.u32 %v8636, 7
        %v8638 = vsub.s32 %v8635, %v8637
        %v8639 = vrot.slane %v8625, %v8638
        %v8640 = vcombine.low %v8584, %v8600
        %v8641 = vcombine.high %v8584, %v8600
        %v8643 = vunpack.c.l.s4 1934713408
        %v8644 = vunpack.c.0.s8 %v8643
        %v8645 = vlaneseq
        %v8646 = vshrl.u32 %v8645, 7
        %v8647 = vsub.s32 %v8644, %v8646
        %v8648 = vrot.slane %v8640, %v8647
        %v8650 = vunpack.c.l.s4 1934713408
        %v8651 = vunpack.c.0.s8 %v8650
        %v8652 = vlaneseq
        %v8653 = vshrl.u32 %v8652, 7
        %v8654 = vsub.s32 %v8651, %v8653
        %v8655 = vrot.slane %v8641, %v8654
        %v8656 = vcombine.low %v8591, %v8607
        %v8657 = vcombine.high %v8591, %v8607
        %v8659 = vunpack.c.l.s4 1934713408
        %v8660 = vunpack.c.0.s8 %v8659
        %v8661 = vlaneseq
        %v8662 = vshrl.u32 %v8661, 7
        %v8663 = vsub.s32 %v8660, %v8662
        %v8664 = vrot.slane %v8656, %v8663
        %v8666 = vunpack.c.l.s4 1934713408
        %v8667 = vunpack.c.0.s8 %v8666
        %v8668 = vlaneseq
        %v8669 = vshrl.u32 %v8668, 7
        %v8670 = vsub.s32 %v8667, %v8669
        %v8671 = vrot.slane %v8657, %v8670
        %v8672 = vcombine.low %v8616, %v8632
        %v8673 = vcombine.high %v8616, %v8632
        %v8675 = vunpack.c.l.s4 1934713408
        %v8676 = vunpack.c.0.s8 %v8675
        %v8677 = vlaneseq
        %v8678 = vshrl.u32 %v8677, 7
        %v8679 = vsub.s32 %v8676, %v8678
        %v8680 = vrot.slane %v8672, %v8679
        %v8682 = vunpack.c.l.s4 1934713408
        %v8683 = vunpack.c.0.s8 %v8682
        %v8684 = vlaneseq
        %v8685 = vshrl.u32 %v8684, 7
        %v8686 = vsub.s32 %v8683, %v8685
        %v8687 = vrot.slane %v8673, %v8686
        %v8688 = vcombine.low %v8623, %v8639
        %v8689 = vcombine.high %v8623, %v8639
        %v8691 = vunpack.c.l.s4 1934713408
        %v8692 = vunpack.c.0.s8 %v8691
        %v8693 = vlaneseq
        %v8694 = vshrl.u32 %v8693, 7
        %v8695 = vsub.s32 %v8692, %v8694
        %v8696 = vrot.slane %v8688, %v8695
        %v8698 = vunpack.c.l.s4 1934713408
        %v8699 = vunpack.c.0.s8 %v8698
        %v8700 = vlaneseq
        %v8701 = vshrl.u32 %v8700, 7
        %v8702 = vsub.s32 %v8699, %v8701
        %v8703 = vrot.slane %v8689, %v8702
        %v8704 = vcombine.low %v8648, %v8680
        %v8705 = vcombine.high %v8648, %v8680
        %v8706 = vcombine.low %v8655, %v8687
        %v8707 = vcombine.high %v8655, %v8687
        %v8708 = vcombine.low %v8664, %v8696
        %v8709 = vcombine.high %v8664, %v8696
        %v8710 = vcombine.low %v8671, %v8703
        %v8711 = vcombine.high %v8671, %v8703
        %v8712 = vcombine.low %v8073, %v8137
        %v8713 = vcombine.high %v8073, %v8137
        %v8715 = vunpack.c.l.s4 1983009808
        %v8716 = vunpack.c.0.s8 %v8715
        %v8717 = vlaneseq
        %v8718 = vshrl.u32 %v8717, 7
        %v8719 = vsub.s32 %v8716, %v8718
        %v8720 = vrot.slane %v8712, %v8719
        %v8722 = vunpack.c.l.s4 1983009808
        %v8723 = vunpack.c.0.s8 %v8722
        %v8724 = vlaneseq
        %v8725 = vshrl.u32 %v8724, 7
        %v8726 = vsub.s32 %v8723, %v8725
        %v8727 = vrot.slane %v8713, %v8726
        %v8728 = vcombine.low %v8105, %v8169
        %v8729 = vcombine.high %v8105, %v8169
        %v8731 = vunpack.c.l.s4 1983009808
        %v8732 = vunpack.c.0.s8 %v8731
        %v8733 = vlaneseq
        %v8734 = vshrl.u32 %v8733, 7
        %v8735 = vsub.s32 %v8732, %v8734
        %v8736 = vrot.slane %v8728, %v8735
        %v8738 = vunpack.c.l.s4 1983009808
        %v8739 = vunpack.c.0.s8 %v8738
        %v8740 = vlaneseq
        %v8741 = vshrl.u32 %v8740, 7
        %v8742 = vsub.s32 %v8739, %v8741
        %v8743 = vrot.slane %v8729, %v8742
        %v8744 = vcombine.low %v8201, %v8265
        %v8745 = vcombine.high %v8201, %v8265
        %v8747 = vunpack.c.l.s4 1983009808
        %v8748 = vunpack.c.0.s8 %v8747
        %v8749 = vlaneseq
        %v8750 = vshrl.u32 %v8749, 7
        %v8751 = vsub.s32 %v8748, %v8750
        %v8752 = vrot.slane %v8744, %v8751
        %v8754 = vunpack.c.l.s4 1983009808
        %v8755 = vunpack.c.0.s8 %v8754
        %v8756 = vlaneseq
        %v8757 = vshrl.u32 %v8756, 7
        %v8758 = vsub.s32 %v8755, %v8757
        %v8759 = vrot.slane %v8745, %v8758
        %v8760 = vcombine.low %v8233, %v8297
        %v8761 = vcombine.high %v8233, %v8297
        %v8763 = vunpack.c.l.s4 1983009808
        %v8764 = vunpack.c.0.s8 %v8763
        %v8765 = vlaneseq
        %v8766 = vshrl.u32 %v8765, 7
        %v8767 = vsub.s32 %v8764, %v8766
        %v8768 = vrot.slane %v8760, %v8767
        %v8770 = vunpack.c.l.s4 1983009808
        %v8771 = vunpack.c.0.s8 %v8770
        %v8772 = vlaneseq
        %v8773 = vshrl.u32 %v8772, 7
        %v8774 = vsub.s32 %v8771, %v8773
        %v8775 = vrot.slane %v8761, %v8774
        %v8776 = vcombine.low %v8720, %v8736
        %v8777 = vcombine.high %v8720, %v8736
        %v8779 = vunpack.c.l.s4 1934713408
        %v8780 = vunpack.c.0.s8 %v8779
        %v8781 = vlaneseq
        %v8782 = vshrl.u32 %v8781, 7
        %v8783 = vsub.s32 %v8780, %v8782
        %v8784 = vrot.slane %v8776, %v8783
        %v8786 = vunpack.c.l.s4 1934713408
        %v8787 = vunpack.c.0.s8 %v8786
        %v8788 = vlaneseq
        %v8789 = vshrl.u32 %v8788, 7
        %v8790 = vsub.s32 %v8787, %v8789
        %v8791 = vrot.slane %v8777, %v8790
        %v8792 = vcombine.low %v8727, %v8743
        %v8793 = vcombine.high %v8727, %v8743
        %v8795 = vunpack.c.l.s4 1934713408
        %v8796 = vunpack.c.0.s8 %v8795
        %v8797 = vlaneseq
        %v8798 = vshrl.u32 %v8797, 7
        %v8799 = vsub.s32 %v8796, %v8798
        %v8800 = vrot.slane %v8792, %v8799
        %v8802 = vunpack.c.l.s4 1934713408
        %v8803 = vunpack.c.0.s8 %v8802
        %v8804 = vlaneseq
        %v8805 = vshrl.u32 %v8804, 7
        %v8806 = vsub.s32 %v8803, %v8805
        %v8807 = vrot.slane %v8793, %v8806
        %v8808 = vcombine.low %v8752, %v8768
        %v8809 = vcombine.high %v8752, %v8768
        %v8811 = vunpack.c.l.s4 1934713408
        %v8812 = vunpack.c.0.s8 %v8811
        %v8813 = vlaneseq
        %v8814 = vshrl.u32 %v8813, 7
        %v8815 = vsub.s32 %v8812, %v8814
        %v8816 = vrot.slane %v8808, %v8815
        %v8818 = vunpack.c.l.s4 1934713408
        %v8819 = vunpack.c.0.s8 %v8818
        %v8820 = vlaneseq
        %v8821 = vshrl.u32 %v8820, 7
        %v8822 = vsub.s32 %v8819, %v8821
        %v8823 = vrot.slane %v8809, %v8822
        %v8824 = vcombine.low %v8759, %v8775
        %v8825 = vcombine.high %v8759, %v8775
        %v8827 = vunpack.c.l.s4 1934713408
        %v8828 = vunpack.c.0.s8 %v8827
        %v8829 = vlaneseq
        %v8830 = vshrl.u32 %v8829, 7
        %v8831 = vsub.s32 %v8828, %v8830
        %v8832 = vrot.slane %v8824, %v8831
        %v8834 = vunpack.c.l.s4 1934713408
        %v8835 = vunpack.c.0.s8 %v8834
        %v8836 = vlaneseq
        %v8837 = vshrl.u32 %v8836, 7
        %v8838 = vsub.s32 %v8835, %v8837
        %v8839 = vrot.slane %v8825, %v8838
        %v8840 = vcombine.low %v8784, %v8816
        %v8841 = vcombine.high %v8784, %v8816
        %v8842 = vcombine.low %v8791, %v8823
        %v8843 = vcombine.high %v8791, %v8823
        %v8844 = vcombine.low %v8800, %v8832
        %v8845 = vcombine.high %v8800, %v8832
        %v8846 = vcombine.low %v8807, %v8839
        %v8847 = vcombine.high %v8807, %v8839
        %v8850 = vpack.i.b16 %v8568, %v8432
        %v8852 = vshrl.u32 %v8432, 16
        %v8853 = vshrl.u32 %v8568, 16
        %v8854 = vpack.i.b16 %v8853, %v8852
        %v8858 = vpack.i.b16 %v8569, %v8433
        %v8860 = vshrl.u32 %v8433, 16
        %v8861 = vshrl.u32 %v8569, 16
        %v8862 = vpack.i.b16 %v8861, %v8860
        %v8866 = vpack.i.b16 %v8570, %v8434
        %v8868 = vshrl.u32 %v8434, 16
        %v8869 = vshrl.u32 %v8570, 16
        %v8870 = vpack.i.b16 %v8869, %v8868
        %v8874 = vpack.i.b16 %v8571, %v8435
        %v8876 = vshrl.u32 %v8435, 16
        %v8877 = vshrl.u32 %v8571, 16
        %v8878 = vpack.i.b16 %v8877, %v8876
        %v8882 = vpack.i.b16 %v8572, %v8436
        %v8884 = vshrl.u32 %v8436, 16
        %v8885 = vshrl.u32 %v8572, 16
        %v8886 = vpack.i.b16 %v8885, %v8884
        %v8890 = vpack.i.b16 %v8573, %v8437
        %v8892 = vshrl.u32 %v8437, 16
        %v8893 = vshrl.u32 %v8573, 16
        %v8894 = vpack.i.b16 %v8893, %v8892
        %v8898 = vpack.i.b16 %v8574, %v8438
        %v8900 = vshrl.u32 %v8438, 16
        %v8901 = vshrl.u32 %v8574, 16
        %v8902 = vpack.i.b16 %v8901, %v8900
        %v8906 = vpack.i.b16 %v8575, %v8439
        %v8908 = vshrl.u32 %v8439, 16
        %v8909 = vshrl.u32 %v8575, 16
        %v8910 = vpack.i.b16 %v8909, %v8908
        %v8914 = vpack.i.b16 %v8840, %v8704
        %v8916 = vshrl.u32 %v8704, 16
        %v8917 = vshrl.u32 %v8840, 16
        %v8918 = vpack.i.b16 %v8917, %v8916
        %v8922 = vpack.i.b16 %v8841, %v8705
        %v8924 = vshrl.u32 %v8705, 16
        %v8925 = vshrl.u32 %v8841, 16
        %v8926 = vpack.i.b16 %v8925, %v8924
        %v8930 = vpack.i.b16 %v8842, %v8706
        %v8932 = vshrl.u32 %v8706, 16
        %v8933 = vshrl.u32 %v8842, 16
        %v8934 = vpack.i.b16 %v8933, %v8932
        %v8938 = vpack.i.b16 %v8843, %v8707
        %v8940 = vshrl.u32 %v8707, 16
        %v8941 = vshrl.u32 %v8843, 16
        %v8942 = vpack.i.b16 %v8941, %v8940
        %v8946 = vpack.i.b16 %v8844, %v8708
        %v8948 = vshrl.u32 %v8708, 16
        %v8949 = vshrl.u32 %v8844, 16
        %v8950 = vpack.i.b16 %v8949, %v8948
        %v8954 = vpack.i.b16 %v8845, %v8709
        %v8956 = vshrl.u32 %v8709, 16
        %v8957 = vshrl.u32 %v8845, 16
        %v8958 = vpack.i.b16 %v8957, %v8956
        %v8962 = vpack.i.b16 %v8846, %v8710
        %v8964 = vshrl.u32 %v8710, 16
        %v8965 = vshrl.u32 %v8846, 16
        %v8966 = vpack.i.b16 %v8965, %v8964
        %v8970 = vpack.i.b16 %v8847, %v8711
        %v8972 = vshrl.u32 %v8711, 16
        %v8973 = vshrl.u32 %v8847, 16
        %v8974 = vpack.i.b16 %v8973, %v8972
        %8976 = vxpose.xlu0.c.b16.start [1/8] %v8850, 128
        %8977 = vxpose.xlu0.c.b16.cont [2/8] 0, 128
        %8978 = vxpose.xlu0.c.b16.cont [3/8] 0, 128
        %8979 = vxpose.xlu0.c.b16.cont [4/8] 0, 128
        %8980 = vxpose.xlu0.c.b16.cont [5/8] 0, 128
        %8981 = vxpose.xlu0.c.b16.cont [6/8] 0, 128
        %8982 = vxpose.xlu0.c.b16.cont [7/8] 0, 128
        %8983 = vxpose.xlu0.c.b16.end [8/8] 0, 128
        %v8984 = vpop.trf.xlu0
        %v8985 = vpop.trf.xlu0
        %v8986 = vpop.trf.xlu0
        %v8987 = vpop.trf.xlu0
        %v8988 = vpop.trf.xlu0
        %v8989 = vpop.trf.xlu0
        %v8990 = vpop.trf.xlu0
        %v8991 = vpop.trf.xlu0
        %8992 = vxpose.xlu0.c.b16.start [1/8] %v8854, 128
        %8993 = vxpose.xlu0.c.b16.cont [2/8] 0, 128
        %8994 = vxpose.xlu0.c.b16.cont [3/8] 0, 128
        %8995 = vxpose.xlu0.c.b16.cont [4/8] 0, 128
        %8996 = vxpose.xlu0.c.b16.cont [5/8] 0, 128
        %8997 = vxpose.xlu0.c.b16.cont [6/8] 0, 128
        %8998 = vxpose.xlu0.c.b16.cont [7/8] 0, 128
        %8999 = vxpose.xlu0.c.b16.end [8/8] 0, 128
        %v9000 = vpop.trf.xlu0
        %v9001 = vpop.trf.xlu0
        %v9002 = vpop.trf.xlu0
        %v9003 = vpop.trf.xlu0
        %v9004 = vpop.trf.xlu0
        %v9005 = vpop.trf.xlu0
        %v9006 = vpop.trf.xlu0
        %v9007 = vpop.trf.xlu0
        %9008 = vxpose.xlu0.c.b16.start [1/8] %v8858, 128
        %9009 = vxpose.xlu0.c.b16.cont [2/8] 0, 128
        %9010 = vxpose.xlu0.c.b16.cont [3/8] 0, 128
        %9011 = vxpose.xlu0.c.b16.cont [4/8] 0, 128
        %9012 = vxpose.xlu0.c.b16.cont [5/8] 0, 128
        %9013 = vxpose.xlu0.c.b16.cont [6/8] 0, 128
        %9014 = vxpose.xlu0.c.b16.cont [7/8] 0, 128
        %9015 = vxpose.xlu0.c.b16.end [8/8] 0, 128
        %v9016 = vpop.trf.xlu0
        %v9017 = vpop.trf.xlu0
        %v9018 = vpop.trf.xlu0
        %v9019 = vpop.trf.xlu0
        %v9020 = vpop.trf.xlu0
        %v9021 = vpop.trf.xlu0
        %v9022 = vpop.trf.xlu0
        %v9023 = vpop.trf.xlu0
        %9024 = vxpose.xlu0.c.b16.start [1/8] %v8862, 128
        %9025 = vxpose.xlu0.c.b16.cont [2/8] 0, 128
        %9026 = vxpose.xlu0.c.b16.cont [3/8] 0, 128
        %9027 = vxpose.xlu0.c.b16.cont [4/8] 0, 128
        %9028 = vxpose.xlu0.c.b16.cont [5/8] 0, 128
        %9029 = vxpose.xlu0.c.b16.cont [6/8] 0, 128
        %9030 = vxpose.xlu0.c.b16.cont [7/8] 0, 128
        %9031 = vxpose.xlu0.c.b16.end [8/8] 0, 128
        %v9032 = vpop.trf.xlu0
        %v9033 = vpop.trf.xlu0
        %v9034 = vpop.trf.xlu0
        %v9035 = vpop.trf.xlu0
        %v9036 = vpop.trf.xlu0
        %v9037 = vpop.trf.xlu0
        %v9038 = vpop.trf.xlu0
        %v9039 = vpop.trf.xlu0
        %9040 = vxpose.xlu0.c.b16.start [1/8] %v8866, 128
        %9041 = vxpose.xlu0.c.b16.cont [2/8] 0, 128
        %9042 = vxpose.xlu0.c.b16.cont [3/8] 0, 128
        %9043 = vxpose.xlu0.c.b16.cont [4/8] 0, 128
        %9044 = vxpose.xlu0.c.b16.cont [5/8] 0, 128
        %9045 = vxpose.xlu0.c.b16.cont [6/8] 0, 128
        %9046 = vxpose.xlu0.c.b16.cont [7/8] 0, 128
        %9047 = vxpose.xlu0.c.b16.end [8/8] 0, 128
        %v9048 = vpop.trf.xlu0
        %v9049 = vpop.trf.xlu0
        %v9050 = vpop.trf.xlu0
        %v9051 = vpop.trf.xlu0
        %v9052 = vpop.trf.xlu0
        %v9053 = vpop.trf.xlu0
        %v9054 = vpop.trf.xlu0
        %v9055 = vpop.trf.xlu0
        %9056 = vxpose.xlu0.c.b16.start [1/8] %v8870, 128
        %9057 = vxpose.xlu0.c.b16.cont [2/8] 0, 128
        %9058 = vxpose.xlu0.c.b16.cont [3/8] 0, 128
        %9059 = vxpose.xlu0.c.b16.cont [4/8] 0, 128
        %9060 = vxpose.xlu0.c.b16.cont [5/8] 0, 128
        %9061 = vxpose.xlu0.c.b16.cont [6/8] 0, 128
        %9062 = vxpose.xlu0.c.b16.cont [7/8] 0, 128
        %9063 = vxpose.xlu0.c.b16.end [8/8] 0, 128
        %v9064 = vpop.trf.xlu0
        %v9065 = vpop.trf.xlu0
        %v9066 = vpop.trf.xlu0
        %v9067 = vpop.trf.xlu0
        %v9068 = vpop.trf.xlu0
        %v9069 = vpop.trf.xlu0
        %v9070 = vpop.trf.xlu0
        %v9071 = vpop.trf.xlu0
        %9072 = vxpose.xlu0.c.b16.start [1/8] %v8874, 128
        %9073 = vxpose.xlu0.c.b16.cont [2/8] 0, 128
        %9074 = vxpose.xlu0.c.b16.cont [3/8] 0, 128
        %9075 = vxpose.xlu0.c.b16.cont [4/8] 0, 128
        %9076 = vxpose.xlu0.c.b16.cont [5/8] 0, 128
        %9077 = vxpose.xlu0.c.b16.cont [6/8] 0, 128
        %9078 = vxpose.xlu0.c.b16.cont [7/8] 0, 128
        %9079 = vxpose.xlu0.c.b16.end [8/8] 0, 128
        %v9080 = vpop.trf.xlu0
        %v9081 = vpop.trf.xlu0
        %v9082 = vpop.trf.xlu0
        %v9083 = vpop.trf.xlu0
        %v9084 = vpop.trf.xlu0
        %v9085 = vpop.trf.xlu0
        %v9086 = vpop.trf.xlu0
        %v9087 = vpop.trf.xlu0
        %9088 = vxpose.xlu0.c.b16.start [1/8] %v8878, 128
        %9089 = vxpose.xlu0.c.b16.cont [2/8] 0, 128
        %9090 = vxpose.xlu0.c.b16.cont [3/8] 0, 128
        %9091 = vxpose.xlu0.c.b16.cont [4/8] 0, 128
        %9092 = vxpose.xlu0.c.b16.cont [5/8] 0, 128
        %9093 = vxpose.xlu0.c.b16.cont [6/8] 0, 128
        %9094 = vxpose.xlu0.c.b16.cont [7/8] 0, 128
        %9095 = vxpose.xlu0.c.b16.end [8/8] 0, 128
        %v9096 = vpop.trf.xlu0
        %v9097 = vpop.trf.xlu0
        %v9098 = vpop.trf.xlu0
        %v9099 = vpop.trf.xlu0
        %v9100 = vpop.trf.xlu0
        %v9101 = vpop.trf.xlu0
        %v9102 = vpop.trf.xlu0
        %v9103 = vpop.trf.xlu0
        %9104 = vxpose.xlu0.c.b16.start [1/8] %v8882, 128
        %9105 = vxpose.xlu0.c.b16.cont [2/8] 0, 128
        %9106 = vxpose.xlu0.c.b16.cont [3/8] 0, 128
        %9107 = vxpose.xlu0.c.b16.cont [4/8] 0, 128
        %9108 = vxpose.xlu0.c.b16.cont [5/8] 0, 128
        %9109 = vxpose.xlu0.c.b16.cont [6/8] 0, 128
        %9110 = vxpose.xlu0.c.b16.cont [7/8] 0, 128
        %9111 = vxpose.xlu0.c.b16.end [8/8] 0, 128
        %v9112 = vpop.trf.xlu0
        %v9113 = vpop.trf.xlu0
        %v9114 = vpop.trf.xlu0
        %v9115 = vpop.trf.xlu0
        %v9116 = vpop.trf.xlu0
        %v9117 = vpop.trf.xlu0
        %v9118 = vpop.trf.xlu0
        %v9119 = vpop.trf.xlu0
        %9120 = vxpose.xlu0.c.b16.start [1/8] %v8886, 128
        %9121 = vxpose.xlu0.c.b16.cont [2/8] 0, 128
        %9122 = vxpose.xlu0.c.b16.cont [3/8] 0, 128
        %9123 = vxpose.xlu0.c.b16.cont [4/8] 0, 128
        %9124 = vxpose.xlu0.c.b16.cont [5/8] 0, 128
        %9125 = vxpose.xlu0.c.b16.cont [6/8] 0, 128
        %9126 = vxpose.xlu0.c.b16.cont [7/8] 0, 128
        %9127 = vxpose.xlu0.c.b16.end [8/8] 0, 128
        %v9128 = vpop.trf.xlu0
        %v9129 = vpop.trf.xlu0
        %v9130 = vpop.trf.xlu0
        %v9131 = vpop.trf.xlu0
        %v9132 = vpop.trf.xlu0
        %v9133 = vpop.trf.xlu0
        %v9134 = vpop.trf.xlu0
        %v9135 = vpop.trf.xlu0
        %9136 = vxpose.xlu0.c.b16.start [1/8] %v8890, 128
        %9137 = vxpose.xlu0.c.b16.cont [2/8] 0, 128
        %9138 = vxpose.xlu0.c.b16.cont [3/8] 0, 128
        %9139 = vxpose.xlu0.c.b16.cont [4/8] 0, 128
        %9140 = vxpose.xlu0.c.b16.cont [5/8] 0, 128
        %9141 = vxpose.xlu0.c.b16.cont [6/8] 0, 128
        %9142 = vxpose.xlu0.c.b16.cont [7/8] 0, 128
        %9143 = vxpose.xlu0.c.b16.end [8/8] 0, 128
        %v9144 = vpop.trf.xlu0
        %v9145 = vpop.trf.xlu0
        %v9146 = vpop.trf.xlu0
        %v9147 = vpop.trf.xlu0
        %v9148 = vpop.trf.xlu0
        %v9149 = vpop.trf.xlu0
        %v9150 = vpop.trf.xlu0
        %v9151 = vpop.trf.xlu0
        %9152 = vxpose.xlu0.c.b16.start [1/8] %v8894, 128
        %9153 = vxpose.xlu0.c.b16.cont [2/8] 0, 128
        %9154 = vxpose.xlu0.c.b16.cont [3/8] 0, 128
        %9155 = vxpose.xlu0.c.b16.cont [4/8] 0, 128
        %9156 = vxpose.xlu0.c.b16.cont [5/8] 0, 128
        %9157 = vxpose.xlu0.c.b16.cont [6/8] 0, 128
        %9158 = vxpose.xlu0.c.b16.cont [7/8] 0, 128
        %9159 = vxpose.xlu0.c.b16.end [8/8] 0, 128
        %v9160 = vpop.trf.xlu0
        %v9161 = vpop.trf.xlu0
        %v9162 = vpop.trf.xlu0
        %v9163 = vpop.trf.xlu0
        %v9164 = vpop.trf.xlu0
        %v9165 = vpop.trf.xlu0
        %v9166 = vpop.trf.xlu0
        %v9167 = vpop.trf.xlu0
        %9168 = vxpose.xlu0.c.b16.start [1/8] %v8898, 128
        %9169 = vxpose.xlu0.c.b16.cont [2/8] 0, 128
        %9170 = vxpose.xlu0.c.b16.cont [3/8] 0, 128
        %9171 = vxpose.xlu0.c.b16.cont [4/8] 0, 128
        %9172 = vxpose.xlu0.c.b16.cont [5/8] 0, 128
        %9173 = vxpose.xlu0.c.b16.cont [6/8] 0, 128
        %9174 = vxpose.xlu0.c.b16.cont [7/8] 0, 128
        %9175 = vxpose.xlu0.c.b16.end [8/8] 0, 128
        %v9176 = vpop.trf.xlu0
        %v9177 = vpop.trf.xlu0
        %v9178 = vpop.trf.xlu0
        %v9179 = vpop.trf.xlu0
        %v9180 = vpop.trf.xlu0
        %v9181 = vpop.trf.xlu0
        %v9182 = vpop.trf.xlu0
        %v9183 = vpop.trf.xlu0
        %9184 = vxpose.xlu0.c.b16.start [1/8] %v8902, 128
        %9185 = vxpose.xlu0.c.b16.cont [2/8] 0, 128
        %9186 = vxpose.xlu0.c.b16.cont [3/8] 0, 128
        %9187 = vxpose.xlu0.c.b16.cont [4/8] 0, 128
        %9188 = vxpose.xlu0.c.b16.cont [5/8] 0, 128
        %9189 = vxpose.xlu0.c.b16.cont [6/8] 0, 128
        %9190 = vxpose.xlu0.c.b16.cont [7/8] 0, 128
        %9191 = vxpose.xlu0.c.b16.end [8/8] 0, 128
        %v9192 = vpop.trf.xlu0
        %v9193 = vpop.trf.xlu0
        %v9194 = vpop.trf.xlu0
        %v9195 = vpop.trf.xlu0
        %v9196 = vpop.trf.xlu0
        %v9197 = vpop.trf.xlu0
        %v9198 = vpop.trf.xlu0
        %v9199 = vpop.trf.xlu0
        %9200 = vxpose.xlu0.c.b16.start [1/8] %v8906, 128
        %9201 = vxpose.xlu0.c.b16.cont [2/8] 0, 128
        %9202 = vxpose.xlu0.c.b16.cont [3/8] 0, 128
        %9203 = vxpose.xlu0.c.b16.cont [4/8] 0, 128
        %9204 = vxpose.xlu0.c.b16.cont [5/8] 0, 128
        %9205 = vxpose.xlu0.c.b16.cont [6/8] 0, 128
        %9206 = vxpose.xlu0.c.b16.cont [7/8] 0, 128
        %9207 = vxpose.xlu0.c.b16.end [8/8] 0, 128
        %v9208 = vpop.trf.xlu0
        %v9209 = vpop.trf.xlu0
        %v9210 = vpop.trf.xlu0
        %v9211 = vpop.trf.xlu0
        %v9212 = vpop.trf.xlu0
        %v9213 = vpop.trf.xlu0
        %v9214 = vpop.trf.xlu0
        %v9215 = vpop.trf.xlu0
        %9216 = vxpose.xlu0.c.b16.start [1/8] %v8910, 128
        %9217 = vxpose.xlu0.c.b16.cont [2/8] 0, 128
        %9218 = vxpose.xlu0.c.b16.cont [3/8] 0, 128
        %9219 = vxpose.xlu0.c.b16.cont [4/8] 0, 128
        %9220 = vxpose.xlu0.c.b16.cont [5/8] 0, 128
        %9221 = vxpose.xlu0.c.b16.cont [6/8] 0, 128
        %9222 = vxpose.xlu0.c.b16.cont [7/8] 0, 128
        %9223 = vxpose.xlu0.c.b16.end [8/8] 0, 128
        %v9224 = vpop.trf.xlu0
        %v9225 = vpop.trf.xlu0
        %v9226 = vpop.trf.xlu0
        %v9227 = vpop.trf.xlu0
        %v9228 = vpop.trf.xlu0
        %v9229 = vpop.trf.xlu0
        %v9230 = vpop.trf.xlu0
        %v9231 = vpop.trf.xlu0
        %9232 = vxpose.xlu0.c.b16.start [1/8] %v8914, 128
        %9233 = vxpose.xlu0.c.b16.cont [2/8] 0, 128
        %9234 = vxpose.xlu0.c.b16.cont [3/8] 0, 128
        %9235 = vxpose.xlu0.c.b16.cont [4/8] 0, 128
        %9236 = vxpose.xlu0.c.b16.cont [5/8] 0, 128
        %9237 = vxpose.xlu0.c.b16.cont [6/8] 0, 128
        %9238 = vxpose.xlu0.c.b16.cont [7/8] 0, 128
        %9239 = vxpose.xlu0.c.b16.end [8/8] 0, 128
        %v9240 = vpop.trf.xlu0
        %v9241 = vpop.trf.xlu0
        %v9242 = vpop.trf.xlu0
        %v9243 = vpop.trf.xlu0
        %v9244 = vpop.trf.xlu0
        %v9245 = vpop.trf.xlu0
        %v9246 = vpop.trf.xlu0
        %v9247 = vpop.trf.xlu0
        %9248 = vxpose.xlu0.c.b16.start [1/8] %v8918, 128
        %9249 = vxpose.xlu0.c.b16.cont [2/8] 0, 128
        %9250 = vxpose.xlu0.c.b16.cont [3/8] 0, 128
        %9251 = vxpose.xlu0.c.b16.cont [4/8] 0, 128
        %9252 = vxpose.xlu0.c.b16.cont [5/8] 0, 128
        %9253 = vxpose.xlu0.c.b16.cont [6/8] 0, 128
        %9254 = vxpose.xlu0.c.b16.cont [7/8] 0, 128
        %9255 = vxpose.xlu0.c.b16.end [8/8] 0, 128
        %v9256 = vpop.trf.xlu0
        %v9257 = vpop.trf.xlu0
        %v9258 = vpop.trf.xlu0
        %v9259 = vpop.trf.xlu0
        %v9260 = vpop.trf.xlu0
        %v9261 = vpop.trf.xlu0
        %v9262 = vpop.trf.xlu0
        %v9263 = vpop.trf.xlu0
        %9264 = vxpose.xlu0.c.b16.start [1/8] %v8922, 128
        %9265 = vxpose.xlu0.c.b16.cont [2/8] 0, 128
        %9266 = vxpose.xlu0.c.b16.cont [3/8] 0, 128
        %9267 = vxpose.xlu0.c.b16.cont [4/8] 0, 128
        %9268 = vxpose.xlu0.c.b16.cont [5/8] 0, 128
        %9269 = vxpose.xlu0.c.b16.cont [6/8] 0, 128
        %9270 = vxpose.xlu0.c.b16.cont [7/8] 0, 128
        %9271 = vxpose.xlu0.c.b16.end [8/8] 0, 128
        %v9272 = vpop.trf.xlu0
        %v9273 = vpop.trf.xlu0
        %v9274 = vpop.trf.xlu0
        %v9275 = vpop.trf.xlu0
        %v9276 = vpop.trf.xlu0
        %v9277 = vpop.trf.xlu0
        %v9278 = vpop.trf.xlu0
        %v9279 = vpop.trf.xlu0
        %9280 = vxpose.xlu0.c.b16.start [1/8] %v8926, 128
        %9281 = vxpose.xlu0.c.b16.cont [2/8] 0, 128
        %9282 = vxpose.xlu0.c.b16.cont [3/8] 0, 128
        %9283 = vxpose.xlu0.c.b16.cont [4/8] 0, 128
        %9284 = vxpose.xlu0.c.b16.cont [5/8] 0, 128
        %9285 = vxpose.xlu0.c.b16.cont [6/8] 0, 128
        %9286 = vxpose.xlu0.c.b16.cont [7/8] 0, 128
        %9287 = vxpose.xlu0.c.b16.end [8/8] 0, 128
        %v9288 = vpop.trf.xlu0
        %v9289 = vpop.trf.xlu0
        %v9290 = vpop.trf.xlu0
        %v9291 = vpop.trf.xlu0
        %v9292 = vpop.trf.xlu0
        %v9293 = vpop.trf.xlu0
        %v9294 = vpop.trf.xlu0
        %v9295 = vpop.trf.xlu0
        %9296 = vxpose.xlu0.c.b16.start [1/8] %v8930, 128
        %9297 = vxpose.xlu0.c.b16.cont [2/8] 0, 128
        %9298 = vxpose.xlu0.c.b16.cont [3/8] 0, 128
        %9299 = vxpose.xlu0.c.b16.cont [4/8] 0, 128
        %9300 = vxpose.xlu0.c.b16.cont [5/8] 0, 128
        %9301 = vxpose.xlu0.c.b16.cont [6/8] 0, 128
        %9302 = vxpose.xlu0.c.b16.cont [7/8] 0, 128
        %9303 = vxpose.xlu0.c.b16.end [8/8] 0, 128
        %v9304 = vpop.trf.xlu0
        %v9305 = vpop.trf.xlu0
        %v9306 = vpop.trf.xlu0
        %v9307 = vpop.trf.xlu0
        %v9308 = vpop.trf.xlu0
        %v9309 = vpop.trf.xlu0
        %v9310 = vpop.trf.xlu0
        %v9311 = vpop.trf.xlu0
        %9312 = vxpose.xlu0.c.b16.start [1/8] %v8934, 128
        %9313 = vxpose.xlu0.c.b16.cont [2/8] 0, 128
        %9314 = vxpose.xlu0.c.b16.cont [3/8] 0, 128
        %9315 = vxpose.xlu0.c.b16.cont [4/8] 0, 128
        %9316 = vxpose.xlu0.c.b16.cont [5/8] 0, 128
        %9317 = vxpose.xlu0.c.b16.cont [6/8] 0, 128
        %9318 = vxpose.xlu0.c.b16.cont [7/8] 0, 128
        %9319 = vxpose.xlu0.c.b16.end [8/8] 0, 128
        %v9320 = vpop.trf.xlu0
        %v9321 = vpop.trf.xlu0
        %v9322 = vpop.trf.xlu0
        %v9323 = vpop.trf.xlu0
        %v9324 = vpop.trf.xlu0
        %v9325 = vpop.trf.xlu0
        %v9326 = vpop.trf.xlu0
        %v9327 = vpop.trf.xlu0
        %9328 = vxpose.xlu0.c.b16.start [1/8] %v8938, 128
        %9329 = vxpose.xlu0.c.b16.cont [2/8] 0, 128
        %9330 = vxpose.xlu0.c.b16.cont [3/8] 0, 128
        %9331 = vxpose.xlu0.c.b16.cont [4/8] 0, 128
        %9332 = vxpose.xlu0.c.b16.cont [5/8] 0, 128
        %9333 = vxpose.xlu0.c.b16.cont [6/8] 0, 128
        %9334 = vxpose.xlu0.c.b16.cont [7/8] 0, 128
        %9335 = vxpose.xlu0.c.b16.end [8/8] 0, 128
        %v9336 = vpop.trf.xlu0
        %v9337 = vpop.trf.xlu0
        %v9338 = vpop.trf.xlu0
        %v9339 = vpop.trf.xlu0
        %v9340 = vpop.trf.xlu0
        %v9341 = vpop.trf.xlu0
        %v9342 = vpop.trf.xlu0
        %v9343 = vpop.trf.xlu0
        %9344 = vxpose.xlu0.c.b16.start [1/8] %v8942, 128
        %9345 = vxpose.xlu0.c.b16.cont [2/8] 0, 128
        %9346 = vxpose.xlu0.c.b16.cont [3/8] 0, 128
        %9347 = vxpose.xlu0.c.b16.cont [4/8] 0, 128
        %9348 = vxpose.xlu0.c.b16.cont [5/8] 0, 128
        %9349 = vxpose.xlu0.c.b16.cont [6/8] 0, 128
        %9350 = vxpose.xlu0.c.b16.cont [7/8] 0, 128
        %9351 = vxpose.xlu0.c.b16.end [8/8] 0, 128
        %v9352 = vpop.trf.xlu0
        %v9353 = vpop.trf.xlu0
        %v9354 = vpop.trf.xlu0
        %v9355 = vpop.trf.xlu0
        %v9356 = vpop.trf.xlu0
        %v9357 = vpop.trf.xlu0
        %v9358 = vpop.trf.xlu0
        %v9359 = vpop.trf.xlu0
        %9360 = vxpose.xlu0.c.b16.start [1/8] %v8946, 128
        %9361 = vxpose.xlu0.c.b16.cont [2/8] 0, 128
        %9362 = vxpose.xlu0.c.b16.cont [3/8] 0, 128
        %9363 = vxpose.xlu0.c.b16.cont [4/8] 0, 128
        %9364 = vxpose.xlu0.c.b16.cont [5/8] 0, 128
        %9365 = vxpose.xlu0.c.b16.cont [6/8] 0, 128
        %9366 = vxpose.xlu0.c.b16.cont [7/8] 0, 128
        %9367 = vxpose.xlu0.c.b16.end [8/8] 0, 128
        %v9368 = vpop.trf.xlu0
        %v9369 = vpop.trf.xlu0
        %v9370 = vpop.trf.xlu0
        %v9371 = vpop.trf.xlu0
        %v9372 = vpop.trf.xlu0
        %v9373 = vpop.trf.xlu0
        %v9374 = vpop.trf.xlu0
        %v9375 = vpop.trf.xlu0
        %9376 = vxpose.xlu0.c.b16.start [1/8] %v8950, 128
        %9377 = vxpose.xlu0.c.b16.cont [2/8] 0, 128
        %9378 = vxpose.xlu0.c.b16.cont [3/8] 0, 128
        %9379 = vxpose.xlu0.c.b16.cont [4/8] 0, 128
        %9380 = vxpose.xlu0.c.b16.cont [5/8] 0, 128
        %9381 = vxpose.xlu0.c.b16.cont [6/8] 0, 128
        %9382 = vxpose.xlu0.c.b16.cont [7/8] 0, 128
        %9383 = vxpose.xlu0.c.b16.end [8/8] 0, 128
        %v9384 = vpop.trf.xlu0
        %v9385 = vpop.trf.xlu0
        %v9386 = vpop.trf.xlu0
        %v9387 = vpop.trf.xlu0
        %v9388 = vpop.trf.xlu0
        %v9389 = vpop.trf.xlu0
        %v9390 = vpop.trf.xlu0
        %v9391 = vpop.trf.xlu0
        %9392 = vxpose.xlu0.c.b16.start [1/8] %v8954, 128
        %9393 = vxpose.xlu0.c.b16.cont [2/8] 0, 128
        %9394 = vxpose.xlu0.c.b16.cont [3/8] 0, 128
        %9395 = vxpose.xlu0.c.b16.cont [4/8] 0, 128
        %9396 = vxpose.xlu0.c.b16.cont [5/8] 0, 128
        %9397 = vxpose.xlu0.c.b16.cont [6/8] 0, 128
        %9398 = vxpose.xlu0.c.b16.cont [7/8] 0, 128
        %9399 = vxpose.xlu0.c.b16.end [8/8] 0, 128
        %v9400 = vpop.trf.xlu0
        %v9401 = vpop.trf.xlu0
        %v9402 = vpop.trf.xlu0
        %v9403 = vpop.trf.xlu0
        %v9404 = vpop.trf.xlu0
        %v9405 = vpop.trf.xlu0
        %v9406 = vpop.trf.xlu0
        %v9407 = vpop.trf.xlu0
        %9408 = vxpose.xlu0.c.b16.start [1/8] %v8958, 128
        %9409 = vxpose.xlu0.c.b16.cont [2/8] 0, 128
        %9410 = vxpose.xlu0.c.b16.cont [3/8] 0, 128
        %9411 = vxpose.xlu0.c.b16.cont [4/8] 0, 128
        %9412 = vxpose.xlu0.c.b16.cont [5/8] 0, 128
        %9413 = vxpose.xlu0.c.b16.cont [6/8] 0, 128
        %9414 = vxpose.xlu0.c.b16.cont [7/8] 0, 128
        %9415 = vxpose.xlu0.c.b16.end [8/8] 0, 128
        %v9416 = vpop.trf.xlu0
        %v9417 = vpop.trf.xlu0
        %v9418 = vpop.trf.xlu0
        %v9419 = vpop.trf.xlu0
        %v9420 = vpop.trf.xlu0
        %v9421 = vpop.trf.xlu0
        %v9422 = vpop.trf.xlu0
        %v9423 = vpop.trf.xlu0
        %9424 = vxpose.xlu0.c.b16.start [1/8] %v8962, 128
        %9425 = vxpose.xlu0.c.b16.cont [2/8] 0, 128
        %9426 = vxpose.xlu0.c.b16.cont [3/8] 0, 128
        %9427 = vxpose.xlu0.c.b16.cont [4/8] 0, 128
        %9428 = vxpose.xlu0.c.b16.cont [5/8] 0, 128
        %9429 = vxpose.xlu0.c.b16.cont [6/8] 0, 128
        %9430 = vxpose.xlu0.c.b16.cont [7/8] 0, 128
        %9431 = vxpose.xlu0.c.b16.end [8/8] 0, 128
        %v9432 = vpop.trf.xlu0
        %v9433 = vpop.trf.xlu0
        %v9434 = vpop.trf.xlu0
        %v9435 = vpop.trf.xlu0
        %v9436 = vpop.trf.xlu0
        %v9437 = vpop.trf.xlu0
        %v9438 = vpop.trf.xlu0
        %v9439 = vpop.trf.xlu0
        %9440 = vxpose.xlu0.c.b16.start [1/8] %v8966, 128
        %9441 = vxpose.xlu0.c.b16.cont [2/8] 0, 128
        %9442 = vxpose.xlu0.c.b16.cont [3/8] 0, 128
        %9443 = vxpose.xlu0.c.b16.cont [4/8] 0, 128
        %9444 = vxpose.xlu0.c.b16.cont [5/8] 0, 128
        %9445 = vxpose.xlu0.c.b16.cont [6/8] 0, 128
        %9446 = vxpose.xlu0.c.b16.cont [7/8] 0, 128
        %9447 = vxpose.xlu0.c.b16.end [8/8] 0, 128
        %v9448 = vpop.trf.xlu0
        %v9449 = vpop.trf.xlu0
        %v9450 = vpop.trf.xlu0
        %v9451 = vpop.trf.xlu0
        %v9452 = vpop.trf.xlu0
        %v9453 = vpop.trf.xlu0
        %v9454 = vpop.trf.xlu0
        %v9455 = vpop.trf.xlu0
        %9456 = vxpose.xlu0.c.b16.start [1/8] %v8970, 128
        %9457 = vxpose.xlu0.c.b16.cont [2/8] 0, 128
        %9458 = vxpose.xlu0.c.b16.cont [3/8] 0, 128
        %9459 = vxpose.xlu0.c.b16.cont [4/8] 0, 128
        %9460 = vxpose.xlu0.c.b16.cont [5/8] 0, 128
        %9461 = vxpose.xlu0.c.b16.cont [6/8] 0, 128
        %9462 = vxpose.xlu0.c.b16.cont [7/8] 0, 128
        %9463 = vxpose.xlu0.c.b16.end [8/8] 0, 128
        %v9464 = vpop.trf.xlu0
        %v9465 = vpop.trf.xlu0
        %v9466 = vpop.trf.xlu0
        %v9467 = vpop.trf.xlu0
        %v9468 = vpop.trf.xlu0
        %v9469 = vpop.trf.xlu0
        %v9470 = vpop.trf.xlu0
        %v9471 = vpop.trf.xlu0
        %9472 = vxpose.xlu0.c.b16.start [1/8] %v8974, 128
        %9473 = vxpose.xlu0.c.b16.cont [2/8] 0, 128
        %9474 = vxpose.xlu0.c.b16.cont [3/8] 0, 128
        %9475 = vxpose.xlu0.c.b16.cont [4/8] 0, 128
        %9476 = vxpose.xlu0.c.b16.cont [5/8] 0, 128
        %9477 = vxpose.xlu0.c.b16.cont [6/8] 0, 128
        %9478 = vxpose.xlu0.c.b16.cont [7/8] 0, 128
        %9479 = vxpose.xlu0.c.b16.end [8/8] 0, 128
        %v9480 = vpop.trf.xlu0
        %v9481 = vpop.trf.xlu0
        %v9482 = vpop.trf.xlu0
        %v9483 = vpop.trf.xlu0
        %v9484 = vpop.trf.xlu0
        %v9485 = vpop.trf.xlu0
        %v9486 = vpop.trf.xlu0
        %v9487 = vpop.trf.xlu0
        %v9488 = vcombine.low %v8984, %v9048
        %v9490 = vunpack.c.l.s4 1983009808
        %v9491 = vunpack.c.0.s8 %v9490
        %v9492 = vlaneseq
        %v9493 = vshrl.u32 %v9492, 7
        %v9494 = vsub.s32 %v9491, %v9493
        %v9495 = vrot.slane %v9488, %v9494
        %v9496 = vcombine.low %v9016, %v9080
        %v9498 = vunpack.c.l.s4 1983009808
        %v9499 = vunpack.c.0.s8 %v9498
        %v9500 = vlaneseq
        %v9501 = vshrl.u32 %v9500, 7
        %v9502 = vsub.s32 %v9499, %v9501
        %v9503 = vrot.slane %v9496, %v9502
        %v9504 = vcombine.low %v9112, %v9176
        %v9506 = vunpack.c.l.s4 1983009808
        %v9507 = vunpack.c.0.s8 %v9506
        %v9508 = vlaneseq
        %v9509 = vshrl.u32 %v9508, 7
        %v9510 = vsub.s32 %v9507, %v9509
        %v9511 = vrot.slane %v9504, %v9510
        %v9512 = vcombine.low %v9144, %v9208
        %v9514 = vunpack.c.l.s4 1983009808
        %v9515 = vunpack.c.0.s8 %v9514
        %v9516 = vlaneseq
        %v9517 = vshrl.u32 %v9516, 7
        %v9518 = vsub.s32 %v9515, %v9517
        %v9519 = vrot.slane %v9512, %v9518
        %v9520 = vcombine.low %v9495, %v9503
        %v9522 = vunpack.c.l.s4 1934713408
        %v9523 = vunpack.c.0.s8 %v9522
        %v9524 = vlaneseq
        %v9525 = vshrl.u32 %v9524, 7
        %v9526 = vsub.s32 %v9523, %v9525
        %v9527 = vrot.slane %v9520, %v9526
        %v9528 = vcombine.low %v9511, %v9519
        %v9530 = vunpack.c.l.s4 1934713408
        %v9531 = vunpack.c.0.s8 %v9530
        %v9532 = vlaneseq
        %v9533 = vshrl.u32 %v9532, 7
        %v9534 = vsub.s32 %v9531, %v9533
        %v9535 = vrot.slane %v9528, %v9534
        %v9536 = vcombine.low %v9527, %v9535
        %v9537 = vcombine.high %v9527, %v9535
        %v9538 = vcombine.low %v9000, %v9064
        %v9540 = vunpack.c.l.s4 1983009808
        %v9541 = vunpack.c.0.s8 %v9540
        %v9542 = vlaneseq
        %v9543 = vshrl.u32 %v9542, 7
        %v9544 = vsub.s32 %v9541, %v9543
        %v9545 = vrot.slane %v9538, %v9544
        %v9546 = vcombine.low %v9032, %v9096
        %v9548 = vunpack.c.l.s4 1983009808
        %v9549 = vunpack.c.0.s8 %v9548
        %v9550 = vlaneseq
        %v9551 = vshrl.u32 %v9550, 7
        %v9552 = vsub.s32 %v9549, %v9551
        %v9553 = vrot.slane %v9546, %v9552
        %v9554 = vcombine.low %v9128, %v9192
        %v9556 = vunpack.c.l.s4 1983009808
        %v9557 = vunpack.c.0.s8 %v9556
        %v9558 = vlaneseq
        %v9559 = vshrl.u32 %v9558, 7
        %v9560 = vsub.s32 %v9557, %v9559
        %v9561 = vrot.slane %v9554, %v9560
        %v9562 = vcombine.low %v9160, %v9224
        %v9564 = vunpack.c.l.s4 1983009808
        %v9565 = vunpack.c.0.s8 %v9564
        %v9566 = vlaneseq
        %v9567 = vshrl.u32 %v9566, 7
        %v9568 = vsub.s32 %v9565, %v9567
        %v9569 = vrot.slane %v9562, %v9568
        %v9570 = vcombine.low %v9545, %v9553
        %v9572 = vunpack.c.l.s4 1934713408
        %v9573 = vunpack.c.0.s8 %v9572
        %v9574 = vlaneseq
        %v9575 = vshrl.u32 %v9574, 7
        %v9576 = vsub.s32 %v9573, %v9575
        %v9577 = vrot.slane %v9570, %v9576
        %v9578 = vcombine.low %v9561, %v9569
        %v9580 = vunpack.c.l.s4 1934713408
        %v9581 = vunpack.c.0.s8 %v9580
        %v9582 = vlaneseq
        %v9583 = vshrl.u32 %v9582, 7
        %v9584 = vsub.s32 %v9581, %v9583
        %v9585 = vrot.slane %v9578, %v9584
        %v9586 = vcombine.low %v9577, %v9585
        %v9587 = vcombine.high %v9577, %v9585
        %v9588 = vcombine.low %v9240, %v9304
        %v9590 = vunpack.c.l.s4 1983009808
        %v9591 = vunpack.c.0.s8 %v9590
        %v9592 = vlaneseq
        %v9593 = vshrl.u32 %v9592, 7
        %v9594 = vsub.s32 %v9591, %v9593
        %v9595 = vrot.slane %v9588, %v9594
        %v9596 = vcombine.low %v9272, %v9336
        %v9598 = vunpack.c.l.s4 1983009808
        %v9599 = vunpack.c.0.s8 %v9598
        %v9600 = vlaneseq
        %v9601 = vshrl.u32 %v9600, 7
        %v9602 = vsub.s32 %v9599, %v9601
        %v9603 = vrot.slane %v9596, %v9602
        %v9604 = vcombine.low %v9368, %v9432
        %v9606 = vunpack.c.l.s4 1983009808
        %v9607 = vunpack.c.0.s8 %v9606
        %v9608 = vlaneseq
        %v9609 = vshrl.u32 %v9608, 7
        %v9610 = vsub.s32 %v9607, %v9609
        %v9611 = vrot.slane %v9604, %v9610
        %v9612 = vcombine.low %v9400, %v9464
        %v9614 = vunpack.c.l.s4 1983009808
        %v9615 = vunpack.c.0.s8 %v9614
        %v9616 = vlaneseq
        %v9617 = vshrl.u32 %v9616, 7
        %v9618 = vsub.s32 %v9615, %v9617
        %v9619 = vrot.slane %v9612, %v9618
        %v9620 = vcombine.low %v9595, %v9603
        %v9622 = vunpack.c.l.s4 1934713408
        %v9623 = vunpack.c.0.s8 %v9622
        %v9624 = vlaneseq
        %v9625 = vshrl.u32 %v9624, 7
        %v9626 = vsub.s32 %v9623, %v9625
        %v9627 = vrot.slane %v9620, %v9626
        %v9628 = vcombine.low %v9611, %v9619
        %v9630 = vunpack.c.l.s4 1934713408
        %v9631 = vunpack.c.0.s8 %v9630
        %v9632 = vlaneseq
        %v9633 = vshrl.u32 %v9632, 7
        %v9634 = vsub.s32 %v9631, %v9633
        %v9635 = vrot.slane %v9628, %v9634
        %v9636 = vcombine.low %v9627, %v9635
        %v9637 = vcombine.high %v9627, %v9635
        %v9638 = vcombine.low %v9256, %v9320
        %v9640 = vunpack.c.l.s4 1983009808
        %v9641 = vunpack.c.0.s8 %v9640
        %v9642 = vlaneseq
        %v9643 = vshrl.u32 %v9642, 7
        %v9644 = vsub.s32 %v9641, %v9643
        %v9645 = vrot.slane %v9638, %v9644
        %v9646 = vcombine.low %v9288, %v9352
        %v9648 = vunpack.c.l.s4 1983009808
        %v9649 = vunpack.c.0.s8 %v9648
        %v9650 = vlaneseq
        %v9651 = vshrl.u32 %v9650, 7
        %v9652 = vsub.s32 %v9649, %v9651
        %v9653 = vrot.slane %v9646, %v9652
        %v9654 = vcombine.low %v9384, %v9448
        %v9656 = vunpack.c.l.s4 1983009808
        %v9657 = vunpack.c.0.s8 %v9656
        %v9658 = vlaneseq
        %v9659 = vshrl.u32 %v9658, 7
        %v9660 = vsub.s32 %v9657, %v9659
        %v9661 = vrot.slane %v9654, %v9660
        %v9662 = vcombine.low %v9416, %v9480
        %v9664 = vunpack.c.l.s4 1983009808
        %v9665 = vunpack.c.0.s8 %v9664
        %v9666 = vlaneseq
        %v9667 = vshrl.u32 %v9666, 7
        %v9668 = vsub.s32 %v9665, %v9667
        %v9669 = vrot.slane %v9662, %v9668
        %v9670 = vcombine.low %v9645, %v9653
        %v9672 = vunpack.c.l.s4 1934713408
        %v9673 = vunpack.c.0.s8 %v9672
        %v9674 = vlaneseq
        %v9675 = vshrl.u32 %v9674, 7
        %v9676 = vsub.s32 %v9673, %v9675
        %v9677 = vrot.slane %v9670, %v9676
        %v9678 = vcombine.low %v9661, %v9669
        %v9680 = vunpack.c.l.s4 1934713408
        %v9681 = vunpack.c.0.s8 %v9680
        %v9682 = vlaneseq
        %v9683 = vshrl.u32 %v9682, 7
        %v9684 = vsub.s32 %v9681, %v9683
        %v9685 = vrot.slane %v9678, %v9684
        %v9686 = vcombine.low %v9677, %v9685
        %v9687 = vcombine.high %v9677, %v9685
        %v9690 = vpack.i.b16 %v9586, %v9536
        %v9691 = vshrl.u32 %v9536, 16
        %v9692 = vshrl.u32 %v9586, 16
        %v9693 = vpack.i.b16 %v9692, %v9691
        %v9696 = vpack.i.b16 %v9587, %v9537
        %v9697 = vshrl.u32 %v9537, 16
        %v9698 = vshrl.u32 %v9587, 16
        %v9699 = vpack.i.b16 %v9698, %v9697
        %v9702 = vpack.i.b16 %v9686, %v9636
        %v9703 = vshrl.u32 %v9636, 16
        %v9704 = vshrl.u32 %v9686, 16
        %v9705 = vpack.i.b16 %v9704, %v9703
        %v9708 = vpack.i.b16 %v9687, %v9637
        %v9709 = vshrl.u32 %v9637, 16
        %v9710 = vshrl.u32 %v9687, 16
        %v9711 = vpack.i.b16 %v9710, %v9709
        %v9713 = vsel %vm7999, %v9690, 0
        %v9716 = vsel %vm7999, %v9702, 0
        %v9719 = vsel %vm7999, %v8044, 0
        %9721 = vmatprep.subr.bf16.mxu0 0
        %9722 = vmatpush1.bf16.xpose.msra.mxu0 %v9719
        %9723 = vmatprep.subr.bf16.mxu0 0
        %9724 = vmatpush1.bf16.xpose.msra.mxu0 0
        %9725 = vmatprep.subr.bf16.mxu0 0
        %9726 = vmatpush1.bf16.xpose.msra.mxu0 0
        %9727 = vmatprep.subr.bf16.mxu0 0
        %9728 = vmatpush1.bf16.xpose.msra.mxu0 0
        %9729 = vmatprep.subr.bf16.mxu0 0
        %9730 = vmatpush1.bf16.xpose.msra.mxu0 0
        %9731 = vmatprep.subr.bf16.mxu0 0
        %9732 = vmatpush1.bf16.xpose.msra.mxu0 0
        %9733 = vmatprep.subr.bf16.mxu0 0
        %9734 = vmatpush1.bf16.xpose.msra.mxu0 0
        %9735 = vmatprep.subr.bf16.mxu0 0
        %9736 = vmatpush1.bf16.xpose.msra.mxu0 0
        %9737 = vmatprep.subr.bf16.mxu0 0
        %9738 = vmatpush1.bf16.xpose.msra.mxu0 0
        %9739 = vmatprep.subr.bf16.mxu0 0
        %9740 = vmatpush1.bf16.xpose.msra.mxu0 0
        %9741 = vmatprep.subr.bf16.mxu0 0
        %9742 = vmatpush1.bf16.xpose.msra.mxu0 0
        %9743 = vmatprep.subr.bf16.mxu0 0
        %9744 = vmatpush1.bf16.xpose.msra.mxu0 0
        %9745 = vmatprep.subr.bf16.mxu0 0
        %9746 = vmatpush1.bf16.xpose.msra.mxu0 0
        %9747 = vmatprep.subr.bf16.mxu0 0
        %9748 = vmatpush1.bf16.xpose.msra.mxu0 0
        %9749 = vmatprep.subr.bf16.mxu0 0
        %9750 = vmatpush1.bf16.xpose.msra.mxu0 0
        %9751 = vmatprep.subr.bf16.mxu0 0
        %9752 = vmatpush1.bf16.xpose.msra.mxu0 0
        %9753 = vmatprep.mubr.bf16.mxu0 0
        %9754 = vmatmul.mubr.bf16.gmra.mrb[0].mxu0 %v9713
        %v9755 = vpop.f32.mrb[0].mxu0
        %v9756 = vadd.f32 0.0, %v9755
        %v9757 = vpop.f32.mrb[0].mxu0
        %v9758 = vpop.f32.mrb[0].mxu0
        %v9759 = vadd.f32 0.0, %v9758
        %v9760 = vpop.f32.mrb[0].mxu0
        %9761 = vmatprep.mubr.bf16.mxu0 0
        %9762 = vmatmul.mubr.bf16.gmra.mrb[0].mxu0 %v9716
        %v9763 = vpop.f32.mrb[0].mxu0
        %v9764 = vadd.f32 0.0, %v9763
        %v9765 = vpop.f32.mrb[0].mxu0
        %v9766 = vpop.f32.mrb[0].mxu0
        %v9767 = vadd.f32 0.0, %v9766
        %v9768 = vpop.f32.mrb[0].mxu0
        %9769 = vdwg.mxu0
        %v9771 = vsel %vm7999, %v9693, 0
        %v9774 = vsel %vm7999, %v9705, 0
        %v9777 = vsel %vm7999, %v8045, 0
        %9779 = vmatprep.subr.bf16.mxu0 0
        %9780 = vmatpush1.bf16.xpose.msra.mxu0 %v9777
        %9781 = vmatprep.subr.bf16.mxu0 0
        %9782 = vmatpush1.bf16.xpose.msra.mxu0 0
        %9783 = vmatprep.subr.bf16.mxu0 0
        %9784 = vmatpush1.bf16.xpose.msra.mxu0 0
        %9785 = vmatprep.subr.bf16.mxu0 0
        %9786 = vmatpush1.bf16.xpose.msra.mxu0 0
        %9787 = vmatprep.subr.bf16.mxu0 0
        %9788 = vmatpush1.bf16.xpose.msra.mxu0 0
        %9789 = vmatprep.subr.bf16.mxu0 0
        %9790 = vmatpush1.bf16.xpose.msra.mxu0 0
        %9791 = vmatprep.subr.bf16.mxu0 0
        %9792 = vmatpush1.bf16.xpose.msra.mxu0 0
        %9793 = vmatprep.subr.bf16.mxu0 0
        %9794 = vmatpush1.bf16.xpose.msra.mxu0 0
        %9795 = vmatprep.subr.bf16.mxu0 0
        %9796 = vmatpush1.bf16.xpose.msra.mxu0 0
        %9797 = vmatprep.subr.bf16.mxu0 0
        %9798 = vmatpush1.bf16.xpose.msra.mxu0 0
        %9799 = vmatprep.subr.bf16.mxu0 0
        %9800 = vmatpush1.bf16.xpose.msra.mxu0 0
        %9801 = vmatprep.subr.bf16.mxu0 0
        %9802 = vmatpush1.bf16.xpose.msra.mxu0 0
        %9803 = vmatprep.subr.bf16.mxu0 0
        %9804 = vmatpush1.bf16.xpose.msra.mxu0 0
        %9805 = vmatprep.subr.bf16.mxu0 0
        %9806 = vmatpush1.bf16.xpose.msra.mxu0 0
        %9807 = vmatprep.subr.bf16.mxu0 0
        %9808 = vmatpush1.bf16.xpose.msra.mxu0 0
        %9809 = vmatprep.subr.bf16.mxu0 0
        %9810 = vmatpush1.bf16.xpose.msra.mxu0 0
        %9811 = vmatprep.mubr.bf16.mxu0 0
        %9812 = vmatmul.mubr.bf16.gmra.mrb[0].mxu0 %v9771
        %v9813 = vpop.f32.mrb[0].mxu0
        %v9814 = vadd.f32 0.0, %v9813
        %v9815 = vpop.f32.mrb[0].mxu0
        %v9816 = vpop.f32.mrb[0].mxu0
        %v9817 = vadd.f32 0.0, %v9816
        %v9818 = vpop.f32.mrb[0].mxu0
        %9819 = vmatprep.mubr.bf16.mxu0 0
        %9820 = vmatmul.mubr.bf16.gmra.mrb[0].mxu0 %v9774
        %v9821 = vpop.f32.mrb[0].mxu0
        %v9822 = vadd.f32 0.0, %v9821
        %v9823 = vpop.f32.mrb[0].mxu0
        %v9824 = vpop.f32.mrb[0].mxu0
        %v9825 = vadd.f32 0.0, %v9824
        %v9826 = vpop.f32.mrb[0].mxu0
        %9827 = vdwg.mxu0
        %v9829 = vsel %vm7999, %v9696, 0
        %v9832 = vsel %vm7999, %v9708, 0
        %v9835 = vsel %vm7999, %v8046, 0
        %9837 = vmatprep.subr.bf16.mxu0 0
        %9838 = vmatpush1.bf16.xpose.msra.mxu0 %v9835
        %9839 = vmatprep.subr.bf16.mxu0 0
        %9840 = vmatpush1.bf16.xpose.msra.mxu0 0
        %9841 = vmatprep.subr.bf16.mxu0 0
        %9842 = vmatpush1.bf16.xpose.msra.mxu0 0
        %9843 = vmatprep.subr.bf16.mxu0 0
        %9844 = vmatpush1.bf16.xpose.msra.mxu0 0
        %9845 = vmatprep.subr.bf16.mxu0 0
        %9846 = vmatpush1.bf16.xpose.msra.mxu0 0
        %9847 = vmatprep.subr.bf16.mxu0 0
        %9848 = vmatpush1.bf16.xpose.msra.mxu0 0
        %9849 = vmatprep.subr.bf16.mxu0 0
        %9850 = vmatpush1.bf16.xpose.msra.mxu0 0
        %9851 = vmatprep.subr.bf16.mxu0 0
        %9852 = vmatpush1.bf16.xpose.msra.mxu0 0
        %9853 = vmatprep.subr.bf16.mxu0 0
        %9854 = vmatpush1.bf16.xpose.msra.mxu0 0
        %9855 = vmatprep.subr.bf16.mxu0 0
        %9856 = vmatpush1.bf16.xpose.msra.mxu0 0
        %9857 = vmatprep.subr.bf16.mxu0 0
        %9858 = vmatpush1.bf16.xpose.msra.mxu0 0
        %9859 = vmatprep.subr.bf16.mxu0 0
        %9860 = vmatpush1.bf16.xpose.msra.mxu0 0
        %9861 = vmatprep.subr.bf16.mxu0 0
        %9862 = vmatpush1.bf16.xpose.msra.mxu0 0
        %9863 = vmatprep.subr.bf16.mxu0 0
        %9864 = vmatpush1.bf16.xpose.msra.mxu0 0
        %9865 = vmatprep.subr.bf16.mxu0 0
        %9866 = vmatpush1.bf16.xpose.msra.mxu0 0
        %9867 = vmatprep.subr.bf16.mxu0 0
        %9868 = vmatpush1.bf16.xpose.msra.mxu0 0
        %9869 = vmatprep.mubr.bf16.mxu0 0
        %9870 = vmatmul.mubr.bf16.gmra.mrb[0].mxu0 %v9829
        %v9871 = vpop.f32.mrb[0].mxu0
        %v9872 = vadd.f32 0.0, %v9871
        %v9873 = vpop.f32.mrb[0].mxu0
        %v9874 = vpop.f32.mrb[0].mxu0
        %v9875 = vadd.f32 0.0, %v9874
        %v9876 = vpop.f32.mrb[0].mxu0
        %9877 = vmatprep.mubr.bf16.mxu0 0
        %9878 = vmatmul.mubr.bf16.gmra.mrb[0].mxu0 %v9832
        %v9879 = vpop.f32.mrb[0].mxu0
        %v9880 = vadd.f32 0.0, %v9879
        %v9881 = vpop.f32.mrb[0].mxu0
        %v9882 = vpop.f32.mrb[0].mxu0
        %v9883 = vadd.f32 0.0, %v9882
        %v9884 = vpop.f32.mrb[0].mxu0
        %9885 = vdwg.mxu0
        %v9887 = vsel %vm7999, %v9699, 0
        %v9890 = vsel %vm7999, %v9711, 0
        %v9893 = vsel %vm7999, %v8047, 0
        %9895 = vmatprep.subr.bf16.mxu0 0
        %9896 = vmatpush1.bf16.xpose.msra.mxu0 %v9893
        %9897 = vmatprep.subr.bf16.mxu0 0
        %9898 = vmatpush1.bf16.xpose.msra.mxu0 0
        %9899 = vmatprep.subr.bf16.mxu0 0
        %9900 = vmatpush1.bf16.xpose.msra.mxu0 0
        %9901 = vmatprep.subr.bf16.mxu0 0
        %9902 = vmatpush1.bf16.xpose.msra.mxu0 0
        %9903 = vmatprep.subr.bf16.mxu0 0
        %9904 = vmatpush1.bf16.xpose.msra.mxu0 0
        %9905 = vmatprep.subr.bf16.mxu0 0
        %9906 = vmatpush1.bf16.xpose.msra.mxu0 0
        %9907 = vmatprep.subr.bf16.mxu0 0
        %9908 = vmatpush1.bf16.xpose.msra.mxu0 0
        %9909 = vmatprep.subr.bf16.mxu0 0
        %9910 = vmatpush1.bf16.xpose.msra.mxu0 0
        %9911 = vmatprep.subr.bf16.mxu0 0
        %9912 = vmatpush1.bf16.xpose.msra.mxu0 0
        %9913 = vmatprep.subr.bf16.mxu0 0
        %9914 = vmatpush1.bf16.xpose.msra.mxu0 0
        %9915 = vmatprep.subr.bf16.mxu0 0
        %9916 = vmatpush1.bf16.xpose.msra.mxu0 0
        %9917 = vmatprep.subr.bf16.mxu0 0
        %9918 = vmatpush1.bf16.xpose.msra.mxu0 0
        %9919 = vmatprep.subr.bf16.mxu0 0
        %9920 = vmatpush1.bf16.xpose.msra.mxu0 0
        %9921 = vmatprep.subr.bf16.mxu0 0
        %9922 = vmatpush1.bf16.xpose.msra.mxu0 0
        %9923 = vmatprep.subr.bf16.mxu0 0
        %9924 = vmatpush1.bf16.xpose.msra.mxu0 0
        %9925 = vmatprep.subr.bf16.mxu0 0
        %9926 = vmatpush1.bf16.xpose.msra.mxu0 0
        %9927 = vmatprep.mubr.bf16.mxu0 0
        %9928 = vmatmul.mubr.bf16.gmra.mrb[0].mxu0 %v9887
        %v9929 = vpop.f32.mrb[0].mxu0
        %v9930 = vadd.f32 0.0, %v9929
        %v9931 = vpop.f32.mrb[0].mxu0
        %v9932 = vpop.f32.mrb[0].mxu0
        %v9933 = vadd.f32 0.0, %v9932
        %v9934 = vpop.f32.mrb[0].mxu0
        %9935 = vmatprep.mubr.bf16.mxu0 0
        %9936 = vmatmul.mubr.bf16.gmra.mrb[0].mxu0 %v9890
        %v9937 = vpop.f32.mrb[0].mxu0
        %v9938 = vadd.f32 0.0, %v9937
        %v9939 = vpop.f32.mrb[0].mxu0
        %v9940 = vpop.f32.mrb[0].mxu0
        %v9941 = vadd.f32 0.0, %v9940
        %v9942 = vpop.f32.mrb[0].mxu0
        %9943 = vdwg.mxu0
        %9944 = vxpose.xlu0.b32.start [1/16] %v9756, 128
        %9945 = vxpose.xlu0.b32.cont [2/16] %v9759, 128
        %9946 = vxpose.xlu0.b32.cont [3/16] %v9764, 128
        %9947 = vxpose.xlu0.b32.cont [4/16] %v9767, 128
        %9948 = vxpose.xlu0.b32.cont [5/16] 0.0, 128
        %9949 = vxpose.xlu0.b32.cont [6/16] 0.0, 128
        %9950 = vxpose.xlu0.b32.cont [7/16] 0.0, 128
        %9951 = vxpose.xlu0.b32.cont [8/16] 0.0, 128
        %9952 = vxpose.xlu0.b32.cont [9/16] 0.0, 128
        %9953 = vxpose.xlu0.b32.cont [10/16] 0.0, 128
        %9954 = vxpose.xlu0.b32.cont [11/16] 0.0, 128
        %9955 = vxpose.xlu0.b32.cont [12/16] 0.0, 128
        %9956 = vxpose.xlu0.b32.cont [13/16] 0.0, 128
        %9957 = vxpose.xlu0.b32.cont [14/16] 0.0, 128
        %9958 = vxpose.xlu0.b32.cont [15/16] 0.0, 128
        %9959 = vxpose.xlu0.b32.end [16/16] 0.0, 128
        %v9960 = vpop.trf.xlu0
        %v9961 = vpop.trf.xlu0
        %v9962 = vpop.trf.xlu0
        %v9963 = vpop.trf.xlu0
        %v9964 = vpop.trf.xlu0
        %v9965 = vpop.trf.xlu0
        %v9966 = vpop.trf.xlu0
        %v9967 = vpop.trf.xlu0
        %v9968 = vpop.trf.xlu0
        %v9969 = vpop.trf.xlu0
        %v9970 = vpop.trf.xlu0
        %v9971 = vpop.trf.xlu0
        %v9972 = vpop.trf.xlu0
        %v9973 = vpop.trf.xlu0
        %v9974 = vpop.trf.xlu0
        %v9975 = vpop.trf.xlu0
        %9976 = vxpose.xlu0.b32.start [1/16] %v9814, 128
        %9977 = vxpose.xlu0.b32.cont [2/16] %v9817, 128
        %9978 = vxpose.xlu0.b32.cont [3/16] %v9822, 128
        %9979 = vxpose.xlu0.b32.cont [4/16] %v9825, 128
        %9980 = vxpose.xlu0.b32.cont [5/16] 0.0, 128
        %9981 = vxpose.xlu0.b32.cont [6/16] 0.0, 128
        %9982 = vxpose.xlu0.b32.cont [7/16] 0.0, 128
        %9983 = vxpose.xlu0.b32.cont [8/16] 0.0, 128
        %9984 = vxpose.xlu0.b32.cont [9/16] 0.0, 128
        %9985 = vxpose.xlu0.b32.cont [10/16] 0.0, 128
        %9986 = vxpose.xlu0.b32.cont [11/16] 0.0, 128
        %9987 = vxpose.xlu0.b32.cont [12/16] 0.0, 128
        %9988 = vxpose.xlu0.b32.cont [13/16] 0.0, 128
        %9989 = vxpose.xlu0.b32.cont [14/16] 0.0, 128
        %9990 = vxpose.xlu0.b32.cont [15/16] 0.0, 128
        %9991 = vxpose.xlu0.b32.end [16/16] 0.0, 128
        %v9992 = vpop.trf.xlu0
        %v9993 = vpop.trf.xlu0
        %v9994 = vpop.trf.xlu0
        %v9995 = vpop.trf.xlu0
        %v9996 = vpop.trf.xlu0
        %v9997 = vpop.trf.xlu0
        %v9998 = vpop.trf.xlu0
        %v9999 = vpop.trf.xlu0
        %v10000 = vpop.trf.xlu0
        %v10001 = vpop.trf.xlu0
        %v10002 = vpop.trf.xlu0
        %v10003 = vpop.trf.xlu0
        %v10004 = vpop.trf.xlu0
        %v10005 = vpop.trf.xlu0
        %v10006 = vpop.trf.xlu0
        %v10007 = vpop.trf.xlu0
        %10008 = vxpose.xlu0.b32.start [1/16] %v9872, 128
        %10009 = vxpose.xlu0.b32.cont [2/16] %v9875, 128
        %10010 = vxpose.xlu0.b32.cont [3/16] %v9880, 128
        %10011 = vxpose.xlu0.b32.cont [4/16] %v9883, 128
        %10012 = vxpose.xlu0.b32.cont [5/16] 0.0, 128
        %10013 = vxpose.xlu0.b32.cont [6/16] 0.0, 128
        %10014 = vxpose.xlu0.b32.cont [7/16] 0.0, 128
        %10015 = vxpose.xlu0.b32.cont [8/16] 0.0, 128
        %10016 = vxpose.xlu0.b32.cont [9/16] 0.0, 128
        %10017 = vxpose.xlu0.b32.cont [10/16] 0.0, 128
        %10018 = vxpose.xlu0.b32.cont [11/16] 0.0, 128
        %10019 = vxpose.xlu0.b32.cont [12/16] 0.0, 128
        %10020 = vxpose.xlu0.b32.cont [13/16] 0.0, 128
        %10021 = vxpose.xlu0.b32.cont [14/16] 0.0, 128
        %10022 = vxpose.xlu0.b32.cont [15/16] 0.0, 128
        %10023 = vxpose.xlu0.b32.end [16/16] 0.0, 128
        %v10024 = vpop.trf.xlu0
        %v10025 = vpop.trf.xlu0
        %v10026 = vpop.trf.xlu0
        %v10027 = vpop.trf.xlu0
        %v10028 = vpop.trf.xlu0
        %v10029 = vpop.trf.xlu0
        %v10030 = vpop.trf.xlu0
        %v10031 = vpop.trf.xlu0
        %v10032 = vpop.trf.xlu0
        %v10033 = vpop.trf.xlu0
        %v10034 = vpop.trf.xlu0
        %v10035 = vpop.trf.xlu0
        %v10036 = vpop.trf.xlu0
        %v10037 = vpop.trf.xlu0
        %v10038 = vpop.trf.xlu0
        %v10039 = vpop.trf.xlu0
        %10040 = vxpose.xlu0.b32.start [1/16] %v9930, 128
        %10041 = vxpose.xlu0.b32.cont [2/16] %v9933, 128
        %10042 = vxpose.xlu0.b32.cont [3/16] %v9938, 128
        %10043 = vxpose.xlu0.b32.cont [4/16] %v9941, 128
        %10044 = vxpose.xlu0.b32.cont [5/16] 0.0, 128
        %10045 = vxpose.xlu0.b32.cont [6/16] 0.0, 128
        %10046 = vxpose.xlu0.b32.cont [7/16] 0.0, 128
        %10047 = vxpose.xlu0.b32.cont [8/16] 0.0, 128
        %10048 = vxpose.xlu0.b32.cont [9/16] 0.0, 128
        %10049 = vxpose.xlu0.b32.cont [10/16] 0.0, 128
        %10050 = vxpose.xlu0.b32.cont [11/16] 0.0, 128
        %10051 = vxpose.xlu0.b32.cont [12/16] 0.0, 128
        %10052 = vxpose.xlu0.b32.cont [13/16] 0.0, 128
        %10053 = vxpose.xlu0.b32.cont [14/16] 0.0, 128
        %10054 = vxpose.xlu0.b32.cont [15/16] 0.0, 128
        %10055 = vxpose.xlu0.b32.end [16/16] 0.0, 128
        %v10056 = vpop.trf.xlu0
        %v10057 = vpop.trf.xlu0
        %v10058 = vpop.trf.xlu0
        %v10059 = vpop.trf.xlu0
        %v10060 = vpop.trf.xlu0
        %v10061 = vpop.trf.xlu0
        %v10062 = vpop.trf.xlu0
        %v10063 = vpop.trf.xlu0
        %v10064 = vpop.trf.xlu0
        %v10065 = vpop.trf.xlu0
        %v10066 = vpop.trf.xlu0
        %v10067 = vpop.trf.xlu0
        %v10068 = vpop.trf.xlu0
        %v10069 = vpop.trf.xlu0
        %v10070 = vpop.trf.xlu0
        %v10071 = vpop.trf.xlu0
        %v10072 = vcombine.low %v9960, %v10024
        %v10073 = vcombine.high %v9960, %v10024
        %v10075 = vunpack.c.l.s4 1983009808
        %v10076 = vunpack.c.0.s8 %v10075
        %v10077 = vlaneseq
        %v10078 = vshrl.u32 %v10077, 7
        %v10079 = vsub.s32 %v10076, %v10078
        %v10080 = vrot.slane %v10072, %v10079
        %v10082 = vunpack.c.l.s4 1983009808
        %v10083 = vunpack.c.0.s8 %v10082
        %v10084 = vlaneseq
        %v10085 = vshrl.u32 %v10084, 7
        %v10086 = vsub.s32 %v10083, %v10085
        %v10087 = vrot.slane %v10073, %v10086
        %v10088 = vcombine.low %v9992, %v10056
        %v10089 = vcombine.high %v9992, %v10056
        %v10091 = vunpack.c.l.s4 1983009808
        %v10092 = vunpack.c.0.s8 %v10091
        %v10093 = vlaneseq
        %v10094 = vshrl.u32 %v10093, 7
        %v10095 = vsub.s32 %v10092, %v10094
        %v10096 = vrot.slane %v10088, %v10095
        %v10098 = vunpack.c.l.s4 1983009808
        %v10099 = vunpack.c.0.s8 %v10098
        %v10100 = vlaneseq
        %v10101 = vshrl.u32 %v10100, 7
        %v10102 = vsub.s32 %v10099, %v10101
        %v10103 = vrot.slane %v10089, %v10102
        %v10104 = vcombine.low %v10080, %v10096
        %v10105 = vcombine.high %v10080, %v10096
        %v10107 = vunpack.c.l.s4 1934713408
        %v10108 = vunpack.c.0.s8 %v10107
        %v10109 = vlaneseq
        %v10110 = vshrl.u32 %v10109, 7
        %v10111 = vsub.s32 %v10108, %v10110
        %v10112 = vrot.slane %v10104, %v10111
        %v10114 = vunpack.c.l.s4 1934713408
        %v10115 = vunpack.c.0.s8 %v10114
        %v10116 = vlaneseq
        %v10117 = vshrl.u32 %v10116, 7
        %v10118 = vsub.s32 %v10115, %v10117
        %v10119 = vrot.slane %v10105, %v10118
        %v10120 = vcombine.low %v10087, %v10103
        %v10121 = vcombine.high %v10087, %v10103
        %v10123 = vunpack.c.l.s4 1934713408
        %v10124 = vunpack.c.0.s8 %v10123
        %v10125 = vlaneseq
        %v10126 = vshrl.u32 %v10125, 7
        %v10127 = vsub.s32 %v10124, %v10126
        %v10128 = vrot.slane %v10120, %v10127
        %v10130 = vunpack.c.l.s4 1934713408
        %v10131 = vunpack.c.0.s8 %v10130
        %v10132 = vlaneseq
        %v10133 = vshrl.u32 %v10132, 7
        %v10134 = vsub.s32 %v10131, %v10133
        %v10135 = vrot.slane %v10121, %v10134
        %v10136 = vcombine.high %v10112, 0.0
        %v10137 = vcombine.high %v10119, 0.0
        %v10138 = vcombine.high %v10128, 0.0
        %v10139 = vcombine.high %v10135, 0.0
        %v10140 = vcombine.low %v10112, %v10119
        %v10142 = vunpack.c.l.s4 1983009808
        %v10143 = vunpack.c.0.s8 %v10142
        %v10144 = vlaneseq
        %v10145 = vshrl.u32 %v10144, 7
        %v10146 = vsub.s32 %v10143, %v10145
        %v10147 = vrot.slane %v10140, %v10146
        %v10148 = vcombine.low %v10136, %v10137
        %v10150 = vunpack.c.l.s4 1983009808
        %v10151 = vunpack.c.0.s8 %v10150
        %v10152 = vlaneseq
        %v10153 = vshrl.u32 %v10152, 7
        %v10154 = vsub.s32 %v10151, %v10153
        %v10155 = vrot.slane %v10148, %v10154
        %v10156 = vcombine.low %v10128, %v10135
        %v10158 = vunpack.c.l.s4 1983009808
        %v10159 = vunpack.c.0.s8 %v10158
        %v10160 = vlaneseq
        %v10161 = vshrl.u32 %v10160, 7
        %v10162 = vsub.s32 %v10159, %v10161
        %v10163 = vrot.slane %v10156, %v10162
        %v10164 = vcombine.low %v10138, %v10139
        %v10166 = vunpack.c.l.s4 1983009808
        %v10167 = vunpack.c.0.s8 %v10166
        %v10168 = vlaneseq
        %v10169 = vshrl.u32 %v10168, 7
        %v10170 = vsub.s32 %v10167, %v10169
        %v10171 = vrot.slane %v10164, %v10170
        %v10172 = vcombine.low %v10147, %v10155
        %v10173 = vcombine.high %v10147, %v10155
        %v10175 = vunpack.c.l.s4 1934713408
        %v10176 = vunpack.c.0.s8 %v10175
        %v10177 = vlaneseq
        %v10178 = vshrl.u32 %v10177, 7
        %v10179 = vsub.s32 %v10176, %v10178
        %v10180 = vrot.slane %v10172, %v10179
        %v10182 = vunpack.c.l.s4 1934713408
        %v10183 = vunpack.c.0.s8 %v10182
        %v10184 = vlaneseq
        %v10185 = vshrl.u32 %v10184, 7
        %v10186 = vsub.s32 %v10183, %v10185
        %v10187 = vrot.slane %v10173, %v10186
        %v10188 = vcombine.low %v10163, %v10171
        %v10189 = vcombine.high %v10163, %v10171
        %v10191 = vunpack.c.l.s4 1934713408
        %v10192 = vunpack.c.0.s8 %v10191
        %v10193 = vlaneseq
        %v10194 = vshrl.u32 %v10193, 7
        %v10195 = vsub.s32 %v10192, %v10194
        %v10196 = vrot.slane %v10188, %v10195
        %v10198 = vunpack.c.l.s4 1934713408
        %v10199 = vunpack.c.0.s8 %v10198
        %v10200 = vlaneseq
        %v10201 = vshrl.u32 %v10200, 7
        %v10202 = vsub.s32 %v10199, %v10201
        %v10203 = vrot.slane %v10189, %v10202
        %v10204 = vcombine.low %v10180, %v10196
        %v10205 = vcombine.high %v10180, %v10196
        %v10206 = vcombine.low %v10187, %v10203
        %v10207 = vcombine.high %v10187, %v10203
        %10209 = vrot.lane.b32.xlu0 %v10205, 32
        %v10210 = vpop.permute.xlu0 %10209
        %10213 = vrot.lane.b32.xlu0 %v10206, 64
        %v10214 = vpop.permute.xlu0 %10213
        %10217 = vrot.lane.b32.xlu0 %v10207, 96
        %v10218 = vpop.permute.xlu0 %10217
        %v10220 = vsel %vm3257, %v10204, %v10210
        %v10221 = vsel %vm5196, %v10220, %v10214
        %v10222 = vsel %vm5198, %v10221, %v10218
        %v10223 = vpack.c.bf16 %v10222, %v10222
        %v10240 = vunpack.c.l.b16 %v5363
        %v10241 = vunpack.c.l.b16 %v5364
        %v10242 = vunpack.c.l.b16 %v5365
        %v10243 = vunpack.c.l.b16 %v5366
        %v10244 = vunpack.c.l.b16 %v5367
        %v10245 = vunpack.c.l.b16 %v5368
        %v10246 = vunpack.c.l.b16 %v5369
        %v10247 = vunpack.c.l.b16 %v5370
        %v10248 = vunpack.c.l.b16 %v5371
        %v10249 = vunpack.c.l.b16 %v5372
        %v10250 = vunpack.c.l.b16 %v5373
        %v10251 = vunpack.c.l.b16 %v5374
        %v10252 = vunpack.c.l.b16 %v5375
        %v10253 = vunpack.c.l.b16 %v5376
        %v10254 = vunpack.c.l.b16 %v5377
        %v10255 = vunpack.c.l.b16 %v5378
        %v10256 = vpack.c.b16 %v10241, %v10240
        %v10257 = vpack.c.b16 %v10243, %v10242
        %v10258 = vpack.c.b16 %v10245, %v10244
        %v10259 = vpack.c.b16 %v10247, %v10246
        %v10260 = vpack.c.b16 %v10249, %v10248
        %v10261 = vpack.c.b16 %v10251, %v10250
        %v10262 = vpack.c.b16 %v10253, %v10252
        %v10263 = vpack.c.b16 %v10255, %v10254
        %10272 = vmatprep.subr.bf16.mxu0 0
        %10273 = vmatpush1.bf16.msra.mxu0 %v10256
        %10274 = vmatprep.subr.bf16.mxu0 0
        %10275 = vmatpush1.bf16.msra.mxu0 %v10257
        %10276 = vmatprep.subr.bf16.mxu0 0
        %10277 = vmatpush1.bf16.msra.mxu0 %v10258
        %10278 = vmatprep.subr.bf16.mxu0 0
        %10279 = vmatpush1.bf16.msra.mxu0 %v10259
        %10280 = vmatprep.subr.bf16.mxu0 0
        %10281 = vmatpush1.bf16.msra.mxu0 %v10260
        %10282 = vmatprep.subr.bf16.mxu0 0
        %10283 = vmatpush1.bf16.msra.mxu0 %v10261
        %10284 = vmatprep.subr.bf16.mxu0 0
        %10285 = vmatpush1.bf16.msra.mxu0 %v10262
        %10286 = vmatprep.subr.bf16.mxu0 0
        %10287 = vmatpush1.bf16.msra.mxu0 %v10263
        %10288 = vmatprep.subr.bf16.mxu0 0
        %10289 = vmatpush1.bf16.msra.mxu0 0
        %10290 = vmatprep.subr.bf16.mxu0 0
        %10291 = vmatpush1.bf16.msra.mxu0 0
        %10292 = vmatprep.subr.bf16.mxu0 0
        %10293 = vmatpush1.bf16.msra.mxu0 0
        %10294 = vmatprep.subr.bf16.mxu0 0
        %10295 = vmatpush1.bf16.msra.mxu0 0
        %10296 = vmatprep.subr.bf16.mxu0 0
        %10297 = vmatpush1.bf16.msra.mxu0 0
        %10298 = vmatprep.subr.bf16.mxu0 0
        %10299 = vmatpush1.bf16.msra.mxu0 0
        %10300 = vmatprep.subr.bf16.mxu0 0
        %10301 = vmatpush1.bf16.msra.mxu0 0
        %10302 = vmatprep.subr.bf16.mxu0 0
        %10303 = vmatpush1.bf16.msra.mxu0 0
        %10304 = vmatprep.mubr.bf16.mxu0 0
        %10305 = vmatmul.mubr.bf16.gmra.mrb[0].mxu0 %v10223
        %v10306 = vpop.f32.mrb[0].mxu0
        %v10307 = vadd.f32 %v5314, %v10306
        %v10308 = vpop.f32.mrb[0].mxu0
        %v10309 = vpop.f32.mrb[0].mxu0
        %v10310 = vpop.f32.mrb[0].mxu0
        %10311 = vdwg.mxu0
        %10312 = vadd.xlane.f32.xlu0 %v10307
        %v10313 = vpop.xlane.xlu0 %10312
        %v10314 = vmul.f32 %v10313, %v5291
        %v10315 = vsub.f32 %v10307, %v10314
        %v10316 = vmul.f32 %v10315, %v10315
        %10317 = vadd.xlane.f32.xlu0 %v10316
        %v10318 = vpop.xlane.xlu0 %10317
        %v10319 = vmul.f32 %v10318, %v5291
        %v10320 = vadd.f32 %v10319, 1e-06
        %v10321 = vrsqrt.pop %v10320
        %v10322 = vmul.f32 %v10315, %v10321
        %v10324 = vlaneseq
        %v10325 = vshrl.u32 %v10324, 7
        %v10326 = vsub.s32 0, %v10325
        %v10327 = vrot.slane %v5379, %v10326
        %v10329 = vmul.f32 %v10322, %v10327
        %v10331 = vlaneseq
        %v10332 = vshrl.u32 %v10331, 7
        %v10333 = vsub.s32 0, %v10332
        %v10334 = vrot.slane %v5380, %v10333
        %v10336 = vadd.f32 %v10329, %v10334
        %v10337 = vld [vmem:[%s1188] sm:$0xff]
        %v10338 = vld [vmem:[%s1188 + $0x8] sm:$0xff]
        %v10339 = vld [vmem:[%s1188 + $0x10] sm:$0xff]
        %v10340 = vld [vmem:[%s1188 + $0x18] sm:$0xff]
        %v10341 = vld [vmem:[%s1188 + $0x20] sm:$0xff]
        %v10342 = vld [vmem:[%s1188 + $0x28] sm:$0xff]
        %v10343 = vld [vmem:[%s1188 + $0x30] sm:$0xff]
        %v10344 = vld [vmem:[%s1188 + $0x38] sm:$0xff]
        %v10345 = vld [vmem:[%s1188 + $0x40] sm:$0xff]
        %v10346 = vld [vmem:[%s1188 + $0x48] sm:$0xff]
        %v10347 = vld [vmem:[%s1188 + $0x50] sm:$0xff]
        %v10348 = vld [vmem:[%s1188 + $0x58] sm:$0xff]
        %v10349 = vld [vmem:[%s1188 + $0x60] sm:$0xff]
        %v10350 = vld [vmem:[%s1188 + $0x68] sm:$0xff]
        %v10351 = vld [vmem:[%s1188 + $0x70] sm:$0xff]
        %v10352 = vld [vmem:[%s1188 + $0x78] sm:$0xff]
        %v10353 = vpack.c.bf16 %v10336, %v10336
        %v10354 = vld [vmem:[%s1370] sm:$0x3]
        %v10356 = vlaneseq
        %v10357 = vshrl.u32 %v10356, 7
        %v10358 = vsub.s32 0, %v10357
        %v10359 = vrot.slane %v10354, %v10358
        %v10360 = vlaneseq
        %v10361 = vshrl.u32 %v10360, 7
        %v10362 = vsub.s32 1, %v10361
        %v10363 = vrot.slane %v10354, %v10362
        %v10382 = vunpack.c.l.b16 %v10337
        %v10383 = vunpack.c.h.b16 %v10337
        %v10384 = vunpack.c.l.b16 %v10338
        %v10385 = vunpack.c.h.b16 %v10338
        %v10386 = vunpack.c.l.b16 %v10339
        %v10387 = vunpack.c.h.b16 %v10339
        %v10388 = vunpack.c.l.b16 %v10340
        %v10389 = vunpack.c.h.b16 %v10340
        %v10390 = vunpack.c.l.b16 %v10341
        %v10391 = vunpack.c.h.b16 %v10341
        %v10392 = vunpack.c.l.b16 %v10342
        %v10393 = vunpack.c.h.b16 %v10342
        %v10394 = vunpack.c.l.b16 %v10343
        %v10395 = vunpack.c.h.b16 %v10343
        %v10396 = vunpack.c.l.b16 %v10344
        %v10397 = vunpack.c.h.b16 %v10344
        %v10398 = vunpack.c.l.b16 %v10345
        %v10399 = vunpack.c.h.b16 %v10345
        %v10400 = vunpack.c.l.b16 %v10346
        %v10401 = vunpack.c.h.b16 %v10346
        %v10402 = vunpack.c.l.b16 %v10347
        %v10403 = vunpack.c.h.b16 %v10347
        %v10404 = vunpack.c.l.b16 %v10348
        %v10405 = vunpack.c.h.b16 %v10348
        %v10406 = vunpack.c.l.b16 %v10349
        %v10407 = vunpack.c.h.b16 %v10349
        %v10408 = vunpack.c.l.b16 %v10350
        %v10409 = vunpack.c.h.b16 %v10350
        %v10410 = vunpack.c.l.b16 %v10351
        %v10411 = vunpack.c.h.b16 %v10351
        %v10412 = vunpack.c.l.b16 %v10352
        %v10413 = vunpack.c.h.b16 %v10352
        %v10414 = vpack.c.b16 %v10384, %v10382
        %v10415 = vpack.c.b16 %v10385, %v10383
        %v10416 = vpack.c.b16 %v10388, %v10386
        %v10417 = vpack.c.b16 %v10389, %v10387
        %v10418 = vpack.c.b16 %v10392, %v10390
        %v10419 = vpack.c.b16 %v10393, %v10391
        %v10420 = vpack.c.b16 %v10396, %v10394
        %v10421 = vpack.c.b16 %v10397, %v10395
        %v10422 = vpack.c.b16 %v10400, %v10398
        %v10423 = vpack.c.b16 %v10401, %v10399
        %v10424 = vpack.c.b16 %v10404, %v10402
        %v10425 = vpack.c.b16 %v10405, %v10403
        %v10426 = vpack.c.b16 %v10408, %v10406
        %v10427 = vpack.c.b16 %v10409, %v10407
        %v10428 = vpack.c.b16 %v10412, %v10410
        %v10429 = vpack.c.b16 %v10413, %v10411
        %10446 = vmatprep.subr.bf16.mxu0 %v10415
        %10447 = vmatpush1.bf16.msra.mxu0 %v10414
        %10448 = vmatprep.subr.bf16.mxu0 %v10417
        %10449 = vmatpush1.bf16.msra.mxu0 %v10416
        %10450 = vmatprep.subr.bf16.mxu0 %v10419
        %10451 = vmatpush1.bf16.msra.mxu0 %v10418
        %10452 = vmatprep.subr.bf16.mxu0 %v10421
        %10453 = vmatpush1.bf16.msra.mxu0 %v10420
        %10454 = vmatprep.subr.bf16.mxu0 %v10423
        %10455 = vmatpush1.bf16.msra.mxu0 %v10422
        %10456 = vmatprep.subr.bf16.mxu0 %v10425
        %10457 = vmatpush1.bf16.msra.mxu0 %v10424
        %10458 = vmatprep.subr.bf16.mxu0 %v10427
        %10459 = vmatpush1.bf16.msra.mxu0 %v10426
        %10460 = vmatprep.subr.bf16.mxu0 %v10429
        %10461 = vmatpush1.bf16.msra.mxu0 %v10428
        %10462 = vmatprep.subr.bf16.mxu0 0
        %10463 = vmatpush1.bf16.msra.mxu0 0
        %10464 = vmatprep.subr.bf16.mxu0 0
        %10465 = vmatpush1.bf16.msra.mxu0 0
        %10466 = vmatprep.subr.bf16.mxu0 0
        %10467 = vmatpush1.bf16.msra.mxu0 0
        %10468 = vmatprep.subr.bf16.mxu0 0
        %10469 = vmatpush1.bf16.msra.mxu0 0
        %10470 = vmatprep.subr.bf16.mxu0 0
        %10471 = vmatpush1.bf16.msra.mxu0 0
        %10472 = vmatprep.subr.bf16.mxu0 0
        %10473 = vmatpush1.bf16.msra.mxu0 0
        %10474 = vmatprep.subr.bf16.mxu0 0
        %10475 = vmatpush1.bf16.msra.mxu0 0
        %10476 = vmatprep.subr.bf16.mxu0 0
        %10477 = vmatpush1.bf16.msra.mxu0 0
        %10478 = vmatprep.mubr.bf16.mxu0 0
        %10479 = vmatmul.mubr.bf16.gmra.mrb[0].mxu0 %v10353
        %v10480 = vpop.f32.mrb[0].mxu0
        %v10481 = vadd.f32 %v10359, %v10480
        %v10482 = vpop.f32.mrb[0].mxu0
        %v10483 = vadd.f32 %v10363, %v10482
        %v10484 = vpop.f32.mrb[0].mxu0
        %v10485 = vpop.f32.mrb[0].mxu0
        %10486 = vdwg.mxu0
        %v10487 = vmax.f32 %v10481, 0.0
        %v10488 = vmax.f32 %v10483, 0.0
        %v10489 = vld [vmem:[%s1197] sm:$0xf]
        %v10490 = vld [vmem:[%s1197 + $0x4] sm:$0xf]
        %v10491 = vld [vmem:[%s1197 + $0x8] sm:$0xf]
        %v10492 = vld [vmem:[%s1197 + $0xc] sm:$0xf]
        %v10493 = vld [vmem:[%s1197 + $0x10] sm:$0xf]
        %v10494 = vld [vmem:[%s1197 + $0x14] sm:$0xf]
        %v10495 = vld [vmem:[%s1197 + $0x18] sm:$0xf]
        %v10496 = vld [vmem:[%s1197 + $0x1c] sm:$0xf]
        %v10497 = vld [vmem:[%s1197 + $0x20] sm:$0xf]
        %v10498 = vld [vmem:[%s1197 + $0x24] sm:$0xf]
        %v10499 = vld [vmem:[%s1197 + $0x28] sm:$0xf]
        %v10500 = vld [vmem:[%s1197 + $0x2c] sm:$0xf]
        %v10501 = vld [vmem:[%s1197 + $0x30] sm:$0xf]
        %v10502 = vld [vmem:[%s1197 + $0x34] sm:$0xf]
        %v10503 = vld [vmem:[%s1197 + $0x38] sm:$0xf]
        %v10504 = vld [vmem:[%s1197 + $0x3c] sm:$0xf]
        %v10505 = vld [vmem:[%s1197 + $0x40] sm:$0xf]
        %v10506 = vld [vmem:[%s1197 + $0x44] sm:$0xf]
        %v10507 = vld [vmem:[%s1197 + $0x48] sm:$0xf]
        %v10508 = vld [vmem:[%s1197 + $0x4c] sm:$0xf]
        %v10509 = vld [vmem:[%s1197 + $0x50] sm:$0xf]
        %v10510 = vld [vmem:[%s1197 + $0x54] sm:$0xf]
        %v10511 = vld [vmem:[%s1197 + $0x58] sm:$0xf]
        %v10512 = vld [vmem:[%s1197 + $0x5c] sm:$0xf]
        %v10513 = vld [vmem:[%s1197 + $0x60] sm:$0xf]
        %v10514 = vld [vmem:[%s1197 + $0x64] sm:$0xf]
        %v10515 = vld [vmem:[%s1197 + $0x68] sm:$0xf]
        %v10516 = vld [vmem:[%s1197 + $0x6c] sm:$0xf]
        %v10517 = vld [vmem:[%s1197 + $0x70] sm:$0xf]
        %v10518 = vld [vmem:[%s1197 + $0x74] sm:$0xf]
        %v10519 = vld [vmem:[%s1197 + $0x78] sm:$0xf]
        %v10520 = vld [vmem:[%s1197 + $0x7c] sm:$0xf]
        %v10521 = vpack.c.bf16 %v10487, %v10487
        %v10522 = vpack.c.bf16 %v10488, %v10488
        %v10523 = vld [vmem:[%s1373] sm:$0x1]
        %v10525 = vlaneseq
        %v10526 = vshrl.u32 %v10525, 7
        %v10527 = vsub.s32 0, %v10526
        %v10528 = vrot.slane %v10523, %v10527
        %v10562 = vunpack.c.l.b16 %v10489
        %v10563 = vunpack.c.l.b16 %v10490
        %v10564 = vunpack.c.l.b16 %v10491
        %v10565 = vunpack.c.l.b16 %v10492
        %v10566 = vunpack.c.l.b16 %v10493
        %v10567 = vunpack.c.l.b16 %v10494
        %v10568 = vunpack.c.l.b16 %v10495
        %v10569 = vunpack.c.l.b16 %v10496
        %v10570 = vunpack.c.l.b16 %v10497
        %v10571 = vunpack.c.l.b16 %v10498
        %v10572 = vunpack.c.l.b16 %v10499
        %v10573 = vunpack.c.l.b16 %v10500
        %v10574 = vunpack.c.l.b16 %v10501
        %v10575 = vunpack.c.l.b16 %v10502
        %v10576 = vunpack.c.l.b16 %v10503
        %v10577 = vunpack.c.l.b16 %v10504
        %v10578 = vunpack.c.l.b16 %v10505
        %v10579 = vunpack.c.l.b16 %v10506
        %v10580 = vunpack.c.l.b16 %v10507
        %v10581 = vunpack.c.l.b16 %v10508
        %v10582 = vunpack.c.l.b16 %v10509
        %v10583 = vunpack.c.l.b16 %v10510
        %v10584 = vunpack.c.l.b16 %v10511
        %v10585 = vunpack.c.l.b16 %v10512
        %v10586 = vunpack.c.l.b16 %v10513
        %v10587 = vunpack.c.l.b16 %v10514
        %v10588 = vunpack.c.l.b16 %v10515
        %v10589 = vunpack.c.l.b16 %v10516
        %v10590 = vunpack.c.l.b16 %v10517
        %v10591 = vunpack.c.l.b16 %v10518
        %v10592 = vunpack.c.l.b16 %v10519
        %v10593 = vunpack.c.l.b16 %v10520
        %v10594 = vpack.c.b16 %v10563, %v10562
        %v10595 = vpack.c.b16 %v10565, %v10564
        %v10596 = vpack.c.b16 %v10567, %v10566
        %v10597 = vpack.c.b16 %v10569, %v10568
        %v10598 = vpack.c.b16 %v10571, %v10570
        %v10599 = vpack.c.b16 %v10573, %v10572
        %v10600 = vpack.c.b16 %v10575, %v10574
        %v10601 = vpack.c.b16 %v10577, %v10576
        %v10602 = vpack.c.b16 %v10579, %v10578
        %v10603 = vpack.c.b16 %v10581, %v10580
        %v10604 = vpack.c.b16 %v10583, %v10582
        %v10605 = vpack.c.b16 %v10585, %v10584
        %v10606 = vpack.c.b16 %v10587, %v10586
        %v10607 = vpack.c.b16 %v10589, %v10588
        %v10608 = vpack.c.b16 %v10591, %v10590
        %v10609 = vpack.c.b16 %v10593, %v10592
        %10626 = vmatprep.subr.bf16.mxu0 0
        %10627 = vmatpush1.bf16.msra.mxu0 %v10594
        %10628 = vmatprep.subr.bf16.mxu0 0
        %10629 = vmatpush1.bf16.msra.mxu0 %v10595
        %10630 = vmatprep.subr.bf16.mxu0 0
        %10631 = vmatpush1.bf16.msra.mxu0 %v10596
        %10632 = vmatprep.subr.bf16.mxu0 0
        %10633 = vmatpush1.bf16.msra.mxu0 %v10597
        %10634 = vmatprep.subr.bf16.mxu0 0
        %10635 = vmatpush1.bf16.msra.mxu0 %v10598
        %10636 = vmatprep.subr.bf16.mxu0 0
        %10637 = vmatpush1.bf16.msra.mxu0 %v10599
        %10638 = vmatprep.subr.bf16.mxu0 0
        %10639 = vmatpush1.bf16.msra.mxu0 %v10600
        %10640 = vmatprep.subr.bf16.mxu0 0
        %10641 = vmatpush1.bf16.msra.mxu0 %v10601
        %10642 = vmatprep.subr.bf16.mxu0 0
        %10643 = vmatpush1.bf16.msra.mxu0 %v10602
        %10644 = vmatprep.subr.bf16.mxu0 0
        %10645 = vmatpush1.bf16.msra.mxu0 %v10603
        %10646 = vmatprep.subr.bf16.mxu0 0
        %10647 = vmatpush1.bf16.msra.mxu0 %v10604
        %10648 = vmatprep.subr.bf16.mxu0 0
        %10649 = vmatpush1.bf16.msra.mxu0 %v10605
        %10650 = vmatprep.subr.bf16.mxu0 0
        %10651 = vmatpush1.bf16.msra.mxu0 %v10606
        %10652 = vmatprep.subr.bf16.mxu0 0
        %10653 = vmatpush1.bf16.msra.mxu0 %v10607
        %10654 = vmatprep.subr.bf16.mxu0 0
        %10655 = vmatpush1.bf16.msra.mxu0 %v10608
        %10656 = vmatprep.subr.bf16.mxu0 0
        %10657 = vmatpush1.bf16.msra.mxu0 %v10609
        %10658 = vmatprep.mubr.bf16.mxu0 %v10522
        %10659 = vmatmul.mubr.bf16.gmra.mrb[0].mxu0 %v10521
        %v10660 = vpop.f32.mrb[0].mxu0
        %v10661 = vadd.f32 %v10528, %v10660
        %v10662 = vpop.f32.mrb[0].mxu0
        %v10663 = vpop.f32.mrb[0].mxu0
        %v10664 = vpop.f32.mrb[0].mxu0
        %10665 = vdwg.mxu0
        %v10666 = vadd.f32 %v10661, %v10336
        %v10667 = vld [vmem:[%s1376] sm:$0x1]
        %v10668 = vld [vmem:[%s1379] sm:$0x1]
        %10669 = vadd.xlane.f32.xlu0 %v10666
        %v10670 = vpop.xlane.xlu0 %10669
        %v10671 = vmul.f32 %v10670, %v5291
        %v10672 = vsub.f32 %v10666, %v10671
        %v10673 = vmul.f32 %v10672, %v10672
        %10674 = vadd.xlane.f32.xlu0 %v10673
        %v10675 = vpop.xlane.xlu0 %10674
        %v10676 = vmul.f32 %v10675, %v5291
        %v10677 = vadd.f32 %v10676, 1e-06
        %v10678 = vrsqrt.pop %v10677
        %v10679 = vmul.f32 %v10672, %v10678
        %v10681 = vlaneseq
        %v10682 = vshrl.u32 %v10681, 7
        %v10683 = vsub.s32 0, %v10682
        %v10684 = vrot.slane %v10667, %v10683
        %v10686 = vmul.f32 %v10679, %v10684
        %v10688 = vlaneseq
        %v10689 = vshrl.u32 %v10688, 7
        %v10690 = vsub.s32 0, %v10689
        %v10691 = vrot.slane %v10668, %v10690
        %v10693 = vadd.f32 %v10686, %v10691
        %10694 = vst [vmem:[#allocation2] sm:$0xff] %v10693
        %p10695 = scmp.eq.s32.totalorder %s65, 1
        // Predicated region
        $region177: #{tpu_custom_call.1} parent=119 // pred_check
          %p10696 = pneg %p10695
        $region178: #{tpu_custom_call.1} parent=119 // pred_check_branch
          %10698 = sbr.rel (%p10696) target = $region180
        $region179: #{tpu_custom_call.1} parent=119 // pred_region
          %v10699 = vld [vmem:[%s23] sm:$0x1]
          %v10700 = vld [vmem:[%s24] sm:$0x1]
          %10701 = vadd.xlane.f32.xlu0 %v10693
          %v10702 = vpop.xlane.xlu0 %10701
          %v10703 = vmul.f32 %v10702, %v5291
          %v10704 = vsub.f32 %v10693, %v10703
          %v10705 = vmul.f32 %v10704, %v10704
          %10706 = vadd.xlane.f32.xlu0 %v10705
          %v10707 = vpop.xlane.xlu0 %10706
          %v10708 = vmul.f32 %v10707, %v5291
          %v10709 = vadd.f32 %v10708, 1e-06
          %v10710 = vrsqrt.pop %v10709
          %v10711 = vmul.f32 %v10704, %v10710
          %v10713 = vlaneseq
          %v10714 = vshrl.u32 %v10713, 7
          %v10715 = vsub.s32 0, %v10714
          %v10716 = vrot.slane %v10699, %v10715
          %v10718 = vmul.f32 %v10711, %v10716
          %v10720 = vlaneseq
          %v10721 = vshrl.u32 %v10720, 7
          %v10722 = vsub.s32 0, %v10721
          %v10723 = vrot.slane %v10700, %v10722
          %v10725 = vadd.f32 %v10718, %v10723
          %10726 = vst [vmem:[%s1351] sm:$0xff] %v10725
        $region180: #{tpu_custom_call.1} parent=119 // pred_fallthru
          _
        %s10727 = sand.u32 %s715, 1
        %s10728 = scalar_lea.sflag [#allocation5], %s10727
        %s10729 = sand.u32 %s715, 1
        %s10730 = smul.addr %s10729, 8
        %s10731 = scalar_lea.vmem [#allocation24], %s10730
        // Predicated region
        $region181: #{tpu_custom_call.1} parent=119 // pred_check
          %p10732 = pneg %p725
        $region182: #{tpu_custom_call.1} parent=119 // pred_check_branch
          %10734 = sbr.rel (%p10732) target = $region184
        $region183: #{tpu_custom_call.1} parent=119 // pred_region
          %s10736 = ssub.s32 128, 128
          %10737 = vsyncadd %s10728, %s10736
          %s10738 = smul.addr %s64, 128
          %s10739 = scalar_lea.hbm %s25, %s10738
          %s10741 = sshll.u32 %s10731, 4
          %s10742 = int_to_ptr.vmem [resolvable:$true] %s10741
          %10744 = dma.vmem_to_hbm [thread:$0]  %s10742, 128, %s10739, %s10728
        $region184: #{tpu_custom_call.1} parent=119 // pred_fallthru
          _
      $region120: #{tpu_custom_call.1} parent=5 // pred_fallthru
        _
      %p10745 = scmp.le.s32.totalorder 2, %s55
      // Predicated region
      $region185: #{tpu_custom_call.1} parent=5 // pred_check
        %p10746 = pneg %p10745
      $region186: #{tpu_custom_call.1} parent=5 // pred_check_branch
        %10748 = sbr.rel (%p10746) target = $region188
      $region187: #{tpu_custom_call.1} parent=5 // pred_region
        %s10749 = ssub.s32 %s55, 2
        // Predicated region
        $region189: #{tpu_custom_call.1} parent=187 // pred_check
          %p10750 = pneg %p731
        $region190: #{tpu_custom_call.1} parent=187 // pred_check_branch
          %10752 = sbr.rel (%p10750) target = $region192
        $region191: #{tpu_custom_call.1} parent=187 // pred_region
          %s10753 = sand.u32 %s716, 1
          %s10754 = scalar_lea.sflag [#allocation5], %s10753
          %s10755 = sand.u32 %s716, 1
          %s10756 = smul.addr %s10755, 8
          %s10757 = scalar_lea.vmem [#allocation24], %s10756
          %10758 = dma.done %s10754, 128
        $region192: #{tpu_custom_call.1} parent=187 // pred_fallthru
          _
      $region188: #{tpu_custom_call.1} parent=5 // pred_fallthru
        _
    $region6: #{tpu_custom_call.1} parent=1 // loop_footer
      %s59 = sadd.s32 1, %s55
    $region7: #{tpu_custom_call.1} parent=1 // loop_footer_branch
      %54 = sbr.rel target = $region3
    $region8: #{tpu_custom_call.1} parent=1 // loop_exit
      _
    %10759 = vsyncpa [#allocation4], 1
    %s10760 = scalar_lea.sflag [#allocation4], 1
    %10761 = vsyncpa %s10760, 1
    %10762 = vsyncpa [#allocation7], 1
    %s10763 = scalar_lea.sflag [#allocation7], 1
    %10764 = vsyncpa %s10763, 1
    %10765 = vsyncpa [#allocation10], 1
    %s10766 = scalar_lea.sflag [#allocation10], 1
    %10767 = vsyncpa %s10766, 1
    %10768 = vsyncpa [#allocation13], 1
    %s10769 = scalar_lea.sflag [#allocation13], 1
    %10770 = vsyncpa %s10769, 1
    %10771 = vsyncpa [#allocation16], 1
    %s10772 = scalar_lea.sflag [#allocation16], 1
    %10773 = vsyncpa %s10772, 1
    %10774 = vsyncpa [#allocation19], 1
    %s10775 = scalar_lea.sflag [#allocation19], 1
    %10776 = vsyncpa %s10775, 1
    %10777 = vsyncpa [#allocation22], 1
    %s10778 = scalar_lea.sflag [#allocation22], 1
    %10779 = vsyncpa %s10778, 1
    %10780 = vsyncpa [#allocation5], 1
    %s10781 = scalar_lea.sflag [#allocation5], 1
    %10782 = vsyncpa %s10781, 1

</llo_original>
